<compile_context>
chip_gen: v7x
topology: tpu7x:2x2x1
jax: 0.10.0
libtpu: 0.0.40
codegen_flags: <defaults>
</compile_context>

<pallas_src>
import functools

import jax
import jax.numpy as jnp
from jax.experimental import pallas as pl
from jax.experimental.pallas import tpu as pltpu

C_IN, C_OUT = 3, 1
KH = KW = 11
STRIDE = 7
PAD = 5
DIL = 2

# Tap decomposition: the input row read for output row `ho` and kernel row `kh`
# is  ho*STRIDE + kh*DIL = STRIDE*(ho + qh) + rh  with  qh, rh = divmod(kh*DIL, STRIDE).
# Same decomposition for columns.  So after regrouping rows/cols into
# (block, residue) pairs, every tap is a *static contiguous* 2-D slice.
_QR = [divmod(k * DIL, STRIDE) for k in range(KH)]   # (q, r) per kernel offset
_Q_MAX = max(q for q, _ in _QR)                      # = 2 for (K=11, dil=2, stride=7)


def _conv_tanh_kernel(x_ref, w_ref, b_ref, o_ref, *, h_out, w_out):
    # x_ref: (1, C_IN*STRIDE*STRIDE, H_blk, W_blk) VMEM — stride-residue planes
    # w_ref: (C_IN*KH*KW,) SMEM — weights flattened in (c, kh, kw) order
    # b_ref: (1,)          SMEM — scalar bias
    # o_ref: (1, h_out, w_out) VMEM
    acc = jnp.zeros((h_out, w_out), jnp.float32)
    for c in range(C_IN):
        for kh in range(KH):
            qh, rh = _QR[kh]
            for kw in range(KW):
                qw, rw = _QR[kw]
                plane = c * STRIDE * STRIDE + rh * STRIDE + rw
                tap = x_ref[0, plane, pl.ds(qh, h_out), pl.ds(qw, w_out)]
                acc = acc + w_ref[c * KH * KW + kh * KW + kw] * tap
    o_ref[0] = jnp.tanh(acc + b_ref[0])


def conv_tanh(x, weight, bias):
    """tanh(Conv2d(3, 1, 11, stride=7, padding=5, dilation=2)(x)).

    x:      (N, 3, H, W) float32 NCHW
    weight: (1, 3, 11, 11) float32
    bias:   (1,) float32
    returns (N, 1, H_out, W_out) float32
    """
    n, c, h, w = x.shape
    assert c == C_IN
    x = x.astype(jnp.float32)

    h_out = (h + 2 * PAD - DIL * (KH - 1) - 1) // STRIDE + 1
    w_out = (w + 2 * PAD - DIL * (KW - 1) - 1) // STRIDE + 1
    h_blk = h_out + _Q_MAX
    w_blk = w_out + _Q_MAX
    tot_h = h_blk * STRIDE
    tot_w = w_blk * STRIDE

    # Zero-pad (top/left = PAD, bottom/right = whatever reaches tot_h / tot_w;
    # rows/cols past the stride grid are never read, so cropping is safe).
    x_p = jnp.pad(x, ((0, 0), (0, 0),
                      (PAD, max(0, tot_h - PAD - h)),
                      (PAD, max(0, tot_w - PAD - w))))[:, :, :tot_h, :tot_w]

    # Regroup rows/cols by residue mod STRIDE:
    # (N,C,H_blk,7,W_blk,7) -> (N,C,7,7,H_blk,W_blk) -> (N, C*49, H_blk, W_blk)
    x_r = x_p.reshape(n, C_IN, h_blk, STRIDE, w_blk, STRIDE)
    x_r = jnp.transpose(x_r, (0, 1, 3, 5, 2, 4))
    x_r = x_r.reshape(n, C_IN * STRIDE * STRIDE, h_blk, w_blk)

    w_flat = weight.astype(jnp.float32).reshape(C_IN * KH * KW)  # (c, kh, kw)
    b = bias.astype(jnp.float32).reshape(1)

    cost = pl.CostEstimate(
        flops=2 * n * h_out * w_out * C_IN * KH * KW + n * h_out * w_out,
        transcendentals=n * h_out * w_out,
        bytes_accessed=(x_r.size + w_flat.size + 1 + n * h_out * w_out) * 4,
    )

    kernel = functools.partial(_conv_tanh_kernel, h_out=h_out, w_out=w_out)
    out = pl.pallas_call(
        kernel,
        out_shape=jax.ShapeDtypeStruct((n, h_out, w_out), jnp.float32),
        grid_spec=pltpu.PrefetchScalarGridSpec(
            num_scalar_prefetch=0,
            grid=(n,),
            in_specs=[
                pl.BlockSpec((1, C_IN * STRIDE * STRIDE, h_blk, w_blk),
                             lambda i: (i, 0, 0, 0)),
                pl.BlockSpec(memory_space=pltpu.MemorySpace.SMEM),   # weights
                pl.BlockSpec(memory_space=pltpu.MemorySpace.SMEM),   # bias
            ],
            out_specs=pl.BlockSpec((1, h_out, w_out), lambda i: (i, 0, 0)),
        ),
        compiler_params=pltpu.CompilerParams(
            dimension_semantics=("parallel",)),
        cost_estimate=cost,
    )(x_r, w_flat, b)

    return out.reshape(n, C_OUT, h_out, w_out)


if __name__ == "__main__":
    key = jax.random.PRNGKey(0)
    k_x, k_w, k_b = jax.random.split(key, 3)

    # Small shapes consistent with the module: batch=2, C_in=3, spatial 64x64.
    N, H, W = 2, 64, 64
    x = jax.random.normal(k_x, (N, C_IN, H, W), dtype=jnp.float32)

    fan_in = C_IN * KH * KW
    weight = jax.random.normal(k_w, (C_OUT, C_IN, KH, KW),
                               dtype=jnp.float32) / jnp.sqrt(float(fan_in))
    bias = jax.random.normal(k_b, (C_OUT,), dtype=jnp.float32) * 0.1

    y = jax.block_until_ready(jax.jit(conv_tanh)(x, weight, bias))

    # Pure-JAX reference.
    ref = jax.lax.conv_general_dilated(
        x, weight, window_strides=(STRIDE, STRIDE),
        padding=((PAD, PAD), (PAD, PAD)),
        rhs_dilation=(DIL, DIL),
        dimension_numbers=("NCHW", "OIHW", "NCHW"),
    ) + bias.reshape(1, C_OUT, 1, 1)
    ref = jnp.tanh(ref)

    assert y.shape == ref.shape == (N, 1, 8, 8), (y.shape, ref.shape)
    max_err = float(jnp.max(jnp.abs(y - ref)))
    assert max_err < 1e-4, max_err

    print("KERNEL_OK")
</pallas_src>

<mosaic_0001>
module attributes {stable_mosaic.version = 11 : i64} {
  func.func @_conv_tanh_kernel(%arg0: i32, %arg1: memref<1x147x10x10xf32, #tpu.memory_space<vmem>>, %arg2: memref<363xf32, #tpu.memory_space<smem>>, %arg3: memref<1xf32, #tpu.memory_space<smem>>, %arg4: memref<1x8x8xf32, #tpu.memory_space<vmem>>) attributes {dimension_semantics = [#tpu.dimension_semantics<parallel>], iteration_bounds = array<i64: 2>, scalar_prefetch = 0 : i64, scratch_operands = 0 : i64, tpu.core_type = #tpu.core_type<tc>, window_params = [{transform_indices = @transform_0, window_bounds = array<i64: 1, 147, 10, 10>}, {transform_indices = @transform_1, window_bounds = array<i64: 363>}, {transform_indices = @transform_2, window_bounds = array<i64: 1>}, {transform_indices = @transform_3, window_bounds = array<i64: 1, 8, 8>}]} {
    %cst = arith.constant 0.000000e+00 : f32
    %0 = vector.broadcast %cst : f32 to vector<8x8xf32>
    %c0 = arith.constant 0 : index
    %c0_0 = arith.constant 0 : index
    %c0_1 = arith.constant 0 : index
    %c0_2 = arith.constant 0 : index
    %1 = vector.load %arg1[%c0, %c0_0, %c0_1, %c0_2] : memref<1x147x10x10xf32, #tpu.memory_space<vmem>>, vector<1x1x8x8xf32>
    %2 = vector.shape_cast %1 : vector<1x1x8x8xf32> to vector<8x8xf32>
    %c0_3 = arith.constant 0 : index
    %3 = memref.load %arg2[%c0_3] : memref<363xf32, #tpu.memory_space<smem>>
    %4 = vector.broadcast %3 : f32 to vector<8x8xf32>
    %5 = arith.mulf %4, %2 : vector<8x8xf32>
    %6 = arith.addf %0, %5 : vector<8x8xf32>
    %c0_4 = arith.constant 0 : index
    %c2 = arith.constant 2 : index
    %c0_5 = arith.constant 0 : index
    %c0_6 = arith.constant 0 : index
    %7 = vector.load %arg1[%c0_4, %c2, %c0_5, %c0_6] : memref<1x147x10x10xf32, #tpu.memory_space<vmem>>, vector<1x1x8x8xf32>
    %8 = vector.shape_cast %7 : vector<1x1x8x8xf32> to vector<8x8xf32>
    %c1 = arith.constant 1 : index
    %9 = memref.load %arg2[%c1] : memref<363xf32, #tpu.memory_space<smem>>
    %10 = vector.broadcast %9 : f32 to vector<8x8xf32>
    %11 = arith.mulf %10, %8 : vector<8x8xf32>
    %12 = arith.addf %6, %11 : vector<8x8xf32>
    %c0_7 = arith.constant 0 : index
    %c4 = arith.constant 4 : index
    %c0_8 = arith.constant 0 : index
    %c0_9 = arith.constant 0 : index
    %13 = vector.load %arg1[%c0_7, %c4, %c0_8, %c0_9] : memref<1x147x10x10xf32, #tpu.memory_space<vmem>>, vector<1x1x8x8xf32>
    %14 = vector.shape_cast %13 : vector<1x1x8x8xf32> to vector<8x8xf32>
    %c2_10 = arith.constant 2 : index
    %15 = memref.load %arg2[%c2_10] : memref<363xf32, #tpu.memory_space<smem>>
    %16 = vector.broadcast %15 : f32 to vector<8x8xf32>
    %17 = arith.mulf %16, %14 : vector<8x8xf32>
    %18 = arith.addf %12, %17 : vector<8x8xf32>
    %c0_11 = arith.constant 0 : index
    %c6 = arith.constant 6 : index
    %c0_12 = arith.constant 0 : index
    %c0_13 = arith.constant 0 : index
    %19 = vector.load %arg1[%c0_11, %c6, %c0_12, %c0_13] : memref<1x147x10x10xf32, #tpu.memory_space<vmem>>, vector<1x1x8x8xf32>
    %20 = vector.shape_cast %19 : vector<1x1x8x8xf32> to vector<8x8xf32>
    %c3 = arith.constant 3 : index
    %21 = memref.load %arg2[%c3] : memref<363xf32, #tpu.memory_space<smem>>
    %22 = vector.broadcast %21 : f32 to vector<8x8xf32>
    %23 = arith.mulf %22, %20 : vector<8x8xf32>
    %24 = arith.addf %18, %23 : vector<8x8xf32>
    %c0_14 = arith.constant 0 : index
    %c1_15 = arith.constant 1 : index
    %c0_16 = arith.constant 0 : index
    %c1_17 = arith.constant 1 : index
    %25 = vector.load %arg1[%c0_14, %c1_15, %c0_16, %c1_17] : memref<1x147x10x10xf32, #tpu.memory_space<vmem>>, vector<1x1x8x8xf32>
    %26 = vector.shape_cast %25 : vector<1x1x8x8xf32> to vector<8x8xf32>
    %c4_18 = arith.constant 4 : index
    %27 = memref.load %arg2[%c4_18] : memref<363xf32, #tpu.memory_space<smem>>
    %28 = vector.broadcast %27 : f32 to vector<8x8xf32>
    %29 = arith.mulf %28, %26 : vector<8x8xf32>
    %30 = arith.addf %24, %29 : vector<8x8xf32>
    %c0_19 = arith.constant 0 : index
    %c3_20 = arith.constant 3 : index
    %c0_21 = arith.constant 0 : index
    %c1_22 = arith.constant 1 : index
    %31 = vector.load %arg1[%c0_19, %c3_20, %c0_21, %c1_22] : memref<1x147x10x10xf32, #tpu.memory_space<vmem>>, vector<1x1x8x8xf32>
    %32 = vector.shape_cast %31 : vector<1x1x8x8xf32> to vector<8x8xf32>
    %c5 = arith.constant 5 : index
    %33 = memref.load %arg2[%c5] : memref<363xf32, #tpu.memory_space<smem>>
    %34 = vector.broadcast %33 : f32 to vector<8x8xf32>
    %35 = arith.mulf %34, %32 : vector<8x8xf32>
    %36 = arith.addf %30, %35 : vector<8x8xf32>
    %c0_23 = arith.constant 0 : index
    %c5_24 = arith.constant 5 : index
    %c0_25 = arith.constant 0 : index
    %c1_26 = arith.constant 1 : index
    %37 = vector.load %arg1[%c0_23, %c5_24, %c0_25, %c1_26] : memref<1x147x10x10xf32, #tpu.memory_space<vmem>>, vector<1x1x8x8xf32>
    %38 = vector.shape_cast %37 : vector<1x1x8x8xf32> to vector<8x8xf32>
    %c6_27 = arith.constant 6 : index
    %39 = memref.load %arg2[%c6_27] : memref<363xf32, #tpu.memory_space<smem>>
    %40 = vector.broadcast %39 : f32 to vector<8x8xf32>
    %41 = arith.mulf %40, %38 : vector<8x8xf32>
    %42 = arith.addf %36, %41 : vector<8x8xf32>
    %c0_28 = arith.constant 0 : index
    %c0_29 = arith.constant 0 : index
    %c0_30 = arith.constant 0 : index
    %c2_31 = arith.constant 2 : index
    %43 = vector.load %arg1[%c0_28, %c0_29, %c0_30, %c2_31] : memref<1x147x10x10xf32, #tpu.memory_space<vmem>>, vector<1x1x8x8xf32>
    %44 = vector.shape_cast %43 : vector<1x1x8x8xf32> to vector<8x8xf32>
    %c7 = arith.constant 7 : index
    %45 = memref.load %arg2[%c7] : memref<363xf32, #tpu.memory_space<smem>>
    %46 = vector.broadcast %45 : f32 to vector<8x8xf32>
    %47 = arith.mulf %46, %44 : vector<8x8xf32>
    %48 = arith.addf %42, %47 : vector<8x8xf32>
    %c0_32 = arith.constant 0 : index
    %c2_33 = arith.constant 2 : index
    %c0_34 = arith.constant 0 : index
    %c2_35 = arith.constant 2 : index
    %49 = vector.load %arg1[%c0_32, %c2_33, %c0_34, %c2_35] : memref<1x147x10x10xf32, #tpu.memory_space<vmem>>, vector<1x1x8x8xf32>
    %50 = vector.shape_cast %49 : vector<1x1x8x8xf32> to vector<8x8xf32>
    %c8 = arith.constant 8 : index
    %51 = memref.load %arg2[%c8] : memref<363xf32, #tpu.memory_space<smem>>
    %52 = vector.broadcast %51 : f32 to vector<8x8xf32>
    %53 = arith.mulf %52, %50 : vector<8x8xf32>
    %54 = arith.addf %48, %53 : vector<8x8xf32>
    %c0_36 = arith.constant 0 : index
    %c4_37 = arith.constant 4 : index
    %c0_38 = arith.constant 0 : index
    %c2_39 = arith.constant 2 : index
    %55 = vector.load %arg1[%c0_36, %c4_37, %c0_38, %c2_39] : memref<1x147x10x10xf32, #tpu.memory_space<vmem>>, vector<1x1x8x8xf32>
    %56 = vector.shape_cast %55 : vector<1x1x8x8xf32> to vector<8x8xf32>
    %c9 = arith.constant 9 : index
    %57 = memref.load %arg2[%c9] : memref<363xf32, #tpu.memory_space<smem>>
    %58 = vector.broadcast %57 : f32 to vector<8x8xf32>
    %59 = arith.mulf %58, %56 : vector<8x8xf32>
    %60 = arith.addf %54, %59 : vector<8x8xf32>
    %c0_40 = arith.constant 0 : index
    %c6_41 = arith.constant 6 : index
    %c0_42 = arith.constant 0 : index
    %c2_43 = arith.constant 2 : index
    %61 = vector.load %arg1[%c0_40, %c6_41, %c0_42, %c2_43] : memref<1x147x10x10xf32, #tpu.memory_space<vmem>>, vector<1x1x8x8xf32>
    %62 = vector.shape_cast %61 : vector<1x1x8x8xf32> to vector<8x8xf32>
    %c10 = arith.constant 10 : index
    %63 = memref.load %arg2[%c10] : memref<363xf32, #tpu.memory_space<smem>>
    %64 = vector.broadcast %63 : f32 to vector<8x8xf32>
    %65 = arith.mulf %64, %62 : vector<8x8xf32>
    %66 = arith.addf %60, %65 : vector<8x8xf32>
    %c0_44 = arith.constant 0 : index
    %c14 = arith.constant 14 : index
    %c0_45 = arith.constant 0 : index
    %c0_46 = arith.constant 0 : index
    %67 = vector.load %arg1[%c0_44, %c14, %c0_45, %c0_46] : memref<1x147x10x10xf32, #tpu.memory_space<vmem>>, vector<1x1x8x8xf32>
    %68 = vector.shape_cast %67 : vector<1x1x8x8xf32> to vector<8x8xf32>
    %c11 = arith.constant 11 : index
    %69 = memref.load %arg2[%c11] : memref<363xf32, #tpu.memory_space<smem>>
    %70 = vector.broadcast %69 : f32 to vector<8x8xf32>
    %71 = arith.mulf %70, %68 : vector<8x8xf32>
    %72 = arith.addf %66, %71 : vector<8x8xf32>
    %c0_47 = arith.constant 0 : index
    %c16 = arith.constant 16 : index
    %c0_48 = arith.constant 0 : index
    %c0_49 = arith.constant 0 : index
    %73 = vector.load %arg1[%c0_47, %c16, %c0_48, %c0_49] : memref<1x147x10x10xf32, #tpu.memory_space<vmem>>, vector<1x1x8x8xf32>
    %74 = vector.shape_cast %73 : vector<1x1x8x8xf32> to vector<8x8xf32>
    %c12 = arith.constant 12 : index
    %75 = memref.load %arg2[%c12] : memref<363xf32, #tpu.memory_space<smem>>
    %76 = vector.broadcast %75 : f32 to vector<8x8xf32>
    %77 = arith.mulf %76, %74 : vector<8x8xf32>
    %78 = arith.addf %72, %77 : vector<8x8xf32>
    %c0_50 = arith.constant 0 : index
    %c18 = arith.constant 18 : index
    %c0_51 = arith.constant 0 : index
    %c0_52 = arith.constant 0 : index
    %79 = vector.load %arg1[%c0_50, %c18, %c0_51, %c0_52] : memref<1x147x10x10xf32, #tpu.memory_space<vmem>>, vector<1x1x8x8xf32>
    %80 = vector.shape_cast %79 : vector<1x1x8x8xf32> to vector<8x8xf32>
    %c13 = arith.constant 13 : index
    %81 = memref.load %arg2[%c13] : memref<363xf32, #tpu.memory_space<smem>>
    %82 = vector.broadcast %81 : f32 to vector<8x8xf32>
    %83 = arith.mulf %82, %80 : vector<8x8xf32>
    %84 = arith.addf %78, %83 : vector<8x8xf32>
    %c0_53 = arith.constant 0 : index
    %c20 = arith.constant 20 : index
    %c0_54 = arith.constant 0 : index
    %c0_55 = arith.constant 0 : index
    %85 = vector.load %arg1[%c0_53, %c20, %c0_54, %c0_55] : memref<1x147x10x10xf32, #tpu.memory_space<vmem>>, vector<1x1x8x8xf32>
    %86 = vector.shape_cast %85 : vector<1x1x8x8xf32> to vector<8x8xf32>
    %c14_56 = arith.constant 14 : index
    %87 = memref.load %arg2[%c14_56] : memref<363xf32, #tpu.memory_space<smem>>
    %88 = vector.broadcast %87 : f32 to vector<8x8xf32>
    %89 = arith.mulf %88, %86 : vector<8x8xf32>
    %90 = arith.addf %84, %89 : vector<8x8xf32>
    %c0_57 = arith.constant 0 : index
    %c15 = arith.constant 15 : index
    %c0_58 = arith.constant 0 : index
    %c1_59 = arith.constant 1 : index
    %91 = vector.load %arg1[%c0_57, %c15, %c0_58, %c1_59] : memref<1x147x10x10xf32, #tpu.memory_space<vmem>>, vector<1x1x8x8xf32>
    %92 = vector.shape_cast %91 : vector<1x1x8x8xf32> to vector<8x8xf32>
    %c15_60 = arith.constant 15 : index
    %93 = memref.load %arg2[%c15_60] : memref<363xf32, #tpu.memory_space<smem>>
    %94 = vector.broadcast %93 : f32 to vector<8x8xf32>
    %95 = arith.mulf %94, %92 : vector<8x8xf32>
    %96 = arith.addf %90, %95 : vector<8x8xf32>
    %c0_61 = arith.constant 0 : index
    %c17 = arith.constant 17 : index
    %c0_62 = arith.constant 0 : index
    %c1_63 = arith.constant 1 : index
    %97 = vector.load %arg1[%c0_61, %c17, %c0_62, %c1_63] : memref<1x147x10x10xf32, #tpu.memory_space<vmem>>, vector<1x1x8x8xf32>
    %98 = vector.shape_cast %97 : vector<1x1x8x8xf32> to vector<8x8xf32>
    %c16_64 = arith.constant 16 : index
    %99 = memref.load %arg2[%c16_64] : memref<363xf32, #tpu.memory_space<smem>>
    %100 = vector.broadcast %99 : f32 to vector<8x8xf32>
    %101 = arith.mulf %100, %98 : vector<8x8xf32>
    %102 = arith.addf %96, %101 : vector<8x8xf32>
    %c0_65 = arith.constant 0 : index
    %c19 = arith.constant 19 : index
    %c0_66 = arith.constant 0 : index
    %c1_67 = arith.constant 1 : index
    %103 = vector.load %arg1[%c0_65, %c19, %c0_66, %c1_67] : memref<1x147x10x10xf32, #tpu.memory_space<vmem>>, vector<1x1x8x8xf32>
    %104 = vector.shape_cast %103 : vector<1x1x8x8xf32> to vector<8x8xf32>
    %c17_68 = arith.constant 17 : index
    %105 = memref.load %arg2[%c17_68] : memref<363xf32, #tpu.memory_space<smem>>
    %106 = vector.broadcast %105 : f32 to vector<8x8xf32>
    %107 = arith.mulf %106, %104 : vector<8x8xf32>
    %108 = arith.addf %102, %107 : vector<8x8xf32>
    %c0_69 = arith.constant 0 : index
    %c14_70 = arith.constant 14 : index
    %c0_71 = arith.constant 0 : index
    %c2_72 = arith.constant 2 : index
    %109 = vector.load %arg1[%c0_69, %c14_70, %c0_71, %c2_72] : memref<1x147x10x10xf32, #tpu.memory_space<vmem>>, vector<1x1x8x8xf32>
    %110 = vector.shape_cast %109 : vector<1x1x8x8xf32> to vector<8x8xf32>
    %c18_73 = arith.constant 18 : index
    %111 = memref.load %arg2[%c18_73] : memref<363xf32, #tpu.memory_space<smem>>
    %112 = vector.broadcast %111 : f32 to vector<8x8xf32>
    %113 = arith.mulf %112, %110 : vector<8x8xf32>
    %114 = arith.addf %108, %113 : vector<8x8xf32>
    %c0_74 = arith.constant 0 : index
    %c16_75 = arith.constant 16 : index
    %c0_76 = arith.constant 0 : index
    %c2_77 = arith.constant 2 : index
    %115 = vector.load %arg1[%c0_74, %c16_75, %c0_76, %c2_77] : memref<1x147x10x10xf32, #tpu.memory_space<vmem>>, vector<1x1x8x8xf32>
    %116 = vector.shape_cast %115 : vector<1x1x8x8xf32> to vector<8x8xf32>
    %c19_78 = arith.constant 19 : index
    %117 = memref.load %arg2[%c19_78] : memref<363xf32, #tpu.memory_space<smem>>
    %118 = vector.broadcast %117 : f32 to vector<8x8xf32>
    %119 = arith.mulf %118, %116 : vector<8x8xf32>
    %120 = arith.addf %114, %119 : vector<8x8xf32>
    %c0_79 = arith.constant 0 : index
    %c18_80 = arith.constant 18 : index
    %c0_81 = arith.constant 0 : index
    %c2_82 = arith.constant 2 : index
    %121 = vector.load %arg1[%c0_79, %c18_80, %c0_81, %c2_82] : memref<1x147x10x10xf32, #tpu.memory_space<vmem>>, vector<1x1x8x8xf32>
    %122 = vector.shape_cast %121 : vector<1x1x8x8xf32> to vector<8x8xf32>
    %c20_83 = arith.constant 20 : index
    %123 = memref.load %arg2[%c20_83] : memref<363xf32, #tpu.memory_space<smem>>
    %124 = vector.broadcast %123 : f32 to vector<8x8xf32>
    %125 = arith.mulf %124, %122 : vector<8x8xf32>
    %126 = arith.addf %120, %125 : vector<8x8xf32>
    %c0_84 = arith.constant 0 : index
    %c20_85 = arith.constant 20 : index
    %c0_86 = arith.constant 0 : index
    %c2_87 = arith.constant 2 : index
    %127 = vector.load %arg1[%c0_84, %c20_85, %c0_86, %c2_87] : memref<1x147x10x10xf32, #tpu.memory_space<vmem>>, vector<1x1x8x8xf32>
    %128 = vector.shape_cast %127 : vector<1x1x8x8xf32> to vector<8x8xf32>
    %c21 = arith.constant 21 : index
    %129 = memref.load %arg2[%c21] : memref<363xf32, #tpu.memory_space<smem>>
    %130 = vector.broadcast %129 : f32 to vector<8x8xf32>
    %131 = arith.mulf %130, %128 : vector<8x8xf32>
    %132 = arith.addf %126, %131 : vector<8x8xf32>
    %c0_88 = arith.constant 0 : index
    %c28 = arith.constant 28 : index
    %c0_89 = arith.constant 0 : index
    %c0_90 = arith.constant 0 : index
    %133 = vector.load %arg1[%c0_88, %c28, %c0_89, %c0_90] : memref<1x147x10x10xf32, #tpu.memory_space<vmem>>, vector<1x1x8x8xf32>
    %134 = vector.shape_cast %133 : vector<1x1x8x8xf32> to vector<8x8xf32>
    %c22 = arith.constant 22 : index
    %135 = memref.load %arg2[%c22] : memref<363xf32, #tpu.memory_space<smem>>
    %136 = vector.broadcast %135 : f32 to vector<8x8xf32>
    %137 = arith.mulf %136, %134 : vector<8x8xf32>
    %138 = arith.addf %132, %137 : vector<8x8xf32>
    %c0_91 = arith.constant 0 : index
    %c30 = arith.constant 30 : index
    %c0_92 = arith.constant 0 : index
    %c0_93 = arith.constant 0 : index
    %139 = vector.load %arg1[%c0_91, %c30, %c0_92, %c0_93] : memref<1x147x10x10xf32, #tpu.memory_space<vmem>>, vector<1x1x8x8xf32>
    %140 = vector.shape_cast %139 : vector<1x1x8x8xf32> to vector<8x8xf32>
    %c23 = arith.constant 23 : index
    %141 = memref.load %arg2[%c23] : memref<363xf32, #tpu.memory_space<smem>>
    %142 = vector.broadcast %141 : f32 to vector<8x8xf32>
    %143 = arith.mulf %142, %140 : vector<8x8xf32>
    %144 = arith.addf %138, %143 : vector<8x8xf32>
    %c0_94 = arith.constant 0 : index
    %c32 = arith.constant 32 : index
    %c0_95 = arith.constant 0 : index
    %c0_96 = arith.constant 0 : index
    %145 = vector.load %arg1[%c0_94, %c32, %c0_95, %c0_96] : memref<1x147x10x10xf32, #tpu.memory_space<vmem>>, vector<1x1x8x8xf32>
    %146 = vector.shape_cast %145 : vector<1x1x8x8xf32> to vector<8x8xf32>
    %c24 = arith.constant 24 : index
    %147 = memref.load %arg2[%c24] : memref<363xf32, #tpu.memory_space<smem>>
    %148 = vector.broadcast %147 : f32 to vector<8x8xf32>
    %149 = arith.mulf %148, %146 : vector<8x8xf32>
    %150 = arith.addf %144, %149 : vector<8x8xf32>
    %c0_97 = arith.constant 0 : index
    %c34 = arith.constant 34 : index
    %c0_98 = arith.constant 0 : index
    %c0_99 = arith.constant 0 : index
    %151 = vector.load %arg1[%c0_97, %c34, %c0_98, %c0_99] : memref<1x147x10x10xf32, #tpu.memory_space<vmem>>, vector<1x1x8x8xf32>
    %152 = vector.shape_cast %151 : vector<1x1x8x8xf32> to vector<8x8xf32>
    %c25 = arith.constant 25 : index
    %153 = memref.load %arg2[%c25] : memref<363xf32, #tpu.memory_space<smem>>
    %154 = vector.broadcast %153 : f32 to vector<8x8xf32>
    %155 = arith.mulf %154, %152 : vector<8x8xf32>
    %156 = arith.addf %150, %155 : vector<8x8xf32>
    %c0_100 = arith.constant 0 : index
    %c29 = arith.constant 29 : index
    %c0_101 = arith.constant 0 : index
    %c1_102 = arith.constant 1 : index
    %157 = vector.load %arg1[%c0_100, %c29, %c0_101, %c1_102] : memref<1x147x10x10xf32, #tpu.memory_space<vmem>>, vector<1x1x8x8xf32>
    %158 = vector.shape_cast %157 : vector<1x1x8x8xf32> to vector<8x8xf32>
    %c26 = arith.constant 26 : index
    %159 = memref.load %arg2[%c26] : memref<363xf32, #tpu.memory_space<smem>>
    %160 = vector.broadcast %159 : f32 to vector<8x8xf32>
    %161 = arith.mulf %160, %158 : vector<8x8xf32>
    %162 = arith.addf %156, %161 : vector<8x8xf32>
    %c0_103 = arith.constant 0 : index
    %c31 = arith.constant 31 : index
    %c0_104 = arith.constant 0 : index
    %c1_105 = arith.constant 1 : index
    %163 = vector.load %arg1[%c0_103, %c31, %c0_104, %c1_105] : memref<1x147x10x10xf32, #tpu.memory_space<vmem>>, vector<1x1x8x8xf32>
    %164 = vector.shape_cast %163 : vector<1x1x8x8xf32> to vector<8x8xf32>
    %c27 = arith.constant 27 : index
    %165 = memref.load %arg2[%c27] : memref<363xf32, #tpu.memory_space<smem>>
    %166 = vector.broadcast %165 : f32 to vector<8x8xf32>
    %167 = arith.mulf %166, %164 : vector<8x8xf32>
    %168 = arith.addf %162, %167 : vector<8x8xf32>
    %c0_106 = arith.constant 0 : index
    %c33 = arith.constant 33 : index
    %c0_107 = arith.constant 0 : index
    %c1_108 = arith.constant 1 : index
    %169 = vector.load %arg1[%c0_106, %c33, %c0_107, %c1_108] : memref<1x147x10x10xf32, #tpu.memory_space<vmem>>, vector<1x1x8x8xf32>
    %170 = vector.shape_cast %169 : vector<1x1x8x8xf32> to vector<8x8xf32>
    %c28_109 = arith.constant 28 : index
    %171 = memref.load %arg2[%c28_109] : memref<363xf32, #tpu.memory_space<smem>>
    %172 = vector.broadcast %171 : f32 to vector<8x8xf32>
    %173 = arith.mulf %172, %170 : vector<8x8xf32>
    %174 = arith.addf %168, %173 : vector<8x8xf32>
    %c0_110 = arith.constant 0 : index
    %c28_111 = arith.constant 28 : index
    %c0_112 = arith.constant 0 : index
    %c2_113 = arith.constant 2 : index
    %175 = vector.load %arg1[%c0_110, %c28_111, %c0_112, %c2_113] : memref<1x147x10x10xf32, #tpu.memory_space<vmem>>, vector<1x1x8x8xf32>
    %176 = vector.shape_cast %175 : vector<1x1x8x8xf32> to vector<8x8xf32>
    %c29_114 = arith.constant 29 : index
    %177 = memref.load %arg2[%c29_114] : memref<363xf32, #tpu.memory_space<smem>>
    %178 = vector.broadcast %177 : f32 to vector<8x8xf32>
    %179 = arith.mulf %178, %176 : vector<8x8xf32>
    %180 = arith.addf %174, %179 : vector<8x8xf32>
    %c0_115 = arith.constant 0 : index
    %c30_116 = arith.constant 30 : index
    %c0_117 = arith.constant 0 : index
    %c2_118 = arith.constant 2 : index
    %181 = vector.load %arg1[%c0_115, %c30_116, %c0_117, %c2_118] : memref<1x147x10x10xf32, #tpu.memory_space<vmem>>, vector<1x1x8x8xf32>
    %182 = vector.shape_cast %181 : vector<1x1x8x8xf32> to vector<8x8xf32>
    %c30_119 = arith.constant 30 : index
    %183 = memref.load %arg2[%c30_119] : memref<363xf32, #tpu.memory_space<smem>>
    %184 = vector.broadcast %183 : f32 to vector<8x8xf32>
    %185 = arith.mulf %184, %182 : vector<8x8xf32>
    %186 = arith.addf %180, %185 : vector<8x8xf32>
    %c0_120 = arith.constant 0 : index
    %c32_121 = arith.constant 32 : index
    %c0_122 = arith.constant 0 : index
    %c2_123 = arith.constant 2 : index
    %187 = vector.load %arg1[%c0_120, %c32_121, %c0_122, %c2_123] : memref<1x147x10x10xf32, #tpu.memory_space<vmem>>, vector<1x1x8x8xf32>
    %188 = vector.shape_cast %187 : vector<1x1x8x8xf32> to vector<8x8xf32>
    %c31_124 = arith.constant 31 : index
    %189 = memref.load %arg2[%c31_124] : memref<363xf32, #tpu.memory_space<smem>>
    %190 = vector.broadcast %189 : f32 to vector<8x8xf32>
    %191 = arith.mulf %190, %188 : vector<8x8xf32>
    %192 = arith.addf %186, %191 : vector<8x8xf32>
    %c0_125 = arith.constant 0 : index
    %c34_126 = arith.constant 34 : index
    %c0_127 = arith.constant 0 : index
    %c2_128 = arith.constant 2 : index
    %193 = vector.load %arg1[%c0_125, %c34_126, %c0_127, %c2_128] : memref<1x147x10x10xf32, #tpu.memory_space<vmem>>, vector<1x1x8x8xf32>
    %194 = vector.shape_cast %193 : vector<1x1x8x8xf32> to vector<8x8xf32>
    %c32_129 = arith.constant 32 : index
    %195 = memref.load %arg2[%c32_129] : memref<363xf32, #tpu.memory_space<smem>>
    %196 = vector.broadcast %195 : f32 to vector<8x8xf32>
    %197 = arith.mulf %196, %194 : vector<8x8xf32>
    %198 = arith.addf %192, %197 : vector<8x8xf32>
    %c0_130 = arith.constant 0 : index
    %c42 = arith.constant 42 : index
    %c0_131 = arith.constant 0 : index
    %c0_132 = arith.constant 0 : index
    %199 = vector.load %arg1[%c0_130, %c42, %c0_131, %c0_132] : memref<1x147x10x10xf32, #tpu.memory_space<vmem>>, vector<1x1x8x8xf32>
    %200 = vector.shape_cast %199 : vector<1x1x8x8xf32> to vector<8x8xf32>
    %c33_133 = arith.constant 33 : index
    %201 = memref.load %arg2[%c33_133] : memref<363xf32, #tpu.memory_space<smem>>
    %202 = vector.broadcast %201 : f32 to vector<8x8xf32>
    %203 = arith.mulf %202, %200 : vector<8x8xf32>
    %204 = arith.addf %198, %203 : vector<8x8xf32>
    %c0_134 = arith.constant 0 : index
    %c44 = arith.constant 44 : index
    %c0_135 = arith.constant 0 : index
    %c0_136 = arith.constant 0 : index
    %205 = vector.load %arg1[%c0_134, %c44, %c0_135, %c0_136] : memref<1x147x10x10xf32, #tpu.memory_space<vmem>>, vector<1x1x8x8xf32>
    %206 = vector.shape_cast %205 : vector<1x1x8x8xf32> to vector<8x8xf32>
    %c34_137 = arith.constant 34 : index
    %207 = memref.load %arg2[%c34_137] : memref<363xf32, #tpu.memory_space<smem>>
    %208 = vector.broadcast %207 : f32 to vector<8x8xf32>
    %209 = arith.mulf %208, %206 : vector<8x8xf32>
    %210 = arith.addf %204, %209 : vector<8x8xf32>
    %c0_138 = arith.constant 0 : index
    %c46 = arith.constant 46 : index
    %c0_139 = arith.constant 0 : index
    %c0_140 = arith.constant 0 : index
    %211 = vector.load %arg1[%c0_138, %c46, %c0_139, %c0_140] : memref<1x147x10x10xf32, #tpu.memory_space<vmem>>, vector<1x1x8x8xf32>
    %212 = vector.shape_cast %211 : vector<1x1x8x8xf32> to vector<8x8xf32>
    %c35 = arith.constant 35 : index
    %213 = memref.load %arg2[%c35] : memref<363xf32, #tpu.memory_space<smem>>
    %214 = vector.broadcast %213 : f32 to vector<8x8xf32>
    %215 = arith.mulf %214, %212 : vector<8x8xf32>
    %216 = arith.addf %210, %215 : vector<8x8xf32>
    %c0_141 = arith.constant 0 : index
    %c48 = arith.constant 48 : index
    %c0_142 = arith.constant 0 : index
    %c0_143 = arith.constant 0 : index
    %217 = vector.load %arg1[%c0_141, %c48, %c0_142, %c0_143] : memref<1x147x10x10xf32, #tpu.memory_space<vmem>>, vector<1x1x8x8xf32>
    %218 = vector.shape_cast %217 : vector<1x1x8x8xf32> to vector<8x8xf32>
    %c36 = arith.constant 36 : index
    %219 = memref.load %arg2[%c36] : memref<363xf32, #tpu.memory_space<smem>>
    %220 = vector.broadcast %219 : f32 to vector<8x8xf32>
    %221 = arith.mulf %220, %218 : vector<8x8xf32>
    %222 = arith.addf %216, %221 : vector<8x8xf32>
    %c0_144 = arith.constant 0 : index
    %c43 = arith.constant 43 : index
    %c0_145 = arith.constant 0 : index
    %c1_146 = arith.constant 1 : index
    %223 = vector.load %arg1[%c0_144, %c43, %c0_145, %c1_146] : memref<1x147x10x10xf32, #tpu.memory_space<vmem>>, vector<1x1x8x8xf32>
    %224 = vector.shape_cast %223 : vector<1x1x8x8xf32> to vector<8x8xf32>
    %c37 = arith.constant 37 : index
    %225 = memref.load %arg2[%c37] : memref<363xf32, #tpu.memory_space<smem>>
    %226 = vector.broadcast %225 : f32 to vector<8x8xf32>
    %227 = arith.mulf %226, %224 : vector<8x8xf32>
    %228 = arith.addf %222, %227 : vector<8x8xf32>
    %c0_147 = arith.constant 0 : index
    %c45 = arith.constant 45 : index
    %c0_148 = arith.constant 0 : index
    %c1_149 = arith.constant 1 : index
    %229 = vector.load %arg1[%c0_147, %c45, %c0_148, %c1_149] : memref<1x147x10x10xf32, #tpu.memory_space<vmem>>, vector<1x1x8x8xf32>
    %230 = vector.shape_cast %229 : vector<1x1x8x8xf32> to vector<8x8xf32>
    %c38 = arith.constant 38 : index
    %231 = memref.load %arg2[%c38] : memref<363xf32, #tpu.memory_space<smem>>
    %232 = vector.broadcast %231 : f32 to vector<8x8xf32>
    %233 = arith.mulf %232, %230 : vector<8x8xf32>
    %234 = arith.addf %228, %233 : vector<8x8xf32>
    %c0_150 = arith.constant 0 : index
    %c47 = arith.constant 47 : index
    %c0_151 = arith.constant 0 : index
    %c1_152 = arith.constant 1 : index
    %235 = vector.load %arg1[%c0_150, %c47, %c0_151, %c1_152] : memref<1x147x10x10xf32, #tpu.memory_space<vmem>>, vector<1x1x8x8xf32>
    %236 = vector.shape_cast %235 : vector<1x1x8x8xf32> to vector<8x8xf32>
    %c39 = arith.constant 39 : index
    %237 = memref.load %arg2[%c39] : memref<363xf32, #tpu.memory_space<smem>>
    %238 = vector.broadcast %237 : f32 to vector<8x8xf32>
    %239 = arith.mulf %238, %236 : vector<8x8xf32>
    %240 = arith.addf %234, %239 : vector<8x8xf32>
    %c0_153 = arith.constant 0 : index
    %c42_154 = arith.constant 42 : index
    %c0_155 = arith.constant 0 : index
    %c2_156 = arith.constant 2 : index
    %241 = vector.load %arg1[%c0_153, %c42_154, %c0_155, %c2_156] : memref<1x147x10x10xf32, #tpu.memory_space<vmem>>, vector<1x1x8x8xf32>
    %242 = vector.shape_cast %241 : vector<1x1x8x8xf32> to vector<8x8xf32>
    %c40 = arith.constant 40 : index
    %243 = memref.load %arg2[%c40] : memref<363xf32, #tpu.memory_space<smem>>
    %244 = vector.broadcast %243 : f32 to vector<8x8xf32>
    %245 = arith.mulf %244, %242 : vector<8x8xf32>
    %246 = arith.addf %240, %245 : vector<8x8xf32>
    %c0_157 = arith.constant 0 : index
    %c44_158 = arith.constant 44 : index
    %c0_159 = arith.constant 0 : index
    %c2_160 = arith.constant 2 : index
    %247 = vector.load %arg1[%c0_157, %c44_158, %c0_159, %c2_160] : memref<1x147x10x10xf32, #tpu.memory_space<vmem>>, vector<1x1x8x8xf32>
    %248 = vector.shape_cast %247 : vector<1x1x8x8xf32> to vector<8x8xf32>
    %c41 = arith.constant 41 : index
    %249 = memref.load %arg2[%c41] : memref<363xf32, #tpu.memory_space<smem>>
    %250 = vector.broadcast %249 : f32 to vector<8x8xf32>
    %251 = arith.mulf %250, %248 : vector<8x8xf32>
    %252 = arith.addf %246, %251 : vector<8x8xf32>
    %c0_161 = arith.constant 0 : index
    %c46_162 = arith.constant 46 : index
    %c0_163 = arith.constant 0 : index
    %c2_164 = arith.constant 2 : index
    %253 = vector.load %arg1[%c0_161, %c46_162, %c0_163, %c2_164] : memref<1x147x10x10xf32, #tpu.memory_space<vmem>>, vector<1x1x8x8xf32>
    %254 = vector.shape_cast %253 : vector<1x1x8x8xf32> to vector<8x8xf32>
    %c42_165 = arith.constant 42 : index
    %255 = memref.load %arg2[%c42_165] : memref<363xf32, #tpu.memory_space<smem>>
    %256 = vector.broadcast %255 : f32 to vector<8x8xf32>
    %257 = arith.mulf %256, %254 : vector<8x8xf32>
    %258 = arith.addf %252, %257 : vector<8x8xf32>
    %c0_166 = arith.constant 0 : index
    %c48_167 = arith.constant 48 : index
    %c0_168 = arith.constant 0 : index
    %c2_169 = arith.constant 2 : index
    %259 = vector.load %arg1[%c0_166, %c48_167, %c0_168, %c2_169] : memref<1x147x10x10xf32, #tpu.memory_space<vmem>>, vector<1x1x8x8xf32>
    %260 = vector.shape_cast %259 : vector<1x1x8x8xf32> to vector<8x8xf32>
    %c43_170 = arith.constant 43 : index
    %261 = memref.load %arg2[%c43_170] : memref<363xf32, #tpu.memory_space<smem>>
    %262 = vector.broadcast %261 : f32 to vector<8x8xf32>
    %263 = arith.mulf %262, %260 : vector<8x8xf32>
    %264 = arith.addf %258, %263 : vector<8x8xf32>
    %c0_171 = arith.constant 0 : index
    %c7_172 = arith.constant 7 : index
    %c1_173 = arith.constant 1 : index
    %c0_174 = arith.constant 0 : index
    %265 = vector.load %arg1[%c0_171, %c7_172, %c1_173, %c0_174] : memref<1x147x10x10xf32, #tpu.memory_space<vmem>>, vector<1x1x8x8xf32>
    %266 = vector.shape_cast %265 : vector<1x1x8x8xf32> to vector<8x8xf32>
    %c44_175 = arith.constant 44 : index
    %267 = memref.load %arg2[%c44_175] : memref<363xf32, #tpu.memory_space<smem>>
    %268 = vector.broadcast %267 : f32 to vector<8x8xf32>
    %269 = arith.mulf %268, %266 : vector<8x8xf32>
    %270 = arith.addf %264, %269 : vector<8x8xf32>
    %c0_176 = arith.constant 0 : index
    %c9_177 = arith.constant 9 : index
    %c1_178 = arith.constant 1 : index
    %c0_179 = arith.constant 0 : index
    %271 = vector.load %arg1[%c0_176, %c9_177, %c1_178, %c0_179] : memref<1x147x10x10xf32, #tpu.memory_space<vmem>>, vector<1x1x8x8xf32>
    %272 = vector.shape_cast %271 : vector<1x1x8x8xf32> to vector<8x8xf32>
    %c45_180 = arith.constant 45 : index
    %273 = memref.load %arg2[%c45_180] : memref<363xf32, #tpu.memory_space<smem>>
    %274 = vector.broadcast %273 : f32 to vector<8x8xf32>
    %275 = arith.mulf %274, %272 : vector<8x8xf32>
    %276 = arith.addf %270, %275 : vector<8x8xf32>
    %c0_181 = arith.constant 0 : index
    %c11_182 = arith.constant 11 : index
    %c1_183 = arith.constant 1 : index
    %c0_184 = arith.constant 0 : index
    %277 = vector.load %arg1[%c0_181, %c11_182, %c1_183, %c0_184] : memref<1x147x10x10xf32, #tpu.memory_space<vmem>>, vector<1x1x8x8xf32>
    %278 = vector.shape_cast %277 : vector<1x1x8x8xf32> to vector<8x8xf32>
    %c46_185 = arith.constant 46 : index
    %279 = memref.load %arg2[%c46_185] : memref<363xf32, #tpu.memory_space<smem>>
    %280 = vector.broadcast %279 : f32 to vector<8x8xf32>
    %281 = arith.mulf %280, %278 : vector<8x8xf32>
    %282 = arith.addf %276, %281 : vector<8x8xf32>
    %c0_186 = arith.constant 0 : index
    %c13_187 = arith.constant 13 : index
    %c1_188 = arith.constant 1 : index
    %c0_189 = arith.constant 0 : index
    %283 = vector.load %arg1[%c0_186, %c13_187, %c1_188, %c0_189] : memref<1x147x10x10xf32, #tpu.memory_space<vmem>>, vector<1x1x8x8xf32>
    %284 = vector.shape_cast %283 : vector<1x1x8x8xf32> to vector<8x8xf32>
    %c47_190 = arith.constant 47 : index
    %285 = memref.load %arg2[%c47_190] : memref<363xf32, #tpu.memory_space<smem>>
    %286 = vector.broadcast %285 : f32 to vector<8x8xf32>
    %287 = arith.mulf %286, %284 : vector<8x8xf32>
    %288 = arith.addf %282, %287 : vector<8x8xf32>
    %c0_191 = arith.constant 0 : index
    %c8_192 = arith.constant 8 : index
    %c1_193 = arith.constant 1 : index
    %c1_194 = arith.constant 1 : index
    %289 = vector.load %arg1[%c0_191, %c8_192, %c1_193, %c1_194] : memref<1x147x10x10xf32, #tpu.memory_space<vmem>>, vector<1x1x8x8xf32>
    %290 = vector.shape_cast %289 : vector<1x1x8x8xf32> to vector<8x8xf32>
    %c48_195 = arith.constant 48 : index
    %291 = memref.load %arg2[%c48_195] : memref<363xf32, #tpu.memory_space<smem>>
    %292 = vector.broadcast %291 : f32 to vector<8x8xf32>
    %293 = arith.mulf %292, %290 : vector<8x8xf32>
    %294 = arith.addf %288, %293 : vector<8x8xf32>
    %c0_196 = arith.constant 0 : index
    %c10_197 = arith.constant 10 : index
    %c1_198 = arith.constant 1 : index
    %c1_199 = arith.constant 1 : index
    %295 = vector.load %arg1[%c0_196, %c10_197, %c1_198, %c1_199] : memref<1x147x10x10xf32, #tpu.memory_space<vmem>>, vector<1x1x8x8xf32>
    %296 = vector.shape_cast %295 : vector<1x1x8x8xf32> to vector<8x8xf32>
    %c49 = arith.constant 49 : index
    %297 = memref.load %arg2[%c49] : memref<363xf32, #tpu.memory_space<smem>>
    %298 = vector.broadcast %297 : f32 to vector<8x8xf32>
    %299 = arith.mulf %298, %296 : vector<8x8xf32>
    %300 = arith.addf %294, %299 : vector<8x8xf32>
    %c0_200 = arith.constant 0 : index
    %c12_201 = arith.constant 12 : index
    %c1_202 = arith.constant 1 : index
    %c1_203 = arith.constant 1 : index
    %301 = vector.load %arg1[%c0_200, %c12_201, %c1_202, %c1_203] : memref<1x147x10x10xf32, #tpu.memory_space<vmem>>, vector<1x1x8x8xf32>
    %302 = vector.shape_cast %301 : vector<1x1x8x8xf32> to vector<8x8xf32>
    %c50 = arith.constant 50 : index
    %303 = memref.load %arg2[%c50] : memref<363xf32, #tpu.memory_space<smem>>
    %304 = vector.broadcast %303 : f32 to vector<8x8xf32>
    %305 = arith.mulf %304, %302 : vector<8x8xf32>
    %306 = arith.addf %300, %305 : vector<8x8xf32>
    %c0_204 = arith.constant 0 : index
    %c7_205 = arith.constant 7 : index
    %c1_206 = arith.constant 1 : index
    %c2_207 = arith.constant 2 : index
    %307 = vector.load %arg1[%c0_204, %c7_205, %c1_206, %c2_207] : memref<1x147x10x10xf32, #tpu.memory_space<vmem>>, vector<1x1x8x8xf32>
    %308 = vector.shape_cast %307 : vector<1x1x8x8xf32> to vector<8x8xf32>
    %c51 = arith.constant 51 : index
    %309 = memref.load %arg2[%c51] : memref<363xf32, #tpu.memory_space<smem>>
    %310 = vector.broadcast %309 : f32 to vector<8x8xf32>
    %311 = arith.mulf %310, %308 : vector<8x8xf32>
    %312 = arith.addf %306, %311 : vector<8x8xf32>
    %c0_208 = arith.constant 0 : index
    %c9_209 = arith.constant 9 : index
    %c1_210 = arith.constant 1 : index
    %c2_211 = arith.constant 2 : index
    %313 = vector.load %arg1[%c0_208, %c9_209, %c1_210, %c2_211] : memref<1x147x10x10xf32, #tpu.memory_space<vmem>>, vector<1x1x8x8xf32>
    %314 = vector.shape_cast %313 : vector<1x1x8x8xf32> to vector<8x8xf32>
    %c52 = arith.constant 52 : index
    %315 = memref.load %arg2[%c52] : memref<363xf32, #tpu.memory_space<smem>>
    %316 = vector.broadcast %315 : f32 to vector<8x8xf32>
    %317 = arith.mulf %316, %314 : vector<8x8xf32>
    %318 = arith.addf %312, %317 : vector<8x8xf32>
    %c0_212 = arith.constant 0 : index
    %c11_213 = arith.constant 11 : index
    %c1_214 = arith.constant 1 : index
    %c2_215 = arith.constant 2 : index
    %319 = vector.load %arg1[%c0_212, %c11_213, %c1_214, %c2_215] : memref<1x147x10x10xf32, #tpu.memory_space<vmem>>, vector<1x1x8x8xf32>
    %320 = vector.shape_cast %319 : vector<1x1x8x8xf32> to vector<8x8xf32>
    %c53 = arith.constant 53 : index
    %321 = memref.load %arg2[%c53] : memref<363xf32, #tpu.memory_space<smem>>
    %322 = vector.broadcast %321 : f32 to vector<8x8xf32>
    %323 = arith.mulf %322, %320 : vector<8x8xf32>
    %324 = arith.addf %318, %323 : vector<8x8xf32>
    %c0_216 = arith.constant 0 : index
    %c13_217 = arith.constant 13 : index
    %c1_218 = arith.constant 1 : index
    %c2_219 = arith.constant 2 : index
    %325 = vector.load %arg1[%c0_216, %c13_217, %c1_218, %c2_219] : memref<1x147x10x10xf32, #tpu.memory_space<vmem>>, vector<1x1x8x8xf32>
    %326 = vector.shape_cast %325 : vector<1x1x8x8xf32> to vector<8x8xf32>
    %c54 = arith.constant 54 : index
    %327 = memref.load %arg2[%c54] : memref<363xf32, #tpu.memory_space<smem>>
    %328 = vector.broadcast %327 : f32 to vector<8x8xf32>
    %329 = arith.mulf %328, %326 : vector<8x8xf32>
    %330 = arith.addf %324, %329 : vector<8x8xf32>
    %c0_220 = arith.constant 0 : index
    %c21_221 = arith.constant 21 : index
    %c1_222 = arith.constant 1 : index
    %c0_223 = arith.constant 0 : index
    %331 = vector.load %arg1[%c0_220, %c21_221, %c1_222, %c0_223] : memref<1x147x10x10xf32, #tpu.memory_space<vmem>>, vector<1x1x8x8xf32>
    %332 = vector.shape_cast %331 : vector<1x1x8x8xf32> to vector<8x8xf32>
    %c55 = arith.constant 55 : index
    %333 = memref.load %arg2[%c55] : memref<363xf32, #tpu.memory_space<smem>>
    %334 = vector.broadcast %333 : f32 to vector<8x8xf32>
    %335 = arith.mulf %334, %332 : vector<8x8xf32>
    %336 = arith.addf %330, %335 : vector<8x8xf32>
    %c0_224 = arith.constant 0 : index
    %c23_225 = arith.constant 23 : index
    %c1_226 = arith.constant 1 : index
    %c0_227 = arith.constant 0 : index
    %337 = vector.load %arg1[%c0_224, %c23_225, %c1_226, %c0_227] : memref<1x147x10x10xf32, #tpu.memory_space<vmem>>, vector<1x1x8x8xf32>
    %338 = vector.shape_cast %337 : vector<1x1x8x8xf32> to vector<8x8xf32>
    %c56 = arith.constant 56 : index
    %339 = memref.load %arg2[%c56] : memref<363xf32, #tpu.memory_space<smem>>
    %340 = vector.broadcast %339 : f32 to vector<8x8xf32>
    %341 = arith.mulf %340, %338 : vector<8x8xf32>
    %342 = arith.addf %336, %341 : vector<8x8xf32>
    %c0_228 = arith.constant 0 : index
    %c25_229 = arith.constant 25 : index
    %c1_230 = arith.constant 1 : index
    %c0_231 = arith.constant 0 : index
    %343 = vector.load %arg1[%c0_228, %c25_229, %c1_230, %c0_231] : memref<1x147x10x10xf32, #tpu.memory_space<vmem>>, vector<1x1x8x8xf32>
    %344 = vector.shape_cast %343 : vector<1x1x8x8xf32> to vector<8x8xf32>
    %c57 = arith.constant 57 : index
    %345 = memref.load %arg2[%c57] : memref<363xf32, #tpu.memory_space<smem>>
    %346 = vector.broadcast %345 : f32 to vector<8x8xf32>
    %347 = arith.mulf %346, %344 : vector<8x8xf32>
    %348 = arith.addf %342, %347 : vector<8x8xf32>
    %c0_232 = arith.constant 0 : index
    %c27_233 = arith.constant 27 : index
    %c1_234 = arith.constant 1 : index
    %c0_235 = arith.constant 0 : index
    %349 = vector.load %arg1[%c0_232, %c27_233, %c1_234, %c0_235] : memref<1x147x10x10xf32, #tpu.memory_space<vmem>>, vector<1x1x8x8xf32>
    %350 = vector.shape_cast %349 : vector<1x1x8x8xf32> to vector<8x8xf32>
    %c58 = arith.constant 58 : index
    %351 = memref.load %arg2[%c58] : memref<363xf32, #tpu.memory_space<smem>>
    %352 = vector.broadcast %351 : f32 to vector<8x8xf32>
    %353 = arith.mulf %352, %350 : vector<8x8xf32>
    %354 = arith.addf %348, %353 : vector<8x8xf32>
    %c0_236 = arith.constant 0 : index
    %c22_237 = arith.constant 22 : index
    %c1_238 = arith.constant 1 : index
    %c1_239 = arith.constant 1 : index
    %355 = vector.load %arg1[%c0_236, %c22_237, %c1_238, %c1_239] : memref<1x147x10x10xf32, #tpu.memory_space<vmem>>, vector<1x1x8x8xf32>
    %356 = vector.shape_cast %355 : vector<1x1x8x8xf32> to vector<8x8xf32>
    %c59 = arith.constant 59 : index
    %357 = memref.load %arg2[%c59] : memref<363xf32, #tpu.memory_space<smem>>
    %358 = vector.broadcast %357 : f32 to vector<8x8xf32>
    %359 = arith.mulf %358, %356 : vector<8x8xf32>
    %360 = arith.addf %354, %359 : vector<8x8xf32>
    %c0_240 = arith.constant 0 : index
    %c24_241 = arith.constant 24 : index
    %c1_242 = arith.constant 1 : index
    %c1_243 = arith.constant 1 : index
    %361 = vector.load %arg1[%c0_240, %c24_241, %c1_242, %c1_243] : memref<1x147x10x10xf32, #tpu.memory_space<vmem>>, vector<1x1x8x8xf32>
    %362 = vector.shape_cast %361 : vector<1x1x8x8xf32> to vector<8x8xf32>
    %c60 = arith.constant 60 : index
    %363 = memref.load %arg2[%c60] : memref<363xf32, #tpu.memory_space<smem>>
    %364 = vector.broadcast %363 : f32 to vector<8x8xf32>
    %365 = arith.mulf %364, %362 : vector<8x8xf32>
    %366 = arith.addf %360, %365 : vector<8x8xf32>
    %c0_244 = arith.constant 0 : index
    %c26_245 = arith.constant 26 : index
    %c1_246 = arith.constant 1 : index
    %c1_247 = arith.constant 1 : index
    %367 = vector.load %arg1[%c0_244, %c26_245, %c1_246, %c1_247] : memref<1x147x10x10xf32, #tpu.memory_space<vmem>>, vector<1x1x8x8xf32>
    %368 = vector.shape_cast %367 : vector<1x1x8x8xf32> to vector<8x8xf32>
    %c61 = arith.constant 61 : index
    %369 = memref.load %arg2[%c61] : memref<363xf32, #tpu.memory_space<smem>>
    %370 = vector.broadcast %369 : f32 to vector<8x8xf32>
    %371 = arith.mulf %370, %368 : vector<8x8xf32>
    %372 = arith.addf %366, %371 : vector<8x8xf32>
    %c0_248 = arith.constant 0 : index
    %c21_249 = arith.constant 21 : index
    %c1_250 = arith.constant 1 : index
    %c2_251 = arith.constant 2 : index
    %373 = vector.load %arg1[%c0_248, %c21_249, %c1_250, %c2_251] : memref<1x147x10x10xf32, #tpu.memory_space<vmem>>, vector<1x1x8x8xf32>
    %374 = vector.shape_cast %373 : vector<1x1x8x8xf32> to vector<8x8xf32>
    %c62 = arith.constant 62 : index
    %375 = memref.load %arg2[%c62] : memref<363xf32, #tpu.memory_space<smem>>
    %376 = vector.broadcast %375 : f32 to vector<8x8xf32>
    %377 = arith.mulf %376, %374 : vector<8x8xf32>
    %378 = arith.addf %372, %377 : vector<8x8xf32>
    %c0_252 = arith.constant 0 : index
    %c23_253 = arith.constant 23 : index
    %c1_254 = arith.constant 1 : index
    %c2_255 = arith.constant 2 : index
    %379 = vector.load %arg1[%c0_252, %c23_253, %c1_254, %c2_255] : memref<1x147x10x10xf32, #tpu.memory_space<vmem>>, vector<1x1x8x8xf32>
    %380 = vector.shape_cast %379 : vector<1x1x8x8xf32> to vector<8x8xf32>
    %c63 = arith.constant 63 : index
    %381 = memref.load %arg2[%c63] : memref<363xf32, #tpu.memory_space<smem>>
    %382 = vector.broadcast %381 : f32 to vector<8x8xf32>
    %383 = arith.mulf %382, %380 : vector<8x8xf32>
    %384 = arith.addf %378, %383 : vector<8x8xf32>
    %c0_256 = arith.constant 0 : index
    %c25_257 = arith.constant 25 : index
    %c1_258 = arith.constant 1 : index
    %c2_259 = arith.constant 2 : index
    %385 = vector.load %arg1[%c0_256, %c25_257, %c1_258, %c2_259] : memref<1x147x10x10xf32, #tpu.memory_space<vmem>>, vector<1x1x8x8xf32>
    %386 = vector.shape_cast %385 : vector<1x1x8x8xf32> to vector<8x8xf32>
    %c64 = arith.constant 64 : index
    %387 = memref.load %arg2[%c64] : memref<363xf32, #tpu.memory_space<smem>>
    %388 = vector.broadcast %387 : f32 to vector<8x8xf32>
    %389 = arith.mulf %388, %386 : vector<8x8xf32>
    %390 = arith.addf %384, %389 : vector<8x8xf32>
    %c0_260 = arith.constant 0 : index
    %c27_261 = arith.constant 27 : index
    %c1_262 = arith.constant 1 : index
    %c2_263 = arith.constant 2 : index
    %391 = vector.load %arg1[%c0_260, %c27_261, %c1_262, %c2_263] : memref<1x147x10x10xf32, #tpu.memory_space<vmem>>, vector<1x1x8x8xf32>
    %392 = vector.shape_cast %391 : vector<1x1x8x8xf32> to vector<8x8xf32>
    %c65 = arith.constant 65 : index
    %393 = memref.load %arg2[%c65] : memref<363xf32, #tpu.memory_space<smem>>
    %394 = vector.broadcast %393 : f32 to vector<8x8xf32>
    %395 = arith.mulf %394, %392 : vector<8x8xf32>
    %396 = arith.addf %390, %395 : vector<8x8xf32>
    %c0_264 = arith.constant 0 : index
    %c35_265 = arith.constant 35 : index
    %c1_266 = arith.constant 1 : index
    %c0_267 = arith.constant 0 : index
    %397 = vector.load %arg1[%c0_264, %c35_265, %c1_266, %c0_267] : memref<1x147x10x10xf32, #tpu.memory_space<vmem>>, vector<1x1x8x8xf32>
    %398 = vector.shape_cast %397 : vector<1x1x8x8xf32> to vector<8x8xf32>
    %c66 = arith.constant 66 : index
    %399 = memref.load %arg2[%c66] : memref<363xf32, #tpu.memory_space<smem>>
    %400 = vector.broadcast %399 : f32 to vector<8x8xf32>
    %401 = arith.mulf %400, %398 : vector<8x8xf32>
    %402 = arith.addf %396, %401 : vector<8x8xf32>
    %c0_268 = arith.constant 0 : index
    %c37_269 = arith.constant 37 : index
    %c1_270 = arith.constant 1 : index
    %c0_271 = arith.constant 0 : index
    %403 = vector.load %arg1[%c0_268, %c37_269, %c1_270, %c0_271] : memref<1x147x10x10xf32, #tpu.memory_space<vmem>>, vector<1x1x8x8xf32>
    %404 = vector.shape_cast %403 : vector<1x1x8x8xf32> to vector<8x8xf32>
    %c67 = arith.constant 67 : index
    %405 = memref.load %arg2[%c67] : memref<363xf32, #tpu.memory_space<smem>>
    %406 = vector.broadcast %405 : f32 to vector<8x8xf32>
    %407 = arith.mulf %406, %404 : vector<8x8xf32>
    %408 = arith.addf %402, %407 : vector<8x8xf32>
    %c0_272 = arith.constant 0 : index
    %c39_273 = arith.constant 39 : index
    %c1_274 = arith.constant 1 : index
    %c0_275 = arith.constant 0 : index
    %409 = vector.load %arg1[%c0_272, %c39_273, %c1_274, %c0_275] : memref<1x147x10x10xf32, #tpu.memory_space<vmem>>, vector<1x1x8x8xf32>
    %410 = vector.shape_cast %409 : vector<1x1x8x8xf32> to vector<8x8xf32>
    %c68 = arith.constant 68 : index
    %411 = memref.load %arg2[%c68] : memref<363xf32, #tpu.memory_space<smem>>
    %412 = vector.broadcast %411 : f32 to vector<8x8xf32>
    %413 = arith.mulf %412, %410 : vector<8x8xf32>
    %414 = arith.addf %408, %413 : vector<8x8xf32>
    %c0_276 = arith.constant 0 : index
    %c41_277 = arith.constant 41 : index
    %c1_278 = arith.constant 1 : index
    %c0_279 = arith.constant 0 : index
    %415 = vector.load %arg1[%c0_276, %c41_277, %c1_278, %c0_279] : memref<1x147x10x10xf32, #tpu.memory_space<vmem>>, vector<1x1x8x8xf32>
    %416 = vector.shape_cast %415 : vector<1x1x8x8xf32> to vector<8x8xf32>
    %c69 = arith.constant 69 : index
    %417 = memref.load %arg2[%c69] : memref<363xf32, #tpu.memory_space<smem>>
    %418 = vector.broadcast %417 : f32 to vector<8x8xf32>
    %419 = arith.mulf %418, %416 : vector<8x8xf32>
    %420 = arith.addf %414, %419 : vector<8x8xf32>
    %c0_280 = arith.constant 0 : index
    %c36_281 = arith.constant 36 : index
    %c1_282 = arith.constant 1 : index
    %c1_283 = arith.constant 1 : index
    %421 = vector.load %arg1[%c0_280, %c36_281, %c1_282, %c1_283] : memref<1x147x10x10xf32, #tpu.memory_space<vmem>>, vector<1x1x8x8xf32>
    %422 = vector.shape_cast %421 : vector<1x1x8x8xf32> to vector<8x8xf32>
    %c70 = arith.constant 70 : index
    %423 = memref.load %arg2[%c70] : memref<363xf32, #tpu.memory_space<smem>>
    %424 = vector.broadcast %423 : f32 to vector<8x8xf32>
    %425 = arith.mulf %424, %422 : vector<8x8xf32>
    %426 = arith.addf %420, %425 : vector<8x8xf32>
    %c0_284 = arith.constant 0 : index
    %c38_285 = arith.constant 38 : index
    %c1_286 = arith.constant 1 : index
    %c1_287 = arith.constant 1 : index
    %427 = vector.load %arg1[%c0_284, %c38_285, %c1_286, %c1_287] : memref<1x147x10x10xf32, #tpu.memory_space<vmem>>, vector<1x1x8x8xf32>
    %428 = vector.shape_cast %427 : vector<1x1x8x8xf32> to vector<8x8xf32>
    %c71 = arith.constant 71 : index
    %429 = memref.load %arg2[%c71] : memref<363xf32, #tpu.memory_space<smem>>
    %430 = vector.broadcast %429 : f32 to vector<8x8xf32>
    %431 = arith.mulf %430, %428 : vector<8x8xf32>
    %432 = arith.addf %426, %431 : vector<8x8xf32>
    %c0_288 = arith.constant 0 : index
    %c40_289 = arith.constant 40 : index
    %c1_290 = arith.constant 1 : index
    %c1_291 = arith.constant 1 : index
    %433 = vector.load %arg1[%c0_288, %c40_289, %c1_290, %c1_291] : memref<1x147x10x10xf32, #tpu.memory_space<vmem>>, vector<1x1x8x8xf32>
    %434 = vector.shape_cast %433 : vector<1x1x8x8xf32> to vector<8x8xf32>
    %c72 = arith.constant 72 : index
    %435 = memref.load %arg2[%c72] : memref<363xf32, #tpu.memory_space<smem>>
    %436 = vector.broadcast %435 : f32 to vector<8x8xf32>
    %437 = arith.mulf %436, %434 : vector<8x8xf32>
    %438 = arith.addf %432, %437 : vector<8x8xf32>
    %c0_292 = arith.constant 0 : index
    %c35_293 = arith.constant 35 : index
    %c1_294 = arith.constant 1 : index
    %c2_295 = arith.constant 2 : index
    %439 = vector.load %arg1[%c0_292, %c35_293, %c1_294, %c2_295] : memref<1x147x10x10xf32, #tpu.memory_space<vmem>>, vector<1x1x8x8xf32>
    %440 = vector.shape_cast %439 : vector<1x1x8x8xf32> to vector<8x8xf32>
    %c73 = arith.constant 73 : index
    %441 = memref.load %arg2[%c73] : memref<363xf32, #tpu.memory_space<smem>>
    %442 = vector.broadcast %441 : f32 to vector<8x8xf32>
    %443 = arith.mulf %442, %440 : vector<8x8xf32>
    %444 = arith.addf %438, %443 : vector<8x8xf32>
    %c0_296 = arith.constant 0 : index
    %c37_297 = arith.constant 37 : index
    %c1_298 = arith.constant 1 : index
    %c2_299 = arith.constant 2 : index
    %445 = vector.load %arg1[%c0_296, %c37_297, %c1_298, %c2_299] : memref<1x147x10x10xf32, #tpu.memory_space<vmem>>, vector<1x1x8x8xf32>
    %446 = vector.shape_cast %445 : vector<1x1x8x8xf32> to vector<8x8xf32>
    %c74 = arith.constant 74 : index
    %447 = memref.load %arg2[%c74] : memref<363xf32, #tpu.memory_space<smem>>
    %448 = vector.broadcast %447 : f32 to vector<8x8xf32>
    %449 = arith.mulf %448, %446 : vector<8x8xf32>
    %450 = arith.addf %444, %449 : vector<8x8xf32>
    %c0_300 = arith.constant 0 : index
    %c39_301 = arith.constant 39 : index
    %c1_302 = arith.constant 1 : index
    %c2_303 = arith.constant 2 : index
    %451 = vector.load %arg1[%c0_300, %c39_301, %c1_302, %c2_303] : memref<1x147x10x10xf32, #tpu.memory_space<vmem>>, vector<1x1x8x8xf32>
    %452 = vector.shape_cast %451 : vector<1x1x8x8xf32> to vector<8x8xf32>
    %c75 = arith.constant 75 : index
    %453 = memref.load %arg2[%c75] : memref<363xf32, #tpu.memory_space<smem>>
    %454 = vector.broadcast %453 : f32 to vector<8x8xf32>
    %455 = arith.mulf %454, %452 : vector<8x8xf32>
    %456 = arith.addf %450, %455 : vector<8x8xf32>
    %c0_304 = arith.constant 0 : index
    %c41_305 = arith.constant 41 : index
    %c1_306 = arith.constant 1 : index
    %c2_307 = arith.constant 2 : index
    %457 = vector.load %arg1[%c0_304, %c41_305, %c1_306, %c2_307] : memref<1x147x10x10xf32, #tpu.memory_space<vmem>>, vector<1x1x8x8xf32>
    %458 = vector.shape_cast %457 : vector<1x1x8x8xf32> to vector<8x8xf32>
    %c76 = arith.constant 76 : index
    %459 = memref.load %arg2[%c76] : memref<363xf32, #tpu.memory_space<smem>>
    %460 = vector.broadcast %459 : f32 to vector<8x8xf32>
    %461 = arith.mulf %460, %458 : vector<8x8xf32>
    %462 = arith.addf %456, %461 : vector<8x8xf32>
    %c0_308 = arith.constant 0 : index
    %c0_309 = arith.constant 0 : index
    %c2_310 = arith.constant 2 : index
    %c0_311 = arith.constant 0 : index
    %463 = vector.load %arg1[%c0_308, %c0_309, %c2_310, %c0_311] : memref<1x147x10x10xf32, #tpu.memory_space<vmem>>, vector<1x1x8x8xf32>
    %464 = vector.shape_cast %463 : vector<1x1x8x8xf32> to vector<8x8xf32>
    %c77 = arith.constant 77 : index
    %465 = memref.load %arg2[%c77] : memref<363xf32, #tpu.memory_space<smem>>
    %466 = vector.broadcast %465 : f32 to vector<8x8xf32>
    %467 = arith.mulf %466, %464 : vector<8x8xf32>
    %468 = arith.addf %462, %467 : vector<8x8xf32>
    %c0_312 = arith.constant 0 : index
    %c2_313 = arith.constant 2 : index
    %c2_314 = arith.constant 2 : index
    %c0_315 = arith.constant 0 : index
    %469 = vector.load %arg1[%c0_312, %c2_313, %c2_314, %c0_315] : memref<1x147x10x10xf32, #tpu.memory_space<vmem>>, vector<1x1x8x8xf32>
    %470 = vector.shape_cast %469 : vector<1x1x8x8xf32> to vector<8x8xf32>
    %c78 = arith.constant 78 : index
    %471 = memref.load %arg2[%c78] : memref<363xf32, #tpu.memory_space<smem>>
    %472 = vector.broadcast %471 : f32 to vector<8x8xf32>
    %473 = arith.mulf %472, %470 : vector<8x8xf32>
    %474 = arith.addf %468, %473 : vector<8x8xf32>
    %c0_316 = arith.constant 0 : index
    %c4_317 = arith.constant 4 : index
    %c2_318 = arith.constant 2 : index
    %c0_319 = arith.constant 0 : index
    %475 = vector.load %arg1[%c0_316, %c4_317, %c2_318, %c0_319] : memref<1x147x10x10xf32, #tpu.memory_space<vmem>>, vector<1x1x8x8xf32>
    %476 = vector.shape_cast %475 : vector<1x1x8x8xf32> to vector<8x8xf32>
    %c79 = arith.constant 79 : index
    %477 = memref.load %arg2[%c79] : memref<363xf32, #tpu.memory_space<smem>>
    %478 = vector.broadcast %477 : f32 to vector<8x8xf32>
    %479 = arith.mulf %478, %476 : vector<8x8xf32>
    %480 = arith.addf %474, %479 : vector<8x8xf32>
    %c0_320 = arith.constant 0 : index
    %c6_321 = arith.constant 6 : index
    %c2_322 = arith.constant 2 : index
    %c0_323 = arith.constant 0 : index
    %481 = vector.load %arg1[%c0_320, %c6_321, %c2_322, %c0_323] : memref<1x147x10x10xf32, #tpu.memory_space<vmem>>, vector<1x1x8x8xf32>
    %482 = vector.shape_cast %481 : vector<1x1x8x8xf32> to vector<8x8xf32>
    %c80 = arith.constant 80 : index
    %483 = memref.load %arg2[%c80] : memref<363xf32, #tpu.memory_space<smem>>
    %484 = vector.broadcast %483 : f32 to vector<8x8xf32>
    %485 = arith.mulf %484, %482 : vector<8x8xf32>
    %486 = arith.addf %480, %485 : vector<8x8xf32>
    %c0_324 = arith.constant 0 : index
    %c1_325 = arith.constant 1 : index
    %c2_326 = arith.constant 2 : index
    %c1_327 = arith.constant 1 : index
    %487 = vector.load %arg1[%c0_324, %c1_325, %c2_326, %c1_327] : memref<1x147x10x10xf32, #tpu.memory_space<vmem>>, vector<1x1x8x8xf32>
    %488 = vector.shape_cast %487 : vector<1x1x8x8xf32> to vector<8x8xf32>
    %c81 = arith.constant 81 : index
    %489 = memref.load %arg2[%c81] : memref<363xf32, #tpu.memory_space<smem>>
    %490 = vector.broadcast %489 : f32 to vector<8x8xf32>
    %491 = arith.mulf %490, %488 : vector<8x8xf32>
    %492 = arith.addf %486, %491 : vector<8x8xf32>
    %c0_328 = arith.constant 0 : index
    %c3_329 = arith.constant 3 : index
    %c2_330 = arith.constant 2 : index
    %c1_331 = arith.constant 1 : index
    %493 = vector.load %arg1[%c0_328, %c3_329, %c2_330, %c1_331] : memref<1x147x10x10xf32, #tpu.memory_space<vmem>>, vector<1x1x8x8xf32>
    %494 = vector.shape_cast %493 : vector<1x1x8x8xf32> to vector<8x8xf32>
    %c82 = arith.constant 82 : index
    %495 = memref.load %arg2[%c82] : memref<363xf32, #tpu.memory_space<smem>>
    %496 = vector.broadcast %495 : f32 to vector<8x8xf32>
    %497 = arith.mulf %496, %494 : vector<8x8xf32>
    %498 = arith.addf %492, %497 : vector<8x8xf32>
    %c0_332 = arith.constant 0 : index
    %c5_333 = arith.constant 5 : index
    %c2_334 = arith.constant 2 : index
    %c1_335 = arith.constant 1 : index
    %499 = vector.load %arg1[%c0_332, %c5_333, %c2_334, %c1_335] : memref<1x147x10x10xf32, #tpu.memory_space<vmem>>, vector<1x1x8x8xf32>
    %500 = vector.shape_cast %499 : vector<1x1x8x8xf32> to vector<8x8xf32>
    %c83 = arith.constant 83 : index
    %501 = memref.load %arg2[%c83] : memref<363xf32, #tpu.memory_space<smem>>
    %502 = vector.broadcast %501 : f32 to vector<8x8xf32>
    %503 = arith.mulf %502, %500 : vector<8x8xf32>
    %504 = arith.addf %498, %503 : vector<8x8xf32>
    %c0_336 = arith.constant 0 : index
    %c0_337 = arith.constant 0 : index
    %c2_338 = arith.constant 2 : index
    %c2_339 = arith.constant 2 : index
    %505 = vector.load %arg1[%c0_336, %c0_337, %c2_338, %c2_339] : memref<1x147x10x10xf32, #tpu.memory_space<vmem>>, vector<1x1x8x8xf32>
    %506 = vector.shape_cast %505 : vector<1x1x8x8xf32> to vector<8x8xf32>
    %c84 = arith.constant 84 : index
    %507 = memref.load %arg2[%c84] : memref<363xf32, #tpu.memory_space<smem>>
    %508 = vector.broadcast %507 : f32 to vector<8x8xf32>
    %509 = arith.mulf %508, %506 : vector<8x8xf32>
    %510 = arith.addf %504, %509 : vector<8x8xf32>
    %c0_340 = arith.constant 0 : index
    %c2_341 = arith.constant 2 : index
    %c2_342 = arith.constant 2 : index
    %c2_343 = arith.constant 2 : index
    %511 = vector.load %arg1[%c0_340, %c2_341, %c2_342, %c2_343] : memref<1x147x10x10xf32, #tpu.memory_space<vmem>>, vector<1x1x8x8xf32>
    %512 = vector.shape_cast %511 : vector<1x1x8x8xf32> to vector<8x8xf32>
    %c85 = arith.constant 85 : index
    %513 = memref.load %arg2[%c85] : memref<363xf32, #tpu.memory_space<smem>>
    %514 = vector.broadcast %513 : f32 to vector<8x8xf32>
    %515 = arith.mulf %514, %512 : vector<8x8xf32>
    %516 = arith.addf %510, %515 : vector<8x8xf32>
    %c0_344 = arith.constant 0 : index
    %c4_345 = arith.constant 4 : index
    %c2_346 = arith.constant 2 : index
    %c2_347 = arith.constant 2 : index
    %517 = vector.load %arg1[%c0_344, %c4_345, %c2_346, %c2_347] : memref<1x147x10x10xf32, #tpu.memory_space<vmem>>, vector<1x1x8x8xf32>
    %518 = vector.shape_cast %517 : vector<1x1x8x8xf32> to vector<8x8xf32>
    %c86 = arith.constant 86 : index
    %519 = memref.load %arg2[%c86] : memref<363xf32, #tpu.memory_space<smem>>
    %520 = vector.broadcast %519 : f32 to vector<8x8xf32>
    %521 = arith.mulf %520, %518 : vector<8x8xf32>
    %522 = arith.addf %516, %521 : vector<8x8xf32>
    %c0_348 = arith.constant 0 : index
    %c6_349 = arith.constant 6 : index
    %c2_350 = arith.constant 2 : index
    %c2_351 = arith.constant 2 : index
    %523 = vector.load %arg1[%c0_348, %c6_349, %c2_350, %c2_351] : memref<1x147x10x10xf32, #tpu.memory_space<vmem>>, vector<1x1x8x8xf32>
    %524 = vector.shape_cast %523 : vector<1x1x8x8xf32> to vector<8x8xf32>
    %c87 = arith.constant 87 : index
    %525 = memref.load %arg2[%c87] : memref<363xf32, #tpu.memory_space<smem>>
    %526 = vector.broadcast %525 : f32 to vector<8x8xf32>
    %527 = arith.mulf %526, %524 : vector<8x8xf32>
    %528 = arith.addf %522, %527 : vector<8x8xf32>
    %c0_352 = arith.constant 0 : index
    %c14_353 = arith.constant 14 : index
    %c2_354 = arith.constant 2 : index
    %c0_355 = arith.constant 0 : index
    %529 = vector.load %arg1[%c0_352, %c14_353, %c2_354, %c0_355] : memref<1x147x10x10xf32, #tpu.memory_space<vmem>>, vector<1x1x8x8xf32>
    %530 = vector.shape_cast %529 : vector<1x1x8x8xf32> to vector<8x8xf32>
    %c88 = arith.constant 88 : index
    %531 = memref.load %arg2[%c88] : memref<363xf32, #tpu.memory_space<smem>>
    %532 = vector.broadcast %531 : f32 to vector<8x8xf32>
    %533 = arith.mulf %532, %530 : vector<8x8xf32>
    %534 = arith.addf %528, %533 : vector<8x8xf32>
    %c0_356 = arith.constant 0 : index
    %c16_357 = arith.constant 16 : index
    %c2_358 = arith.constant 2 : index
    %c0_359 = arith.constant 0 : index
    %535 = vector.load %arg1[%c0_356, %c16_357, %c2_358, %c0_359] : memref<1x147x10x10xf32, #tpu.memory_space<vmem>>, vector<1x1x8x8xf32>
    %536 = vector.shape_cast %535 : vector<1x1x8x8xf32> to vector<8x8xf32>
    %c89 = arith.constant 89 : index
    %537 = memref.load %arg2[%c89] : memref<363xf32, #tpu.memory_space<smem>>
    %538 = vector.broadcast %537 : f32 to vector<8x8xf32>
    %539 = arith.mulf %538, %536 : vector<8x8xf32>
    %540 = arith.addf %534, %539 : vector<8x8xf32>
    %c0_360 = arith.constant 0 : index
    %c18_361 = arith.constant 18 : index
    %c2_362 = arith.constant 2 : index
    %c0_363 = arith.constant 0 : index
    %541 = vector.load %arg1[%c0_360, %c18_361, %c2_362, %c0_363] : memref<1x147x10x10xf32, #tpu.memory_space<vmem>>, vector<1x1x8x8xf32>
    %542 = vector.shape_cast %541 : vector<1x1x8x8xf32> to vector<8x8xf32>
    %c90 = arith.constant 90 : index
    %543 = memref.load %arg2[%c90] : memref<363xf32, #tpu.memory_space<smem>>
    %544 = vector.broadcast %543 : f32 to vector<8x8xf32>
    %545 = arith.mulf %544, %542 : vector<8x8xf32>
    %546 = arith.addf %540, %545 : vector<8x8xf32>
    %c0_364 = arith.constant 0 : index
    %c20_365 = arith.constant 20 : index
    %c2_366 = arith.constant 2 : index
    %c0_367 = arith.constant 0 : index
    %547 = vector.load %arg1[%c0_364, %c20_365, %c2_366, %c0_367] : memref<1x147x10x10xf32, #tpu.memory_space<vmem>>, vector<1x1x8x8xf32>
    %548 = vector.shape_cast %547 : vector<1x1x8x8xf32> to vector<8x8xf32>
    %c91 = arith.constant 91 : index
    %549 = memref.load %arg2[%c91] : memref<363xf32, #tpu.memory_space<smem>>
    %550 = vector.broadcast %549 : f32 to vector<8x8xf32>
    %551 = arith.mulf %550, %548 : vector<8x8xf32>
    %552 = arith.addf %546, %551 : vector<8x8xf32>
    %c0_368 = arith.constant 0 : index
    %c15_369 = arith.constant 15 : index
    %c2_370 = arith.constant 2 : index
    %c1_371 = arith.constant 1 : index
    %553 = vector.load %arg1[%c0_368, %c15_369, %c2_370, %c1_371] : memref<1x147x10x10xf32, #tpu.memory_space<vmem>>, vector<1x1x8x8xf32>
    %554 = vector.shape_cast %553 : vector<1x1x8x8xf32> to vector<8x8xf32>
    %c92 = arith.constant 92 : index
    %555 = memref.load %arg2[%c92] : memref<363xf32, #tpu.memory_space<smem>>
    %556 = vector.broadcast %555 : f32 to vector<8x8xf32>
    %557 = arith.mulf %556, %554 : vector<8x8xf32>
    %558 = arith.addf %552, %557 : vector<8x8xf32>
    %c0_372 = arith.constant 0 : index
    %c17_373 = arith.constant 17 : index
    %c2_374 = arith.constant 2 : index
    %c1_375 = arith.constant 1 : index
    %559 = vector.load %arg1[%c0_372, %c17_373, %c2_374, %c1_375] : memref<1x147x10x10xf32, #tpu.memory_space<vmem>>, vector<1x1x8x8xf32>
    %560 = vector.shape_cast %559 : vector<1x1x8x8xf32> to vector<8x8xf32>
    %c93 = arith.constant 93 : index
    %561 = memref.load %arg2[%c93] : memref<363xf32, #tpu.memory_space<smem>>
    %562 = vector.broadcast %561 : f32 to vector<8x8xf32>
    %563 = arith.mulf %562, %560 : vector<8x8xf32>
    %564 = arith.addf %558, %563 : vector<8x8xf32>
    %c0_376 = arith.constant 0 : index
    %c19_377 = arith.constant 19 : index
    %c2_378 = arith.constant 2 : index
    %c1_379 = arith.constant 1 : index
    %565 = vector.load %arg1[%c0_376, %c19_377, %c2_378, %c1_379] : memref<1x147x10x10xf32, #tpu.memory_space<vmem>>, vector<1x1x8x8xf32>
    %566 = vector.shape_cast %565 : vector<1x1x8x8xf32> to vector<8x8xf32>
    %c94 = arith.constant 94 : index
    %567 = memref.load %arg2[%c94] : memref<363xf32, #tpu.memory_space<smem>>
    %568 = vector.broadcast %567 : f32 to vector<8x8xf32>
    %569 = arith.mulf %568, %566 : vector<8x8xf32>
    %570 = arith.addf %564, %569 : vector<8x8xf32>
    %c0_380 = arith.constant 0 : index
    %c14_381 = arith.constant 14 : index
    %c2_382 = arith.constant 2 : index
    %c2_383 = arith.constant 2 : index
    %571 = vector.load %arg1[%c0_380, %c14_381, %c2_382, %c2_383] : memref<1x147x10x10xf32, #tpu.memory_space<vmem>>, vector<1x1x8x8xf32>
    %572 = vector.shape_cast %571 : vector<1x1x8x8xf32> to vector<8x8xf32>
    %c95 = arith.constant 95 : index
    %573 = memref.load %arg2[%c95] : memref<363xf32, #tpu.memory_space<smem>>
    %574 = vector.broadcast %573 : f32 to vector<8x8xf32>
    %575 = arith.mulf %574, %572 : vector<8x8xf32>
    %576 = arith.addf %570, %575 : vector<8x8xf32>
    %c0_384 = arith.constant 0 : index
    %c16_385 = arith.constant 16 : index
    %c2_386 = arith.constant 2 : index
    %c2_387 = arith.constant 2 : index
    %577 = vector.load %arg1[%c0_384, %c16_385, %c2_386, %c2_387] : memref<1x147x10x10xf32, #tpu.memory_space<vmem>>, vector<1x1x8x8xf32>
    %578 = vector.shape_cast %577 : vector<1x1x8x8xf32> to vector<8x8xf32>
    %c96 = arith.constant 96 : index
    %579 = memref.load %arg2[%c96] : memref<363xf32, #tpu.memory_space<smem>>
    %580 = vector.broadcast %579 : f32 to vector<8x8xf32>
    %581 = arith.mulf %580, %578 : vector<8x8xf32>
    %582 = arith.addf %576, %581 : vector<8x8xf32>
    %c0_388 = arith.constant 0 : index
    %c18_389 = arith.constant 18 : index
    %c2_390 = arith.constant 2 : index
    %c2_391 = arith.constant 2 : index
    %583 = vector.load %arg1[%c0_388, %c18_389, %c2_390, %c2_391] : memref<1x147x10x10xf32, #tpu.memory_space<vmem>>, vector<1x1x8x8xf32>
    %584 = vector.shape_cast %583 : vector<1x1x8x8xf32> to vector<8x8xf32>
    %c97 = arith.constant 97 : index
    %585 = memref.load %arg2[%c97] : memref<363xf32, #tpu.memory_space<smem>>
    %586 = vector.broadcast %585 : f32 to vector<8x8xf32>
    %587 = arith.mulf %586, %584 : vector<8x8xf32>
    %588 = arith.addf %582, %587 : vector<8x8xf32>
    %c0_392 = arith.constant 0 : index
    %c20_393 = arith.constant 20 : index
    %c2_394 = arith.constant 2 : index
    %c2_395 = arith.constant 2 : index
    %589 = vector.load %arg1[%c0_392, %c20_393, %c2_394, %c2_395] : memref<1x147x10x10xf32, #tpu.memory_space<vmem>>, vector<1x1x8x8xf32>
    %590 = vector.shape_cast %589 : vector<1x1x8x8xf32> to vector<8x8xf32>
    %c98 = arith.constant 98 : index
    %591 = memref.load %arg2[%c98] : memref<363xf32, #tpu.memory_space<smem>>
    %592 = vector.broadcast %591 : f32 to vector<8x8xf32>
    %593 = arith.mulf %592, %590 : vector<8x8xf32>
    %594 = arith.addf %588, %593 : vector<8x8xf32>
    %c0_396 = arith.constant 0 : index
    %c28_397 = arith.constant 28 : index
    %c2_398 = arith.constant 2 : index
    %c0_399 = arith.constant 0 : index
    %595 = vector.load %arg1[%c0_396, %c28_397, %c2_398, %c0_399] : memref<1x147x10x10xf32, #tpu.memory_space<vmem>>, vector<1x1x8x8xf32>
    %596 = vector.shape_cast %595 : vector<1x1x8x8xf32> to vector<8x8xf32>
    %c99 = arith.constant 99 : index
    %597 = memref.load %arg2[%c99] : memref<363xf32, #tpu.memory_space<smem>>
    %598 = vector.broadcast %597 : f32 to vector<8x8xf32>
    %599 = arith.mulf %598, %596 : vector<8x8xf32>
    %600 = arith.addf %594, %599 : vector<8x8xf32>
    %c0_400 = arith.constant 0 : index
    %c30_401 = arith.constant 30 : index
    %c2_402 = arith.constant 2 : index
    %c0_403 = arith.constant 0 : index
    %601 = vector.load %arg1[%c0_400, %c30_401, %c2_402, %c0_403] : memref<1x147x10x10xf32, #tpu.memory_space<vmem>>, vector<1x1x8x8xf32>
    %602 = vector.shape_cast %601 : vector<1x1x8x8xf32> to vector<8x8xf32>
    %c100 = arith.constant 100 : index
    %603 = memref.load %arg2[%c100] : memref<363xf32, #tpu.memory_space<smem>>
    %604 = vector.broadcast %603 : f32 to vector<8x8xf32>
    %605 = arith.mulf %604, %602 : vector<8x8xf32>
    %606 = arith.addf %600, %605 : vector<8x8xf32>
    %c0_404 = arith.constant 0 : index
    %c32_405 = arith.constant 32 : index
    %c2_406 = arith.constant 2 : index
    %c0_407 = arith.constant 0 : index
    %607 = vector.load %arg1[%c0_404, %c32_405, %c2_406, %c0_407] : memref<1x147x10x10xf32, #tpu.memory_space<vmem>>, vector<1x1x8x8xf32>
    %608 = vector.shape_cast %607 : vector<1x1x8x8xf32> to vector<8x8xf32>
    %c101 = arith.constant 101 : index
    %609 = memref.load %arg2[%c101] : memref<363xf32, #tpu.memory_space<smem>>
    %610 = vector.broadcast %609 : f32 to vector<8x8xf32>
    %611 = arith.mulf %610, %608 : vector<8x8xf32>
    %612 = arith.addf %606, %611 : vector<8x8xf32>
    %c0_408 = arith.constant 0 : index
    %c34_409 = arith.constant 34 : index
    %c2_410 = arith.constant 2 : index
    %c0_411 = arith.constant 0 : index
    %613 = vector.load %arg1[%c0_408, %c34_409, %c2_410, %c0_411] : memref<1x147x10x10xf32, #tpu.memory_space<vmem>>, vector<1x1x8x8xf32>
    %614 = vector.shape_cast %613 : vector<1x1x8x8xf32> to vector<8x8xf32>
    %c102 = arith.constant 102 : index
    %615 = memref.load %arg2[%c102] : memref<363xf32, #tpu.memory_space<smem>>
    %616 = vector.broadcast %615 : f32 to vector<8x8xf32>
    %617 = arith.mulf %616, %614 : vector<8x8xf32>
    %618 = arith.addf %612, %617 : vector<8x8xf32>
    %c0_412 = arith.constant 0 : index
    %c29_413 = arith.constant 29 : index
    %c2_414 = arith.constant 2 : index
    %c1_415 = arith.constant 1 : index
    %619 = vector.load %arg1[%c0_412, %c29_413, %c2_414, %c1_415] : memref<1x147x10x10xf32, #tpu.memory_space<vmem>>, vector<1x1x8x8xf32>
    %620 = vector.shape_cast %619 : vector<1x1x8x8xf32> to vector<8x8xf32>
    %c103 = arith.constant 103 : index
    %621 = memref.load %arg2[%c103] : memref<363xf32, #tpu.memory_space<smem>>
    %622 = vector.broadcast %621 : f32 to vector<8x8xf32>
    %623 = arith.mulf %622, %620 : vector<8x8xf32>
    %624 = arith.addf %618, %623 : vector<8x8xf32>
    %c0_416 = arith.constant 0 : index
    %c31_417 = arith.constant 31 : index
    %c2_418 = arith.constant 2 : index
    %c1_419 = arith.constant 1 : index
    %625 = vector.load %arg1[%c0_416, %c31_417, %c2_418, %c1_419] : memref<1x147x10x10xf32, #tpu.memory_space<vmem>>, vector<1x1x8x8xf32>
    %626 = vector.shape_cast %625 : vector<1x1x8x8xf32> to vector<8x8xf32>
    %c104 = arith.constant 104 : index
    %627 = memref.load %arg2[%c104] : memref<363xf32, #tpu.memory_space<smem>>
    %628 = vector.broadcast %627 : f32 to vector<8x8xf32>
    %629 = arith.mulf %628, %626 : vector<8x8xf32>
    %630 = arith.addf %624, %629 : vector<8x8xf32>
    %c0_420 = arith.constant 0 : index
    %c33_421 = arith.constant 33 : index
    %c2_422 = arith.constant 2 : index
    %c1_423 = arith.constant 1 : index
    %631 = vector.load %arg1[%c0_420, %c33_421, %c2_422, %c1_423] : memref<1x147x10x10xf32, #tpu.memory_space<vmem>>, vector<1x1x8x8xf32>
    %632 = vector.shape_cast %631 : vector<1x1x8x8xf32> to vector<8x8xf32>
    %c105 = arith.constant 105 : index
    %633 = memref.load %arg2[%c105] : memref<363xf32, #tpu.memory_space<smem>>
    %634 = vector.broadcast %633 : f32 to vector<8x8xf32>
    %635 = arith.mulf %634, %632 : vector<8x8xf32>
    %636 = arith.addf %630, %635 : vector<8x8xf32>
    %c0_424 = arith.constant 0 : index
    %c28_425 = arith.constant 28 : index
    %c2_426 = arith.constant 2 : index
    %c2_427 = arith.constant 2 : index
    %637 = vector.load %arg1[%c0_424, %c28_425, %c2_426, %c2_427] : memref<1x147x10x10xf32, #tpu.memory_space<vmem>>, vector<1x1x8x8xf32>
    %638 = vector.shape_cast %637 : vector<1x1x8x8xf32> to vector<8x8xf32>
    %c106 = arith.constant 106 : index
    %639 = memref.load %arg2[%c106] : memref<363xf32, #tpu.memory_space<smem>>
    %640 = vector.broadcast %639 : f32 to vector<8x8xf32>
    %641 = arith.mulf %640, %638 : vector<8x8xf32>
    %642 = arith.addf %636, %641 : vector<8x8xf32>
    %c0_428 = arith.constant 0 : index
    %c30_429 = arith.constant 30 : index
    %c2_430 = arith.constant 2 : index
    %c2_431 = arith.constant 2 : index
    %643 = vector.load %arg1[%c0_428, %c30_429, %c2_430, %c2_431] : memref<1x147x10x10xf32, #tpu.memory_space<vmem>>, vector<1x1x8x8xf32>
    %644 = vector.shape_cast %643 : vector<1x1x8x8xf32> to vector<8x8xf32>
    %c107 = arith.constant 107 : index
    %645 = memref.load %arg2[%c107] : memref<363xf32, #tpu.memory_space<smem>>
    %646 = vector.broadcast %645 : f32 to vector<8x8xf32>
    %647 = arith.mulf %646, %644 : vector<8x8xf32>
    %648 = arith.addf %642, %647 : vector<8x8xf32>
    %c0_432 = arith.constant 0 : index
    %c32_433 = arith.constant 32 : index
    %c2_434 = arith.constant 2 : index
    %c2_435 = arith.constant 2 : index
    %649 = vector.load %arg1[%c0_432, %c32_433, %c2_434, %c2_435] : memref<1x147x10x10xf32, #tpu.memory_space<vmem>>, vector<1x1x8x8xf32>
    %650 = vector.shape_cast %649 : vector<1x1x8x8xf32> to vector<8x8xf32>
    %c108 = arith.constant 108 : index
    %651 = memref.load %arg2[%c108] : memref<363xf32, #tpu.memory_space<smem>>
    %652 = vector.broadcast %651 : f32 to vector<8x8xf32>
    %653 = arith.mulf %652, %650 : vector<8x8xf32>
    %654 = arith.addf %648, %653 : vector<8x8xf32>
    %c0_436 = arith.constant 0 : index
    %c34_437 = arith.constant 34 : index
    %c2_438 = arith.constant 2 : index
    %c2_439 = arith.constant 2 : index
    %655 = vector.load %arg1[%c0_436, %c34_437, %c2_438, %c2_439] : memref<1x147x10x10xf32, #tpu.memory_space<vmem>>, vector<1x1x8x8xf32>
    %656 = vector.shape_cast %655 : vector<1x1x8x8xf32> to vector<8x8xf32>
    %c109 = arith.constant 109 : index
    %657 = memref.load %arg2[%c109] : memref<363xf32, #tpu.memory_space<smem>>
    %658 = vector.broadcast %657 : f32 to vector<8x8xf32>
    %659 = arith.mulf %658, %656 : vector<8x8xf32>
    %660 = arith.addf %654, %659 : vector<8x8xf32>
    %c0_440 = arith.constant 0 : index
    %c42_441 = arith.constant 42 : index
    %c2_442 = arith.constant 2 : index
    %c0_443 = arith.constant 0 : index
    %661 = vector.load %arg1[%c0_440, %c42_441, %c2_442, %c0_443] : memref<1x147x10x10xf32, #tpu.memory_space<vmem>>, vector<1x1x8x8xf32>
    %662 = vector.shape_cast %661 : vector<1x1x8x8xf32> to vector<8x8xf32>
    %c110 = arith.constant 110 : index
    %663 = memref.load %arg2[%c110] : memref<363xf32, #tpu.memory_space<smem>>
    %664 = vector.broadcast %663 : f32 to vector<8x8xf32>
    %665 = arith.mulf %664, %662 : vector<8x8xf32>
    %666 = arith.addf %660, %665 : vector<8x8xf32>
    %c0_444 = arith.constant 0 : index
    %c44_445 = arith.constant 44 : index
    %c2_446 = arith.constant 2 : index
    %c0_447 = arith.constant 0 : index
    %667 = vector.load %arg1[%c0_444, %c44_445, %c2_446, %c0_447] : memref<1x147x10x10xf32, #tpu.memory_space<vmem>>, vector<1x1x8x8xf32>
    %668 = vector.shape_cast %667 : vector<1x1x8x8xf32> to vector<8x8xf32>
    %c111 = arith.constant 111 : index
    %669 = memref.load %arg2[%c111] : memref<363xf32, #tpu.memory_space<smem>>
    %670 = vector.broadcast %669 : f32 to vector<8x8xf32>
    %671 = arith.mulf %670, %668 : vector<8x8xf32>
    %672 = arith.addf %666, %671 : vector<8x8xf32>
    %c0_448 = arith.constant 0 : index
    %c46_449 = arith.constant 46 : index
    %c2_450 = arith.constant 2 : index
    %c0_451 = arith.constant 0 : index
    %673 = vector.load %arg1[%c0_448, %c46_449, %c2_450, %c0_451] : memref<1x147x10x10xf32, #tpu.memory_space<vmem>>, vector<1x1x8x8xf32>
    %674 = vector.shape_cast %673 : vector<1x1x8x8xf32> to vector<8x8xf32>
    %c112 = arith.constant 112 : index
    %675 = memref.load %arg2[%c112] : memref<363xf32, #tpu.memory_space<smem>>
    %676 = vector.broadcast %675 : f32 to vector<8x8xf32>
    %677 = arith.mulf %676, %674 : vector<8x8xf32>
    %678 = arith.addf %672, %677 : vector<8x8xf32>
    %c0_452 = arith.constant 0 : index
    %c48_453 = arith.constant 48 : index
    %c2_454 = arith.constant 2 : index
    %c0_455 = arith.constant 0 : index
    %679 = vector.load %arg1[%c0_452, %c48_453, %c2_454, %c0_455] : memref<1x147x10x10xf32, #tpu.memory_space<vmem>>, vector<1x1x8x8xf32>
    %680 = vector.shape_cast %679 : vector<1x1x8x8xf32> to vector<8x8xf32>
    %c113 = arith.constant 113 : index
    %681 = memref.load %arg2[%c113] : memref<363xf32, #tpu.memory_space<smem>>
    %682 = vector.broadcast %681 : f32 to vector<8x8xf32>
    %683 = arith.mulf %682, %680 : vector<8x8xf32>
    %684 = arith.addf %678, %683 : vector<8x8xf32>
    %c0_456 = arith.constant 0 : index
    %c43_457 = arith.constant 43 : index
    %c2_458 = arith.constant 2 : index
    %c1_459 = arith.constant 1 : index
    %685 = vector.load %arg1[%c0_456, %c43_457, %c2_458, %c1_459] : memref<1x147x10x10xf32, #tpu.memory_space<vmem>>, vector<1x1x8x8xf32>
    %686 = vector.shape_cast %685 : vector<1x1x8x8xf32> to vector<8x8xf32>
    %c114 = arith.constant 114 : index
    %687 = memref.load %arg2[%c114] : memref<363xf32, #tpu.memory_space<smem>>
    %688 = vector.broadcast %687 : f32 to vector<8x8xf32>
    %689 = arith.mulf %688, %686 : vector<8x8xf32>
    %690 = arith.addf %684, %689 : vector<8x8xf32>
    %c0_460 = arith.constant 0 : index
    %c45_461 = arith.constant 45 : index
    %c2_462 = arith.constant 2 : index
    %c1_463 = arith.constant 1 : index
    %691 = vector.load %arg1[%c0_460, %c45_461, %c2_462, %c1_463] : memref<1x147x10x10xf32, #tpu.memory_space<vmem>>, vector<1x1x8x8xf32>
    %692 = vector.shape_cast %691 : vector<1x1x8x8xf32> to vector<8x8xf32>
    %c115 = arith.constant 115 : index
    %693 = memref.load %arg2[%c115] : memref<363xf32, #tpu.memory_space<smem>>
    %694 = vector.broadcast %693 : f32 to vector<8x8xf32>
    %695 = arith.mulf %694, %692 : vector<8x8xf32>
    %696 = arith.addf %690, %695 : vector<8x8xf32>
    %c0_464 = arith.constant 0 : index
    %c47_465 = arith.constant 47 : index
    %c2_466 = arith.constant 2 : index
    %c1_467 = arith.constant 1 : index
    %697 = vector.load %arg1[%c0_464, %c47_465, %c2_466, %c1_467] : memref<1x147x10x10xf32, #tpu.memory_space<vmem>>, vector<1x1x8x8xf32>
    %698 = vector.shape_cast %697 : vector<1x1x8x8xf32> to vector<8x8xf32>
    %c116 = arith.constant 116 : index
    %699 = memref.load %arg2[%c116] : memref<363xf32, #tpu.memory_space<smem>>
    %700 = vector.broadcast %699 : f32 to vector<8x8xf32>
    %701 = arith.mulf %700, %698 : vector<8x8xf32>
    %702 = arith.addf %696, %701 : vector<8x8xf32>
    %c0_468 = arith.constant 0 : index
    %c42_469 = arith.constant 42 : index
    %c2_470 = arith.constant 2 : index
    %c2_471 = arith.constant 2 : index
    %703 = vector.load %arg1[%c0_468, %c42_469, %c2_470, %c2_471] : memref<1x147x10x10xf32, #tpu.memory_space<vmem>>, vector<1x1x8x8xf32>
    %704 = vector.shape_cast %703 : vector<1x1x8x8xf32> to vector<8x8xf32>
    %c117 = arith.constant 117 : index
    %705 = memref.load %arg2[%c117] : memref<363xf32, #tpu.memory_space<smem>>
    %706 = vector.broadcast %705 : f32 to vector<8x8xf32>
    %707 = arith.mulf %706, %704 : vector<8x8xf32>
    %708 = arith.addf %702, %707 : vector<8x8xf32>
    %c0_472 = arith.constant 0 : index
    %c44_473 = arith.constant 44 : index
    %c2_474 = arith.constant 2 : index
    %c2_475 = arith.constant 2 : index
    %709 = vector.load %arg1[%c0_472, %c44_473, %c2_474, %c2_475] : memref<1x147x10x10xf32, #tpu.memory_space<vmem>>, vector<1x1x8x8xf32>
    %710 = vector.shape_cast %709 : vector<1x1x8x8xf32> to vector<8x8xf32>
    %c118 = arith.constant 118 : index
    %711 = memref.load %arg2[%c118] : memref<363xf32, #tpu.memory_space<smem>>
    %712 = vector.broadcast %711 : f32 to vector<8x8xf32>
    %713 = arith.mulf %712, %710 : vector<8x8xf32>
    %714 = arith.addf %708, %713 : vector<8x8xf32>
    %c0_476 = arith.constant 0 : index
    %c46_477 = arith.constant 46 : index
    %c2_478 = arith.constant 2 : index
    %c2_479 = arith.constant 2 : index
    %715 = vector.load %arg1[%c0_476, %c46_477, %c2_478, %c2_479] : memref<1x147x10x10xf32, #tpu.memory_space<vmem>>, vector<1x1x8x8xf32>
    %716 = vector.shape_cast %715 : vector<1x1x8x8xf32> to vector<8x8xf32>
    %c119 = arith.constant 119 : index
    %717 = memref.load %arg2[%c119] : memref<363xf32, #tpu.memory_space<smem>>
    %718 = vector.broadcast %717 : f32 to vector<8x8xf32>
    %719 = arith.mulf %718, %716 : vector<8x8xf32>
    %720 = arith.addf %714, %719 : vector<8x8xf32>
    %c0_480 = arith.constant 0 : index
    %c48_481 = arith.constant 48 : index
    %c2_482 = arith.constant 2 : index
    %c2_483 = arith.constant 2 : index
    %721 = vector.load %arg1[%c0_480, %c48_481, %c2_482, %c2_483] : memref<1x147x10x10xf32, #tpu.memory_space<vmem>>, vector<1x1x8x8xf32>
    %722 = vector.shape_cast %721 : vector<1x1x8x8xf32> to vector<8x8xf32>
    %c120 = arith.constant 120 : index
    %723 = memref.load %arg2[%c120] : memref<363xf32, #tpu.memory_space<smem>>
    %724 = vector.broadcast %723 : f32 to vector<8x8xf32>
    %725 = arith.mulf %724, %722 : vector<8x8xf32>
    %726 = arith.addf %720, %725 : vector<8x8xf32>
    %c0_484 = arith.constant 0 : index
    %c49_485 = arith.constant 49 : index
    %c0_486 = arith.constant 0 : index
    %c0_487 = arith.constant 0 : index
    %727 = vector.load %arg1[%c0_484, %c49_485, %c0_486, %c0_487] : memref<1x147x10x10xf32, #tpu.memory_space<vmem>>, vector<1x1x8x8xf32>
    %728 = vector.shape_cast %727 : vector<1x1x8x8xf32> to vector<8x8xf32>
    %c121 = arith.constant 121 : index
    %729 = memref.load %arg2[%c121] : memref<363xf32, #tpu.memory_space<smem>>
    %730 = vector.broadcast %729 : f32 to vector<8x8xf32>
    %731 = arith.mulf %730, %728 : vector<8x8xf32>
    %732 = arith.addf %726, %731 : vector<8x8xf32>
    %c0_488 = arith.constant 0 : index
    %c51_489 = arith.constant 51 : index
    %c0_490 = arith.constant 0 : index
    %c0_491 = arith.constant 0 : index
    %733 = vector.load %arg1[%c0_488, %c51_489, %c0_490, %c0_491] : memref<1x147x10x10xf32, #tpu.memory_space<vmem>>, vector<1x1x8x8xf32>
    %734 = vector.shape_cast %733 : vector<1x1x8x8xf32> to vector<8x8xf32>
    %c122 = arith.constant 122 : index
    %735 = memref.load %arg2[%c122] : memref<363xf32, #tpu.memory_space<smem>>
    %736 = vector.broadcast %735 : f32 to vector<8x8xf32>
    %737 = arith.mulf %736, %734 : vector<8x8xf32>
    %738 = arith.addf %732, %737 : vector<8x8xf32>
    %c0_492 = arith.constant 0 : index
    %c53_493 = arith.constant 53 : index
    %c0_494 = arith.constant 0 : index
    %c0_495 = arith.constant 0 : index
    %739 = vector.load %arg1[%c0_492, %c53_493, %c0_494, %c0_495] : memref<1x147x10x10xf32, #tpu.memory_space<vmem>>, vector<1x1x8x8xf32>
    %740 = vector.shape_cast %739 : vector<1x1x8x8xf32> to vector<8x8xf32>
    %c123 = arith.constant 123 : index
    %741 = memref.load %arg2[%c123] : memref<363xf32, #tpu.memory_space<smem>>
    %742 = vector.broadcast %741 : f32 to vector<8x8xf32>
    %743 = arith.mulf %742, %740 : vector<8x8xf32>
    %744 = arith.addf %738, %743 : vector<8x8xf32>
    %c0_496 = arith.constant 0 : index
    %c55_497 = arith.constant 55 : index
    %c0_498 = arith.constant 0 : index
    %c0_499 = arith.constant 0 : index
    %745 = vector.load %arg1[%c0_496, %c55_497, %c0_498, %c0_499] : memref<1x147x10x10xf32, #tpu.memory_space<vmem>>, vector<1x1x8x8xf32>
    %746 = vector.shape_cast %745 : vector<1x1x8x8xf32> to vector<8x8xf32>
    %c124 = arith.constant 124 : index
    %747 = memref.load %arg2[%c124] : memref<363xf32, #tpu.memory_space<smem>>
    %748 = vector.broadcast %747 : f32 to vector<8x8xf32>
    %749 = arith.mulf %748, %746 : vector<8x8xf32>
    %750 = arith.addf %744, %749 : vector<8x8xf32>
    %c0_500 = arith.constant 0 : index
    %c50_501 = arith.constant 50 : index
    %c0_502 = arith.constant 0 : index
    %c1_503 = arith.constant 1 : index
    %751 = vector.load %arg1[%c0_500, %c50_501, %c0_502, %c1_503] : memref<1x147x10x10xf32, #tpu.memory_space<vmem>>, vector<1x1x8x8xf32>
    %752 = vector.shape_cast %751 : vector<1x1x8x8xf32> to vector<8x8xf32>
    %c125 = arith.constant 125 : index
    %753 = memref.load %arg2[%c125] : memref<363xf32, #tpu.memory_space<smem>>
    %754 = vector.broadcast %753 : f32 to vector<8x8xf32>
    %755 = arith.mulf %754, %752 : vector<8x8xf32>
    %756 = arith.addf %750, %755 : vector<8x8xf32>
    %c0_504 = arith.constant 0 : index
    %c52_505 = arith.constant 52 : index
    %c0_506 = arith.constant 0 : index
    %c1_507 = arith.constant 1 : index
    %757 = vector.load %arg1[%c0_504, %c52_505, %c0_506, %c1_507] : memref<1x147x10x10xf32, #tpu.memory_space<vmem>>, vector<1x1x8x8xf32>
    %758 = vector.shape_cast %757 : vector<1x1x8x8xf32> to vector<8x8xf32>
    %c126 = arith.constant 126 : index
    %759 = memref.load %arg2[%c126] : memref<363xf32, #tpu.memory_space<smem>>
    %760 = vector.broadcast %759 : f32 to vector<8x8xf32>
    %761 = arith.mulf %760, %758 : vector<8x8xf32>
    %762 = arith.addf %756, %761 : vector<8x8xf32>
    %c0_508 = arith.constant 0 : index
    %c54_509 = arith.constant 54 : index
    %c0_510 = arith.constant 0 : index
    %c1_511 = arith.constant 1 : index
    %763 = vector.load %arg1[%c0_508, %c54_509, %c0_510, %c1_511] : memref<1x147x10x10xf32, #tpu.memory_space<vmem>>, vector<1x1x8x8xf32>
    %764 = vector.shape_cast %763 : vector<1x1x8x8xf32> to vector<8x8xf32>
    %c127 = arith.constant 127 : index
    %765 = memref.load %arg2[%c127] : memref<363xf32, #tpu.memory_space<smem>>
    %766 = vector.broadcast %765 : f32 to vector<8x8xf32>
    %767 = arith.mulf %766, %764 : vector<8x8xf32>
    %768 = arith.addf %762, %767 : vector<8x8xf32>
    %c0_512 = arith.constant 0 : index
    %c49_513 = arith.constant 49 : index
    %c0_514 = arith.constant 0 : index
    %c2_515 = arith.constant 2 : index
    %769 = vector.load %arg1[%c0_512, %c49_513, %c0_514, %c2_515] : memref<1x147x10x10xf32, #tpu.memory_space<vmem>>, vector<1x1x8x8xf32>
    %770 = vector.shape_cast %769 : vector<1x1x8x8xf32> to vector<8x8xf32>
    %c128 = arith.constant 128 : index
    %771 = memref.load %arg2[%c128] : memref<363xf32, #tpu.memory_space<smem>>
    %772 = vector.broadcast %771 : f32 to vector<8x8xf32>
    %773 = arith.mulf %772, %770 : vector<8x8xf32>
    %774 = arith.addf %768, %773 : vector<8x8xf32>
    %c0_516 = arith.constant 0 : index
    %c51_517 = arith.constant 51 : index
    %c0_518 = arith.constant 0 : index
    %c2_519 = arith.constant 2 : index
    %775 = vector.load %arg1[%c0_516, %c51_517, %c0_518, %c2_519] : memref<1x147x10x10xf32, #tpu.memory_space<vmem>>, vector<1x1x8x8xf32>
    %776 = vector.shape_cast %775 : vector<1x1x8x8xf32> to vector<8x8xf32>
    %c129 = arith.constant 129 : index
    %777 = memref.load %arg2[%c129] : memref<363xf32, #tpu.memory_space<smem>>
    %778 = vector.broadcast %777 : f32 to vector<8x8xf32>
    %779 = arith.mulf %778, %776 : vector<8x8xf32>
    %780 = arith.addf %774, %779 : vector<8x8xf32>
    %c0_520 = arith.constant 0 : index
    %c53_521 = arith.constant 53 : index
    %c0_522 = arith.constant 0 : index
    %c2_523 = arith.constant 2 : index
    %781 = vector.load %arg1[%c0_520, %c53_521, %c0_522, %c2_523] : memref<1x147x10x10xf32, #tpu.memory_space<vmem>>, vector<1x1x8x8xf32>
    %782 = vector.shape_cast %781 : vector<1x1x8x8xf32> to vector<8x8xf32>
    %c130 = arith.constant 130 : index
    %783 = memref.load %arg2[%c130] : memref<363xf32, #tpu.memory_space<smem>>
    %784 = vector.broadcast %783 : f32 to vector<8x8xf32>
    %785 = arith.mulf %784, %782 : vector<8x8xf32>
    %786 = arith.addf %780, %785 : vector<8x8xf32>
    %c0_524 = arith.constant 0 : index
    %c55_525 = arith.constant 55 : index
    %c0_526 = arith.constant 0 : index
    %c2_527 = arith.constant 2 : index
    %787 = vector.load %arg1[%c0_524, %c55_525, %c0_526, %c2_527] : memref<1x147x10x10xf32, #tpu.memory_space<vmem>>, vector<1x1x8x8xf32>
    %788 = vector.shape_cast %787 : vector<1x1x8x8xf32> to vector<8x8xf32>
    %c131 = arith.constant 131 : index
    %789 = memref.load %arg2[%c131] : memref<363xf32, #tpu.memory_space<smem>>
    %790 = vector.broadcast %789 : f32 to vector<8x8xf32>
    %791 = arith.mulf %790, %788 : vector<8x8xf32>
    %792 = arith.addf %786, %791 : vector<8x8xf32>
    %c0_528 = arith.constant 0 : index
    %c63_529 = arith.constant 63 : index
    %c0_530 = arith.constant 0 : index
    %c0_531 = arith.constant 0 : index
    %793 = vector.load %arg1[%c0_528, %c63_529, %c0_530, %c0_531] : memref<1x147x10x10xf32, #tpu.memory_space<vmem>>, vector<1x1x8x8xf32>
    %794 = vector.shape_cast %793 : vector<1x1x8x8xf32> to vector<8x8xf32>
    %c132 = arith.constant 132 : index
    %795 = memref.load %arg2[%c132] : memref<363xf32, #tpu.memory_space<smem>>
    %796 = vector.broadcast %795 : f32 to vector<8x8xf32>
    %797 = arith.mulf %796, %794 : vector<8x8xf32>
    %798 = arith.addf %792, %797 : vector<8x8xf32>
    %c0_532 = arith.constant 0 : index
    %c65_533 = arith.constant 65 : index
    %c0_534 = arith.constant 0 : index
    %c0_535 = arith.constant 0 : index
    %799 = vector.load %arg1[%c0_532, %c65_533, %c0_534, %c0_535] : memref<1x147x10x10xf32, #tpu.memory_space<vmem>>, vector<1x1x8x8xf32>
    %800 = vector.shape_cast %799 : vector<1x1x8x8xf32> to vector<8x8xf32>
    %c133 = arith.constant 133 : index
    %801 = memref.load %arg2[%c133] : memref<363xf32, #tpu.memory_space<smem>>
    %802 = vector.broadcast %801 : f32 to vector<8x8xf32>
    %803 = arith.mulf %802, %800 : vector<8x8xf32>
    %804 = arith.addf %798, %803 : vector<8x8xf32>
    %c0_536 = arith.constant 0 : index
    %c67_537 = arith.constant 67 : index
    %c0_538 = arith.constant 0 : index
    %c0_539 = arith.constant 0 : index
    %805 = vector.load %arg1[%c0_536, %c67_537, %c0_538, %c0_539] : memref<1x147x10x10xf32, #tpu.memory_space<vmem>>, vector<1x1x8x8xf32>
    %806 = vector.shape_cast %805 : vector<1x1x8x8xf32> to vector<8x8xf32>
    %c134 = arith.constant 134 : index
    %807 = memref.load %arg2[%c134] : memref<363xf32, #tpu.memory_space<smem>>
    %808 = vector.broadcast %807 : f32 to vector<8x8xf32>
    %809 = arith.mulf %808, %806 : vector<8x8xf32>
    %810 = arith.addf %804, %809 : vector<8x8xf32>
    %c0_540 = arith.constant 0 : index
    %c69_541 = arith.constant 69 : index
    %c0_542 = arith.constant 0 : index
    %c0_543 = arith.constant 0 : index
    %811 = vector.load %arg1[%c0_540, %c69_541, %c0_542, %c0_543] : memref<1x147x10x10xf32, #tpu.memory_space<vmem>>, vector<1x1x8x8xf32>
    %812 = vector.shape_cast %811 : vector<1x1x8x8xf32> to vector<8x8xf32>
    %c135 = arith.constant 135 : index
    %813 = memref.load %arg2[%c135] : memref<363xf32, #tpu.memory_space<smem>>
    %814 = vector.broadcast %813 : f32 to vector<8x8xf32>
    %815 = arith.mulf %814, %812 : vector<8x8xf32>
    %816 = arith.addf %810, %815 : vector<8x8xf32>
    %c0_544 = arith.constant 0 : index
    %c64_545 = arith.constant 64 : index
    %c0_546 = arith.constant 0 : index
    %c1_547 = arith.constant 1 : index
    %817 = vector.load %arg1[%c0_544, %c64_545, %c0_546, %c1_547] : memref<1x147x10x10xf32, #tpu.memory_space<vmem>>, vector<1x1x8x8xf32>
    %818 = vector.shape_cast %817 : vector<1x1x8x8xf32> to vector<8x8xf32>
    %c136 = arith.constant 136 : index
    %819 = memref.load %arg2[%c136] : memref<363xf32, #tpu.memory_space<smem>>
    %820 = vector.broadcast %819 : f32 to vector<8x8xf32>
    %821 = arith.mulf %820, %818 : vector<8x8xf32>
    %822 = arith.addf %816, %821 : vector<8x8xf32>
    %c0_548 = arith.constant 0 : index
    %c66_549 = arith.constant 66 : index
    %c0_550 = arith.constant 0 : index
    %c1_551 = arith.constant 1 : index
    %823 = vector.load %arg1[%c0_548, %c66_549, %c0_550, %c1_551] : memref<1x147x10x10xf32, #tpu.memory_space<vmem>>, vector<1x1x8x8xf32>
    %824 = vector.shape_cast %823 : vector<1x1x8x8xf32> to vector<8x8xf32>
    %c137 = arith.constant 137 : index
    %825 = memref.load %arg2[%c137] : memref<363xf32, #tpu.memory_space<smem>>
    %826 = vector.broadcast %825 : f32 to vector<8x8xf32>
    %827 = arith.mulf %826, %824 : vector<8x8xf32>
    %828 = arith.addf %822, %827 : vector<8x8xf32>
    %c0_552 = arith.constant 0 : index
    %c68_553 = arith.constant 68 : index
    %c0_554 = arith.constant 0 : index
    %c1_555 = arith.constant 1 : index
    %829 = vector.load %arg1[%c0_552, %c68_553, %c0_554, %c1_555] : memref<1x147x10x10xf32, #tpu.memory_space<vmem>>, vector<1x1x8x8xf32>
    %830 = vector.shape_cast %829 : vector<1x1x8x8xf32> to vector<8x8xf32>
    %c138 = arith.constant 138 : index
    %831 = memref.load %arg2[%c138] : memref<363xf32, #tpu.memory_space<smem>>
    %832 = vector.broadcast %831 : f32 to vector<8x8xf32>
    %833 = arith.mulf %832, %830 : vector<8x8xf32>
    %834 = arith.addf %828, %833 : vector<8x8xf32>
    %c0_556 = arith.constant 0 : index
    %c63_557 = arith.constant 63 : index
    %c0_558 = arith.constant 0 : index
    %c2_559 = arith.constant 2 : index
    %835 = vector.load %arg1[%c0_556, %c63_557, %c0_558, %c2_559] : memref<1x147x10x10xf32, #tpu.memory_space<vmem>>, vector<1x1x8x8xf32>
    %836 = vector.shape_cast %835 : vector<1x1x8x8xf32> to vector<8x8xf32>
    %c139 = arith.constant 139 : index
    %837 = memref.load %arg2[%c139] : memref<363xf32, #tpu.memory_space<smem>>
    %838 = vector.broadcast %837 : f32 to vector<8x8xf32>
    %839 = arith.mulf %838, %836 : vector<8x8xf32>
    %840 = arith.addf %834, %839 : vector<8x8xf32>
    %c0_560 = arith.constant 0 : index
    %c65_561 = arith.constant 65 : index
    %c0_562 = arith.constant 0 : index
    %c2_563 = arith.constant 2 : index
    %841 = vector.load %arg1[%c0_560, %c65_561, %c0_562, %c2_563] : memref<1x147x10x10xf32, #tpu.memory_space<vmem>>, vector<1x1x8x8xf32>
    %842 = vector.shape_cast %841 : vector<1x1x8x8xf32> to vector<8x8xf32>
    %c140 = arith.constant 140 : index
    %843 = memref.load %arg2[%c140] : memref<363xf32, #tpu.memory_space<smem>>
    %844 = vector.broadcast %843 : f32 to vector<8x8xf32>
    %845 = arith.mulf %844, %842 : vector<8x8xf32>
    %846 = arith.addf %840, %845 : vector<8x8xf32>
    %c0_564 = arith.constant 0 : index
    %c67_565 = arith.constant 67 : index
    %c0_566 = arith.constant 0 : index
    %c2_567 = arith.constant 2 : index
    %847 = vector.load %arg1[%c0_564, %c67_565, %c0_566, %c2_567] : memref<1x147x10x10xf32, #tpu.memory_space<vmem>>, vector<1x1x8x8xf32>
    %848 = vector.shape_cast %847 : vector<1x1x8x8xf32> to vector<8x8xf32>
    %c141 = arith.constant 141 : index
    %849 = memref.load %arg2[%c141] : memref<363xf32, #tpu.memory_space<smem>>
    %850 = vector.broadcast %849 : f32 to vector<8x8xf32>
    %851 = arith.mulf %850, %848 : vector<8x8xf32>
    %852 = arith.addf %846, %851 : vector<8x8xf32>
    %c0_568 = arith.constant 0 : index
    %c69_569 = arith.constant 69 : index
    %c0_570 = arith.constant 0 : index
    %c2_571 = arith.constant 2 : index
    %853 = vector.load %arg1[%c0_568, %c69_569, %c0_570, %c2_571] : memref<1x147x10x10xf32, #tpu.memory_space<vmem>>, vector<1x1x8x8xf32>
    %854 = vector.shape_cast %853 : vector<1x1x8x8xf32> to vector<8x8xf32>
    %c142 = arith.constant 142 : index
    %855 = memref.load %arg2[%c142] : memref<363xf32, #tpu.memory_space<smem>>
    %856 = vector.broadcast %855 : f32 to vector<8x8xf32>
    %857 = arith.mulf %856, %854 : vector<8x8xf32>
    %858 = arith.addf %852, %857 : vector<8x8xf32>
    %c0_572 = arith.constant 0 : index
    %c77_573 = arith.constant 77 : index
    %c0_574 = arith.constant 0 : index
    %c0_575 = arith.constant 0 : index
    %859 = vector.load %arg1[%c0_572, %c77_573, %c0_574, %c0_575] : memref<1x147x10x10xf32, #tpu.memory_space<vmem>>, vector<1x1x8x8xf32>
    %860 = vector.shape_cast %859 : vector<1x1x8x8xf32> to vector<8x8xf32>
    %c143 = arith.constant 143 : index
    %861 = memref.load %arg2[%c143] : memref<363xf32, #tpu.memory_space<smem>>
    %862 = vector.broadcast %861 : f32 to vector<8x8xf32>
    %863 = arith.mulf %862, %860 : vector<8x8xf32>
    %864 = arith.addf %858, %863 : vector<8x8xf32>
    %c0_576 = arith.constant 0 : index
    %c79_577 = arith.constant 79 : index
    %c0_578 = arith.constant 0 : index
    %c0_579 = arith.constant 0 : index
    %865 = vector.load %arg1[%c0_576, %c79_577, %c0_578, %c0_579] : memref<1x147x10x10xf32, #tpu.memory_space<vmem>>, vector<1x1x8x8xf32>
    %866 = vector.shape_cast %865 : vector<1x1x8x8xf32> to vector<8x8xf32>
    %c144 = arith.constant 144 : index
    %867 = memref.load %arg2[%c144] : memref<363xf32, #tpu.memory_space<smem>>
    %868 = vector.broadcast %867 : f32 to vector<8x8xf32>
    %869 = arith.mulf %868, %866 : vector<8x8xf32>
    %870 = arith.addf %864, %869 : vector<8x8xf32>
    %c0_580 = arith.constant 0 : index
    %c81_581 = arith.constant 81 : index
    %c0_582 = arith.constant 0 : index
    %c0_583 = arith.constant 0 : index
    %871 = vector.load %arg1[%c0_580, %c81_581, %c0_582, %c0_583] : memref<1x147x10x10xf32, #tpu.memory_space<vmem>>, vector<1x1x8x8xf32>
    %872 = vector.shape_cast %871 : vector<1x1x8x8xf32> to vector<8x8xf32>
    %c145 = arith.constant 145 : index
    %873 = memref.load %arg2[%c145] : memref<363xf32, #tpu.memory_space<smem>>
    %874 = vector.broadcast %873 : f32 to vector<8x8xf32>
    %875 = arith.mulf %874, %872 : vector<8x8xf32>
    %876 = arith.addf %870, %875 : vector<8x8xf32>
    %c0_584 = arith.constant 0 : index
    %c83_585 = arith.constant 83 : index
    %c0_586 = arith.constant 0 : index
    %c0_587 = arith.constant 0 : index
    %877 = vector.load %arg1[%c0_584, %c83_585, %c0_586, %c0_587] : memref<1x147x10x10xf32, #tpu.memory_space<vmem>>, vector<1x1x8x8xf32>
    %878 = vector.shape_cast %877 : vector<1x1x8x8xf32> to vector<8x8xf32>
    %c146 = arith.constant 146 : index
    %879 = memref.load %arg2[%c146] : memref<363xf32, #tpu.memory_space<smem>>
    %880 = vector.broadcast %879 : f32 to vector<8x8xf32>
    %881 = arith.mulf %880, %878 : vector<8x8xf32>
    %882 = arith.addf %876, %881 : vector<8x8xf32>
    %c0_588 = arith.constant 0 : index
    %c78_589 = arith.constant 78 : index
    %c0_590 = arith.constant 0 : index
    %c1_591 = arith.constant 1 : index
    %883 = vector.load %arg1[%c0_588, %c78_589, %c0_590, %c1_591] : memref<1x147x10x10xf32, #tpu.memory_space<vmem>>, vector<1x1x8x8xf32>
    %884 = vector.shape_cast %883 : vector<1x1x8x8xf32> to vector<8x8xf32>
    %c147 = arith.constant 147 : index
    %885 = memref.load %arg2[%c147] : memref<363xf32, #tpu.memory_space<smem>>
    %886 = vector.broadcast %885 : f32 to vector<8x8xf32>
    %887 = arith.mulf %886, %884 : vector<8x8xf32>
    %888 = arith.addf %882, %887 : vector<8x8xf32>
    %c0_592 = arith.constant 0 : index
    %c80_593 = arith.constant 80 : index
    %c0_594 = arith.constant 0 : index
    %c1_595 = arith.constant 1 : index
    %889 = vector.load %arg1[%c0_592, %c80_593, %c0_594, %c1_595] : memref<1x147x10x10xf32, #tpu.memory_space<vmem>>, vector<1x1x8x8xf32>
    %890 = vector.shape_cast %889 : vector<1x1x8x8xf32> to vector<8x8xf32>
    %c148 = arith.constant 148 : index
    %891 = memref.load %arg2[%c148] : memref<363xf32, #tpu.memory_space<smem>>
    %892 = vector.broadcast %891 : f32 to vector<8x8xf32>
    %893 = arith.mulf %892, %890 : vector<8x8xf32>
    %894 = arith.addf %888, %893 : vector<8x8xf32>
    %c0_596 = arith.constant 0 : index
    %c82_597 = arith.constant 82 : index
    %c0_598 = arith.constant 0 : index
    %c1_599 = arith.constant 1 : index
    %895 = vector.load %arg1[%c0_596, %c82_597, %c0_598, %c1_599] : memref<1x147x10x10xf32, #tpu.memory_space<vmem>>, vector<1x1x8x8xf32>
    %896 = vector.shape_cast %895 : vector<1x1x8x8xf32> to vector<8x8xf32>
    %c149 = arith.constant 149 : index
    %897 = memref.load %arg2[%c149] : memref<363xf32, #tpu.memory_space<smem>>
    %898 = vector.broadcast %897 : f32 to vector<8x8xf32>
    %899 = arith.mulf %898, %896 : vector<8x8xf32>
    %900 = arith.addf %894, %899 : vector<8x8xf32>
    %c0_600 = arith.constant 0 : index
    %c77_601 = arith.constant 77 : index
    %c0_602 = arith.constant 0 : index
    %c2_603 = arith.constant 2 : index
    %901 = vector.load %arg1[%c0_600, %c77_601, %c0_602, %c2_603] : memref<1x147x10x10xf32, #tpu.memory_space<vmem>>, vector<1x1x8x8xf32>
    %902 = vector.shape_cast %901 : vector<1x1x8x8xf32> to vector<8x8xf32>
    %c150 = arith.constant 150 : index
    %903 = memref.load %arg2[%c150] : memref<363xf32, #tpu.memory_space<smem>>
    %904 = vector.broadcast %903 : f32 to vector<8x8xf32>
    %905 = arith.mulf %904, %902 : vector<8x8xf32>
    %906 = arith.addf %900, %905 : vector<8x8xf32>
    %c0_604 = arith.constant 0 : index
    %c79_605 = arith.constant 79 : index
    %c0_606 = arith.constant 0 : index
    %c2_607 = arith.constant 2 : index
    %907 = vector.load %arg1[%c0_604, %c79_605, %c0_606, %c2_607] : memref<1x147x10x10xf32, #tpu.memory_space<vmem>>, vector<1x1x8x8xf32>
    %908 = vector.shape_cast %907 : vector<1x1x8x8xf32> to vector<8x8xf32>
    %c151 = arith.constant 151 : index
    %909 = memref.load %arg2[%c151] : memref<363xf32, #tpu.memory_space<smem>>
    %910 = vector.broadcast %909 : f32 to vector<8x8xf32>
    %911 = arith.mulf %910, %908 : vector<8x8xf32>
    %912 = arith.addf %906, %911 : vector<8x8xf32>
    %c0_608 = arith.constant 0 : index
    %c81_609 = arith.constant 81 : index
    %c0_610 = arith.constant 0 : index
    %c2_611 = arith.constant 2 : index
    %913 = vector.load %arg1[%c0_608, %c81_609, %c0_610, %c2_611] : memref<1x147x10x10xf32, #tpu.memory_space<vmem>>, vector<1x1x8x8xf32>
    %914 = vector.shape_cast %913 : vector<1x1x8x8xf32> to vector<8x8xf32>
    %c152 = arith.constant 152 : index
    %915 = memref.load %arg2[%c152] : memref<363xf32, #tpu.memory_space<smem>>
    %916 = vector.broadcast %915 : f32 to vector<8x8xf32>
    %917 = arith.mulf %916, %914 : vector<8x8xf32>
    %918 = arith.addf %912, %917 : vector<8x8xf32>
    %c0_612 = arith.constant 0 : index
    %c83_613 = arith.constant 83 : index
    %c0_614 = arith.constant 0 : index
    %c2_615 = arith.constant 2 : index
    %919 = vector.load %arg1[%c0_612, %c83_613, %c0_614, %c2_615] : memref<1x147x10x10xf32, #tpu.memory_space<vmem>>, vector<1x1x8x8xf32>
    %920 = vector.shape_cast %919 : vector<1x1x8x8xf32> to vector<8x8xf32>
    %c153 = arith.constant 153 : index
    %921 = memref.load %arg2[%c153] : memref<363xf32, #tpu.memory_space<smem>>
    %922 = vector.broadcast %921 : f32 to vector<8x8xf32>
    %923 = arith.mulf %922, %920 : vector<8x8xf32>
    %924 = arith.addf %918, %923 : vector<8x8xf32>
    %c0_616 = arith.constant 0 : index
    %c91_617 = arith.constant 91 : index
    %c0_618 = arith.constant 0 : index
    %c0_619 = arith.constant 0 : index
    %925 = vector.load %arg1[%c0_616, %c91_617, %c0_618, %c0_619] : memref<1x147x10x10xf32, #tpu.memory_space<vmem>>, vector<1x1x8x8xf32>
    %926 = vector.shape_cast %925 : vector<1x1x8x8xf32> to vector<8x8xf32>
    %c154 = arith.constant 154 : index
    %927 = memref.load %arg2[%c154] : memref<363xf32, #tpu.memory_space<smem>>
    %928 = vector.broadcast %927 : f32 to vector<8x8xf32>
    %929 = arith.mulf %928, %926 : vector<8x8xf32>
    %930 = arith.addf %924, %929 : vector<8x8xf32>
    %c0_620 = arith.constant 0 : index
    %c93_621 = arith.constant 93 : index
    %c0_622 = arith.constant 0 : index
    %c0_623 = arith.constant 0 : index
    %931 = vector.load %arg1[%c0_620, %c93_621, %c0_622, %c0_623] : memref<1x147x10x10xf32, #tpu.memory_space<vmem>>, vector<1x1x8x8xf32>
    %932 = vector.shape_cast %931 : vector<1x1x8x8xf32> to vector<8x8xf32>
    %c155 = arith.constant 155 : index
    %933 = memref.load %arg2[%c155] : memref<363xf32, #tpu.memory_space<smem>>
    %934 = vector.broadcast %933 : f32 to vector<8x8xf32>
    %935 = arith.mulf %934, %932 : vector<8x8xf32>
    %936 = arith.addf %930, %935 : vector<8x8xf32>
    %c0_624 = arith.constant 0 : index
    %c95_625 = arith.constant 95 : index
    %c0_626 = arith.constant 0 : index
    %c0_627 = arith.constant 0 : index
    %937 = vector.load %arg1[%c0_624, %c95_625, %c0_626, %c0_627] : memref<1x147x10x10xf32, #tpu.memory_space<vmem>>, vector<1x1x8x8xf32>
    %938 = vector.shape_cast %937 : vector<1x1x8x8xf32> to vector<8x8xf32>
    %c156 = arith.constant 156 : index
    %939 = memref.load %arg2[%c156] : memref<363xf32, #tpu.memory_space<smem>>
    %940 = vector.broadcast %939 : f32 to vector<8x8xf32>
    %941 = arith.mulf %940, %938 : vector<8x8xf32>
    %942 = arith.addf %936, %941 : vector<8x8xf32>
    %c0_628 = arith.constant 0 : index
    %c97_629 = arith.constant 97 : index
    %c0_630 = arith.constant 0 : index
    %c0_631 = arith.constant 0 : index
    %943 = vector.load %arg1[%c0_628, %c97_629, %c0_630, %c0_631] : memref<1x147x10x10xf32, #tpu.memory_space<vmem>>, vector<1x1x8x8xf32>
    %944 = vector.shape_cast %943 : vector<1x1x8x8xf32> to vector<8x8xf32>
    %c157 = arith.constant 157 : index
    %945 = memref.load %arg2[%c157] : memref<363xf32, #tpu.memory_space<smem>>
    %946 = vector.broadcast %945 : f32 to vector<8x8xf32>
    %947 = arith.mulf %946, %944 : vector<8x8xf32>
    %948 = arith.addf %942, %947 : vector<8x8xf32>
    %c0_632 = arith.constant 0 : index
    %c92_633 = arith.constant 92 : index
    %c0_634 = arith.constant 0 : index
    %c1_635 = arith.constant 1 : index
    %949 = vector.load %arg1[%c0_632, %c92_633, %c0_634, %c1_635] : memref<1x147x10x10xf32, #tpu.memory_space<vmem>>, vector<1x1x8x8xf32>
    %950 = vector.shape_cast %949 : vector<1x1x8x8xf32> to vector<8x8xf32>
    %c158 = arith.constant 158 : index
    %951 = memref.load %arg2[%c158] : memref<363xf32, #tpu.memory_space<smem>>
    %952 = vector.broadcast %951 : f32 to vector<8x8xf32>
    %953 = arith.mulf %952, %950 : vector<8x8xf32>
    %954 = arith.addf %948, %953 : vector<8x8xf32>
    %c0_636 = arith.constant 0 : index
    %c94_637 = arith.constant 94 : index
    %c0_638 = arith.constant 0 : index
    %c1_639 = arith.constant 1 : index
    %955 = vector.load %arg1[%c0_636, %c94_637, %c0_638, %c1_639] : memref<1x147x10x10xf32, #tpu.memory_space<vmem>>, vector<1x1x8x8xf32>
    %956 = vector.shape_cast %955 : vector<1x1x8x8xf32> to vector<8x8xf32>
    %c159 = arith.constant 159 : index
    %957 = memref.load %arg2[%c159] : memref<363xf32, #tpu.memory_space<smem>>
    %958 = vector.broadcast %957 : f32 to vector<8x8xf32>
    %959 = arith.mulf %958, %956 : vector<8x8xf32>
    %960 = arith.addf %954, %959 : vector<8x8xf32>
    %c0_640 = arith.constant 0 : index
    %c96_641 = arith.constant 96 : index
    %c0_642 = arith.constant 0 : index
    %c1_643 = arith.constant 1 : index
    %961 = vector.load %arg1[%c0_640, %c96_641, %c0_642, %c1_643] : memref<1x147x10x10xf32, #tpu.memory_space<vmem>>, vector<1x1x8x8xf32>
    %962 = vector.shape_cast %961 : vector<1x1x8x8xf32> to vector<8x8xf32>
    %c160 = arith.constant 160 : index
    %963 = memref.load %arg2[%c160] : memref<363xf32, #tpu.memory_space<smem>>
    %964 = vector.broadcast %963 : f32 to vector<8x8xf32>
    %965 = arith.mulf %964, %962 : vector<8x8xf32>
    %966 = arith.addf %960, %965 : vector<8x8xf32>
    %c0_644 = arith.constant 0 : index
    %c91_645 = arith.constant 91 : index
    %c0_646 = arith.constant 0 : index
    %c2_647 = arith.constant 2 : index
    %967 = vector.load %arg1[%c0_644, %c91_645, %c0_646, %c2_647] : memref<1x147x10x10xf32, #tpu.memory_space<vmem>>, vector<1x1x8x8xf32>
    %968 = vector.shape_cast %967 : vector<1x1x8x8xf32> to vector<8x8xf32>
    %c161 = arith.constant 161 : index
    %969 = memref.load %arg2[%c161] : memref<363xf32, #tpu.memory_space<smem>>
    %970 = vector.broadcast %969 : f32 to vector<8x8xf32>
    %971 = arith.mulf %970, %968 : vector<8x8xf32>
    %972 = arith.addf %966, %971 : vector<8x8xf32>
    %c0_648 = arith.constant 0 : index
    %c93_649 = arith.constant 93 : index
    %c0_650 = arith.constant 0 : index
    %c2_651 = arith.constant 2 : index
    %973 = vector.load %arg1[%c0_648, %c93_649, %c0_650, %c2_651] : memref<1x147x10x10xf32, #tpu.memory_space<vmem>>, vector<1x1x8x8xf32>
    %974 = vector.shape_cast %973 : vector<1x1x8x8xf32> to vector<8x8xf32>
    %c162 = arith.constant 162 : index
    %975 = memref.load %arg2[%c162] : memref<363xf32, #tpu.memory_space<smem>>
    %976 = vector.broadcast %975 : f32 to vector<8x8xf32>
    %977 = arith.mulf %976, %974 : vector<8x8xf32>
    %978 = arith.addf %972, %977 : vector<8x8xf32>
    %c0_652 = arith.constant 0 : index
    %c95_653 = arith.constant 95 : index
    %c0_654 = arith.constant 0 : index
    %c2_655 = arith.constant 2 : index
    %979 = vector.load %arg1[%c0_652, %c95_653, %c0_654, %c2_655] : memref<1x147x10x10xf32, #tpu.memory_space<vmem>>, vector<1x1x8x8xf32>
    %980 = vector.shape_cast %979 : vector<1x1x8x8xf32> to vector<8x8xf32>
    %c163 = arith.constant 163 : index
    %981 = memref.load %arg2[%c163] : memref<363xf32, #tpu.memory_space<smem>>
    %982 = vector.broadcast %981 : f32 to vector<8x8xf32>
    %983 = arith.mulf %982, %980 : vector<8x8xf32>
    %984 = arith.addf %978, %983 : vector<8x8xf32>
    %c0_656 = arith.constant 0 : index
    %c97_657 = arith.constant 97 : index
    %c0_658 = arith.constant 0 : index
    %c2_659 = arith.constant 2 : index
    %985 = vector.load %arg1[%c0_656, %c97_657, %c0_658, %c2_659] : memref<1x147x10x10xf32, #tpu.memory_space<vmem>>, vector<1x1x8x8xf32>
    %986 = vector.shape_cast %985 : vector<1x1x8x8xf32> to vector<8x8xf32>
    %c164 = arith.constant 164 : index
    %987 = memref.load %arg2[%c164] : memref<363xf32, #tpu.memory_space<smem>>
    %988 = vector.broadcast %987 : f32 to vector<8x8xf32>
    %989 = arith.mulf %988, %986 : vector<8x8xf32>
    %990 = arith.addf %984, %989 : vector<8x8xf32>
    %c0_660 = arith.constant 0 : index
    %c56_661 = arith.constant 56 : index
    %c1_662 = arith.constant 1 : index
    %c0_663 = arith.constant 0 : index
    %991 = vector.load %arg1[%c0_660, %c56_661, %c1_662, %c0_663] : memref<1x147x10x10xf32, #tpu.memory_space<vmem>>, vector<1x1x8x8xf32>
    %992 = vector.shape_cast %991 : vector<1x1x8x8xf32> to vector<8x8xf32>
    %c165 = arith.constant 165 : index
    %993 = memref.load %arg2[%c165] : memref<363xf32, #tpu.memory_space<smem>>
    %994 = vector.broadcast %993 : f32 to vector<8x8xf32>
    %995 = arith.mulf %994, %992 : vector<8x8xf32>
    %996 = arith.addf %990, %995 : vector<8x8xf32>
    %c0_664 = arith.constant 0 : index
    %c58_665 = arith.constant 58 : index
    %c1_666 = arith.constant 1 : index
    %c0_667 = arith.constant 0 : index
    %997 = vector.load %arg1[%c0_664, %c58_665, %c1_666, %c0_667] : memref<1x147x10x10xf32, #tpu.memory_space<vmem>>, vector<1x1x8x8xf32>
    %998 = vector.shape_cast %997 : vector<1x1x8x8xf32> to vector<8x8xf32>
    %c166 = arith.constant 166 : index
    %999 = memref.load %arg2[%c166] : memref<363xf32, #tpu.memory_space<smem>>
    %1000 = vector.broadcast %999 : f32 to vector<8x8xf32>
    %1001 = arith.mulf %1000, %998 : vector<8x8xf32>
    %1002 = arith.addf %996, %1001 : vector<8x8xf32>
    %c0_668 = arith.constant 0 : index
    %c60_669 = arith.constant 60 : index
    %c1_670 = arith.constant 1 : index
    %c0_671 = arith.constant 0 : index
    %1003 = vector.load %arg1[%c0_668, %c60_669, %c1_670, %c0_671] : memref<1x147x10x10xf32, #tpu.memory_space<vmem>>, vector<1x1x8x8xf32>
    %1004 = vector.shape_cast %1003 : vector<1x1x8x8xf32> to vector<8x8xf32>
    %c167 = arith.constant 167 : index
    %1005 = memref.load %arg2[%c167] : memref<363xf32, #tpu.memory_space<smem>>
    %1006 = vector.broadcast %1005 : f32 to vector<8x8xf32>
    %1007 = arith.mulf %1006, %1004 : vector<8x8xf32>
    %1008 = arith.addf %1002, %1007 : vector<8x8xf32>
    %c0_672 = arith.constant 0 : index
    %c62_673 = arith.constant 62 : index
    %c1_674 = arith.constant 1 : index
    %c0_675 = arith.constant 0 : index
    %1009 = vector.load %arg1[%c0_672, %c62_673, %c1_674, %c0_675] : memref<1x147x10x10xf32, #tpu.memory_space<vmem>>, vector<1x1x8x8xf32>
    %1010 = vector.shape_cast %1009 : vector<1x1x8x8xf32> to vector<8x8xf32>
    %c168 = arith.constant 168 : index
    %1011 = memref.load %arg2[%c168] : memref<363xf32, #tpu.memory_space<smem>>
    %1012 = vector.broadcast %1011 : f32 to vector<8x8xf32>
    %1013 = arith.mulf %1012, %1010 : vector<8x8xf32>
    %1014 = arith.addf %1008, %1013 : vector<8x8xf32>
    %c0_676 = arith.constant 0 : index
    %c57_677 = arith.constant 57 : index
    %c1_678 = arith.constant 1 : index
    %c1_679 = arith.constant 1 : index
    %1015 = vector.load %arg1[%c0_676, %c57_677, %c1_678, %c1_679] : memref<1x147x10x10xf32, #tpu.memory_space<vmem>>, vector<1x1x8x8xf32>
    %1016 = vector.shape_cast %1015 : vector<1x1x8x8xf32> to vector<8x8xf32>
    %c169 = arith.constant 169 : index
    %1017 = memref.load %arg2[%c169] : memref<363xf32, #tpu.memory_space<smem>>
    %1018 = vector.broadcast %1017 : f32 to vector<8x8xf32>
    %1019 = arith.mulf %1018, %1016 : vector<8x8xf32>
    %1020 = arith.addf %1014, %1019 : vector<8x8xf32>
    %c0_680 = arith.constant 0 : index
    %c59_681 = arith.constant 59 : index
    %c1_682 = arith.constant 1 : index
    %c1_683 = arith.constant 1 : index
    %1021 = vector.load %arg1[%c0_680, %c59_681, %c1_682, %c1_683] : memref<1x147x10x10xf32, #tpu.memory_space<vmem>>, vector<1x1x8x8xf32>
    %1022 = vector.shape_cast %1021 : vector<1x1x8x8xf32> to vector<8x8xf32>
    %c170 = arith.constant 170 : index
    %1023 = memref.load %arg2[%c170] : memref<363xf32, #tpu.memory_space<smem>>
    %1024 = vector.broadcast %1023 : f32 to vector<8x8xf32>
    %1025 = arith.mulf %1024, %1022 : vector<8x8xf32>
    %1026 = arith.addf %1020, %1025 : vector<8x8xf32>
    %c0_684 = arith.constant 0 : index
    %c61_685 = arith.constant 61 : index
    %c1_686 = arith.constant 1 : index
    %c1_687 = arith.constant 1 : index
    %1027 = vector.load %arg1[%c0_684, %c61_685, %c1_686, %c1_687] : memref<1x147x10x10xf32, #tpu.memory_space<vmem>>, vector<1x1x8x8xf32>
    %1028 = vector.shape_cast %1027 : vector<1x1x8x8xf32> to vector<8x8xf32>
    %c171 = arith.constant 171 : index
    %1029 = memref.load %arg2[%c171] : memref<363xf32, #tpu.memory_space<smem>>
    %1030 = vector.broadcast %1029 : f32 to vector<8x8xf32>
    %1031 = arith.mulf %1030, %1028 : vector<8x8xf32>
    %1032 = arith.addf %1026, %1031 : vector<8x8xf32>
    %c0_688 = arith.constant 0 : index
    %c56_689 = arith.constant 56 : index
    %c1_690 = arith.constant 1 : index
    %c2_691 = arith.constant 2 : index
    %1033 = vector.load %arg1[%c0_688, %c56_689, %c1_690, %c2_691] : memref<1x147x10x10xf32, #tpu.memory_space<vmem>>, vector<1x1x8x8xf32>
    %1034 = vector.shape_cast %1033 : vector<1x1x8x8xf32> to vector<8x8xf32>
    %c172 = arith.constant 172 : index
    %1035 = memref.load %arg2[%c172] : memref<363xf32, #tpu.memory_space<smem>>
    %1036 = vector.broadcast %1035 : f32 to vector<8x8xf32>
    %1037 = arith.mulf %1036, %1034 : vector<8x8xf32>
    %1038 = arith.addf %1032, %1037 : vector<8x8xf32>
    %c0_692 = arith.constant 0 : index
    %c58_693 = arith.constant 58 : index
    %c1_694 = arith.constant 1 : index
    %c2_695 = arith.constant 2 : index
    %1039 = vector.load %arg1[%c0_692, %c58_693, %c1_694, %c2_695] : memref<1x147x10x10xf32, #tpu.memory_space<vmem>>, vector<1x1x8x8xf32>
    %1040 = vector.shape_cast %1039 : vector<1x1x8x8xf32> to vector<8x8xf32>
    %c173 = arith.constant 173 : index
    %1041 = memref.load %arg2[%c173] : memref<363xf32, #tpu.memory_space<smem>>
    %1042 = vector.broadcast %1041 : f32 to vector<8x8xf32>
    %1043 = arith.mulf %1042, %1040 : vector<8x8xf32>
    %1044 = arith.addf %1038, %1043 : vector<8x8xf32>
    %c0_696 = arith.constant 0 : index
    %c60_697 = arith.constant 60 : index
    %c1_698 = arith.constant 1 : index
    %c2_699 = arith.constant 2 : index
    %1045 = vector.load %arg1[%c0_696, %c60_697, %c1_698, %c2_699] : memref<1x147x10x10xf32, #tpu.memory_space<vmem>>, vector<1x1x8x8xf32>
    %1046 = vector.shape_cast %1045 : vector<1x1x8x8xf32> to vector<8x8xf32>
    %c174 = arith.constant 174 : index
    %1047 = memref.load %arg2[%c174] : memref<363xf32, #tpu.memory_space<smem>>
    %1048 = vector.broadcast %1047 : f32 to vector<8x8xf32>
    %1049 = arith.mulf %1048, %1046 : vector<8x8xf32>
    %1050 = arith.addf %1044, %1049 : vector<8x8xf32>
    %c0_700 = arith.constant 0 : index
    %c62_701 = arith.constant 62 : index
    %c1_702 = arith.constant 1 : index
    %c2_703 = arith.constant 2 : index
    %1051 = vector.load %arg1[%c0_700, %c62_701, %c1_702, %c2_703] : memref<1x147x10x10xf32, #tpu.memory_space<vmem>>, vector<1x1x8x8xf32>
    %1052 = vector.shape_cast %1051 : vector<1x1x8x8xf32> to vector<8x8xf32>
    %c175 = arith.constant 175 : index
    %1053 = memref.load %arg2[%c175] : memref<363xf32, #tpu.memory_space<smem>>
    %1054 = vector.broadcast %1053 : f32 to vector<8x8xf32>
    %1055 = arith.mulf %1054, %1052 : vector<8x8xf32>
    %1056 = arith.addf %1050, %1055 : vector<8x8xf32>
    %c0_704 = arith.constant 0 : index
    %c70_705 = arith.constant 70 : index
    %c1_706 = arith.constant 1 : index
    %c0_707 = arith.constant 0 : index
    %1057 = vector.load %arg1[%c0_704, %c70_705, %c1_706, %c0_707] : memref<1x147x10x10xf32, #tpu.memory_space<vmem>>, vector<1x1x8x8xf32>
    %1058 = vector.shape_cast %1057 : vector<1x1x8x8xf32> to vector<8x8xf32>
    %c176 = arith.constant 176 : index
    %1059 = memref.load %arg2[%c176] : memref<363xf32, #tpu.memory_space<smem>>
    %1060 = vector.broadcast %1059 : f32 to vector<8x8xf32>
    %1061 = arith.mulf %1060, %1058 : vector<8x8xf32>
    %1062 = arith.addf %1056, %1061 : vector<8x8xf32>
    %c0_708 = arith.constant 0 : index
    %c72_709 = arith.constant 72 : index
    %c1_710 = arith.constant 1 : index
    %c0_711 = arith.constant 0 : index
    %1063 = vector.load %arg1[%c0_708, %c72_709, %c1_710, %c0_711] : memref<1x147x10x10xf32, #tpu.memory_space<vmem>>, vector<1x1x8x8xf32>
    %1064 = vector.shape_cast %1063 : vector<1x1x8x8xf32> to vector<8x8xf32>
    %c177 = arith.constant 177 : index
    %1065 = memref.load %arg2[%c177] : memref<363xf32, #tpu.memory_space<smem>>
    %1066 = vector.broadcast %1065 : f32 to vector<8x8xf32>
    %1067 = arith.mulf %1066, %1064 : vector<8x8xf32>
    %1068 = arith.addf %1062, %1067 : vector<8x8xf32>
    %c0_712 = arith.constant 0 : index
    %c74_713 = arith.constant 74 : index
    %c1_714 = arith.constant 1 : index
    %c0_715 = arith.constant 0 : index
    %1069 = vector.load %arg1[%c0_712, %c74_713, %c1_714, %c0_715] : memref<1x147x10x10xf32, #tpu.memory_space<vmem>>, vector<1x1x8x8xf32>
    %1070 = vector.shape_cast %1069 : vector<1x1x8x8xf32> to vector<8x8xf32>
    %c178 = arith.constant 178 : index
    %1071 = memref.load %arg2[%c178] : memref<363xf32, #tpu.memory_space<smem>>
    %1072 = vector.broadcast %1071 : f32 to vector<8x8xf32>
    %1073 = arith.mulf %1072, %1070 : vector<8x8xf32>
    %1074 = arith.addf %1068, %1073 : vector<8x8xf32>
    %c0_716 = arith.constant 0 : index
    %c76_717 = arith.constant 76 : index
    %c1_718 = arith.constant 1 : index
    %c0_719 = arith.constant 0 : index
    %1075 = vector.load %arg1[%c0_716, %c76_717, %c1_718, %c0_719] : memref<1x147x10x10xf32, #tpu.memory_space<vmem>>, vector<1x1x8x8xf32>
    %1076 = vector.shape_cast %1075 : vector<1x1x8x8xf32> to vector<8x8xf32>
    %c179 = arith.constant 179 : index
    %1077 = memref.load %arg2[%c179] : memref<363xf32, #tpu.memory_space<smem>>
    %1078 = vector.broadcast %1077 : f32 to vector<8x8xf32>
    %1079 = arith.mulf %1078, %1076 : vector<8x8xf32>
    %1080 = arith.addf %1074, %1079 : vector<8x8xf32>
    %c0_720 = arith.constant 0 : index
    %c71_721 = arith.constant 71 : index
    %c1_722 = arith.constant 1 : index
    %c1_723 = arith.constant 1 : index
    %1081 = vector.load %arg1[%c0_720, %c71_721, %c1_722, %c1_723] : memref<1x147x10x10xf32, #tpu.memory_space<vmem>>, vector<1x1x8x8xf32>
    %1082 = vector.shape_cast %1081 : vector<1x1x8x8xf32> to vector<8x8xf32>
    %c180 = arith.constant 180 : index
    %1083 = memref.load %arg2[%c180] : memref<363xf32, #tpu.memory_space<smem>>
    %1084 = vector.broadcast %1083 : f32 to vector<8x8xf32>
    %1085 = arith.mulf %1084, %1082 : vector<8x8xf32>
    %1086 = arith.addf %1080, %1085 : vector<8x8xf32>
    %c0_724 = arith.constant 0 : index
    %c73_725 = arith.constant 73 : index
    %c1_726 = arith.constant 1 : index
    %c1_727 = arith.constant 1 : index
    %1087 = vector.load %arg1[%c0_724, %c73_725, %c1_726, %c1_727] : memref<1x147x10x10xf32, #tpu.memory_space<vmem>>, vector<1x1x8x8xf32>
    %1088 = vector.shape_cast %1087 : vector<1x1x8x8xf32> to vector<8x8xf32>
    %c181 = arith.constant 181 : index
    %1089 = memref.load %arg2[%c181] : memref<363xf32, #tpu.memory_space<smem>>
    %1090 = vector.broadcast %1089 : f32 to vector<8x8xf32>
    %1091 = arith.mulf %1090, %1088 : vector<8x8xf32>
    %1092 = arith.addf %1086, %1091 : vector<8x8xf32>
    %c0_728 = arith.constant 0 : index
    %c75_729 = arith.constant 75 : index
    %c1_730 = arith.constant 1 : index
    %c1_731 = arith.constant 1 : index
    %1093 = vector.load %arg1[%c0_728, %c75_729, %c1_730, %c1_731] : memref<1x147x10x10xf32, #tpu.memory_space<vmem>>, vector<1x1x8x8xf32>
    %1094 = vector.shape_cast %1093 : vector<1x1x8x8xf32> to vector<8x8xf32>
    %c182 = arith.constant 182 : index
    %1095 = memref.load %arg2[%c182] : memref<363xf32, #tpu.memory_space<smem>>
    %1096 = vector.broadcast %1095 : f32 to vector<8x8xf32>
    %1097 = arith.mulf %1096, %1094 : vector<8x8xf32>
    %1098 = arith.addf %1092, %1097 : vector<8x8xf32>
    %c0_732 = arith.constant 0 : index
    %c70_733 = arith.constant 70 : index
    %c1_734 = arith.constant 1 : index
    %c2_735 = arith.constant 2 : index
    %1099 = vector.load %arg1[%c0_732, %c70_733, %c1_734, %c2_735] : memref<1x147x10x10xf32, #tpu.memory_space<vmem>>, vector<1x1x8x8xf32>
    %1100 = vector.shape_cast %1099 : vector<1x1x8x8xf32> to vector<8x8xf32>
    %c183 = arith.constant 183 : index
    %1101 = memref.load %arg2[%c183] : memref<363xf32, #tpu.memory_space<smem>>
    %1102 = vector.broadcast %1101 : f32 to vector<8x8xf32>
    %1103 = arith.mulf %1102, %1100 : vector<8x8xf32>
    %1104 = arith.addf %1098, %1103 : vector<8x8xf32>
    %c0_736 = arith.constant 0 : index
    %c72_737 = arith.constant 72 : index
    %c1_738 = arith.constant 1 : index
    %c2_739 = arith.constant 2 : index
    %1105 = vector.load %arg1[%c0_736, %c72_737, %c1_738, %c2_739] : memref<1x147x10x10xf32, #tpu.memory_space<vmem>>, vector<1x1x8x8xf32>
    %1106 = vector.shape_cast %1105 : vector<1x1x8x8xf32> to vector<8x8xf32>
    %c184 = arith.constant 184 : index
    %1107 = memref.load %arg2[%c184] : memref<363xf32, #tpu.memory_space<smem>>
    %1108 = vector.broadcast %1107 : f32 to vector<8x8xf32>
    %1109 = arith.mulf %1108, %1106 : vector<8x8xf32>
    %1110 = arith.addf %1104, %1109 : vector<8x8xf32>
    %c0_740 = arith.constant 0 : index
    %c74_741 = arith.constant 74 : index
    %c1_742 = arith.constant 1 : index
    %c2_743 = arith.constant 2 : index
    %1111 = vector.load %arg1[%c0_740, %c74_741, %c1_742, %c2_743] : memref<1x147x10x10xf32, #tpu.memory_space<vmem>>, vector<1x1x8x8xf32>
    %1112 = vector.shape_cast %1111 : vector<1x1x8x8xf32> to vector<8x8xf32>
    %c185 = arith.constant 185 : index
    %1113 = memref.load %arg2[%c185] : memref<363xf32, #tpu.memory_space<smem>>
    %1114 = vector.broadcast %1113 : f32 to vector<8x8xf32>
    %1115 = arith.mulf %1114, %1112 : vector<8x8xf32>
    %1116 = arith.addf %1110, %1115 : vector<8x8xf32>
    %c0_744 = arith.constant 0 : index
    %c76_745 = arith.constant 76 : index
    %c1_746 = arith.constant 1 : index
    %c2_747 = arith.constant 2 : index
    %1117 = vector.load %arg1[%c0_744, %c76_745, %c1_746, %c2_747] : memref<1x147x10x10xf32, #tpu.memory_space<vmem>>, vector<1x1x8x8xf32>
    %1118 = vector.shape_cast %1117 : vector<1x1x8x8xf32> to vector<8x8xf32>
    %c186 = arith.constant 186 : index
    %1119 = memref.load %arg2[%c186] : memref<363xf32, #tpu.memory_space<smem>>
    %1120 = vector.broadcast %1119 : f32 to vector<8x8xf32>
    %1121 = arith.mulf %1120, %1118 : vector<8x8xf32>
    %1122 = arith.addf %1116, %1121 : vector<8x8xf32>
    %c0_748 = arith.constant 0 : index
    %c84_749 = arith.constant 84 : index
    %c1_750 = arith.constant 1 : index
    %c0_751 = arith.constant 0 : index
    %1123 = vector.load %arg1[%c0_748, %c84_749, %c1_750, %c0_751] : memref<1x147x10x10xf32, #tpu.memory_space<vmem>>, vector<1x1x8x8xf32>
    %1124 = vector.shape_cast %1123 : vector<1x1x8x8xf32> to vector<8x8xf32>
    %c187 = arith.constant 187 : index
    %1125 = memref.load %arg2[%c187] : memref<363xf32, #tpu.memory_space<smem>>
    %1126 = vector.broadcast %1125 : f32 to vector<8x8xf32>
    %1127 = arith.mulf %1126, %1124 : vector<8x8xf32>
    %1128 = arith.addf %1122, %1127 : vector<8x8xf32>
    %c0_752 = arith.constant 0 : index
    %c86_753 = arith.constant 86 : index
    %c1_754 = arith.constant 1 : index
    %c0_755 = arith.constant 0 : index
    %1129 = vector.load %arg1[%c0_752, %c86_753, %c1_754, %c0_755] : memref<1x147x10x10xf32, #tpu.memory_space<vmem>>, vector<1x1x8x8xf32>
    %1130 = vector.shape_cast %1129 : vector<1x1x8x8xf32> to vector<8x8xf32>
    %c188 = arith.constant 188 : index
    %1131 = memref.load %arg2[%c188] : memref<363xf32, #tpu.memory_space<smem>>
    %1132 = vector.broadcast %1131 : f32 to vector<8x8xf32>
    %1133 = arith.mulf %1132, %1130 : vector<8x8xf32>
    %1134 = arith.addf %1128, %1133 : vector<8x8xf32>
    %c0_756 = arith.constant 0 : index
    %c88_757 = arith.constant 88 : index
    %c1_758 = arith.constant 1 : index
    %c0_759 = arith.constant 0 : index
    %1135 = vector.load %arg1[%c0_756, %c88_757, %c1_758, %c0_759] : memref<1x147x10x10xf32, #tpu.memory_space<vmem>>, vector<1x1x8x8xf32>
    %1136 = vector.shape_cast %1135 : vector<1x1x8x8xf32> to vector<8x8xf32>
    %c189 = arith.constant 189 : index
    %1137 = memref.load %arg2[%c189] : memref<363xf32, #tpu.memory_space<smem>>
    %1138 = vector.broadcast %1137 : f32 to vector<8x8xf32>
    %1139 = arith.mulf %1138, %1136 : vector<8x8xf32>
    %1140 = arith.addf %1134, %1139 : vector<8x8xf32>
    %c0_760 = arith.constant 0 : index
    %c90_761 = arith.constant 90 : index
    %c1_762 = arith.constant 1 : index
    %c0_763 = arith.constant 0 : index
    %1141 = vector.load %arg1[%c0_760, %c90_761, %c1_762, %c0_763] : memref<1x147x10x10xf32, #tpu.memory_space<vmem>>, vector<1x1x8x8xf32>
    %1142 = vector.shape_cast %1141 : vector<1x1x8x8xf32> to vector<8x8xf32>
    %c190 = arith.constant 190 : index
    %1143 = memref.load %arg2[%c190] : memref<363xf32, #tpu.memory_space<smem>>
    %1144 = vector.broadcast %1143 : f32 to vector<8x8xf32>
    %1145 = arith.mulf %1144, %1142 : vector<8x8xf32>
    %1146 = arith.addf %1140, %1145 : vector<8x8xf32>
    %c0_764 = arith.constant 0 : index
    %c85_765 = arith.constant 85 : index
    %c1_766 = arith.constant 1 : index
    %c1_767 = arith.constant 1 : index
    %1147 = vector.load %arg1[%c0_764, %c85_765, %c1_766, %c1_767] : memref<1x147x10x10xf32, #tpu.memory_space<vmem>>, vector<1x1x8x8xf32>
    %1148 = vector.shape_cast %1147 : vector<1x1x8x8xf32> to vector<8x8xf32>
    %c191 = arith.constant 191 : index
    %1149 = memref.load %arg2[%c191] : memref<363xf32, #tpu.memory_space<smem>>
    %1150 = vector.broadcast %1149 : f32 to vector<8x8xf32>
    %1151 = arith.mulf %1150, %1148 : vector<8x8xf32>
    %1152 = arith.addf %1146, %1151 : vector<8x8xf32>
    %c0_768 = arith.constant 0 : index
    %c87_769 = arith.constant 87 : index
    %c1_770 = arith.constant 1 : index
    %c1_771 = arith.constant 1 : index
    %1153 = vector.load %arg1[%c0_768, %c87_769, %c1_770, %c1_771] : memref<1x147x10x10xf32, #tpu.memory_space<vmem>>, vector<1x1x8x8xf32>
    %1154 = vector.shape_cast %1153 : vector<1x1x8x8xf32> to vector<8x8xf32>
    %c192 = arith.constant 192 : index
    %1155 = memref.load %arg2[%c192] : memref<363xf32, #tpu.memory_space<smem>>
    %1156 = vector.broadcast %1155 : f32 to vector<8x8xf32>
    %1157 = arith.mulf %1156, %1154 : vector<8x8xf32>
    %1158 = arith.addf %1152, %1157 : vector<8x8xf32>
    %c0_772 = arith.constant 0 : index
    %c89_773 = arith.constant 89 : index
    %c1_774 = arith.constant 1 : index
    %c1_775 = arith.constant 1 : index
    %1159 = vector.load %arg1[%c0_772, %c89_773, %c1_774, %c1_775] : memref<1x147x10x10xf32, #tpu.memory_space<vmem>>, vector<1x1x8x8xf32>
    %1160 = vector.shape_cast %1159 : vector<1x1x8x8xf32> to vector<8x8xf32>
    %c193 = arith.constant 193 : index
    %1161 = memref.load %arg2[%c193] : memref<363xf32, #tpu.memory_space<smem>>
    %1162 = vector.broadcast %1161 : f32 to vector<8x8xf32>
    %1163 = arith.mulf %1162, %1160 : vector<8x8xf32>
    %1164 = arith.addf %1158, %1163 : vector<8x8xf32>
    %c0_776 = arith.constant 0 : index
    %c84_777 = arith.constant 84 : index
    %c1_778 = arith.constant 1 : index
    %c2_779 = arith.constant 2 : index
    %1165 = vector.load %arg1[%c0_776, %c84_777, %c1_778, %c2_779] : memref<1x147x10x10xf32, #tpu.memory_space<vmem>>, vector<1x1x8x8xf32>
    %1166 = vector.shape_cast %1165 : vector<1x1x8x8xf32> to vector<8x8xf32>
    %c194 = arith.constant 194 : index
    %1167 = memref.load %arg2[%c194] : memref<363xf32, #tpu.memory_space<smem>>
    %1168 = vector.broadcast %1167 : f32 to vector<8x8xf32>
    %1169 = arith.mulf %1168, %1166 : vector<8x8xf32>
    %1170 = arith.addf %1164, %1169 : vector<8x8xf32>
    %c0_780 = arith.constant 0 : index
    %c86_781 = arith.constant 86 : index
    %c1_782 = arith.constant 1 : index
    %c2_783 = arith.constant 2 : index
    %1171 = vector.load %arg1[%c0_780, %c86_781, %c1_782, %c2_783] : memref<1x147x10x10xf32, #tpu.memory_space<vmem>>, vector<1x1x8x8xf32>
    %1172 = vector.shape_cast %1171 : vector<1x1x8x8xf32> to vector<8x8xf32>
    %c195 = arith.constant 195 : index
    %1173 = memref.load %arg2[%c195] : memref<363xf32, #tpu.memory_space<smem>>
    %1174 = vector.broadcast %1173 : f32 to vector<8x8xf32>
    %1175 = arith.mulf %1174, %1172 : vector<8x8xf32>
    %1176 = arith.addf %1170, %1175 : vector<8x8xf32>
    %c0_784 = arith.constant 0 : index
    %c88_785 = arith.constant 88 : index
    %c1_786 = arith.constant 1 : index
    %c2_787 = arith.constant 2 : index
    %1177 = vector.load %arg1[%c0_784, %c88_785, %c1_786, %c2_787] : memref<1x147x10x10xf32, #tpu.memory_space<vmem>>, vector<1x1x8x8xf32>
    %1178 = vector.shape_cast %1177 : vector<1x1x8x8xf32> to vector<8x8xf32>
    %c196 = arith.constant 196 : index
    %1179 = memref.load %arg2[%c196] : memref<363xf32, #tpu.memory_space<smem>>
    %1180 = vector.broadcast %1179 : f32 to vector<8x8xf32>
    %1181 = arith.mulf %1180, %1178 : vector<8x8xf32>
    %1182 = arith.addf %1176, %1181 : vector<8x8xf32>
    %c0_788 = arith.constant 0 : index
    %c90_789 = arith.constant 90 : index
    %c1_790 = arith.constant 1 : index
    %c2_791 = arith.constant 2 : index
    %1183 = vector.load %arg1[%c0_788, %c90_789, %c1_790, %c2_791] : memref<1x147x10x10xf32, #tpu.memory_space<vmem>>, vector<1x1x8x8xf32>
    %1184 = vector.shape_cast %1183 : vector<1x1x8x8xf32> to vector<8x8xf32>
    %c197 = arith.constant 197 : index
    %1185 = memref.load %arg2[%c197] : memref<363xf32, #tpu.memory_space<smem>>
    %1186 = vector.broadcast %1185 : f32 to vector<8x8xf32>
    %1187 = arith.mulf %1186, %1184 : vector<8x8xf32>
    %1188 = arith.addf %1182, %1187 : vector<8x8xf32>
    %c0_792 = arith.constant 0 : index
    %c49_793 = arith.constant 49 : index
    %c2_794 = arith.constant 2 : index
    %c0_795 = arith.constant 0 : index
    %1189 = vector.load %arg1[%c0_792, %c49_793, %c2_794, %c0_795] : memref<1x147x10x10xf32, #tpu.memory_space<vmem>>, vector<1x1x8x8xf32>
    %1190 = vector.shape_cast %1189 : vector<1x1x8x8xf32> to vector<8x8xf32>
    %c198 = arith.constant 198 : index
    %1191 = memref.load %arg2[%c198] : memref<363xf32, #tpu.memory_space<smem>>
    %1192 = vector.broadcast %1191 : f32 to vector<8x8xf32>
    %1193 = arith.mulf %1192, %1190 : vector<8x8xf32>
    %1194 = arith.addf %1188, %1193 : vector<8x8xf32>
    %c0_796 = arith.constant 0 : index
    %c51_797 = arith.constant 51 : index
    %c2_798 = arith.constant 2 : index
    %c0_799 = arith.constant 0 : index
    %1195 = vector.load %arg1[%c0_796, %c51_797, %c2_798, %c0_799] : memref<1x147x10x10xf32, #tpu.memory_space<vmem>>, vector<1x1x8x8xf32>
    %1196 = vector.shape_cast %1195 : vector<1x1x8x8xf32> to vector<8x8xf32>
    %c199 = arith.constant 199 : index
    %1197 = memref.load %arg2[%c199] : memref<363xf32, #tpu.memory_space<smem>>
    %1198 = vector.broadcast %1197 : f32 to vector<8x8xf32>
    %1199 = arith.mulf %1198, %1196 : vector<8x8xf32>
    %1200 = arith.addf %1194, %1199 : vector<8x8xf32>
    %c0_800 = arith.constant 0 : index
    %c53_801 = arith.constant 53 : index
    %c2_802 = arith.constant 2 : index
    %c0_803 = arith.constant 0 : index
    %1201 = vector.load %arg1[%c0_800, %c53_801, %c2_802, %c0_803] : memref<1x147x10x10xf32, #tpu.memory_space<vmem>>, vector<1x1x8x8xf32>
    %1202 = vector.shape_cast %1201 : vector<1x1x8x8xf32> to vector<8x8xf32>
    %c200 = arith.constant 200 : index
    %1203 = memref.load %arg2[%c200] : memref<363xf32, #tpu.memory_space<smem>>
    %1204 = vector.broadcast %1203 : f32 to vector<8x8xf32>
    %1205 = arith.mulf %1204, %1202 : vector<8x8xf32>
    %1206 = arith.addf %1200, %1205 : vector<8x8xf32>
    %c0_804 = arith.constant 0 : index
    %c55_805 = arith.constant 55 : index
    %c2_806 = arith.constant 2 : index
    %c0_807 = arith.constant 0 : index
    %1207 = vector.load %arg1[%c0_804, %c55_805, %c2_806, %c0_807] : memref<1x147x10x10xf32, #tpu.memory_space<vmem>>, vector<1x1x8x8xf32>
    %1208 = vector.shape_cast %1207 : vector<1x1x8x8xf32> to vector<8x8xf32>
    %c201 = arith.constant 201 : index
    %1209 = memref.load %arg2[%c201] : memref<363xf32, #tpu.memory_space<smem>>
    %1210 = vector.broadcast %1209 : f32 to vector<8x8xf32>
    %1211 = arith.mulf %1210, %1208 : vector<8x8xf32>
    %1212 = arith.addf %1206, %1211 : vector<8x8xf32>
    %c0_808 = arith.constant 0 : index
    %c50_809 = arith.constant 50 : index
    %c2_810 = arith.constant 2 : index
    %c1_811 = arith.constant 1 : index
    %1213 = vector.load %arg1[%c0_808, %c50_809, %c2_810, %c1_811] : memref<1x147x10x10xf32, #tpu.memory_space<vmem>>, vector<1x1x8x8xf32>
    %1214 = vector.shape_cast %1213 : vector<1x1x8x8xf32> to vector<8x8xf32>
    %c202 = arith.constant 202 : index
    %1215 = memref.load %arg2[%c202] : memref<363xf32, #tpu.memory_space<smem>>
    %1216 = vector.broadcast %1215 : f32 to vector<8x8xf32>
    %1217 = arith.mulf %1216, %1214 : vector<8x8xf32>
    %1218 = arith.addf %1212, %1217 : vector<8x8xf32>
    %c0_812 = arith.constant 0 : index
    %c52_813 = arith.constant 52 : index
    %c2_814 = arith.constant 2 : index
    %c1_815 = arith.constant 1 : index
    %1219 = vector.load %arg1[%c0_812, %c52_813, %c2_814, %c1_815] : memref<1x147x10x10xf32, #tpu.memory_space<vmem>>, vector<1x1x8x8xf32>
    %1220 = vector.shape_cast %1219 : vector<1x1x8x8xf32> to vector<8x8xf32>
    %c203 = arith.constant 203 : index
    %1221 = memref.load %arg2[%c203] : memref<363xf32, #tpu.memory_space<smem>>
    %1222 = vector.broadcast %1221 : f32 to vector<8x8xf32>
    %1223 = arith.mulf %1222, %1220 : vector<8x8xf32>
    %1224 = arith.addf %1218, %1223 : vector<8x8xf32>
    %c0_816 = arith.constant 0 : index
    %c54_817 = arith.constant 54 : index
    %c2_818 = arith.constant 2 : index
    %c1_819 = arith.constant 1 : index
    %1225 = vector.load %arg1[%c0_816, %c54_817, %c2_818, %c1_819] : memref<1x147x10x10xf32, #tpu.memory_space<vmem>>, vector<1x1x8x8xf32>
    %1226 = vector.shape_cast %1225 : vector<1x1x8x8xf32> to vector<8x8xf32>
    %c204 = arith.constant 204 : index
    %1227 = memref.load %arg2[%c204] : memref<363xf32, #tpu.memory_space<smem>>
    %1228 = vector.broadcast %1227 : f32 to vector<8x8xf32>
    %1229 = arith.mulf %1228, %1226 : vector<8x8xf32>
    %1230 = arith.addf %1224, %1229 : vector<8x8xf32>
    %c0_820 = arith.constant 0 : index
    %c49_821 = arith.constant 49 : index
    %c2_822 = arith.constant 2 : index
    %c2_823 = arith.constant 2 : index
    %1231 = vector.load %arg1[%c0_820, %c49_821, %c2_822, %c2_823] : memref<1x147x10x10xf32, #tpu.memory_space<vmem>>, vector<1x1x8x8xf32>
    %1232 = vector.shape_cast %1231 : vector<1x1x8x8xf32> to vector<8x8xf32>
    %c205 = arith.constant 205 : index
    %1233 = memref.load %arg2[%c205] : memref<363xf32, #tpu.memory_space<smem>>
    %1234 = vector.broadcast %1233 : f32 to vector<8x8xf32>
    %1235 = arith.mulf %1234, %1232 : vector<8x8xf32>
    %1236 = arith.addf %1230, %1235 : vector<8x8xf32>
    %c0_824 = arith.constant 0 : index
    %c51_825 = arith.constant 51 : index
    %c2_826 = arith.constant 2 : index
    %c2_827 = arith.constant 2 : index
    %1237 = vector.load %arg1[%c0_824, %c51_825, %c2_826, %c2_827] : memref<1x147x10x10xf32, #tpu.memory_space<vmem>>, vector<1x1x8x8xf32>
    %1238 = vector.shape_cast %1237 : vector<1x1x8x8xf32> to vector<8x8xf32>
    %c206 = arith.constant 206 : index
    %1239 = memref.load %arg2[%c206] : memref<363xf32, #tpu.memory_space<smem>>
    %1240 = vector.broadcast %1239 : f32 to vector<8x8xf32>
    %1241 = arith.mulf %1240, %1238 : vector<8x8xf32>
    %1242 = arith.addf %1236, %1241 : vector<8x8xf32>
    %c0_828 = arith.constant 0 : index
    %c53_829 = arith.constant 53 : index
    %c2_830 = arith.constant 2 : index
    %c2_831 = arith.constant 2 : index
    %1243 = vector.load %arg1[%c0_828, %c53_829, %c2_830, %c2_831] : memref<1x147x10x10xf32, #tpu.memory_space<vmem>>, vector<1x1x8x8xf32>
    %1244 = vector.shape_cast %1243 : vector<1x1x8x8xf32> to vector<8x8xf32>
    %c207 = arith.constant 207 : index
    %1245 = memref.load %arg2[%c207] : memref<363xf32, #tpu.memory_space<smem>>
    %1246 = vector.broadcast %1245 : f32 to vector<8x8xf32>
    %1247 = arith.mulf %1246, %1244 : vector<8x8xf32>
    %1248 = arith.addf %1242, %1247 : vector<8x8xf32>
    %c0_832 = arith.constant 0 : index
    %c55_833 = arith.constant 55 : index
    %c2_834 = arith.constant 2 : index
    %c2_835 = arith.constant 2 : index
    %1249 = vector.load %arg1[%c0_832, %c55_833, %c2_834, %c2_835] : memref<1x147x10x10xf32, #tpu.memory_space<vmem>>, vector<1x1x8x8xf32>
    %1250 = vector.shape_cast %1249 : vector<1x1x8x8xf32> to vector<8x8xf32>
    %c208 = arith.constant 208 : index
    %1251 = memref.load %arg2[%c208] : memref<363xf32, #tpu.memory_space<smem>>
    %1252 = vector.broadcast %1251 : f32 to vector<8x8xf32>
    %1253 = arith.mulf %1252, %1250 : vector<8x8xf32>
    %1254 = arith.addf %1248, %1253 : vector<8x8xf32>
    %c0_836 = arith.constant 0 : index
    %c63_837 = arith.constant 63 : index
    %c2_838 = arith.constant 2 : index
    %c0_839 = arith.constant 0 : index
    %1255 = vector.load %arg1[%c0_836, %c63_837, %c2_838, %c0_839] : memref<1x147x10x10xf32, #tpu.memory_space<vmem>>, vector<1x1x8x8xf32>
    %1256 = vector.shape_cast %1255 : vector<1x1x8x8xf32> to vector<8x8xf32>
    %c209 = arith.constant 209 : index
    %1257 = memref.load %arg2[%c209] : memref<363xf32, #tpu.memory_space<smem>>
    %1258 = vector.broadcast %1257 : f32 to vector<8x8xf32>
    %1259 = arith.mulf %1258, %1256 : vector<8x8xf32>
    %1260 = arith.addf %1254, %1259 : vector<8x8xf32>
    %c0_840 = arith.constant 0 : index
    %c65_841 = arith.constant 65 : index
    %c2_842 = arith.constant 2 : index
    %c0_843 = arith.constant 0 : index
    %1261 = vector.load %arg1[%c0_840, %c65_841, %c2_842, %c0_843] : memref<1x147x10x10xf32, #tpu.memory_space<vmem>>, vector<1x1x8x8xf32>
    %1262 = vector.shape_cast %1261 : vector<1x1x8x8xf32> to vector<8x8xf32>
    %c210 = arith.constant 210 : index
    %1263 = memref.load %arg2[%c210] : memref<363xf32, #tpu.memory_space<smem>>
    %1264 = vector.broadcast %1263 : f32 to vector<8x8xf32>
    %1265 = arith.mulf %1264, %1262 : vector<8x8xf32>
    %1266 = arith.addf %1260, %1265 : vector<8x8xf32>
    %c0_844 = arith.constant 0 : index
    %c67_845 = arith.constant 67 : index
    %c2_846 = arith.constant 2 : index
    %c0_847 = arith.constant 0 : index
    %1267 = vector.load %arg1[%c0_844, %c67_845, %c2_846, %c0_847] : memref<1x147x10x10xf32, #tpu.memory_space<vmem>>, vector<1x1x8x8xf32>
    %1268 = vector.shape_cast %1267 : vector<1x1x8x8xf32> to vector<8x8xf32>
    %c211 = arith.constant 211 : index
    %1269 = memref.load %arg2[%c211] : memref<363xf32, #tpu.memory_space<smem>>
    %1270 = vector.broadcast %1269 : f32 to vector<8x8xf32>
    %1271 = arith.mulf %1270, %1268 : vector<8x8xf32>
    %1272 = arith.addf %1266, %1271 : vector<8x8xf32>
    %c0_848 = arith.constant 0 : index
    %c69_849 = arith.constant 69 : index
    %c2_850 = arith.constant 2 : index
    %c0_851 = arith.constant 0 : index
    %1273 = vector.load %arg1[%c0_848, %c69_849, %c2_850, %c0_851] : memref<1x147x10x10xf32, #tpu.memory_space<vmem>>, vector<1x1x8x8xf32>
    %1274 = vector.shape_cast %1273 : vector<1x1x8x8xf32> to vector<8x8xf32>
    %c212 = arith.constant 212 : index
    %1275 = memref.load %arg2[%c212] : memref<363xf32, #tpu.memory_space<smem>>
    %1276 = vector.broadcast %1275 : f32 to vector<8x8xf32>
    %1277 = arith.mulf %1276, %1274 : vector<8x8xf32>
    %1278 = arith.addf %1272, %1277 : vector<8x8xf32>
    %c0_852 = arith.constant 0 : index
    %c64_853 = arith.constant 64 : index
    %c2_854 = arith.constant 2 : index
    %c1_855 = arith.constant 1 : index
    %1279 = vector.load %arg1[%c0_852, %c64_853, %c2_854, %c1_855] : memref<1x147x10x10xf32, #tpu.memory_space<vmem>>, vector<1x1x8x8xf32>
    %1280 = vector.shape_cast %1279 : vector<1x1x8x8xf32> to vector<8x8xf32>
    %c213 = arith.constant 213 : index
    %1281 = memref.load %arg2[%c213] : memref<363xf32, #tpu.memory_space<smem>>
    %1282 = vector.broadcast %1281 : f32 to vector<8x8xf32>
    %1283 = arith.mulf %1282, %1280 : vector<8x8xf32>
    %1284 = arith.addf %1278, %1283 : vector<8x8xf32>
    %c0_856 = arith.constant 0 : index
    %c66_857 = arith.constant 66 : index
    %c2_858 = arith.constant 2 : index
    %c1_859 = arith.constant 1 : index
    %1285 = vector.load %arg1[%c0_856, %c66_857, %c2_858, %c1_859] : memref<1x147x10x10xf32, #tpu.memory_space<vmem>>, vector<1x1x8x8xf32>
    %1286 = vector.shape_cast %1285 : vector<1x1x8x8xf32> to vector<8x8xf32>
    %c214 = arith.constant 214 : index
    %1287 = memref.load %arg2[%c214] : memref<363xf32, #tpu.memory_space<smem>>
    %1288 = vector.broadcast %1287 : f32 to vector<8x8xf32>
    %1289 = arith.mulf %1288, %1286 : vector<8x8xf32>
    %1290 = arith.addf %1284, %1289 : vector<8x8xf32>
    %c0_860 = arith.constant 0 : index
    %c68_861 = arith.constant 68 : index
    %c2_862 = arith.constant 2 : index
    %c1_863 = arith.constant 1 : index
    %1291 = vector.load %arg1[%c0_860, %c68_861, %c2_862, %c1_863] : memref<1x147x10x10xf32, #tpu.memory_space<vmem>>, vector<1x1x8x8xf32>
    %1292 = vector.shape_cast %1291 : vector<1x1x8x8xf32> to vector<8x8xf32>
    %c215 = arith.constant 215 : index
    %1293 = memref.load %arg2[%c215] : memref<363xf32, #tpu.memory_space<smem>>
    %1294 = vector.broadcast %1293 : f32 to vector<8x8xf32>
    %1295 = arith.mulf %1294, %1292 : vector<8x8xf32>
    %1296 = arith.addf %1290, %1295 : vector<8x8xf32>
    %c0_864 = arith.constant 0 : index
    %c63_865 = arith.constant 63 : index
    %c2_866 = arith.constant 2 : index
    %c2_867 = arith.constant 2 : index
    %1297 = vector.load %arg1[%c0_864, %c63_865, %c2_866, %c2_867] : memref<1x147x10x10xf32, #tpu.memory_space<vmem>>, vector<1x1x8x8xf32>
    %1298 = vector.shape_cast %1297 : vector<1x1x8x8xf32> to vector<8x8xf32>
    %c216 = arith.constant 216 : index
    %1299 = memref.load %arg2[%c216] : memref<363xf32, #tpu.memory_space<smem>>
    %1300 = vector.broadcast %1299 : f32 to vector<8x8xf32>
    %1301 = arith.mulf %1300, %1298 : vector<8x8xf32>
    %1302 = arith.addf %1296, %1301 : vector<8x8xf32>
    %c0_868 = arith.constant 0 : index
    %c65_869 = arith.constant 65 : index
    %c2_870 = arith.constant 2 : index
    %c2_871 = arith.constant 2 : index
    %1303 = vector.load %arg1[%c0_868, %c65_869, %c2_870, %c2_871] : memref<1x147x10x10xf32, #tpu.memory_space<vmem>>, vector<1x1x8x8xf32>
    %1304 = vector.shape_cast %1303 : vector<1x1x8x8xf32> to vector<8x8xf32>
    %c217 = arith.constant 217 : index
    %1305 = memref.load %arg2[%c217] : memref<363xf32, #tpu.memory_space<smem>>
    %1306 = vector.broadcast %1305 : f32 to vector<8x8xf32>
    %1307 = arith.mulf %1306, %1304 : vector<8x8xf32>
    %1308 = arith.addf %1302, %1307 : vector<8x8xf32>
    %c0_872 = arith.constant 0 : index
    %c67_873 = arith.constant 67 : index
    %c2_874 = arith.constant 2 : index
    %c2_875 = arith.constant 2 : index
    %1309 = vector.load %arg1[%c0_872, %c67_873, %c2_874, %c2_875] : memref<1x147x10x10xf32, #tpu.memory_space<vmem>>, vector<1x1x8x8xf32>
    %1310 = vector.shape_cast %1309 : vector<1x1x8x8xf32> to vector<8x8xf32>
    %c218 = arith.constant 218 : index
    %1311 = memref.load %arg2[%c218] : memref<363xf32, #tpu.memory_space<smem>>
    %1312 = vector.broadcast %1311 : f32 to vector<8x8xf32>
    %1313 = arith.mulf %1312, %1310 : vector<8x8xf32>
    %1314 = arith.addf %1308, %1313 : vector<8x8xf32>
    %c0_876 = arith.constant 0 : index
    %c69_877 = arith.constant 69 : index
    %c2_878 = arith.constant 2 : index
    %c2_879 = arith.constant 2 : index
    %1315 = vector.load %arg1[%c0_876, %c69_877, %c2_878, %c2_879] : memref<1x147x10x10xf32, #tpu.memory_space<vmem>>, vector<1x1x8x8xf32>
    %1316 = vector.shape_cast %1315 : vector<1x1x8x8xf32> to vector<8x8xf32>
    %c219 = arith.constant 219 : index
    %1317 = memref.load %arg2[%c219] : memref<363xf32, #tpu.memory_space<smem>>
    %1318 = vector.broadcast %1317 : f32 to vector<8x8xf32>
    %1319 = arith.mulf %1318, %1316 : vector<8x8xf32>
    %1320 = arith.addf %1314, %1319 : vector<8x8xf32>
    %c0_880 = arith.constant 0 : index
    %c77_881 = arith.constant 77 : index
    %c2_882 = arith.constant 2 : index
    %c0_883 = arith.constant 0 : index
    %1321 = vector.load %arg1[%c0_880, %c77_881, %c2_882, %c0_883] : memref<1x147x10x10xf32, #tpu.memory_space<vmem>>, vector<1x1x8x8xf32>
    %1322 = vector.shape_cast %1321 : vector<1x1x8x8xf32> to vector<8x8xf32>
    %c220 = arith.constant 220 : index
    %1323 = memref.load %arg2[%c220] : memref<363xf32, #tpu.memory_space<smem>>
    %1324 = vector.broadcast %1323 : f32 to vector<8x8xf32>
    %1325 = arith.mulf %1324, %1322 : vector<8x8xf32>
    %1326 = arith.addf %1320, %1325 : vector<8x8xf32>
    %c0_884 = arith.constant 0 : index
    %c79_885 = arith.constant 79 : index
    %c2_886 = arith.constant 2 : index
    %c0_887 = arith.constant 0 : index
    %1327 = vector.load %arg1[%c0_884, %c79_885, %c2_886, %c0_887] : memref<1x147x10x10xf32, #tpu.memory_space<vmem>>, vector<1x1x8x8xf32>
    %1328 = vector.shape_cast %1327 : vector<1x1x8x8xf32> to vector<8x8xf32>
    %c221 = arith.constant 221 : index
    %1329 = memref.load %arg2[%c221] : memref<363xf32, #tpu.memory_space<smem>>
    %1330 = vector.broadcast %1329 : f32 to vector<8x8xf32>
    %1331 = arith.mulf %1330, %1328 : vector<8x8xf32>
    %1332 = arith.addf %1326, %1331 : vector<8x8xf32>
    %c0_888 = arith.constant 0 : index
    %c81_889 = arith.constant 81 : index
    %c2_890 = arith.constant 2 : index
    %c0_891 = arith.constant 0 : index
    %1333 = vector.load %arg1[%c0_888, %c81_889, %c2_890, %c0_891] : memref<1x147x10x10xf32, #tpu.memory_space<vmem>>, vector<1x1x8x8xf32>
    %1334 = vector.shape_cast %1333 : vector<1x1x8x8xf32> to vector<8x8xf32>
    %c222 = arith.constant 222 : index
    %1335 = memref.load %arg2[%c222] : memref<363xf32, #tpu.memory_space<smem>>
    %1336 = vector.broadcast %1335 : f32 to vector<8x8xf32>
    %1337 = arith.mulf %1336, %1334 : vector<8x8xf32>
    %1338 = arith.addf %1332, %1337 : vector<8x8xf32>
    %c0_892 = arith.constant 0 : index
    %c83_893 = arith.constant 83 : index
    %c2_894 = arith.constant 2 : index
    %c0_895 = arith.constant 0 : index
    %1339 = vector.load %arg1[%c0_892, %c83_893, %c2_894, %c0_895] : memref<1x147x10x10xf32, #tpu.memory_space<vmem>>, vector<1x1x8x8xf32>
    %1340 = vector.shape_cast %1339 : vector<1x1x8x8xf32> to vector<8x8xf32>
    %c223 = arith.constant 223 : index
    %1341 = memref.load %arg2[%c223] : memref<363xf32, #tpu.memory_space<smem>>
    %1342 = vector.broadcast %1341 : f32 to vector<8x8xf32>
    %1343 = arith.mulf %1342, %1340 : vector<8x8xf32>
    %1344 = arith.addf %1338, %1343 : vector<8x8xf32>
    %c0_896 = arith.constant 0 : index
    %c78_897 = arith.constant 78 : index
    %c2_898 = arith.constant 2 : index
    %c1_899 = arith.constant 1 : index
    %1345 = vector.load %arg1[%c0_896, %c78_897, %c2_898, %c1_899] : memref<1x147x10x10xf32, #tpu.memory_space<vmem>>, vector<1x1x8x8xf32>
    %1346 = vector.shape_cast %1345 : vector<1x1x8x8xf32> to vector<8x8xf32>
    %c224 = arith.constant 224 : index
    %1347 = memref.load %arg2[%c224] : memref<363xf32, #tpu.memory_space<smem>>
    %1348 = vector.broadcast %1347 : f32 to vector<8x8xf32>
    %1349 = arith.mulf %1348, %1346 : vector<8x8xf32>
    %1350 = arith.addf %1344, %1349 : vector<8x8xf32>
    %c0_900 = arith.constant 0 : index
    %c80_901 = arith.constant 80 : index
    %c2_902 = arith.constant 2 : index
    %c1_903 = arith.constant 1 : index
    %1351 = vector.load %arg1[%c0_900, %c80_901, %c2_902, %c1_903] : memref<1x147x10x10xf32, #tpu.memory_space<vmem>>, vector<1x1x8x8xf32>
    %1352 = vector.shape_cast %1351 : vector<1x1x8x8xf32> to vector<8x8xf32>
    %c225 = arith.constant 225 : index
    %1353 = memref.load %arg2[%c225] : memref<363xf32, #tpu.memory_space<smem>>
    %1354 = vector.broadcast %1353 : f32 to vector<8x8xf32>
    %1355 = arith.mulf %1354, %1352 : vector<8x8xf32>
    %1356 = arith.addf %1350, %1355 : vector<8x8xf32>
    %c0_904 = arith.constant 0 : index
    %c82_905 = arith.constant 82 : index
    %c2_906 = arith.constant 2 : index
    %c1_907 = arith.constant 1 : index
    %1357 = vector.load %arg1[%c0_904, %c82_905, %c2_906, %c1_907] : memref<1x147x10x10xf32, #tpu.memory_space<vmem>>, vector<1x1x8x8xf32>
    %1358 = vector.shape_cast %1357 : vector<1x1x8x8xf32> to vector<8x8xf32>
    %c226 = arith.constant 226 : index
    %1359 = memref.load %arg2[%c226] : memref<363xf32, #tpu.memory_space<smem>>
    %1360 = vector.broadcast %1359 : f32 to vector<8x8xf32>
    %1361 = arith.mulf %1360, %1358 : vector<8x8xf32>
    %1362 = arith.addf %1356, %1361 : vector<8x8xf32>
    %c0_908 = arith.constant 0 : index
    %c77_909 = arith.constant 77 : index
    %c2_910 = arith.constant 2 : index
    %c2_911 = arith.constant 2 : index
    %1363 = vector.load %arg1[%c0_908, %c77_909, %c2_910, %c2_911] : memref<1x147x10x10xf32, #tpu.memory_space<vmem>>, vector<1x1x8x8xf32>
    %1364 = vector.shape_cast %1363 : vector<1x1x8x8xf32> to vector<8x8xf32>
    %c227 = arith.constant 227 : index
    %1365 = memref.load %arg2[%c227] : memref<363xf32, #tpu.memory_space<smem>>
    %1366 = vector.broadcast %1365 : f32 to vector<8x8xf32>
    %1367 = arith.mulf %1366, %1364 : vector<8x8xf32>
    %1368 = arith.addf %1362, %1367 : vector<8x8xf32>
    %c0_912 = arith.constant 0 : index
    %c79_913 = arith.constant 79 : index
    %c2_914 = arith.constant 2 : index
    %c2_915 = arith.constant 2 : index
    %1369 = vector.load %arg1[%c0_912, %c79_913, %c2_914, %c2_915] : memref<1x147x10x10xf32, #tpu.memory_space<vmem>>, vector<1x1x8x8xf32>
    %1370 = vector.shape_cast %1369 : vector<1x1x8x8xf32> to vector<8x8xf32>
    %c228 = arith.constant 228 : index
    %1371 = memref.load %arg2[%c228] : memref<363xf32, #tpu.memory_space<smem>>
    %1372 = vector.broadcast %1371 : f32 to vector<8x8xf32>
    %1373 = arith.mulf %1372, %1370 : vector<8x8xf32>
    %1374 = arith.addf %1368, %1373 : vector<8x8xf32>
    %c0_916 = arith.constant 0 : index
    %c81_917 = arith.constant 81 : index
    %c2_918 = arith.constant 2 : index
    %c2_919 = arith.constant 2 : index
    %1375 = vector.load %arg1[%c0_916, %c81_917, %c2_918, %c2_919] : memref<1x147x10x10xf32, #tpu.memory_space<vmem>>, vector<1x1x8x8xf32>
    %1376 = vector.shape_cast %1375 : vector<1x1x8x8xf32> to vector<8x8xf32>
    %c229 = arith.constant 229 : index
    %1377 = memref.load %arg2[%c229] : memref<363xf32, #tpu.memory_space<smem>>
    %1378 = vector.broadcast %1377 : f32 to vector<8x8xf32>
    %1379 = arith.mulf %1378, %1376 : vector<8x8xf32>
    %1380 = arith.addf %1374, %1379 : vector<8x8xf32>
    %c0_920 = arith.constant 0 : index
    %c83_921 = arith.constant 83 : index
    %c2_922 = arith.constant 2 : index
    %c2_923 = arith.constant 2 : index
    %1381 = vector.load %arg1[%c0_920, %c83_921, %c2_922, %c2_923] : memref<1x147x10x10xf32, #tpu.memory_space<vmem>>, vector<1x1x8x8xf32>
    %1382 = vector.shape_cast %1381 : vector<1x1x8x8xf32> to vector<8x8xf32>
    %c230 = arith.constant 230 : index
    %1383 = memref.load %arg2[%c230] : memref<363xf32, #tpu.memory_space<smem>>
    %1384 = vector.broadcast %1383 : f32 to vector<8x8xf32>
    %1385 = arith.mulf %1384, %1382 : vector<8x8xf32>
    %1386 = arith.addf %1380, %1385 : vector<8x8xf32>
    %c0_924 = arith.constant 0 : index
    %c91_925 = arith.constant 91 : index
    %c2_926 = arith.constant 2 : index
    %c0_927 = arith.constant 0 : index
    %1387 = vector.load %arg1[%c0_924, %c91_925, %c2_926, %c0_927] : memref<1x147x10x10xf32, #tpu.memory_space<vmem>>, vector<1x1x8x8xf32>
    %1388 = vector.shape_cast %1387 : vector<1x1x8x8xf32> to vector<8x8xf32>
    %c231 = arith.constant 231 : index
    %1389 = memref.load %arg2[%c231] : memref<363xf32, #tpu.memory_space<smem>>
    %1390 = vector.broadcast %1389 : f32 to vector<8x8xf32>
    %1391 = arith.mulf %1390, %1388 : vector<8x8xf32>
    %1392 = arith.addf %1386, %1391 : vector<8x8xf32>
    %c0_928 = arith.constant 0 : index
    %c93_929 = arith.constant 93 : index
    %c2_930 = arith.constant 2 : index
    %c0_931 = arith.constant 0 : index
    %1393 = vector.load %arg1[%c0_928, %c93_929, %c2_930, %c0_931] : memref<1x147x10x10xf32, #tpu.memory_space<vmem>>, vector<1x1x8x8xf32>
    %1394 = vector.shape_cast %1393 : vector<1x1x8x8xf32> to vector<8x8xf32>
    %c232 = arith.constant 232 : index
    %1395 = memref.load %arg2[%c232] : memref<363xf32, #tpu.memory_space<smem>>
    %1396 = vector.broadcast %1395 : f32 to vector<8x8xf32>
    %1397 = arith.mulf %1396, %1394 : vector<8x8xf32>
    %1398 = arith.addf %1392, %1397 : vector<8x8xf32>
    %c0_932 = arith.constant 0 : index
    %c95_933 = arith.constant 95 : index
    %c2_934 = arith.constant 2 : index
    %c0_935 = arith.constant 0 : index
    %1399 = vector.load %arg1[%c0_932, %c95_933, %c2_934, %c0_935] : memref<1x147x10x10xf32, #tpu.memory_space<vmem>>, vector<1x1x8x8xf32>
    %1400 = vector.shape_cast %1399 : vector<1x1x8x8xf32> to vector<8x8xf32>
    %c233 = arith.constant 233 : index
    %1401 = memref.load %arg2[%c233] : memref<363xf32, #tpu.memory_space<smem>>
    %1402 = vector.broadcast %1401 : f32 to vector<8x8xf32>
    %1403 = arith.mulf %1402, %1400 : vector<8x8xf32>
    %1404 = arith.addf %1398, %1403 : vector<8x8xf32>
    %c0_936 = arith.constant 0 : index
    %c97_937 = arith.constant 97 : index
    %c2_938 = arith.constant 2 : index
    %c0_939 = arith.constant 0 : index
    %1405 = vector.load %arg1[%c0_936, %c97_937, %c2_938, %c0_939] : memref<1x147x10x10xf32, #tpu.memory_space<vmem>>, vector<1x1x8x8xf32>
    %1406 = vector.shape_cast %1405 : vector<1x1x8x8xf32> to vector<8x8xf32>
    %c234 = arith.constant 234 : index
    %1407 = memref.load %arg2[%c234] : memref<363xf32, #tpu.memory_space<smem>>
    %1408 = vector.broadcast %1407 : f32 to vector<8x8xf32>
    %1409 = arith.mulf %1408, %1406 : vector<8x8xf32>
    %1410 = arith.addf %1404, %1409 : vector<8x8xf32>
    %c0_940 = arith.constant 0 : index
    %c92_941 = arith.constant 92 : index
    %c2_942 = arith.constant 2 : index
    %c1_943 = arith.constant 1 : index
    %1411 = vector.load %arg1[%c0_940, %c92_941, %c2_942, %c1_943] : memref<1x147x10x10xf32, #tpu.memory_space<vmem>>, vector<1x1x8x8xf32>
    %1412 = vector.shape_cast %1411 : vector<1x1x8x8xf32> to vector<8x8xf32>
    %c235 = arith.constant 235 : index
    %1413 = memref.load %arg2[%c235] : memref<363xf32, #tpu.memory_space<smem>>
    %1414 = vector.broadcast %1413 : f32 to vector<8x8xf32>
    %1415 = arith.mulf %1414, %1412 : vector<8x8xf32>
    %1416 = arith.addf %1410, %1415 : vector<8x8xf32>
    %c0_944 = arith.constant 0 : index
    %c94_945 = arith.constant 94 : index
    %c2_946 = arith.constant 2 : index
    %c1_947 = arith.constant 1 : index
    %1417 = vector.load %arg1[%c0_944, %c94_945, %c2_946, %c1_947] : memref<1x147x10x10xf32, #tpu.memory_space<vmem>>, vector<1x1x8x8xf32>
    %1418 = vector.shape_cast %1417 : vector<1x1x8x8xf32> to vector<8x8xf32>
    %c236 = arith.constant 236 : index
    %1419 = memref.load %arg2[%c236] : memref<363xf32, #tpu.memory_space<smem>>
    %1420 = vector.broadcast %1419 : f32 to vector<8x8xf32>
    %1421 = arith.mulf %1420, %1418 : vector<8x8xf32>
    %1422 = arith.addf %1416, %1421 : vector<8x8xf32>
    %c0_948 = arith.constant 0 : index
    %c96_949 = arith.constant 96 : index
    %c2_950 = arith.constant 2 : index
    %c1_951 = arith.constant 1 : index
    %1423 = vector.load %arg1[%c0_948, %c96_949, %c2_950, %c1_951] : memref<1x147x10x10xf32, #tpu.memory_space<vmem>>, vector<1x1x8x8xf32>
    %1424 = vector.shape_cast %1423 : vector<1x1x8x8xf32> to vector<8x8xf32>
    %c237 = arith.constant 237 : index
    %1425 = memref.load %arg2[%c237] : memref<363xf32, #tpu.memory_space<smem>>
    %1426 = vector.broadcast %1425 : f32 to vector<8x8xf32>
    %1427 = arith.mulf %1426, %1424 : vector<8x8xf32>
    %1428 = arith.addf %1422, %1427 : vector<8x8xf32>
    %c0_952 = arith.constant 0 : index
    %c91_953 = arith.constant 91 : index
    %c2_954 = arith.constant 2 : index
    %c2_955 = arith.constant 2 : index
    %1429 = vector.load %arg1[%c0_952, %c91_953, %c2_954, %c2_955] : memref<1x147x10x10xf32, #tpu.memory_space<vmem>>, vector<1x1x8x8xf32>
    %1430 = vector.shape_cast %1429 : vector<1x1x8x8xf32> to vector<8x8xf32>
    %c238 = arith.constant 238 : index
    %1431 = memref.load %arg2[%c238] : memref<363xf32, #tpu.memory_space<smem>>
    %1432 = vector.broadcast %1431 : f32 to vector<8x8xf32>
    %1433 = arith.mulf %1432, %1430 : vector<8x8xf32>
    %1434 = arith.addf %1428, %1433 : vector<8x8xf32>
    %c0_956 = arith.constant 0 : index
    %c93_957 = arith.constant 93 : index
    %c2_958 = arith.constant 2 : index
    %c2_959 = arith.constant 2 : index
    %1435 = vector.load %arg1[%c0_956, %c93_957, %c2_958, %c2_959] : memref<1x147x10x10xf32, #tpu.memory_space<vmem>>, vector<1x1x8x8xf32>
    %1436 = vector.shape_cast %1435 : vector<1x1x8x8xf32> to vector<8x8xf32>
    %c239 = arith.constant 239 : index
    %1437 = memref.load %arg2[%c239] : memref<363xf32, #tpu.memory_space<smem>>
    %1438 = vector.broadcast %1437 : f32 to vector<8x8xf32>
    %1439 = arith.mulf %1438, %1436 : vector<8x8xf32>
    %1440 = arith.addf %1434, %1439 : vector<8x8xf32>
    %c0_960 = arith.constant 0 : index
    %c95_961 = arith.constant 95 : index
    %c2_962 = arith.constant 2 : index
    %c2_963 = arith.constant 2 : index
    %1441 = vector.load %arg1[%c0_960, %c95_961, %c2_962, %c2_963] : memref<1x147x10x10xf32, #tpu.memory_space<vmem>>, vector<1x1x8x8xf32>
    %1442 = vector.shape_cast %1441 : vector<1x1x8x8xf32> to vector<8x8xf32>
    %c240 = arith.constant 240 : index
    %1443 = memref.load %arg2[%c240] : memref<363xf32, #tpu.memory_space<smem>>
    %1444 = vector.broadcast %1443 : f32 to vector<8x8xf32>
    %1445 = arith.mulf %1444, %1442 : vector<8x8xf32>
    %1446 = arith.addf %1440, %1445 : vector<8x8xf32>
    %c0_964 = arith.constant 0 : index
    %c97_965 = arith.constant 97 : index
    %c2_966 = arith.constant 2 : index
    %c2_967 = arith.constant 2 : index
    %1447 = vector.load %arg1[%c0_964, %c97_965, %c2_966, %c2_967] : memref<1x147x10x10xf32, #tpu.memory_space<vmem>>, vector<1x1x8x8xf32>
    %1448 = vector.shape_cast %1447 : vector<1x1x8x8xf32> to vector<8x8xf32>
    %c241 = arith.constant 241 : index
    %1449 = memref.load %arg2[%c241] : memref<363xf32, #tpu.memory_space<smem>>
    %1450 = vector.broadcast %1449 : f32 to vector<8x8xf32>
    %1451 = arith.mulf %1450, %1448 : vector<8x8xf32>
    %1452 = arith.addf %1446, %1451 : vector<8x8xf32>
    %c0_968 = arith.constant 0 : index
    %c98_969 = arith.constant 98 : index
    %c0_970 = arith.constant 0 : index
    %c0_971 = arith.constant 0 : index
    %1453 = vector.load %arg1[%c0_968, %c98_969, %c0_970, %c0_971] : memref<1x147x10x10xf32, #tpu.memory_space<vmem>>, vector<1x1x8x8xf32>
    %1454 = vector.shape_cast %1453 : vector<1x1x8x8xf32> to vector<8x8xf32>
    %c242 = arith.constant 242 : index
    %1455 = memref.load %arg2[%c242] : memref<363xf32, #tpu.memory_space<smem>>
    %1456 = vector.broadcast %1455 : f32 to vector<8x8xf32>
    %1457 = arith.mulf %1456, %1454 : vector<8x8xf32>
    %1458 = arith.addf %1452, %1457 : vector<8x8xf32>
    %c0_972 = arith.constant 0 : index
    %c100_973 = arith.constant 100 : index
    %c0_974 = arith.constant 0 : index
    %c0_975 = arith.constant 0 : index
    %1459 = vector.load %arg1[%c0_972, %c100_973, %c0_974, %c0_975] : memref<1x147x10x10xf32, #tpu.memory_space<vmem>>, vector<1x1x8x8xf32>
    %1460 = vector.shape_cast %1459 : vector<1x1x8x8xf32> to vector<8x8xf32>
    %c243 = arith.constant 243 : index
    %1461 = memref.load %arg2[%c243] : memref<363xf32, #tpu.memory_space<smem>>
    %1462 = vector.broadcast %1461 : f32 to vector<8x8xf32>
    %1463 = arith.mulf %1462, %1460 : vector<8x8xf32>
    %1464 = arith.addf %1458, %1463 : vector<8x8xf32>
    %c0_976 = arith.constant 0 : index
    %c102_977 = arith.constant 102 : index
    %c0_978 = arith.constant 0 : index
    %c0_979 = arith.constant 0 : index
    %1465 = vector.load %arg1[%c0_976, %c102_977, %c0_978, %c0_979] : memref<1x147x10x10xf32, #tpu.memory_space<vmem>>, vector<1x1x8x8xf32>
    %1466 = vector.shape_cast %1465 : vector<1x1x8x8xf32> to vector<8x8xf32>
    %c244 = arith.constant 244 : index
    %1467 = memref.load %arg2[%c244] : memref<363xf32, #tpu.memory_space<smem>>
    %1468 = vector.broadcast %1467 : f32 to vector<8x8xf32>
    %1469 = arith.mulf %1468, %1466 : vector<8x8xf32>
    %1470 = arith.addf %1464, %1469 : vector<8x8xf32>
    %c0_980 = arith.constant 0 : index
    %c104_981 = arith.constant 104 : index
    %c0_982 = arith.constant 0 : index
    %c0_983 = arith.constant 0 : index
    %1471 = vector.load %arg1[%c0_980, %c104_981, %c0_982, %c0_983] : memref<1x147x10x10xf32, #tpu.memory_space<vmem>>, vector<1x1x8x8xf32>
    %1472 = vector.shape_cast %1471 : vector<1x1x8x8xf32> to vector<8x8xf32>
    %c245 = arith.constant 245 : index
    %1473 = memref.load %arg2[%c245] : memref<363xf32, #tpu.memory_space<smem>>
    %1474 = vector.broadcast %1473 : f32 to vector<8x8xf32>
    %1475 = arith.mulf %1474, %1472 : vector<8x8xf32>
    %1476 = arith.addf %1470, %1475 : vector<8x8xf32>
    %c0_984 = arith.constant 0 : index
    %c99_985 = arith.constant 99 : index
    %c0_986 = arith.constant 0 : index
    %c1_987 = arith.constant 1 : index
    %1477 = vector.load %arg1[%c0_984, %c99_985, %c0_986, %c1_987] : memref<1x147x10x10xf32, #tpu.memory_space<vmem>>, vector<1x1x8x8xf32>
    %1478 = vector.shape_cast %1477 : vector<1x1x8x8xf32> to vector<8x8xf32>
    %c246 = arith.constant 246 : index
    %1479 = memref.load %arg2[%c246] : memref<363xf32, #tpu.memory_space<smem>>
    %1480 = vector.broadcast %1479 : f32 to vector<8x8xf32>
    %1481 = arith.mulf %1480, %1478 : vector<8x8xf32>
    %1482 = arith.addf %1476, %1481 : vector<8x8xf32>
    %c0_988 = arith.constant 0 : index
    %c101_989 = arith.constant 101 : index
    %c0_990 = arith.constant 0 : index
    %c1_991 = arith.constant 1 : index
    %1483 = vector.load %arg1[%c0_988, %c101_989, %c0_990, %c1_991] : memref<1x147x10x10xf32, #tpu.memory_space<vmem>>, vector<1x1x8x8xf32>
    %1484 = vector.shape_cast %1483 : vector<1x1x8x8xf32> to vector<8x8xf32>
    %c247 = arith.constant 247 : index
    %1485 = memref.load %arg2[%c247] : memref<363xf32, #tpu.memory_space<smem>>
    %1486 = vector.broadcast %1485 : f32 to vector<8x8xf32>
    %1487 = arith.mulf %1486, %1484 : vector<8x8xf32>
    %1488 = arith.addf %1482, %1487 : vector<8x8xf32>
    %c0_992 = arith.constant 0 : index
    %c103_993 = arith.constant 103 : index
    %c0_994 = arith.constant 0 : index
    %c1_995 = arith.constant 1 : index
    %1489 = vector.load %arg1[%c0_992, %c103_993, %c0_994, %c1_995] : memref<1x147x10x10xf32, #tpu.memory_space<vmem>>, vector<1x1x8x8xf32>
    %1490 = vector.shape_cast %1489 : vector<1x1x8x8xf32> to vector<8x8xf32>
    %c248 = arith.constant 248 : index
    %1491 = memref.load %arg2[%c248] : memref<363xf32, #tpu.memory_space<smem>>
    %1492 = vector.broadcast %1491 : f32 to vector<8x8xf32>
    %1493 = arith.mulf %1492, %1490 : vector<8x8xf32>
    %1494 = arith.addf %1488, %1493 : vector<8x8xf32>
    %c0_996 = arith.constant 0 : index
    %c98_997 = arith.constant 98 : index
    %c0_998 = arith.constant 0 : index
    %c2_999 = arith.constant 2 : index
    %1495 = vector.load %arg1[%c0_996, %c98_997, %c0_998, %c2_999] : memref<1x147x10x10xf32, #tpu.memory_space<vmem>>, vector<1x1x8x8xf32>
    %1496 = vector.shape_cast %1495 : vector<1x1x8x8xf32> to vector<8x8xf32>
    %c249 = arith.constant 249 : index
    %1497 = memref.load %arg2[%c249] : memref<363xf32, #tpu.memory_space<smem>>
    %1498 = vector.broadcast %1497 : f32 to vector<8x8xf32>
    %1499 = arith.mulf %1498, %1496 : vector<8x8xf32>
    %1500 = arith.addf %1494, %1499 : vector<8x8xf32>
    %c0_1000 = arith.constant 0 : index
    %c100_1001 = arith.constant 100 : index
    %c0_1002 = arith.constant 0 : index
    %c2_1003 = arith.constant 2 : index
    %1501 = vector.load %arg1[%c0_1000, %c100_1001, %c0_1002, %c2_1003] : memref<1x147x10x10xf32, #tpu.memory_space<vmem>>, vector<1x1x8x8xf32>
    %1502 = vector.shape_cast %1501 : vector<1x1x8x8xf32> to vector<8x8xf32>
    %c250 = arith.constant 250 : index
    %1503 = memref.load %arg2[%c250] : memref<363xf32, #tpu.memory_space<smem>>
    %1504 = vector.broadcast %1503 : f32 to vector<8x8xf32>
    %1505 = arith.mulf %1504, %1502 : vector<8x8xf32>
    %1506 = arith.addf %1500, %1505 : vector<8x8xf32>
    %c0_1004 = arith.constant 0 : index
    %c102_1005 = arith.constant 102 : index
    %c0_1006 = arith.constant 0 : index
    %c2_1007 = arith.constant 2 : index
    %1507 = vector.load %arg1[%c0_1004, %c102_1005, %c0_1006, %c2_1007] : memref<1x147x10x10xf32, #tpu.memory_space<vmem>>, vector<1x1x8x8xf32>
    %1508 = vector.shape_cast %1507 : vector<1x1x8x8xf32> to vector<8x8xf32>
    %c251 = arith.constant 251 : index
    %1509 = memref.load %arg2[%c251] : memref<363xf32, #tpu.memory_space<smem>>
    %1510 = vector.broadcast %1509 : f32 to vector<8x8xf32>
    %1511 = arith.mulf %1510, %1508 : vector<8x8xf32>
    %1512 = arith.addf %1506, %1511 : vector<8x8xf32>
    %c0_1008 = arith.constant 0 : index
    %c104_1009 = arith.constant 104 : index
    %c0_1010 = arith.constant 0 : index
    %c2_1011 = arith.constant 2 : index
    %1513 = vector.load %arg1[%c0_1008, %c104_1009, %c0_1010, %c2_1011] : memref<1x147x10x10xf32, #tpu.memory_space<vmem>>, vector<1x1x8x8xf32>
    %1514 = vector.shape_cast %1513 : vector<1x1x8x8xf32> to vector<8x8xf32>
    %c252 = arith.constant 252 : index
    %1515 = memref.load %arg2[%c252] : memref<363xf32, #tpu.memory_space<smem>>
    %1516 = vector.broadcast %1515 : f32 to vector<8x8xf32>
    %1517 = arith.mulf %1516, %1514 : vector<8x8xf32>
    %1518 = arith.addf %1512, %1517 : vector<8x8xf32>
    %c0_1012 = arith.constant 0 : index
    %c112_1013 = arith.constant 112 : index
    %c0_1014 = arith.constant 0 : index
    %c0_1015 = arith.constant 0 : index
    %1519 = vector.load %arg1[%c0_1012, %c112_1013, %c0_1014, %c0_1015] : memref<1x147x10x10xf32, #tpu.memory_space<vmem>>, vector<1x1x8x8xf32>
    %1520 = vector.shape_cast %1519 : vector<1x1x8x8xf32> to vector<8x8xf32>
    %c253 = arith.constant 253 : index
    %1521 = memref.load %arg2[%c253] : memref<363xf32, #tpu.memory_space<smem>>
    %1522 = vector.broadcast %1521 : f32 to vector<8x8xf32>
    %1523 = arith.mulf %1522, %1520 : vector<8x8xf32>
    %1524 = arith.addf %1518, %1523 : vector<8x8xf32>
    %c0_1016 = arith.constant 0 : index
    %c114_1017 = arith.constant 114 : index
    %c0_1018 = arith.constant 0 : index
    %c0_1019 = arith.constant 0 : index
    %1525 = vector.load %arg1[%c0_1016, %c114_1017, %c0_1018, %c0_1019] : memref<1x147x10x10xf32, #tpu.memory_space<vmem>>, vector<1x1x8x8xf32>
    %1526 = vector.shape_cast %1525 : vector<1x1x8x8xf32> to vector<8x8xf32>
    %c254 = arith.constant 254 : index
    %1527 = memref.load %arg2[%c254] : memref<363xf32, #tpu.memory_space<smem>>
    %1528 = vector.broadcast %1527 : f32 to vector<8x8xf32>
    %1529 = arith.mulf %1528, %1526 : vector<8x8xf32>
    %1530 = arith.addf %1524, %1529 : vector<8x8xf32>
    %c0_1020 = arith.constant 0 : index
    %c116_1021 = arith.constant 116 : index
    %c0_1022 = arith.constant 0 : index
    %c0_1023 = arith.constant 0 : index
    %1531 = vector.load %arg1[%c0_1020, %c116_1021, %c0_1022, %c0_1023] : memref<1x147x10x10xf32, #tpu.memory_space<vmem>>, vector<1x1x8x8xf32>
    %1532 = vector.shape_cast %1531 : vector<1x1x8x8xf32> to vector<8x8xf32>
    %c255 = arith.constant 255 : index
    %1533 = memref.load %arg2[%c255] : memref<363xf32, #tpu.memory_space<smem>>
    %1534 = vector.broadcast %1533 : f32 to vector<8x8xf32>
    %1535 = arith.mulf %1534, %1532 : vector<8x8xf32>
    %1536 = arith.addf %1530, %1535 : vector<8x8xf32>
    %c0_1024 = arith.constant 0 : index
    %c118_1025 = arith.constant 118 : index
    %c0_1026 = arith.constant 0 : index
    %c0_1027 = arith.constant 0 : index
    %1537 = vector.load %arg1[%c0_1024, %c118_1025, %c0_1026, %c0_1027] : memref<1x147x10x10xf32, #tpu.memory_space<vmem>>, vector<1x1x8x8xf32>
    %1538 = vector.shape_cast %1537 : vector<1x1x8x8xf32> to vector<8x8xf32>
    %c256 = arith.constant 256 : index
    %1539 = memref.load %arg2[%c256] : memref<363xf32, #tpu.memory_space<smem>>
    %1540 = vector.broadcast %1539 : f32 to vector<8x8xf32>
    %1541 = arith.mulf %1540, %1538 : vector<8x8xf32>
    %1542 = arith.addf %1536, %1541 : vector<8x8xf32>
    %c0_1028 = arith.constant 0 : index
    %c113_1029 = arith.constant 113 : index
    %c0_1030 = arith.constant 0 : index
    %c1_1031 = arith.constant 1 : index
    %1543 = vector.load %arg1[%c0_1028, %c113_1029, %c0_1030, %c1_1031] : memref<1x147x10x10xf32, #tpu.memory_space<vmem>>, vector<1x1x8x8xf32>
    %1544 = vector.shape_cast %1543 : vector<1x1x8x8xf32> to vector<8x8xf32>
    %c257 = arith.constant 257 : index
    %1545 = memref.load %arg2[%c257] : memref<363xf32, #tpu.memory_space<smem>>
    %1546 = vector.broadcast %1545 : f32 to vector<8x8xf32>
    %1547 = arith.mulf %1546, %1544 : vector<8x8xf32>
    %1548 = arith.addf %1542, %1547 : vector<8x8xf32>
    %c0_1032 = arith.constant 0 : index
    %c115_1033 = arith.constant 115 : index
    %c0_1034 = arith.constant 0 : index
    %c1_1035 = arith.constant 1 : index
    %1549 = vector.load %arg1[%c0_1032, %c115_1033, %c0_1034, %c1_1035] : memref<1x147x10x10xf32, #tpu.memory_space<vmem>>, vector<1x1x8x8xf32>
    %1550 = vector.shape_cast %1549 : vector<1x1x8x8xf32> to vector<8x8xf32>
    %c258 = arith.constant 258 : index
    %1551 = memref.load %arg2[%c258] : memref<363xf32, #tpu.memory_space<smem>>
    %1552 = vector.broadcast %1551 : f32 to vector<8x8xf32>
    %1553 = arith.mulf %1552, %1550 : vector<8x8xf32>
    %1554 = arith.addf %1548, %1553 : vector<8x8xf32>
    %c0_1036 = arith.constant 0 : index
    %c117_1037 = arith.constant 117 : index
    %c0_1038 = arith.constant 0 : index
    %c1_1039 = arith.constant 1 : index
    %1555 = vector.load %arg1[%c0_1036, %c117_1037, %c0_1038, %c1_1039] : memref<1x147x10x10xf32, #tpu.memory_space<vmem>>, vector<1x1x8x8xf32>
    %1556 = vector.shape_cast %1555 : vector<1x1x8x8xf32> to vector<8x8xf32>
    %c259 = arith.constant 259 : index
    %1557 = memref.load %arg2[%c259] : memref<363xf32, #tpu.memory_space<smem>>
    %1558 = vector.broadcast %1557 : f32 to vector<8x8xf32>
    %1559 = arith.mulf %1558, %1556 : vector<8x8xf32>
    %1560 = arith.addf %1554, %1559 : vector<8x8xf32>
    %c0_1040 = arith.constant 0 : index
    %c112_1041 = arith.constant 112 : index
    %c0_1042 = arith.constant 0 : index
    %c2_1043 = arith.constant 2 : index
    %1561 = vector.load %arg1[%c0_1040, %c112_1041, %c0_1042, %c2_1043] : memref<1x147x10x10xf32, #tpu.memory_space<vmem>>, vector<1x1x8x8xf32>
    %1562 = vector.shape_cast %1561 : vector<1x1x8x8xf32> to vector<8x8xf32>
    %c260 = arith.constant 260 : index
    %1563 = memref.load %arg2[%c260] : memref<363xf32, #tpu.memory_space<smem>>
    %1564 = vector.broadcast %1563 : f32 to vector<8x8xf32>
    %1565 = arith.mulf %1564, %1562 : vector<8x8xf32>
    %1566 = arith.addf %1560, %1565 : vector<8x8xf32>
    %c0_1044 = arith.constant 0 : index
    %c114_1045 = arith.constant 114 : index
    %c0_1046 = arith.constant 0 : index
    %c2_1047 = arith.constant 2 : index
    %1567 = vector.load %arg1[%c0_1044, %c114_1045, %c0_1046, %c2_1047] : memref<1x147x10x10xf32, #tpu.memory_space<vmem>>, vector<1x1x8x8xf32>
    %1568 = vector.shape_cast %1567 : vector<1x1x8x8xf32> to vector<8x8xf32>
    %c261 = arith.constant 261 : index
    %1569 = memref.load %arg2[%c261] : memref<363xf32, #tpu.memory_space<smem>>
    %1570 = vector.broadcast %1569 : f32 to vector<8x8xf32>
    %1571 = arith.mulf %1570, %1568 : vector<8x8xf32>
    %1572 = arith.addf %1566, %1571 : vector<8x8xf32>
    %c0_1048 = arith.constant 0 : index
    %c116_1049 = arith.constant 116 : index
    %c0_1050 = arith.constant 0 : index
    %c2_1051 = arith.constant 2 : index
    %1573 = vector.load %arg1[%c0_1048, %c116_1049, %c0_1050, %c2_1051] : memref<1x147x10x10xf32, #tpu.memory_space<vmem>>, vector<1x1x8x8xf32>
    %1574 = vector.shape_cast %1573 : vector<1x1x8x8xf32> to vector<8x8xf32>
    %c262 = arith.constant 262 : index
    %1575 = memref.load %arg2[%c262] : memref<363xf32, #tpu.memory_space<smem>>
    %1576 = vector.broadcast %1575 : f32 to vector<8x8xf32>
    %1577 = arith.mulf %1576, %1574 : vector<8x8xf32>
    %1578 = arith.addf %1572, %1577 : vector<8x8xf32>
    %c0_1052 = arith.constant 0 : index
    %c118_1053 = arith.constant 118 : index
    %c0_1054 = arith.constant 0 : index
    %c2_1055 = arith.constant 2 : index
    %1579 = vector.load %arg1[%c0_1052, %c118_1053, %c0_1054, %c2_1055] : memref<1x147x10x10xf32, #tpu.memory_space<vmem>>, vector<1x1x8x8xf32>
    %1580 = vector.shape_cast %1579 : vector<1x1x8x8xf32> to vector<8x8xf32>
    %c263 = arith.constant 263 : index
    %1581 = memref.load %arg2[%c263] : memref<363xf32, #tpu.memory_space<smem>>
    %1582 = vector.broadcast %1581 : f32 to vector<8x8xf32>
    %1583 = arith.mulf %1582, %1580 : vector<8x8xf32>
    %1584 = arith.addf %1578, %1583 : vector<8x8xf32>
    %c0_1056 = arith.constant 0 : index
    %c126_1057 = arith.constant 126 : index
    %c0_1058 = arith.constant 0 : index
    %c0_1059 = arith.constant 0 : index
    %1585 = vector.load %arg1[%c0_1056, %c126_1057, %c0_1058, %c0_1059] : memref<1x147x10x10xf32, #tpu.memory_space<vmem>>, vector<1x1x8x8xf32>
    %1586 = vector.shape_cast %1585 : vector<1x1x8x8xf32> to vector<8x8xf32>
    %c264 = arith.constant 264 : index
    %1587 = memref.load %arg2[%c264] : memref<363xf32, #tpu.memory_space<smem>>
    %1588 = vector.broadcast %1587 : f32 to vector<8x8xf32>
    %1589 = arith.mulf %1588, %1586 : vector<8x8xf32>
    %1590 = arith.addf %1584, %1589 : vector<8x8xf32>
    %c0_1060 = arith.constant 0 : index
    %c128_1061 = arith.constant 128 : index
    %c0_1062 = arith.constant 0 : index
    %c0_1063 = arith.constant 0 : index
    %1591 = vector.load %arg1[%c0_1060, %c128_1061, %c0_1062, %c0_1063] : memref<1x147x10x10xf32, #tpu.memory_space<vmem>>, vector<1x1x8x8xf32>
    %1592 = vector.shape_cast %1591 : vector<1x1x8x8xf32> to vector<8x8xf32>
    %c265 = arith.constant 265 : index
    %1593 = memref.load %arg2[%c265] : memref<363xf32, #tpu.memory_space<smem>>
    %1594 = vector.broadcast %1593 : f32 to vector<8x8xf32>
    %1595 = arith.mulf %1594, %1592 : vector<8x8xf32>
    %1596 = arith.addf %1590, %1595 : vector<8x8xf32>
    %c0_1064 = arith.constant 0 : index
    %c130_1065 = arith.constant 130 : index
    %c0_1066 = arith.constant 0 : index
    %c0_1067 = arith.constant 0 : index
    %1597 = vector.load %arg1[%c0_1064, %c130_1065, %c0_1066, %c0_1067] : memref<1x147x10x10xf32, #tpu.memory_space<vmem>>, vector<1x1x8x8xf32>
    %1598 = vector.shape_cast %1597 : vector<1x1x8x8xf32> to vector<8x8xf32>
    %c266 = arith.constant 266 : index
    %1599 = memref.load %arg2[%c266] : memref<363xf32, #tpu.memory_space<smem>>
    %1600 = vector.broadcast %1599 : f32 to vector<8x8xf32>
    %1601 = arith.mulf %1600, %1598 : vector<8x8xf32>
    %1602 = arith.addf %1596, %1601 : vector<8x8xf32>
    %c0_1068 = arith.constant 0 : index
    %c132_1069 = arith.constant 132 : index
    %c0_1070 = arith.constant 0 : index
    %c0_1071 = arith.constant 0 : index
    %1603 = vector.load %arg1[%c0_1068, %c132_1069, %c0_1070, %c0_1071] : memref<1x147x10x10xf32, #tpu.memory_space<vmem>>, vector<1x1x8x8xf32>
    %1604 = vector.shape_cast %1603 : vector<1x1x8x8xf32> to vector<8x8xf32>
    %c267 = arith.constant 267 : index
    %1605 = memref.load %arg2[%c267] : memref<363xf32, #tpu.memory_space<smem>>
    %1606 = vector.broadcast %1605 : f32 to vector<8x8xf32>
    %1607 = arith.mulf %1606, %1604 : vector<8x8xf32>
    %1608 = arith.addf %1602, %1607 : vector<8x8xf32>
    %c0_1072 = arith.constant 0 : index
    %c127_1073 = arith.constant 127 : index
    %c0_1074 = arith.constant 0 : index
    %c1_1075 = arith.constant 1 : index
    %1609 = vector.load %arg1[%c0_1072, %c127_1073, %c0_1074, %c1_1075] : memref<1x147x10x10xf32, #tpu.memory_space<vmem>>, vector<1x1x8x8xf32>
    %1610 = vector.shape_cast %1609 : vector<1x1x8x8xf32> to vector<8x8xf32>
    %c268 = arith.constant 268 : index
    %1611 = memref.load %arg2[%c268] : memref<363xf32, #tpu.memory_space<smem>>
    %1612 = vector.broadcast %1611 : f32 to vector<8x8xf32>
    %1613 = arith.mulf %1612, %1610 : vector<8x8xf32>
    %1614 = arith.addf %1608, %1613 : vector<8x8xf32>
    %c0_1076 = arith.constant 0 : index
    %c129_1077 = arith.constant 129 : index
    %c0_1078 = arith.constant 0 : index
    %c1_1079 = arith.constant 1 : index
    %1615 = vector.load %arg1[%c0_1076, %c129_1077, %c0_1078, %c1_1079] : memref<1x147x10x10xf32, #tpu.memory_space<vmem>>, vector<1x1x8x8xf32>
    %1616 = vector.shape_cast %1615 : vector<1x1x8x8xf32> to vector<8x8xf32>
    %c269 = arith.constant 269 : index
    %1617 = memref.load %arg2[%c269] : memref<363xf32, #tpu.memory_space<smem>>
    %1618 = vector.broadcast %1617 : f32 to vector<8x8xf32>
    %1619 = arith.mulf %1618, %1616 : vector<8x8xf32>
    %1620 = arith.addf %1614, %1619 : vector<8x8xf32>
    %c0_1080 = arith.constant 0 : index
    %c131_1081 = arith.constant 131 : index
    %c0_1082 = arith.constant 0 : index
    %c1_1083 = arith.constant 1 : index
    %1621 = vector.load %arg1[%c0_1080, %c131_1081, %c0_1082, %c1_1083] : memref<1x147x10x10xf32, #tpu.memory_space<vmem>>, vector<1x1x8x8xf32>
    %1622 = vector.shape_cast %1621 : vector<1x1x8x8xf32> to vector<8x8xf32>
    %c270 = arith.constant 270 : index
    %1623 = memref.load %arg2[%c270] : memref<363xf32, #tpu.memory_space<smem>>
    %1624 = vector.broadcast %1623 : f32 to vector<8x8xf32>
    %1625 = arith.mulf %1624, %1622 : vector<8x8xf32>
    %1626 = arith.addf %1620, %1625 : vector<8x8xf32>
    %c0_1084 = arith.constant 0 : index
    %c126_1085 = arith.constant 126 : index
    %c0_1086 = arith.constant 0 : index
    %c2_1087 = arith.constant 2 : index
    %1627 = vector.load %arg1[%c0_1084, %c126_1085, %c0_1086, %c2_1087] : memref<1x147x10x10xf32, #tpu.memory_space<vmem>>, vector<1x1x8x8xf32>
    %1628 = vector.shape_cast %1627 : vector<1x1x8x8xf32> to vector<8x8xf32>
    %c271 = arith.constant 271 : index
    %1629 = memref.load %arg2[%c271] : memref<363xf32, #tpu.memory_space<smem>>
    %1630 = vector.broadcast %1629 : f32 to vector<8x8xf32>
    %1631 = arith.mulf %1630, %1628 : vector<8x8xf32>
    %1632 = arith.addf %1626, %1631 : vector<8x8xf32>
    %c0_1088 = arith.constant 0 : index
    %c128_1089 = arith.constant 128 : index
    %c0_1090 = arith.constant 0 : index
    %c2_1091 = arith.constant 2 : index
    %1633 = vector.load %arg1[%c0_1088, %c128_1089, %c0_1090, %c2_1091] : memref<1x147x10x10xf32, #tpu.memory_space<vmem>>, vector<1x1x8x8xf32>
    %1634 = vector.shape_cast %1633 : vector<1x1x8x8xf32> to vector<8x8xf32>
    %c272 = arith.constant 272 : index
    %1635 = memref.load %arg2[%c272] : memref<363xf32, #tpu.memory_space<smem>>
    %1636 = vector.broadcast %1635 : f32 to vector<8x8xf32>
    %1637 = arith.mulf %1636, %1634 : vector<8x8xf32>
    %1638 = arith.addf %1632, %1637 : vector<8x8xf32>
    %c0_1092 = arith.constant 0 : index
    %c130_1093 = arith.constant 130 : index
    %c0_1094 = arith.constant 0 : index
    %c2_1095 = arith.constant 2 : index
    %1639 = vector.load %arg1[%c0_1092, %c130_1093, %c0_1094, %c2_1095] : memref<1x147x10x10xf32, #tpu.memory_space<vmem>>, vector<1x1x8x8xf32>
    %1640 = vector.shape_cast %1639 : vector<1x1x8x8xf32> to vector<8x8xf32>
    %c273 = arith.constant 273 : index
    %1641 = memref.load %arg2[%c273] : memref<363xf32, #tpu.memory_space<smem>>
    %1642 = vector.broadcast %1641 : f32 to vector<8x8xf32>
    %1643 = arith.mulf %1642, %1640 : vector<8x8xf32>
    %1644 = arith.addf %1638, %1643 : vector<8x8xf32>
    %c0_1096 = arith.constant 0 : index
    %c132_1097 = arith.constant 132 : index
    %c0_1098 = arith.constant 0 : index
    %c2_1099 = arith.constant 2 : index
    %1645 = vector.load %arg1[%c0_1096, %c132_1097, %c0_1098, %c2_1099] : memref<1x147x10x10xf32, #tpu.memory_space<vmem>>, vector<1x1x8x8xf32>
    %1646 = vector.shape_cast %1645 : vector<1x1x8x8xf32> to vector<8x8xf32>
    %c274 = arith.constant 274 : index
    %1647 = memref.load %arg2[%c274] : memref<363xf32, #tpu.memory_space<smem>>
    %1648 = vector.broadcast %1647 : f32 to vector<8x8xf32>
    %1649 = arith.mulf %1648, %1646 : vector<8x8xf32>
    %1650 = arith.addf %1644, %1649 : vector<8x8xf32>
    %c0_1100 = arith.constant 0 : index
    %c140_1101 = arith.constant 140 : index
    %c0_1102 = arith.constant 0 : index
    %c0_1103 = arith.constant 0 : index
    %1651 = vector.load %arg1[%c0_1100, %c140_1101, %c0_1102, %c0_1103] : memref<1x147x10x10xf32, #tpu.memory_space<vmem>>, vector<1x1x8x8xf32>
    %1652 = vector.shape_cast %1651 : vector<1x1x8x8xf32> to vector<8x8xf32>
    %c275 = arith.constant 275 : index
    %1653 = memref.load %arg2[%c275] : memref<363xf32, #tpu.memory_space<smem>>
    %1654 = vector.broadcast %1653 : f32 to vector<8x8xf32>
    %1655 = arith.mulf %1654, %1652 : vector<8x8xf32>
    %1656 = arith.addf %1650, %1655 : vector<8x8xf32>
    %c0_1104 = arith.constant 0 : index
    %c142_1105 = arith.constant 142 : index
    %c0_1106 = arith.constant 0 : index
    %c0_1107 = arith.constant 0 : index
    %1657 = vector.load %arg1[%c0_1104, %c142_1105, %c0_1106, %c0_1107] : memref<1x147x10x10xf32, #tpu.memory_space<vmem>>, vector<1x1x8x8xf32>
    %1658 = vector.shape_cast %1657 : vector<1x1x8x8xf32> to vector<8x8xf32>
    %c276 = arith.constant 276 : index
    %1659 = memref.load %arg2[%c276] : memref<363xf32, #tpu.memory_space<smem>>
    %1660 = vector.broadcast %1659 : f32 to vector<8x8xf32>
    %1661 = arith.mulf %1660, %1658 : vector<8x8xf32>
    %1662 = arith.addf %1656, %1661 : vector<8x8xf32>
    %c0_1108 = arith.constant 0 : index
    %c144_1109 = arith.constant 144 : index
    %c0_1110 = arith.constant 0 : index
    %c0_1111 = arith.constant 0 : index
    %1663 = vector.load %arg1[%c0_1108, %c144_1109, %c0_1110, %c0_1111] : memref<1x147x10x10xf32, #tpu.memory_space<vmem>>, vector<1x1x8x8xf32>
    %1664 = vector.shape_cast %1663 : vector<1x1x8x8xf32> to vector<8x8xf32>
    %c277 = arith.constant 277 : index
    %1665 = memref.load %arg2[%c277] : memref<363xf32, #tpu.memory_space<smem>>
    %1666 = vector.broadcast %1665 : f32 to vector<8x8xf32>
    %1667 = arith.mulf %1666, %1664 : vector<8x8xf32>
    %1668 = arith.addf %1662, %1667 : vector<8x8xf32>
    %c0_1112 = arith.constant 0 : index
    %c146_1113 = arith.constant 146 : index
    %c0_1114 = arith.constant 0 : index
    %c0_1115 = arith.constant 0 : index
    %1669 = vector.load %arg1[%c0_1112, %c146_1113, %c0_1114, %c0_1115] : memref<1x147x10x10xf32, #tpu.memory_space<vmem>>, vector<1x1x8x8xf32>
    %1670 = vector.shape_cast %1669 : vector<1x1x8x8xf32> to vector<8x8xf32>
    %c278 = arith.constant 278 : index
    %1671 = memref.load %arg2[%c278] : memref<363xf32, #tpu.memory_space<smem>>
    %1672 = vector.broadcast %1671 : f32 to vector<8x8xf32>
    %1673 = arith.mulf %1672, %1670 : vector<8x8xf32>
    %1674 = arith.addf %1668, %1673 : vector<8x8xf32>
    %c0_1116 = arith.constant 0 : index
    %c141_1117 = arith.constant 141 : index
    %c0_1118 = arith.constant 0 : index
    %c1_1119 = arith.constant 1 : index
    %1675 = vector.load %arg1[%c0_1116, %c141_1117, %c0_1118, %c1_1119] : memref<1x147x10x10xf32, #tpu.memory_space<vmem>>, vector<1x1x8x8xf32>
    %1676 = vector.shape_cast %1675 : vector<1x1x8x8xf32> to vector<8x8xf32>
    %c279 = arith.constant 279 : index
    %1677 = memref.load %arg2[%c279] : memref<363xf32, #tpu.memory_space<smem>>
    %1678 = vector.broadcast %1677 : f32 to vector<8x8xf32>
    %1679 = arith.mulf %1678, %1676 : vector<8x8xf32>
    %1680 = arith.addf %1674, %1679 : vector<8x8xf32>
    %c0_1120 = arith.constant 0 : index
    %c143_1121 = arith.constant 143 : index
    %c0_1122 = arith.constant 0 : index
    %c1_1123 = arith.constant 1 : index
    %1681 = vector.load %arg1[%c0_1120, %c143_1121, %c0_1122, %c1_1123] : memref<1x147x10x10xf32, #tpu.memory_space<vmem>>, vector<1x1x8x8xf32>
    %1682 = vector.shape_cast %1681 : vector<1x1x8x8xf32> to vector<8x8xf32>
    %c280 = arith.constant 280 : index
    %1683 = memref.load %arg2[%c280] : memref<363xf32, #tpu.memory_space<smem>>
    %1684 = vector.broadcast %1683 : f32 to vector<8x8xf32>
    %1685 = arith.mulf %1684, %1682 : vector<8x8xf32>
    %1686 = arith.addf %1680, %1685 : vector<8x8xf32>
    %c0_1124 = arith.constant 0 : index
    %c145_1125 = arith.constant 145 : index
    %c0_1126 = arith.constant 0 : index
    %c1_1127 = arith.constant 1 : index
    %1687 = vector.load %arg1[%c0_1124, %c145_1125, %c0_1126, %c1_1127] : memref<1x147x10x10xf32, #tpu.memory_space<vmem>>, vector<1x1x8x8xf32>
    %1688 = vector.shape_cast %1687 : vector<1x1x8x8xf32> to vector<8x8xf32>
    %c281 = arith.constant 281 : index
    %1689 = memref.load %arg2[%c281] : memref<363xf32, #tpu.memory_space<smem>>
    %1690 = vector.broadcast %1689 : f32 to vector<8x8xf32>
    %1691 = arith.mulf %1690, %1688 : vector<8x8xf32>
    %1692 = arith.addf %1686, %1691 : vector<8x8xf32>
    %c0_1128 = arith.constant 0 : index
    %c140_1129 = arith.constant 140 : index
    %c0_1130 = arith.constant 0 : index
    %c2_1131 = arith.constant 2 : index
    %1693 = vector.load %arg1[%c0_1128, %c140_1129, %c0_1130, %c2_1131] : memref<1x147x10x10xf32, #tpu.memory_space<vmem>>, vector<1x1x8x8xf32>
    %1694 = vector.shape_cast %1693 : vector<1x1x8x8xf32> to vector<8x8xf32>
    %c282 = arith.constant 282 : index
    %1695 = memref.load %arg2[%c282] : memref<363xf32, #tpu.memory_space<smem>>
    %1696 = vector.broadcast %1695 : f32 to vector<8x8xf32>
    %1697 = arith.mulf %1696, %1694 : vector<8x8xf32>
    %1698 = arith.addf %1692, %1697 : vector<8x8xf32>
    %c0_1132 = arith.constant 0 : index
    %c142_1133 = arith.constant 142 : index
    %c0_1134 = arith.constant 0 : index
    %c2_1135 = arith.constant 2 : index
    %1699 = vector.load %arg1[%c0_1132, %c142_1133, %c0_1134, %c2_1135] : memref<1x147x10x10xf32, #tpu.memory_space<vmem>>, vector<1x1x8x8xf32>
    %1700 = vector.shape_cast %1699 : vector<1x1x8x8xf32> to vector<8x8xf32>
    %c283 = arith.constant 283 : index
    %1701 = memref.load %arg2[%c283] : memref<363xf32, #tpu.memory_space<smem>>
    %1702 = vector.broadcast %1701 : f32 to vector<8x8xf32>
    %1703 = arith.mulf %1702, %1700 : vector<8x8xf32>
    %1704 = arith.addf %1698, %1703 : vector<8x8xf32>
    %c0_1136 = arith.constant 0 : index
    %c144_1137 = arith.constant 144 : index
    %c0_1138 = arith.constant 0 : index
    %c2_1139 = arith.constant 2 : index
    %1705 = vector.load %arg1[%c0_1136, %c144_1137, %c0_1138, %c2_1139] : memref<1x147x10x10xf32, #tpu.memory_space<vmem>>, vector<1x1x8x8xf32>
    %1706 = vector.shape_cast %1705 : vector<1x1x8x8xf32> to vector<8x8xf32>
    %c284 = arith.constant 284 : index
    %1707 = memref.load %arg2[%c284] : memref<363xf32, #tpu.memory_space<smem>>
    %1708 = vector.broadcast %1707 : f32 to vector<8x8xf32>
    %1709 = arith.mulf %1708, %1706 : vector<8x8xf32>
    %1710 = arith.addf %1704, %1709 : vector<8x8xf32>
    %c0_1140 = arith.constant 0 : index
    %c146_1141 = arith.constant 146 : index
    %c0_1142 = arith.constant 0 : index
    %c2_1143 = arith.constant 2 : index
    %1711 = vector.load %arg1[%c0_1140, %c146_1141, %c0_1142, %c2_1143] : memref<1x147x10x10xf32, #tpu.memory_space<vmem>>, vector<1x1x8x8xf32>
    %1712 = vector.shape_cast %1711 : vector<1x1x8x8xf32> to vector<8x8xf32>
    %c285 = arith.constant 285 : index
    %1713 = memref.load %arg2[%c285] : memref<363xf32, #tpu.memory_space<smem>>
    %1714 = vector.broadcast %1713 : f32 to vector<8x8xf32>
    %1715 = arith.mulf %1714, %1712 : vector<8x8xf32>
    %1716 = arith.addf %1710, %1715 : vector<8x8xf32>
    %c0_1144 = arith.constant 0 : index
    %c105_1145 = arith.constant 105 : index
    %c1_1146 = arith.constant 1 : index
    %c0_1147 = arith.constant 0 : index
    %1717 = vector.load %arg1[%c0_1144, %c105_1145, %c1_1146, %c0_1147] : memref<1x147x10x10xf32, #tpu.memory_space<vmem>>, vector<1x1x8x8xf32>
    %1718 = vector.shape_cast %1717 : vector<1x1x8x8xf32> to vector<8x8xf32>
    %c286 = arith.constant 286 : index
    %1719 = memref.load %arg2[%c286] : memref<363xf32, #tpu.memory_space<smem>>
    %1720 = vector.broadcast %1719 : f32 to vector<8x8xf32>
    %1721 = arith.mulf %1720, %1718 : vector<8x8xf32>
    %1722 = arith.addf %1716, %1721 : vector<8x8xf32>
    %c0_1148 = arith.constant 0 : index
    %c107_1149 = arith.constant 107 : index
    %c1_1150 = arith.constant 1 : index
    %c0_1151 = arith.constant 0 : index
    %1723 = vector.load %arg1[%c0_1148, %c107_1149, %c1_1150, %c0_1151] : memref<1x147x10x10xf32, #tpu.memory_space<vmem>>, vector<1x1x8x8xf32>
    %1724 = vector.shape_cast %1723 : vector<1x1x8x8xf32> to vector<8x8xf32>
    %c287 = arith.constant 287 : index
    %1725 = memref.load %arg2[%c287] : memref<363xf32, #tpu.memory_space<smem>>
    %1726 = vector.broadcast %1725 : f32 to vector<8x8xf32>
    %1727 = arith.mulf %1726, %1724 : vector<8x8xf32>
    %1728 = arith.addf %1722, %1727 : vector<8x8xf32>
    %c0_1152 = arith.constant 0 : index
    %c109_1153 = arith.constant 109 : index
    %c1_1154 = arith.constant 1 : index
    %c0_1155 = arith.constant 0 : index
    %1729 = vector.load %arg1[%c0_1152, %c109_1153, %c1_1154, %c0_1155] : memref<1x147x10x10xf32, #tpu.memory_space<vmem>>, vector<1x1x8x8xf32>
    %1730 = vector.shape_cast %1729 : vector<1x1x8x8xf32> to vector<8x8xf32>
    %c288 = arith.constant 288 : index
    %1731 = memref.load %arg2[%c288] : memref<363xf32, #tpu.memory_space<smem>>
    %1732 = vector.broadcast %1731 : f32 to vector<8x8xf32>
    %1733 = arith.mulf %1732, %1730 : vector<8x8xf32>
    %1734 = arith.addf %1728, %1733 : vector<8x8xf32>
    %c0_1156 = arith.constant 0 : index
    %c111_1157 = arith.constant 111 : index
    %c1_1158 = arith.constant 1 : index
    %c0_1159 = arith.constant 0 : index
    %1735 = vector.load %arg1[%c0_1156, %c111_1157, %c1_1158, %c0_1159] : memref<1x147x10x10xf32, #tpu.memory_space<vmem>>, vector<1x1x8x8xf32>
    %1736 = vector.shape_cast %1735 : vector<1x1x8x8xf32> to vector<8x8xf32>
    %c289 = arith.constant 289 : index
    %1737 = memref.load %arg2[%c289] : memref<363xf32, #tpu.memory_space<smem>>
    %1738 = vector.broadcast %1737 : f32 to vector<8x8xf32>
    %1739 = arith.mulf %1738, %1736 : vector<8x8xf32>
    %1740 = arith.addf %1734, %1739 : vector<8x8xf32>
    %c0_1160 = arith.constant 0 : index
    %c106_1161 = arith.constant 106 : index
    %c1_1162 = arith.constant 1 : index
    %c1_1163 = arith.constant 1 : index
    %1741 = vector.load %arg1[%c0_1160, %c106_1161, %c1_1162, %c1_1163] : memref<1x147x10x10xf32, #tpu.memory_space<vmem>>, vector<1x1x8x8xf32>
    %1742 = vector.shape_cast %1741 : vector<1x1x8x8xf32> to vector<8x8xf32>
    %c290 = arith.constant 290 : index
    %1743 = memref.load %arg2[%c290] : memref<363xf32, #tpu.memory_space<smem>>
    %1744 = vector.broadcast %1743 : f32 to vector<8x8xf32>
    %1745 = arith.mulf %1744, %1742 : vector<8x8xf32>
    %1746 = arith.addf %1740, %1745 : vector<8x8xf32>
    %c0_1164 = arith.constant 0 : index
    %c108_1165 = arith.constant 108 : index
    %c1_1166 = arith.constant 1 : index
    %c1_1167 = arith.constant 1 : index
    %1747 = vector.load %arg1[%c0_1164, %c108_1165, %c1_1166, %c1_1167] : memref<1x147x10x10xf32, #tpu.memory_space<vmem>>, vector<1x1x8x8xf32>
    %1748 = vector.shape_cast %1747 : vector<1x1x8x8xf32> to vector<8x8xf32>
    %c291 = arith.constant 291 : index
    %1749 = memref.load %arg2[%c291] : memref<363xf32, #tpu.memory_space<smem>>
    %1750 = vector.broadcast %1749 : f32 to vector<8x8xf32>
    %1751 = arith.mulf %1750, %1748 : vector<8x8xf32>
    %1752 = arith.addf %1746, %1751 : vector<8x8xf32>
    %c0_1168 = arith.constant 0 : index
    %c110_1169 = arith.constant 110 : index
    %c1_1170 = arith.constant 1 : index
    %c1_1171 = arith.constant 1 : index
    %1753 = vector.load %arg1[%c0_1168, %c110_1169, %c1_1170, %c1_1171] : memref<1x147x10x10xf32, #tpu.memory_space<vmem>>, vector<1x1x8x8xf32>
    %1754 = vector.shape_cast %1753 : vector<1x1x8x8xf32> to vector<8x8xf32>
    %c292 = arith.constant 292 : index
    %1755 = memref.load %arg2[%c292] : memref<363xf32, #tpu.memory_space<smem>>
    %1756 = vector.broadcast %1755 : f32 to vector<8x8xf32>
    %1757 = arith.mulf %1756, %1754 : vector<8x8xf32>
    %1758 = arith.addf %1752, %1757 : vector<8x8xf32>
    %c0_1172 = arith.constant 0 : index
    %c105_1173 = arith.constant 105 : index
    %c1_1174 = arith.constant 1 : index
    %c2_1175 = arith.constant 2 : index
    %1759 = vector.load %arg1[%c0_1172, %c105_1173, %c1_1174, %c2_1175] : memref<1x147x10x10xf32, #tpu.memory_space<vmem>>, vector<1x1x8x8xf32>
    %1760 = vector.shape_cast %1759 : vector<1x1x8x8xf32> to vector<8x8xf32>
    %c293 = arith.constant 293 : index
    %1761 = memref.load %arg2[%c293] : memref<363xf32, #tpu.memory_space<smem>>
    %1762 = vector.broadcast %1761 : f32 to vector<8x8xf32>
    %1763 = arith.mulf %1762, %1760 : vector<8x8xf32>
    %1764 = arith.addf %1758, %1763 : vector<8x8xf32>
    %c0_1176 = arith.constant 0 : index
    %c107_1177 = arith.constant 107 : index
    %c1_1178 = arith.constant 1 : index
    %c2_1179 = arith.constant 2 : index
    %1765 = vector.load %arg1[%c0_1176, %c107_1177, %c1_1178, %c2_1179] : memref<1x147x10x10xf32, #tpu.memory_space<vmem>>, vector<1x1x8x8xf32>
    %1766 = vector.shape_cast %1765 : vector<1x1x8x8xf32> to vector<8x8xf32>
    %c294 = arith.constant 294 : index
    %1767 = memref.load %arg2[%c294] : memref<363xf32, #tpu.memory_space<smem>>
    %1768 = vector.broadcast %1767 : f32 to vector<8x8xf32>
    %1769 = arith.mulf %1768, %1766 : vector<8x8xf32>
    %1770 = arith.addf %1764, %1769 : vector<8x8xf32>
    %c0_1180 = arith.constant 0 : index
    %c109_1181 = arith.constant 109 : index
    %c1_1182 = arith.constant 1 : index
    %c2_1183 = arith.constant 2 : index
    %1771 = vector.load %arg1[%c0_1180, %c109_1181, %c1_1182, %c2_1183] : memref<1x147x10x10xf32, #tpu.memory_space<vmem>>, vector<1x1x8x8xf32>
    %1772 = vector.shape_cast %1771 : vector<1x1x8x8xf32> to vector<8x8xf32>
    %c295 = arith.constant 295 : index
    %1773 = memref.load %arg2[%c295] : memref<363xf32, #tpu.memory_space<smem>>
    %1774 = vector.broadcast %1773 : f32 to vector<8x8xf32>
    %1775 = arith.mulf %1774, %1772 : vector<8x8xf32>
    %1776 = arith.addf %1770, %1775 : vector<8x8xf32>
    %c0_1184 = arith.constant 0 : index
    %c111_1185 = arith.constant 111 : index
    %c1_1186 = arith.constant 1 : index
    %c2_1187 = arith.constant 2 : index
    %1777 = vector.load %arg1[%c0_1184, %c111_1185, %c1_1186, %c2_1187] : memref<1x147x10x10xf32, #tpu.memory_space<vmem>>, vector<1x1x8x8xf32>
    %1778 = vector.shape_cast %1777 : vector<1x1x8x8xf32> to vector<8x8xf32>
    %c296 = arith.constant 296 : index
    %1779 = memref.load %arg2[%c296] : memref<363xf32, #tpu.memory_space<smem>>
    %1780 = vector.broadcast %1779 : f32 to vector<8x8xf32>
    %1781 = arith.mulf %1780, %1778 : vector<8x8xf32>
    %1782 = arith.addf %1776, %1781 : vector<8x8xf32>
    %c0_1188 = arith.constant 0 : index
    %c119_1189 = arith.constant 119 : index
    %c1_1190 = arith.constant 1 : index
    %c0_1191 = arith.constant 0 : index
    %1783 = vector.load %arg1[%c0_1188, %c119_1189, %c1_1190, %c0_1191] : memref<1x147x10x10xf32, #tpu.memory_space<vmem>>, vector<1x1x8x8xf32>
    %1784 = vector.shape_cast %1783 : vector<1x1x8x8xf32> to vector<8x8xf32>
    %c297 = arith.constant 297 : index
    %1785 = memref.load %arg2[%c297] : memref<363xf32, #tpu.memory_space<smem>>
    %1786 = vector.broadcast %1785 : f32 to vector<8x8xf32>
    %1787 = arith.mulf %1786, %1784 : vector<8x8xf32>
    %1788 = arith.addf %1782, %1787 : vector<8x8xf32>
    %c0_1192 = arith.constant 0 : index
    %c121_1193 = arith.constant 121 : index
    %c1_1194 = arith.constant 1 : index
    %c0_1195 = arith.constant 0 : index
    %1789 = vector.load %arg1[%c0_1192, %c121_1193, %c1_1194, %c0_1195] : memref<1x147x10x10xf32, #tpu.memory_space<vmem>>, vector<1x1x8x8xf32>
    %1790 = vector.shape_cast %1789 : vector<1x1x8x8xf32> to vector<8x8xf32>
    %c298 = arith.constant 298 : index
    %1791 = memref.load %arg2[%c298] : memref<363xf32, #tpu.memory_space<smem>>
    %1792 = vector.broadcast %1791 : f32 to vector<8x8xf32>
    %1793 = arith.mulf %1792, %1790 : vector<8x8xf32>
    %1794 = arith.addf %1788, %1793 : vector<8x8xf32>
    %c0_1196 = arith.constant 0 : index
    %c123_1197 = arith.constant 123 : index
    %c1_1198 = arith.constant 1 : index
    %c0_1199 = arith.constant 0 : index
    %1795 = vector.load %arg1[%c0_1196, %c123_1197, %c1_1198, %c0_1199] : memref<1x147x10x10xf32, #tpu.memory_space<vmem>>, vector<1x1x8x8xf32>
    %1796 = vector.shape_cast %1795 : vector<1x1x8x8xf32> to vector<8x8xf32>
    %c299 = arith.constant 299 : index
    %1797 = memref.load %arg2[%c299] : memref<363xf32, #tpu.memory_space<smem>>
    %1798 = vector.broadcast %1797 : f32 to vector<8x8xf32>
    %1799 = arith.mulf %1798, %1796 : vector<8x8xf32>
    %1800 = arith.addf %1794, %1799 : vector<8x8xf32>
    %c0_1200 = arith.constant 0 : index
    %c125_1201 = arith.constant 125 : index
    %c1_1202 = arith.constant 1 : index
    %c0_1203 = arith.constant 0 : index
    %1801 = vector.load %arg1[%c0_1200, %c125_1201, %c1_1202, %c0_1203] : memref<1x147x10x10xf32, #tpu.memory_space<vmem>>, vector<1x1x8x8xf32>
    %1802 = vector.shape_cast %1801 : vector<1x1x8x8xf32> to vector<8x8xf32>
    %c300 = arith.constant 300 : index
    %1803 = memref.load %arg2[%c300] : memref<363xf32, #tpu.memory_space<smem>>
    %1804 = vector.broadcast %1803 : f32 to vector<8x8xf32>
    %1805 = arith.mulf %1804, %1802 : vector<8x8xf32>
    %1806 = arith.addf %1800, %1805 : vector<8x8xf32>
    %c0_1204 = arith.constant 0 : index
    %c120_1205 = arith.constant 120 : index
    %c1_1206 = arith.constant 1 : index
    %c1_1207 = arith.constant 1 : index
    %1807 = vector.load %arg1[%c0_1204, %c120_1205, %c1_1206, %c1_1207] : memref<1x147x10x10xf32, #tpu.memory_space<vmem>>, vector<1x1x8x8xf32>
    %1808 = vector.shape_cast %1807 : vector<1x1x8x8xf32> to vector<8x8xf32>
    %c301 = arith.constant 301 : index
    %1809 = memref.load %arg2[%c301] : memref<363xf32, #tpu.memory_space<smem>>
    %1810 = vector.broadcast %1809 : f32 to vector<8x8xf32>
    %1811 = arith.mulf %1810, %1808 : vector<8x8xf32>
    %1812 = arith.addf %1806, %1811 : vector<8x8xf32>
    %c0_1208 = arith.constant 0 : index
    %c122_1209 = arith.constant 122 : index
    %c1_1210 = arith.constant 1 : index
    %c1_1211 = arith.constant 1 : index
    %1813 = vector.load %arg1[%c0_1208, %c122_1209, %c1_1210, %c1_1211] : memref<1x147x10x10xf32, #tpu.memory_space<vmem>>, vector<1x1x8x8xf32>
    %1814 = vector.shape_cast %1813 : vector<1x1x8x8xf32> to vector<8x8xf32>
    %c302 = arith.constant 302 : index
    %1815 = memref.load %arg2[%c302] : memref<363xf32, #tpu.memory_space<smem>>
    %1816 = vector.broadcast %1815 : f32 to vector<8x8xf32>
    %1817 = arith.mulf %1816, %1814 : vector<8x8xf32>
    %1818 = arith.addf %1812, %1817 : vector<8x8xf32>
    %c0_1212 = arith.constant 0 : index
    %c124_1213 = arith.constant 124 : index
    %c1_1214 = arith.constant 1 : index
    %c1_1215 = arith.constant 1 : index
    %1819 = vector.load %arg1[%c0_1212, %c124_1213, %c1_1214, %c1_1215] : memref<1x147x10x10xf32, #tpu.memory_space<vmem>>, vector<1x1x8x8xf32>
    %1820 = vector.shape_cast %1819 : vector<1x1x8x8xf32> to vector<8x8xf32>
    %c303 = arith.constant 303 : index
    %1821 = memref.load %arg2[%c303] : memref<363xf32, #tpu.memory_space<smem>>
    %1822 = vector.broadcast %1821 : f32 to vector<8x8xf32>
    %1823 = arith.mulf %1822, %1820 : vector<8x8xf32>
    %1824 = arith.addf %1818, %1823 : vector<8x8xf32>
    %c0_1216 = arith.constant 0 : index
    %c119_1217 = arith.constant 119 : index
    %c1_1218 = arith.constant 1 : index
    %c2_1219 = arith.constant 2 : index
    %1825 = vector.load %arg1[%c0_1216, %c119_1217, %c1_1218, %c2_1219] : memref<1x147x10x10xf32, #tpu.memory_space<vmem>>, vector<1x1x8x8xf32>
    %1826 = vector.shape_cast %1825 : vector<1x1x8x8xf32> to vector<8x8xf32>
    %c304 = arith.constant 304 : index
    %1827 = memref.load %arg2[%c304] : memref<363xf32, #tpu.memory_space<smem>>
    %1828 = vector.broadcast %1827 : f32 to vector<8x8xf32>
    %1829 = arith.mulf %1828, %1826 : vector<8x8xf32>
    %1830 = arith.addf %1824, %1829 : vector<8x8xf32>
    %c0_1220 = arith.constant 0 : index
    %c121_1221 = arith.constant 121 : index
    %c1_1222 = arith.constant 1 : index
    %c2_1223 = arith.constant 2 : index
    %1831 = vector.load %arg1[%c0_1220, %c121_1221, %c1_1222, %c2_1223] : memref<1x147x10x10xf32, #tpu.memory_space<vmem>>, vector<1x1x8x8xf32>
    %1832 = vector.shape_cast %1831 : vector<1x1x8x8xf32> to vector<8x8xf32>
    %c305 = arith.constant 305 : index
    %1833 = memref.load %arg2[%c305] : memref<363xf32, #tpu.memory_space<smem>>
    %1834 = vector.broadcast %1833 : f32 to vector<8x8xf32>
    %1835 = arith.mulf %1834, %1832 : vector<8x8xf32>
    %1836 = arith.addf %1830, %1835 : vector<8x8xf32>
    %c0_1224 = arith.constant 0 : index
    %c123_1225 = arith.constant 123 : index
    %c1_1226 = arith.constant 1 : index
    %c2_1227 = arith.constant 2 : index
    %1837 = vector.load %arg1[%c0_1224, %c123_1225, %c1_1226, %c2_1227] : memref<1x147x10x10xf32, #tpu.memory_space<vmem>>, vector<1x1x8x8xf32>
    %1838 = vector.shape_cast %1837 : vector<1x1x8x8xf32> to vector<8x8xf32>
    %c306 = arith.constant 306 : index
    %1839 = memref.load %arg2[%c306] : memref<363xf32, #tpu.memory_space<smem>>
    %1840 = vector.broadcast %1839 : f32 to vector<8x8xf32>
    %1841 = arith.mulf %1840, %1838 : vector<8x8xf32>
    %1842 = arith.addf %1836, %1841 : vector<8x8xf32>
    %c0_1228 = arith.constant 0 : index
    %c125_1229 = arith.constant 125 : index
    %c1_1230 = arith.constant 1 : index
    %c2_1231 = arith.constant 2 : index
    %1843 = vector.load %arg1[%c0_1228, %c125_1229, %c1_1230, %c2_1231] : memref<1x147x10x10xf32, #tpu.memory_space<vmem>>, vector<1x1x8x8xf32>
    %1844 = vector.shape_cast %1843 : vector<1x1x8x8xf32> to vector<8x8xf32>
    %c307 = arith.constant 307 : index
    %1845 = memref.load %arg2[%c307] : memref<363xf32, #tpu.memory_space<smem>>
    %1846 = vector.broadcast %1845 : f32 to vector<8x8xf32>
    %1847 = arith.mulf %1846, %1844 : vector<8x8xf32>
    %1848 = arith.addf %1842, %1847 : vector<8x8xf32>
    %c0_1232 = arith.constant 0 : index
    %c133_1233 = arith.constant 133 : index
    %c1_1234 = arith.constant 1 : index
    %c0_1235 = arith.constant 0 : index
    %1849 = vector.load %arg1[%c0_1232, %c133_1233, %c1_1234, %c0_1235] : memref<1x147x10x10xf32, #tpu.memory_space<vmem>>, vector<1x1x8x8xf32>
    %1850 = vector.shape_cast %1849 : vector<1x1x8x8xf32> to vector<8x8xf32>
    %c308 = arith.constant 308 : index
    %1851 = memref.load %arg2[%c308] : memref<363xf32, #tpu.memory_space<smem>>
    %1852 = vector.broadcast %1851 : f32 to vector<8x8xf32>
    %1853 = arith.mulf %1852, %1850 : vector<8x8xf32>
    %1854 = arith.addf %1848, %1853 : vector<8x8xf32>
    %c0_1236 = arith.constant 0 : index
    %c135_1237 = arith.constant 135 : index
    %c1_1238 = arith.constant 1 : index
    %c0_1239 = arith.constant 0 : index
    %1855 = vector.load %arg1[%c0_1236, %c135_1237, %c1_1238, %c0_1239] : memref<1x147x10x10xf32, #tpu.memory_space<vmem>>, vector<1x1x8x8xf32>
    %1856 = vector.shape_cast %1855 : vector<1x1x8x8xf32> to vector<8x8xf32>
    %c309 = arith.constant 309 : index
    %1857 = memref.load %arg2[%c309] : memref<363xf32, #tpu.memory_space<smem>>
    %1858 = vector.broadcast %1857 : f32 to vector<8x8xf32>
    %1859 = arith.mulf %1858, %1856 : vector<8x8xf32>
    %1860 = arith.addf %1854, %1859 : vector<8x8xf32>
    %c0_1240 = arith.constant 0 : index
    %c137_1241 = arith.constant 137 : index
    %c1_1242 = arith.constant 1 : index
    %c0_1243 = arith.constant 0 : index
    %1861 = vector.load %arg1[%c0_1240, %c137_1241, %c1_1242, %c0_1243] : memref<1x147x10x10xf32, #tpu.memory_space<vmem>>, vector<1x1x8x8xf32>
    %1862 = vector.shape_cast %1861 : vector<1x1x8x8xf32> to vector<8x8xf32>
    %c310 = arith.constant 310 : index
    %1863 = memref.load %arg2[%c310] : memref<363xf32, #tpu.memory_space<smem>>
    %1864 = vector.broadcast %1863 : f32 to vector<8x8xf32>
    %1865 = arith.mulf %1864, %1862 : vector<8x8xf32>
    %1866 = arith.addf %1860, %1865 : vector<8x8xf32>
    %c0_1244 = arith.constant 0 : index
    %c139_1245 = arith.constant 139 : index
    %c1_1246 = arith.constant 1 : index
    %c0_1247 = arith.constant 0 : index
    %1867 = vector.load %arg1[%c0_1244, %c139_1245, %c1_1246, %c0_1247] : memref<1x147x10x10xf32, #tpu.memory_space<vmem>>, vector<1x1x8x8xf32>
    %1868 = vector.shape_cast %1867 : vector<1x1x8x8xf32> to vector<8x8xf32>
    %c311 = arith.constant 311 : index
    %1869 = memref.load %arg2[%c311] : memref<363xf32, #tpu.memory_space<smem>>
    %1870 = vector.broadcast %1869 : f32 to vector<8x8xf32>
    %1871 = arith.mulf %1870, %1868 : vector<8x8xf32>
    %1872 = arith.addf %1866, %1871 : vector<8x8xf32>
    %c0_1248 = arith.constant 0 : index
    %c134_1249 = arith.constant 134 : index
    %c1_1250 = arith.constant 1 : index
    %c1_1251 = arith.constant 1 : index
    %1873 = vector.load %arg1[%c0_1248, %c134_1249, %c1_1250, %c1_1251] : memref<1x147x10x10xf32, #tpu.memory_space<vmem>>, vector<1x1x8x8xf32>
    %1874 = vector.shape_cast %1873 : vector<1x1x8x8xf32> to vector<8x8xf32>
    %c312 = arith.constant 312 : index
    %1875 = memref.load %arg2[%c312] : memref<363xf32, #tpu.memory_space<smem>>
    %1876 = vector.broadcast %1875 : f32 to vector<8x8xf32>
    %1877 = arith.mulf %1876, %1874 : vector<8x8xf32>
    %1878 = arith.addf %1872, %1877 : vector<8x8xf32>
    %c0_1252 = arith.constant 0 : index
    %c136_1253 = arith.constant 136 : index
    %c1_1254 = arith.constant 1 : index
    %c1_1255 = arith.constant 1 : index
    %1879 = vector.load %arg1[%c0_1252, %c136_1253, %c1_1254, %c1_1255] : memref<1x147x10x10xf32, #tpu.memory_space<vmem>>, vector<1x1x8x8xf32>
    %1880 = vector.shape_cast %1879 : vector<1x1x8x8xf32> to vector<8x8xf32>
    %c313 = arith.constant 313 : index
    %1881 = memref.load %arg2[%c313] : memref<363xf32, #tpu.memory_space<smem>>
    %1882 = vector.broadcast %1881 : f32 to vector<8x8xf32>
    %1883 = arith.mulf %1882, %1880 : vector<8x8xf32>
    %1884 = arith.addf %1878, %1883 : vector<8x8xf32>
    %c0_1256 = arith.constant 0 : index
    %c138_1257 = arith.constant 138 : index
    %c1_1258 = arith.constant 1 : index
    %c1_1259 = arith.constant 1 : index
    %1885 = vector.load %arg1[%c0_1256, %c138_1257, %c1_1258, %c1_1259] : memref<1x147x10x10xf32, #tpu.memory_space<vmem>>, vector<1x1x8x8xf32>
    %1886 = vector.shape_cast %1885 : vector<1x1x8x8xf32> to vector<8x8xf32>
    %c314 = arith.constant 314 : index
    %1887 = memref.load %arg2[%c314] : memref<363xf32, #tpu.memory_space<smem>>
    %1888 = vector.broadcast %1887 : f32 to vector<8x8xf32>
    %1889 = arith.mulf %1888, %1886 : vector<8x8xf32>
    %1890 = arith.addf %1884, %1889 : vector<8x8xf32>
    %c0_1260 = arith.constant 0 : index
    %c133_1261 = arith.constant 133 : index
    %c1_1262 = arith.constant 1 : index
    %c2_1263 = arith.constant 2 : index
    %1891 = vector.load %arg1[%c0_1260, %c133_1261, %c1_1262, %c2_1263] : memref<1x147x10x10xf32, #tpu.memory_space<vmem>>, vector<1x1x8x8xf32>
    %1892 = vector.shape_cast %1891 : vector<1x1x8x8xf32> to vector<8x8xf32>
    %c315 = arith.constant 315 : index
    %1893 = memref.load %arg2[%c315] : memref<363xf32, #tpu.memory_space<smem>>
    %1894 = vector.broadcast %1893 : f32 to vector<8x8xf32>
    %1895 = arith.mulf %1894, %1892 : vector<8x8xf32>
    %1896 = arith.addf %1890, %1895 : vector<8x8xf32>
    %c0_1264 = arith.constant 0 : index
    %c135_1265 = arith.constant 135 : index
    %c1_1266 = arith.constant 1 : index
    %c2_1267 = arith.constant 2 : index
    %1897 = vector.load %arg1[%c0_1264, %c135_1265, %c1_1266, %c2_1267] : memref<1x147x10x10xf32, #tpu.memory_space<vmem>>, vector<1x1x8x8xf32>
    %1898 = vector.shape_cast %1897 : vector<1x1x8x8xf32> to vector<8x8xf32>
    %c316 = arith.constant 316 : index
    %1899 = memref.load %arg2[%c316] : memref<363xf32, #tpu.memory_space<smem>>
    %1900 = vector.broadcast %1899 : f32 to vector<8x8xf32>
    %1901 = arith.mulf %1900, %1898 : vector<8x8xf32>
    %1902 = arith.addf %1896, %1901 : vector<8x8xf32>
    %c0_1268 = arith.constant 0 : index
    %c137_1269 = arith.constant 137 : index
    %c1_1270 = arith.constant 1 : index
    %c2_1271 = arith.constant 2 : index
    %1903 = vector.load %arg1[%c0_1268, %c137_1269, %c1_1270, %c2_1271] : memref<1x147x10x10xf32, #tpu.memory_space<vmem>>, vector<1x1x8x8xf32>
    %1904 = vector.shape_cast %1903 : vector<1x1x8x8xf32> to vector<8x8xf32>
    %c317 = arith.constant 317 : index
    %1905 = memref.load %arg2[%c317] : memref<363xf32, #tpu.memory_space<smem>>
    %1906 = vector.broadcast %1905 : f32 to vector<8x8xf32>
    %1907 = arith.mulf %1906, %1904 : vector<8x8xf32>
    %1908 = arith.addf %1902, %1907 : vector<8x8xf32>
    %c0_1272 = arith.constant 0 : index
    %c139_1273 = arith.constant 139 : index
    %c1_1274 = arith.constant 1 : index
    %c2_1275 = arith.constant 2 : index
    %1909 = vector.load %arg1[%c0_1272, %c139_1273, %c1_1274, %c2_1275] : memref<1x147x10x10xf32, #tpu.memory_space<vmem>>, vector<1x1x8x8xf32>
    %1910 = vector.shape_cast %1909 : vector<1x1x8x8xf32> to vector<8x8xf32>
    %c318 = arith.constant 318 : index
    %1911 = memref.load %arg2[%c318] : memref<363xf32, #tpu.memory_space<smem>>
    %1912 = vector.broadcast %1911 : f32 to vector<8x8xf32>
    %1913 = arith.mulf %1912, %1910 : vector<8x8xf32>
    %1914 = arith.addf %1908, %1913 : vector<8x8xf32>
    %c0_1276 = arith.constant 0 : index
    %c98_1277 = arith.constant 98 : index
    %c2_1278 = arith.constant 2 : index
    %c0_1279 = arith.constant 0 : index
    %1915 = vector.load %arg1[%c0_1276, %c98_1277, %c2_1278, %c0_1279] : memref<1x147x10x10xf32, #tpu.memory_space<vmem>>, vector<1x1x8x8xf32>
    %1916 = vector.shape_cast %1915 : vector<1x1x8x8xf32> to vector<8x8xf32>
    %c319 = arith.constant 319 : index
    %1917 = memref.load %arg2[%c319] : memref<363xf32, #tpu.memory_space<smem>>
    %1918 = vector.broadcast %1917 : f32 to vector<8x8xf32>
    %1919 = arith.mulf %1918, %1916 : vector<8x8xf32>
    %1920 = arith.addf %1914, %1919 : vector<8x8xf32>
    %c0_1280 = arith.constant 0 : index
    %c100_1281 = arith.constant 100 : index
    %c2_1282 = arith.constant 2 : index
    %c0_1283 = arith.constant 0 : index
    %1921 = vector.load %arg1[%c0_1280, %c100_1281, %c2_1282, %c0_1283] : memref<1x147x10x10xf32, #tpu.memory_space<vmem>>, vector<1x1x8x8xf32>
    %1922 = vector.shape_cast %1921 : vector<1x1x8x8xf32> to vector<8x8xf32>
    %c320 = arith.constant 320 : index
    %1923 = memref.load %arg2[%c320] : memref<363xf32, #tpu.memory_space<smem>>
    %1924 = vector.broadcast %1923 : f32 to vector<8x8xf32>
    %1925 = arith.mulf %1924, %1922 : vector<8x8xf32>
    %1926 = arith.addf %1920, %1925 : vector<8x8xf32>
    %c0_1284 = arith.constant 0 : index
    %c102_1285 = arith.constant 102 : index
    %c2_1286 = arith.constant 2 : index
    %c0_1287 = arith.constant 0 : index
    %1927 = vector.load %arg1[%c0_1284, %c102_1285, %c2_1286, %c0_1287] : memref<1x147x10x10xf32, #tpu.memory_space<vmem>>, vector<1x1x8x8xf32>
    %1928 = vector.shape_cast %1927 : vector<1x1x8x8xf32> to vector<8x8xf32>
    %c321 = arith.constant 321 : index
    %1929 = memref.load %arg2[%c321] : memref<363xf32, #tpu.memory_space<smem>>
    %1930 = vector.broadcast %1929 : f32 to vector<8x8xf32>
    %1931 = arith.mulf %1930, %1928 : vector<8x8xf32>
    %1932 = arith.addf %1926, %1931 : vector<8x8xf32>
    %c0_1288 = arith.constant 0 : index
    %c104_1289 = arith.constant 104 : index
    %c2_1290 = arith.constant 2 : index
    %c0_1291 = arith.constant 0 : index
    %1933 = vector.load %arg1[%c0_1288, %c104_1289, %c2_1290, %c0_1291] : memref<1x147x10x10xf32, #tpu.memory_space<vmem>>, vector<1x1x8x8xf32>
    %1934 = vector.shape_cast %1933 : vector<1x1x8x8xf32> to vector<8x8xf32>
    %c322 = arith.constant 322 : index
    %1935 = memref.load %arg2[%c322] : memref<363xf32, #tpu.memory_space<smem>>
    %1936 = vector.broadcast %1935 : f32 to vector<8x8xf32>
    %1937 = arith.mulf %1936, %1934 : vector<8x8xf32>
    %1938 = arith.addf %1932, %1937 : vector<8x8xf32>
    %c0_1292 = arith.constant 0 : index
    %c99_1293 = arith.constant 99 : index
    %c2_1294 = arith.constant 2 : index
    %c1_1295 = arith.constant 1 : index
    %1939 = vector.load %arg1[%c0_1292, %c99_1293, %c2_1294, %c1_1295] : memref<1x147x10x10xf32, #tpu.memory_space<vmem>>, vector<1x1x8x8xf32>
    %1940 = vector.shape_cast %1939 : vector<1x1x8x8xf32> to vector<8x8xf32>
    %c323 = arith.constant 323 : index
    %1941 = memref.load %arg2[%c323] : memref<363xf32, #tpu.memory_space<smem>>
    %1942 = vector.broadcast %1941 : f32 to vector<8x8xf32>
    %1943 = arith.mulf %1942, %1940 : vector<8x8xf32>
    %1944 = arith.addf %1938, %1943 : vector<8x8xf32>
    %c0_1296 = arith.constant 0 : index
    %c101_1297 = arith.constant 101 : index
    %c2_1298 = arith.constant 2 : index
    %c1_1299 = arith.constant 1 : index
    %1945 = vector.load %arg1[%c0_1296, %c101_1297, %c2_1298, %c1_1299] : memref<1x147x10x10xf32, #tpu.memory_space<vmem>>, vector<1x1x8x8xf32>
    %1946 = vector.shape_cast %1945 : vector<1x1x8x8xf32> to vector<8x8xf32>
    %c324 = arith.constant 324 : index
    %1947 = memref.load %arg2[%c324] : memref<363xf32, #tpu.memory_space<smem>>
    %1948 = vector.broadcast %1947 : f32 to vector<8x8xf32>
    %1949 = arith.mulf %1948, %1946 : vector<8x8xf32>
    %1950 = arith.addf %1944, %1949 : vector<8x8xf32>
    %c0_1300 = arith.constant 0 : index
    %c103_1301 = arith.constant 103 : index
    %c2_1302 = arith.constant 2 : index
    %c1_1303 = arith.constant 1 : index
    %1951 = vector.load %arg1[%c0_1300, %c103_1301, %c2_1302, %c1_1303] : memref<1x147x10x10xf32, #tpu.memory_space<vmem>>, vector<1x1x8x8xf32>
    %1952 = vector.shape_cast %1951 : vector<1x1x8x8xf32> to vector<8x8xf32>
    %c325 = arith.constant 325 : index
    %1953 = memref.load %arg2[%c325] : memref<363xf32, #tpu.memory_space<smem>>
    %1954 = vector.broadcast %1953 : f32 to vector<8x8xf32>
    %1955 = arith.mulf %1954, %1952 : vector<8x8xf32>
    %1956 = arith.addf %1950, %1955 : vector<8x8xf32>
    %c0_1304 = arith.constant 0 : index
    %c98_1305 = arith.constant 98 : index
    %c2_1306 = arith.constant 2 : index
    %c2_1307 = arith.constant 2 : index
    %1957 = vector.load %arg1[%c0_1304, %c98_1305, %c2_1306, %c2_1307] : memref<1x147x10x10xf32, #tpu.memory_space<vmem>>, vector<1x1x8x8xf32>
    %1958 = vector.shape_cast %1957 : vector<1x1x8x8xf32> to vector<8x8xf32>
    %c326 = arith.constant 326 : index
    %1959 = memref.load %arg2[%c326] : memref<363xf32, #tpu.memory_space<smem>>
    %1960 = vector.broadcast %1959 : f32 to vector<8x8xf32>
    %1961 = arith.mulf %1960, %1958 : vector<8x8xf32>
    %1962 = arith.addf %1956, %1961 : vector<8x8xf32>
    %c0_1308 = arith.constant 0 : index
    %c100_1309 = arith.constant 100 : index
    %c2_1310 = arith.constant 2 : index
    %c2_1311 = arith.constant 2 : index
    %1963 = vector.load %arg1[%c0_1308, %c100_1309, %c2_1310, %c2_1311] : memref<1x147x10x10xf32, #tpu.memory_space<vmem>>, vector<1x1x8x8xf32>
    %1964 = vector.shape_cast %1963 : vector<1x1x8x8xf32> to vector<8x8xf32>
    %c327 = arith.constant 327 : index
    %1965 = memref.load %arg2[%c327] : memref<363xf32, #tpu.memory_space<smem>>
    %1966 = vector.broadcast %1965 : f32 to vector<8x8xf32>
    %1967 = arith.mulf %1966, %1964 : vector<8x8xf32>
    %1968 = arith.addf %1962, %1967 : vector<8x8xf32>
    %c0_1312 = arith.constant 0 : index
    %c102_1313 = arith.constant 102 : index
    %c2_1314 = arith.constant 2 : index
    %c2_1315 = arith.constant 2 : index
    %1969 = vector.load %arg1[%c0_1312, %c102_1313, %c2_1314, %c2_1315] : memref<1x147x10x10xf32, #tpu.memory_space<vmem>>, vector<1x1x8x8xf32>
    %1970 = vector.shape_cast %1969 : vector<1x1x8x8xf32> to vector<8x8xf32>
    %c328 = arith.constant 328 : index
    %1971 = memref.load %arg2[%c328] : memref<363xf32, #tpu.memory_space<smem>>
    %1972 = vector.broadcast %1971 : f32 to vector<8x8xf32>
    %1973 = arith.mulf %1972, %1970 : vector<8x8xf32>
    %1974 = arith.addf %1968, %1973 : vector<8x8xf32>
    %c0_1316 = arith.constant 0 : index
    %c104_1317 = arith.constant 104 : index
    %c2_1318 = arith.constant 2 : index
    %c2_1319 = arith.constant 2 : index
    %1975 = vector.load %arg1[%c0_1316, %c104_1317, %c2_1318, %c2_1319] : memref<1x147x10x10xf32, #tpu.memory_space<vmem>>, vector<1x1x8x8xf32>
    %1976 = vector.shape_cast %1975 : vector<1x1x8x8xf32> to vector<8x8xf32>
    %c329 = arith.constant 329 : index
    %1977 = memref.load %arg2[%c329] : memref<363xf32, #tpu.memory_space<smem>>
    %1978 = vector.broadcast %1977 : f32 to vector<8x8xf32>
    %1979 = arith.mulf %1978, %1976 : vector<8x8xf32>
    %1980 = arith.addf %1974, %1979 : vector<8x8xf32>
    %c0_1320 = arith.constant 0 : index
    %c112_1321 = arith.constant 112 : index
    %c2_1322 = arith.constant 2 : index
    %c0_1323 = arith.constant 0 : index
    %1981 = vector.load %arg1[%c0_1320, %c112_1321, %c2_1322, %c0_1323] : memref<1x147x10x10xf32, #tpu.memory_space<vmem>>, vector<1x1x8x8xf32>
    %1982 = vector.shape_cast %1981 : vector<1x1x8x8xf32> to vector<8x8xf32>
    %c330 = arith.constant 330 : index
    %1983 = memref.load %arg2[%c330] : memref<363xf32, #tpu.memory_space<smem>>
    %1984 = vector.broadcast %1983 : f32 to vector<8x8xf32>
    %1985 = arith.mulf %1984, %1982 : vector<8x8xf32>
    %1986 = arith.addf %1980, %1985 : vector<8x8xf32>
    %c0_1324 = arith.constant 0 : index
    %c114_1325 = arith.constant 114 : index
    %c2_1326 = arith.constant 2 : index
    %c0_1327 = arith.constant 0 : index
    %1987 = vector.load %arg1[%c0_1324, %c114_1325, %c2_1326, %c0_1327] : memref<1x147x10x10xf32, #tpu.memory_space<vmem>>, vector<1x1x8x8xf32>
    %1988 = vector.shape_cast %1987 : vector<1x1x8x8xf32> to vector<8x8xf32>
    %c331 = arith.constant 331 : index
    %1989 = memref.load %arg2[%c331] : memref<363xf32, #tpu.memory_space<smem>>
    %1990 = vector.broadcast %1989 : f32 to vector<8x8xf32>
    %1991 = arith.mulf %1990, %1988 : vector<8x8xf32>
    %1992 = arith.addf %1986, %1991 : vector<8x8xf32>
    %c0_1328 = arith.constant 0 : index
    %c116_1329 = arith.constant 116 : index
    %c2_1330 = arith.constant 2 : index
    %c0_1331 = arith.constant 0 : index
    %1993 = vector.load %arg1[%c0_1328, %c116_1329, %c2_1330, %c0_1331] : memref<1x147x10x10xf32, #tpu.memory_space<vmem>>, vector<1x1x8x8xf32>
    %1994 = vector.shape_cast %1993 : vector<1x1x8x8xf32> to vector<8x8xf32>
    %c332 = arith.constant 332 : index
    %1995 = memref.load %arg2[%c332] : memref<363xf32, #tpu.memory_space<smem>>
    %1996 = vector.broadcast %1995 : f32 to vector<8x8xf32>
    %1997 = arith.mulf %1996, %1994 : vector<8x8xf32>
    %1998 = arith.addf %1992, %1997 : vector<8x8xf32>
    %c0_1332 = arith.constant 0 : index
    %c118_1333 = arith.constant 118 : index
    %c2_1334 = arith.constant 2 : index
    %c0_1335 = arith.constant 0 : index
    %1999 = vector.load %arg1[%c0_1332, %c118_1333, %c2_1334, %c0_1335] : memref<1x147x10x10xf32, #tpu.memory_space<vmem>>, vector<1x1x8x8xf32>
    %2000 = vector.shape_cast %1999 : vector<1x1x8x8xf32> to vector<8x8xf32>
    %c333 = arith.constant 333 : index
    %2001 = memref.load %arg2[%c333] : memref<363xf32, #tpu.memory_space<smem>>
    %2002 = vector.broadcast %2001 : f32 to vector<8x8xf32>
    %2003 = arith.mulf %2002, %2000 : vector<8x8xf32>
    %2004 = arith.addf %1998, %2003 : vector<8x8xf32>
    %c0_1336 = arith.constant 0 : index
    %c113_1337 = arith.constant 113 : index
    %c2_1338 = arith.constant 2 : index
    %c1_1339 = arith.constant 1 : index
    %2005 = vector.load %arg1[%c0_1336, %c113_1337, %c2_1338, %c1_1339] : memref<1x147x10x10xf32, #tpu.memory_space<vmem>>, vector<1x1x8x8xf32>
    %2006 = vector.shape_cast %2005 : vector<1x1x8x8xf32> to vector<8x8xf32>
    %c334 = arith.constant 334 : index
    %2007 = memref.load %arg2[%c334] : memref<363xf32, #tpu.memory_space<smem>>
    %2008 = vector.broadcast %2007 : f32 to vector<8x8xf32>
    %2009 = arith.mulf %2008, %2006 : vector<8x8xf32>
    %2010 = arith.addf %2004, %2009 : vector<8x8xf32>
    %c0_1340 = arith.constant 0 : index
    %c115_1341 = arith.constant 115 : index
    %c2_1342 = arith.constant 2 : index
    %c1_1343 = arith.constant 1 : index
    %2011 = vector.load %arg1[%c0_1340, %c115_1341, %c2_1342, %c1_1343] : memref<1x147x10x10xf32, #tpu.memory_space<vmem>>, vector<1x1x8x8xf32>
    %2012 = vector.shape_cast %2011 : vector<1x1x8x8xf32> to vector<8x8xf32>
    %c335 = arith.constant 335 : index
    %2013 = memref.load %arg2[%c335] : memref<363xf32, #tpu.memory_space<smem>>
    %2014 = vector.broadcast %2013 : f32 to vector<8x8xf32>
    %2015 = arith.mulf %2014, %2012 : vector<8x8xf32>
    %2016 = arith.addf %2010, %2015 : vector<8x8xf32>
    %c0_1344 = arith.constant 0 : index
    %c117_1345 = arith.constant 117 : index
    %c2_1346 = arith.constant 2 : index
    %c1_1347 = arith.constant 1 : index
    %2017 = vector.load %arg1[%c0_1344, %c117_1345, %c2_1346, %c1_1347] : memref<1x147x10x10xf32, #tpu.memory_space<vmem>>, vector<1x1x8x8xf32>
    %2018 = vector.shape_cast %2017 : vector<1x1x8x8xf32> to vector<8x8xf32>
    %c336 = arith.constant 336 : index
    %2019 = memref.load %arg2[%c336] : memref<363xf32, #tpu.memory_space<smem>>
    %2020 = vector.broadcast %2019 : f32 to vector<8x8xf32>
    %2021 = arith.mulf %2020, %2018 : vector<8x8xf32>
    %2022 = arith.addf %2016, %2021 : vector<8x8xf32>
    %c0_1348 = arith.constant 0 : index
    %c112_1349 = arith.constant 112 : index
    %c2_1350 = arith.constant 2 : index
    %c2_1351 = arith.constant 2 : index
    %2023 = vector.load %arg1[%c0_1348, %c112_1349, %c2_1350, %c2_1351] : memref<1x147x10x10xf32, #tpu.memory_space<vmem>>, vector<1x1x8x8xf32>
    %2024 = vector.shape_cast %2023 : vector<1x1x8x8xf32> to vector<8x8xf32>
    %c337 = arith.constant 337 : index
    %2025 = memref.load %arg2[%c337] : memref<363xf32, #tpu.memory_space<smem>>
    %2026 = vector.broadcast %2025 : f32 to vector<8x8xf32>
    %2027 = arith.mulf %2026, %2024 : vector<8x8xf32>
    %2028 = arith.addf %2022, %2027 : vector<8x8xf32>
    %c0_1352 = arith.constant 0 : index
    %c114_1353 = arith.constant 114 : index
    %c2_1354 = arith.constant 2 : index
    %c2_1355 = arith.constant 2 : index
    %2029 = vector.load %arg1[%c0_1352, %c114_1353, %c2_1354, %c2_1355] : memref<1x147x10x10xf32, #tpu.memory_space<vmem>>, vector<1x1x8x8xf32>
    %2030 = vector.shape_cast %2029 : vector<1x1x8x8xf32> to vector<8x8xf32>
    %c338 = arith.constant 338 : index
    %2031 = memref.load %arg2[%c338] : memref<363xf32, #tpu.memory_space<smem>>
    %2032 = vector.broadcast %2031 : f32 to vector<8x8xf32>
    %2033 = arith.mulf %2032, %2030 : vector<8x8xf32>
    %2034 = arith.addf %2028, %2033 : vector<8x8xf32>
    %c0_1356 = arith.constant 0 : index
    %c116_1357 = arith.constant 116 : index
    %c2_1358 = arith.constant 2 : index
    %c2_1359 = arith.constant 2 : index
    %2035 = vector.load %arg1[%c0_1356, %c116_1357, %c2_1358, %c2_1359] : memref<1x147x10x10xf32, #tpu.memory_space<vmem>>, vector<1x1x8x8xf32>
    %2036 = vector.shape_cast %2035 : vector<1x1x8x8xf32> to vector<8x8xf32>
    %c339 = arith.constant 339 : index
    %2037 = memref.load %arg2[%c339] : memref<363xf32, #tpu.memory_space<smem>>
    %2038 = vector.broadcast %2037 : f32 to vector<8x8xf32>
    %2039 = arith.mulf %2038, %2036 : vector<8x8xf32>
    %2040 = arith.addf %2034, %2039 : vector<8x8xf32>
    %c0_1360 = arith.constant 0 : index
    %c118_1361 = arith.constant 118 : index
    %c2_1362 = arith.constant 2 : index
    %c2_1363 = arith.constant 2 : index
    %2041 = vector.load %arg1[%c0_1360, %c118_1361, %c2_1362, %c2_1363] : memref<1x147x10x10xf32, #tpu.memory_space<vmem>>, vector<1x1x8x8xf32>
    %2042 = vector.shape_cast %2041 : vector<1x1x8x8xf32> to vector<8x8xf32>
    %c340 = arith.constant 340 : index
    %2043 = memref.load %arg2[%c340] : memref<363xf32, #tpu.memory_space<smem>>
    %2044 = vector.broadcast %2043 : f32 to vector<8x8xf32>
    %2045 = arith.mulf %2044, %2042 : vector<8x8xf32>
    %2046 = arith.addf %2040, %2045 : vector<8x8xf32>
    %c0_1364 = arith.constant 0 : index
    %c126_1365 = arith.constant 126 : index
    %c2_1366 = arith.constant 2 : index
    %c0_1367 = arith.constant 0 : index
    %2047 = vector.load %arg1[%c0_1364, %c126_1365, %c2_1366, %c0_1367] : memref<1x147x10x10xf32, #tpu.memory_space<vmem>>, vector<1x1x8x8xf32>
    %2048 = vector.shape_cast %2047 : vector<1x1x8x8xf32> to vector<8x8xf32>
    %c341 = arith.constant 341 : index
    %2049 = memref.load %arg2[%c341] : memref<363xf32, #tpu.memory_space<smem>>
    %2050 = vector.broadcast %2049 : f32 to vector<8x8xf32>
    %2051 = arith.mulf %2050, %2048 : vector<8x8xf32>
    %2052 = arith.addf %2046, %2051 : vector<8x8xf32>
    %c0_1368 = arith.constant 0 : index
    %c128_1369 = arith.constant 128 : index
    %c2_1370 = arith.constant 2 : index
    %c0_1371 = arith.constant 0 : index
    %2053 = vector.load %arg1[%c0_1368, %c128_1369, %c2_1370, %c0_1371] : memref<1x147x10x10xf32, #tpu.memory_space<vmem>>, vector<1x1x8x8xf32>
    %2054 = vector.shape_cast %2053 : vector<1x1x8x8xf32> to vector<8x8xf32>
    %c342 = arith.constant 342 : index
    %2055 = memref.load %arg2[%c342] : memref<363xf32, #tpu.memory_space<smem>>
    %2056 = vector.broadcast %2055 : f32 to vector<8x8xf32>
    %2057 = arith.mulf %2056, %2054 : vector<8x8xf32>
    %2058 = arith.addf %2052, %2057 : vector<8x8xf32>
    %c0_1372 = arith.constant 0 : index
    %c130_1373 = arith.constant 130 : index
    %c2_1374 = arith.constant 2 : index
    %c0_1375 = arith.constant 0 : index
    %2059 = vector.load %arg1[%c0_1372, %c130_1373, %c2_1374, %c0_1375] : memref<1x147x10x10xf32, #tpu.memory_space<vmem>>, vector<1x1x8x8xf32>
    %2060 = vector.shape_cast %2059 : vector<1x1x8x8xf32> to vector<8x8xf32>
    %c343 = arith.constant 343 : index
    %2061 = memref.load %arg2[%c343] : memref<363xf32, #tpu.memory_space<smem>>
    %2062 = vector.broadcast %2061 : f32 to vector<8x8xf32>
    %2063 = arith.mulf %2062, %2060 : vector<8x8xf32>
    %2064 = arith.addf %2058, %2063 : vector<8x8xf32>
    %c0_1376 = arith.constant 0 : index
    %c132_1377 = arith.constant 132 : index
    %c2_1378 = arith.constant 2 : index
    %c0_1379 = arith.constant 0 : index
    %2065 = vector.load %arg1[%c0_1376, %c132_1377, %c2_1378, %c0_1379] : memref<1x147x10x10xf32, #tpu.memory_space<vmem>>, vector<1x1x8x8xf32>
    %2066 = vector.shape_cast %2065 : vector<1x1x8x8xf32> to vector<8x8xf32>
    %c344 = arith.constant 344 : index
    %2067 = memref.load %arg2[%c344] : memref<363xf32, #tpu.memory_space<smem>>
    %2068 = vector.broadcast %2067 : f32 to vector<8x8xf32>
    %2069 = arith.mulf %2068, %2066 : vector<8x8xf32>
    %2070 = arith.addf %2064, %2069 : vector<8x8xf32>
    %c0_1380 = arith.constant 0 : index
    %c127_1381 = arith.constant 127 : index
    %c2_1382 = arith.constant 2 : index
    %c1_1383 = arith.constant 1 : index
    %2071 = vector.load %arg1[%c0_1380, %c127_1381, %c2_1382, %c1_1383] : memref<1x147x10x10xf32, #tpu.memory_space<vmem>>, vector<1x1x8x8xf32>
    %2072 = vector.shape_cast %2071 : vector<1x1x8x8xf32> to vector<8x8xf32>
    %c345 = arith.constant 345 : index
    %2073 = memref.load %arg2[%c345] : memref<363xf32, #tpu.memory_space<smem>>
    %2074 = vector.broadcast %2073 : f32 to vector<8x8xf32>
    %2075 = arith.mulf %2074, %2072 : vector<8x8xf32>
    %2076 = arith.addf %2070, %2075 : vector<8x8xf32>
    %c0_1384 = arith.constant 0 : index
    %c129_1385 = arith.constant 129 : index
    %c2_1386 = arith.constant 2 : index
    %c1_1387 = arith.constant 1 : index
    %2077 = vector.load %arg1[%c0_1384, %c129_1385, %c2_1386, %c1_1387] : memref<1x147x10x10xf32, #tpu.memory_space<vmem>>, vector<1x1x8x8xf32>
    %2078 = vector.shape_cast %2077 : vector<1x1x8x8xf32> to vector<8x8xf32>
    %c346 = arith.constant 346 : index
    %2079 = memref.load %arg2[%c346] : memref<363xf32, #tpu.memory_space<smem>>
    %2080 = vector.broadcast %2079 : f32 to vector<8x8xf32>
    %2081 = arith.mulf %2080, %2078 : vector<8x8xf32>
    %2082 = arith.addf %2076, %2081 : vector<8x8xf32>
    %c0_1388 = arith.constant 0 : index
    %c131_1389 = arith.constant 131 : index
    %c2_1390 = arith.constant 2 : index
    %c1_1391 = arith.constant 1 : index
    %2083 = vector.load %arg1[%c0_1388, %c131_1389, %c2_1390, %c1_1391] : memref<1x147x10x10xf32, #tpu.memory_space<vmem>>, vector<1x1x8x8xf32>
    %2084 = vector.shape_cast %2083 : vector<1x1x8x8xf32> to vector<8x8xf32>
    %c347 = arith.constant 347 : index
    %2085 = memref.load %arg2[%c347] : memref<363xf32, #tpu.memory_space<smem>>
    %2086 = vector.broadcast %2085 : f32 to vector<8x8xf32>
    %2087 = arith.mulf %2086, %2084 : vector<8x8xf32>
    %2088 = arith.addf %2082, %2087 : vector<8x8xf32>
    %c0_1392 = arith.constant 0 : index
    %c126_1393 = arith.constant 126 : index
    %c2_1394 = arith.constant 2 : index
    %c2_1395 = arith.constant 2 : index
    %2089 = vector.load %arg1[%c0_1392, %c126_1393, %c2_1394, %c2_1395] : memref<1x147x10x10xf32, #tpu.memory_space<vmem>>, vector<1x1x8x8xf32>
    %2090 = vector.shape_cast %2089 : vector<1x1x8x8xf32> to vector<8x8xf32>
    %c348 = arith.constant 348 : index
    %2091 = memref.load %arg2[%c348] : memref<363xf32, #tpu.memory_space<smem>>
    %2092 = vector.broadcast %2091 : f32 to vector<8x8xf32>
    %2093 = arith.mulf %2092, %2090 : vector<8x8xf32>
    %2094 = arith.addf %2088, %2093 : vector<8x8xf32>
    %c0_1396 = arith.constant 0 : index
    %c128_1397 = arith.constant 128 : index
    %c2_1398 = arith.constant 2 : index
    %c2_1399 = arith.constant 2 : index
    %2095 = vector.load %arg1[%c0_1396, %c128_1397, %c2_1398, %c2_1399] : memref<1x147x10x10xf32, #tpu.memory_space<vmem>>, vector<1x1x8x8xf32>
    %2096 = vector.shape_cast %2095 : vector<1x1x8x8xf32> to vector<8x8xf32>
    %c349 = arith.constant 349 : index
    %2097 = memref.load %arg2[%c349] : memref<363xf32, #tpu.memory_space<smem>>
    %2098 = vector.broadcast %2097 : f32 to vector<8x8xf32>
    %2099 = arith.mulf %2098, %2096 : vector<8x8xf32>
    %2100 = arith.addf %2094, %2099 : vector<8x8xf32>
    %c0_1400 = arith.constant 0 : index
    %c130_1401 = arith.constant 130 : index
    %c2_1402 = arith.constant 2 : index
    %c2_1403 = arith.constant 2 : index
    %2101 = vector.load %arg1[%c0_1400, %c130_1401, %c2_1402, %c2_1403] : memref<1x147x10x10xf32, #tpu.memory_space<vmem>>, vector<1x1x8x8xf32>
    %2102 = vector.shape_cast %2101 : vector<1x1x8x8xf32> to vector<8x8xf32>
    %c350 = arith.constant 350 : index
    %2103 = memref.load %arg2[%c350] : memref<363xf32, #tpu.memory_space<smem>>
    %2104 = vector.broadcast %2103 : f32 to vector<8x8xf32>
    %2105 = arith.mulf %2104, %2102 : vector<8x8xf32>
    %2106 = arith.addf %2100, %2105 : vector<8x8xf32>
    %c0_1404 = arith.constant 0 : index
    %c132_1405 = arith.constant 132 : index
    %c2_1406 = arith.constant 2 : index
    %c2_1407 = arith.constant 2 : index
    %2107 = vector.load %arg1[%c0_1404, %c132_1405, %c2_1406, %c2_1407] : memref<1x147x10x10xf32, #tpu.memory_space<vmem>>, vector<1x1x8x8xf32>
    %2108 = vector.shape_cast %2107 : vector<1x1x8x8xf32> to vector<8x8xf32>
    %c351 = arith.constant 351 : index
    %2109 = memref.load %arg2[%c351] : memref<363xf32, #tpu.memory_space<smem>>
    %2110 = vector.broadcast %2109 : f32 to vector<8x8xf32>
    %2111 = arith.mulf %2110, %2108 : vector<8x8xf32>
    %2112 = arith.addf %2106, %2111 : vector<8x8xf32>
    %c0_1408 = arith.constant 0 : index
    %c140_1409 = arith.constant 140 : index
    %c2_1410 = arith.constant 2 : index
    %c0_1411 = arith.constant 0 : index
    %2113 = vector.load %arg1[%c0_1408, %c140_1409, %c2_1410, %c0_1411] : memref<1x147x10x10xf32, #tpu.memory_space<vmem>>, vector<1x1x8x8xf32>
    %2114 = vector.shape_cast %2113 : vector<1x1x8x8xf32> to vector<8x8xf32>
    %c352 = arith.constant 352 : index
    %2115 = memref.load %arg2[%c352] : memref<363xf32, #tpu.memory_space<smem>>
    %2116 = vector.broadcast %2115 : f32 to vector<8x8xf32>
    %2117 = arith.mulf %2116, %2114 : vector<8x8xf32>
    %2118 = arith.addf %2112, %2117 : vector<8x8xf32>
    %c0_1412 = arith.constant 0 : index
    %c142_1413 = arith.constant 142 : index
    %c2_1414 = arith.constant 2 : index
    %c0_1415 = arith.constant 0 : index
    %2119 = vector.load %arg1[%c0_1412, %c142_1413, %c2_1414, %c0_1415] : memref<1x147x10x10xf32, #tpu.memory_space<vmem>>, vector<1x1x8x8xf32>
    %2120 = vector.shape_cast %2119 : vector<1x1x8x8xf32> to vector<8x8xf32>
    %c353 = arith.constant 353 : index
    %2121 = memref.load %arg2[%c353] : memref<363xf32, #tpu.memory_space<smem>>
    %2122 = vector.broadcast %2121 : f32 to vector<8x8xf32>
    %2123 = arith.mulf %2122, %2120 : vector<8x8xf32>
    %2124 = arith.addf %2118, %2123 : vector<8x8xf32>
    %c0_1416 = arith.constant 0 : index
    %c144_1417 = arith.constant 144 : index
    %c2_1418 = arith.constant 2 : index
    %c0_1419 = arith.constant 0 : index
    %2125 = vector.load %arg1[%c0_1416, %c144_1417, %c2_1418, %c0_1419] : memref<1x147x10x10xf32, #tpu.memory_space<vmem>>, vector<1x1x8x8xf32>
    %2126 = vector.shape_cast %2125 : vector<1x1x8x8xf32> to vector<8x8xf32>
    %c354 = arith.constant 354 : index
    %2127 = memref.load %arg2[%c354] : memref<363xf32, #tpu.memory_space<smem>>
    %2128 = vector.broadcast %2127 : f32 to vector<8x8xf32>
    %2129 = arith.mulf %2128, %2126 : vector<8x8xf32>
    %2130 = arith.addf %2124, %2129 : vector<8x8xf32>
    %c0_1420 = arith.constant 0 : index
    %c146_1421 = arith.constant 146 : index
    %c2_1422 = arith.constant 2 : index
    %c0_1423 = arith.constant 0 : index
    %2131 = vector.load %arg1[%c0_1420, %c146_1421, %c2_1422, %c0_1423] : memref<1x147x10x10xf32, #tpu.memory_space<vmem>>, vector<1x1x8x8xf32>
    %2132 = vector.shape_cast %2131 : vector<1x1x8x8xf32> to vector<8x8xf32>
    %c355 = arith.constant 355 : index
    %2133 = memref.load %arg2[%c355] : memref<363xf32, #tpu.memory_space<smem>>
    %2134 = vector.broadcast %2133 : f32 to vector<8x8xf32>
    %2135 = arith.mulf %2134, %2132 : vector<8x8xf32>
    %2136 = arith.addf %2130, %2135 : vector<8x8xf32>
    %c0_1424 = arith.constant 0 : index
    %c141_1425 = arith.constant 141 : index
    %c2_1426 = arith.constant 2 : index
    %c1_1427 = arith.constant 1 : index
    %2137 = vector.load %arg1[%c0_1424, %c141_1425, %c2_1426, %c1_1427] : memref<1x147x10x10xf32, #tpu.memory_space<vmem>>, vector<1x1x8x8xf32>
    %2138 = vector.shape_cast %2137 : vector<1x1x8x8xf32> to vector<8x8xf32>
    %c356 = arith.constant 356 : index
    %2139 = memref.load %arg2[%c356] : memref<363xf32, #tpu.memory_space<smem>>
    %2140 = vector.broadcast %2139 : f32 to vector<8x8xf32>
    %2141 = arith.mulf %2140, %2138 : vector<8x8xf32>
    %2142 = arith.addf %2136, %2141 : vector<8x8xf32>
    %c0_1428 = arith.constant 0 : index
    %c143_1429 = arith.constant 143 : index
    %c2_1430 = arith.constant 2 : index
    %c1_1431 = arith.constant 1 : index
    %2143 = vector.load %arg1[%c0_1428, %c143_1429, %c2_1430, %c1_1431] : memref<1x147x10x10xf32, #tpu.memory_space<vmem>>, vector<1x1x8x8xf32>
    %2144 = vector.shape_cast %2143 : vector<1x1x8x8xf32> to vector<8x8xf32>
    %c357 = arith.constant 357 : index
    %2145 = memref.load %arg2[%c357] : memref<363xf32, #tpu.memory_space<smem>>
    %2146 = vector.broadcast %2145 : f32 to vector<8x8xf32>
    %2147 = arith.mulf %2146, %2144 : vector<8x8xf32>
    %2148 = arith.addf %2142, %2147 : vector<8x8xf32>
    %c0_1432 = arith.constant 0 : index
    %c145_1433 = arith.constant 145 : index
    %c2_1434 = arith.constant 2 : index
    %c1_1435 = arith.constant 1 : index
    %2149 = vector.load %arg1[%c0_1432, %c145_1433, %c2_1434, %c1_1435] : memref<1x147x10x10xf32, #tpu.memory_space<vmem>>, vector<1x1x8x8xf32>
    %2150 = vector.shape_cast %2149 : vector<1x1x8x8xf32> to vector<8x8xf32>
    %c358 = arith.constant 358 : index
    %2151 = memref.load %arg2[%c358] : memref<363xf32, #tpu.memory_space<smem>>
    %2152 = vector.broadcast %2151 : f32 to vector<8x8xf32>
    %2153 = arith.mulf %2152, %2150 : vector<8x8xf32>
    %2154 = arith.addf %2148, %2153 : vector<8x8xf32>
    %c0_1436 = arith.constant 0 : index
    %c140_1437 = arith.constant 140 : index
    %c2_1438 = arith.constant 2 : index
    %c2_1439 = arith.constant 2 : index
    %2155 = vector.load %arg1[%c0_1436, %c140_1437, %c2_1438, %c2_1439] : memref<1x147x10x10xf32, #tpu.memory_space<vmem>>, vector<1x1x8x8xf32>
    %2156 = vector.shape_cast %2155 : vector<1x1x8x8xf32> to vector<8x8xf32>
    %c359 = arith.constant 359 : index
    %2157 = memref.load %arg2[%c359] : memref<363xf32, #tpu.memory_space<smem>>
    %2158 = vector.broadcast %2157 : f32 to vector<8x8xf32>
    %2159 = arith.mulf %2158, %2156 : vector<8x8xf32>
    %2160 = arith.addf %2154, %2159 : vector<8x8xf32>
    %c0_1440 = arith.constant 0 : index
    %c142_1441 = arith.constant 142 : index
    %c2_1442 = arith.constant 2 : index
    %c2_1443 = arith.constant 2 : index
    %2161 = vector.load %arg1[%c0_1440, %c142_1441, %c2_1442, %c2_1443] : memref<1x147x10x10xf32, #tpu.memory_space<vmem>>, vector<1x1x8x8xf32>
    %2162 = vector.shape_cast %2161 : vector<1x1x8x8xf32> to vector<8x8xf32>
    %c360 = arith.constant 360 : index
    %2163 = memref.load %arg2[%c360] : memref<363xf32, #tpu.memory_space<smem>>
    %2164 = vector.broadcast %2163 : f32 to vector<8x8xf32>
    %2165 = arith.mulf %2164, %2162 : vector<8x8xf32>
    %2166 = arith.addf %2160, %2165 : vector<8x8xf32>
    %c0_1444 = arith.constant 0 : index
    %c144_1445 = arith.constant 144 : index
    %c2_1446 = arith.constant 2 : index
    %c2_1447 = arith.constant 2 : index
    %2167 = vector.load %arg1[%c0_1444, %c144_1445, %c2_1446, %c2_1447] : memref<1x147x10x10xf32, #tpu.memory_space<vmem>>, vector<1x1x8x8xf32>
    %2168 = vector.shape_cast %2167 : vector<1x1x8x8xf32> to vector<8x8xf32>
    %c361 = arith.constant 361 : index
    %2169 = memref.load %arg2[%c361] : memref<363xf32, #tpu.memory_space<smem>>
    %2170 = vector.broadcast %2169 : f32 to vector<8x8xf32>
    %2171 = arith.mulf %2170, %2168 : vector<8x8xf32>
    %2172 = arith.addf %2166, %2171 : vector<8x8xf32>
    %c0_1448 = arith.constant 0 : index
    %c146_1449 = arith.constant 146 : index
    %c2_1450 = arith.constant 2 : index
    %c2_1451 = arith.constant 2 : index
    %2173 = vector.load %arg1[%c0_1448, %c146_1449, %c2_1450, %c2_1451] : memref<1x147x10x10xf32, #tpu.memory_space<vmem>>, vector<1x1x8x8xf32>
    %2174 = vector.shape_cast %2173 : vector<1x1x8x8xf32> to vector<8x8xf32>
    %c362 = arith.constant 362 : index
    %2175 = memref.load %arg2[%c362] : memref<363xf32, #tpu.memory_space<smem>>
    %2176 = vector.broadcast %2175 : f32 to vector<8x8xf32>
    %2177 = arith.mulf %2176, %2174 : vector<8x8xf32>
    %2178 = arith.addf %2172, %2177 : vector<8x8xf32>
    %c0_1452 = arith.constant 0 : index
    %2179 = memref.load %arg3[%c0_1452] : memref<1xf32, #tpu.memory_space<smem>>
    %2180 = vector.broadcast %2179 : f32 to vector<8x8xf32>
    %2181 = arith.addf %2178, %2180 : vector<8x8xf32>
    %2182 = math.tanh %2181 : vector<8x8xf32>
    %c0_1453 = arith.constant 0 : index
    %c0_1454 = arith.constant 0 : index
    %c0_1455 = arith.constant 0 : index
    %2183 = vector.load %arg4[%c0_1453, %c0_1454, %c0_1455] : memref<1x8x8xf32, #tpu.memory_space<vmem>>, vector<1x8x8xf32>
    %2184 = vector.shape_cast %2183 : vector<1x8x8xf32> to vector<8x8xf32>
    %2185 = vector.shape_cast %2182 : vector<8x8xf32> to vector<1x8x8xf32>
    tpu.vector_store %arg4[%c0_1453, %c0_1454, %c0_1455], %2185 {strides = array<i32>} : memref<1x8x8xf32, #tpu.memory_space<vmem>>, vector<1x8x8xf32>,
    return
  }
  func.func @transform_0(%arg0: i32) -> (i32, i32, i32, i32) {
    %c0_i32 = arith.constant 0 : i32
    %c0_i32_0 = arith.constant 0 : i32
    %c0_i32_1 = arith.constant 0 : i32
    %c0_i32_2 = arith.constant 0 : i32
    return %arg0, %c0_i32, %c0_i32_0, %c0_i32_1 : i32, i32, i32, i32
  }
  func.func @transform_1(%arg0: i32) -> i32 {
    %c0_i32 = arith.constant 0 : i32
    %c0_i32_0 = arith.constant 0 : i32
    return %c0_i32 : i32
  }
  func.func @transform_2(%arg0: i32) -> i32 {
    %c0_i32 = arith.constant 0 : i32
    %c0_i32_0 = arith.constant 0 : i32
    return %c0_i32 : i32
  }
  func.func @transform_3(%arg0: i32) -> (i32, i32, i32) {
    %c0_i32 = arith.constant 0 : i32
    %c0_i32_0 = arith.constant 0 : i32
    %c0_i32_1 = arith.constant 0 : i32
    return %arg0, %c0_i32, %c0_i32_0 : i32, i32, i32
  }
}

</mosaic_0001>

<llo_original>
// kernel: conv_tanh.1
$region0: #{conv_tanh.1}
  #allocation0 [shape = 'u32[]', space=smem, size = 0x4, offset = 0x4, fixed_abs, tag = 'smem constant byte address 0x4 - core index']
  #allocation1 [shape = 'u32[144,128]{1,0:T(1,128)}', space=vmem, size = 0x12000, scoped, tag = 'internal scratch']
  #allocation2 [shape = 'f32[1]{0:T(128)S(6)}', space=smem, size = 0x200, scoped, tag = 'scoped memory for conv_tanh.1']
  %s0 = inlined_call_operand.vmem [shape: f32[2,147,10,10], index: 0, kind: input, shape index: {}]
  %s1 = inlined_call_operand.vmem [shape: f32[363], index: 1, kind: input, shape index: {}]
  %s2 = inlined_call_operand.<no memory space> [shape: f32[1], index: 2, kind: input, shape index: {}]
  %s3 = inlined_call_operand.hbm [shape: f32[2,8,8], index: 3, kind: output, shape index: {}]
  %s4 = sld [smem:[#allocation0]]
  $region49: #{conv_tanh.1} parent=0
    _
  %s6 = ssub.s32 1, %s4
  %s7 = scalar_select 0, %s6, %s4
  %8 = sst [smem:[#allocation2]] %s2
  $region1: #{conv_tanh.1} parent=0
    #allocation3 [shape = 'u8[1536]{0}', space=smem, size = 0x600, scoped, tag = 'input window, operand 1, single buffered']
    #allocation4 [shape = 's32[2]{0}', space=sflag, size = 0x8, scoped, tag = 'scoped memory for conv_tanh.1']
    #allocation5 [shape = 's32[2]{0}', space=sflag, size = 0x8, scoped, tag = 'scoped memory for conv_tanh.1']
    #allocation6 [shape = 'u8[8192]{0}', space=vmem, size = 0x2000, scoped, tag = 'output window, operand 0']
    %9 = vsyncpa [#allocation5], 0
    %10 = vsyncpa [#allocation4], 0
    %s11 = scalar_lea.sflag [#allocation4], 1
    %12 = vsyncpa %s11, 0
    loop: start=0, step=1, limit=4
    $region2: #{conv_tanh.1} parent=1 // loop_pre_header
      _
    $region3: #{conv_tanh.1} parent=1 // loop_header
      %s14 = sphi 0, %s18
      %p15 = scmp.ge.s32.totalorder %s14, 4
      %s24 = sphi 0, %s26
      %s27 = sphi 0, %s24
      %s28 = sphi 0, %s27
      %s44 = sphi 0, %s28
      %s48 = sphi 0, %s48
      %s50 = sphi 0, %s48
      %s51 = sphi 0, %s50
      %s65 = sphi 0, %s51
      %s69 = sphi 0, %s69
      %s71 = sphi 0, %s69
      %s72 = sphi 0, %s71
      %s86 = sphi 0, %s72
      %s92 = sphi 0, %s94
      %s95 = sphi 0, %s92
      %s96 = sphi 0, %s95
      %s112 = sphi 0, %s96
    $region4: #{conv_tanh.1} parent=1 // loop_header_branch
      %17 = sbr.rel (%p15) target = $region8
    $region5: #{conv_tanh.1} parent=1 // loop_body
      %s19 = ssub.s32 %s14, 1
      %s20 = ssub.s32 %s14, 2
      %s21 = sadd.s32 %s14, 1
      %s22 = ssub.s32 %s14, %s21
      %p23 = scmp.eq.s32.totalorder %s22, 0
      %s25 = sadd.s32 %s24, 1
      %s26 = scalar_select %p23, %s24, %s25
      %p29 = pneg %p23
      %p30 = scmp.eq.s32.totalorder %s14, 1
      %p31 = por %p29, %p30
      %p32 = scmp.ne.s32.totalorder %s24, %s27
      %p33 = scmp.eq.s32.totalorder %s14, 0
      %p34 = por %p32, %p33
      %p35 = scmp.ne.s32.totalorder %s24, %s27
      %p36 = scmp.eq.s32.totalorder %s19, 1
      %p37 = por %p35, %p36
      %p38 = scmp.ne.s32.totalorder %s27, %s28
      %p39 = scmp.eq.s32.totalorder %s19, 0
      %p40 = por %p38, %p39
      %p41 = scmp.ne.s32.totalorder %s27, %s28
      %p42 = scmp.eq.s32.totalorder %s20, 1
      %p43 = por %p41, %p42
      %p45 = scmp.ne.s32.totalorder %s28, %s44
      %p46 = scmp.eq.s32.totalorder %s20, 0
      %p47 = por %p45, %p46
      %s49 = sadd.s32 %s48, 1
      %p52 = scmp.eq.s32.totalorder %s14, 1
      %p53 = scmp.ne.s32.totalorder %s48, %s50
      %p54 = scmp.eq.s32.totalorder %s14, 0
      %p55 = por %p53, %p54
      %p56 = scmp.ne.s32.totalorder %s48, %s50
      %p57 = scmp.eq.s32.totalorder %s19, 1
      %p58 = por %p56, %p57
      %p59 = scmp.ne.s32.totalorder %s50, %s51
      %p60 = scmp.eq.s32.totalorder %s19, 0
      %p61 = por %p59, %p60
      %p62 = scmp.ne.s32.totalorder %s50, %s51
      %p63 = scmp.eq.s32.totalorder %s20, 1
      %p64 = por %p62, %p63
      %p66 = scmp.ne.s32.totalorder %s51, %s65
      %p67 = scmp.eq.s32.totalorder %s20, 0
      %p68 = por %p66, %p67
      %s70 = sadd.s32 %s69, 1
      %p73 = scmp.eq.s32.totalorder %s14, 1
      %p74 = scmp.ne.s32.totalorder %s69, %s71
      %p75 = scmp.eq.s32.totalorder %s14, 0
      %p76 = por %p74, %p75
      %p77 = scmp.ne.s32.totalorder %s69, %s71
      %p78 = scmp.eq.s32.totalorder %s19, 1
      %p79 = por %p77, %p78
      %p80 = scmp.ne.s32.totalorder %s71, %s72
      %p81 = scmp.eq.s32.totalorder %s19, 0
      %p82 = por %p80, %p81
      %p83 = scmp.ne.s32.totalorder %s71, %s72
      %p84 = scmp.eq.s32.totalorder %s20, 1
      %p85 = por %p83, %p84
      %p87 = scmp.ne.s32.totalorder %s72, %s86
      %p88 = scmp.eq.s32.totalorder %s20, 0
      %p89 = por %p87, %p88
      %s90 = ssub.s32 %s14, %s21
      %p91 = scmp.eq.s32.totalorder %s90, 0
      %s93 = sadd.s32 %s92, 1
      %s94 = scalar_select %p91, %s92, %s93
      %p97 = pneg %p91
      %p98 = scmp.eq.s32.totalorder %s14, 1
      %p99 = por %p97, %p98
      %p100 = scmp.ne.s32.totalorder %s92, %s95
      %p101 = scmp.eq.s32.totalorder %s14, 0
      %p102 = por %p100, %p101
      %p103 = scmp.ne.s32.totalorder %s92, %s95
      %p104 = scmp.eq.s32.totalorder %s19, 1
      %p105 = por %p103, %p104
      %p106 = scmp.ne.s32.totalorder %s95, %s96
      %p107 = scmp.eq.s32.totalorder %s19, 0
      %p108 = por %p106, %p107
      %p109 = scmp.ne.s32.totalorder %s95, %s96
      %p110 = scmp.eq.s32.totalorder %s20, 1
      %p111 = por %p109, %p110
      %p113 = scmp.ne.s32.totalorder %s96, %s112
      %p114 = scmp.eq.s32.totalorder %s20, 0
      %p115 = por %p113, %p114
      %p116 = scmp.le.s32.totalorder 1, %s14
      %p117 = scmp.lt.s32.totalorder %s14, 3
      %p118 = pnand %p116, %p117
      %p119 = pneg %p118
      // Predicated region
      $region9: #{conv_tanh.1} parent=5 // pred_check
        _
      $region10: #{conv_tanh.1} parent=5 // pred_check_branch
        %121 = sbr.rel (%p118) target = $region12
      $region11: #{conv_tanh.1} parent=5 // pred_region
        %s122 = ssub.s32 %s14, 1
        // Predicated region
        $region13: #{conv_tanh.1} parent=11 // pred_check
          %p123 = pneg %p61
        $region14: #{conv_tanh.1} parent=11 // pred_check_branch
          %125 = sbr.rel (%p123) target = $region16
        $region15: #{conv_tanh.1} parent=11 // pred_region
          %s127 = ssub.s32 48, 48
          %128 = vsyncadd [#allocation5], %s127
          %s130 = sshll.u32 %s1, 4
          %s131 = int_to_ptr.vmem [resolvable:$true] %s130
          %133 = dma.vmem_to_smem %s131, 48, [#allocation3], [#allocation5]
        $region16: #{conv_tanh.1} parent=11 // pred_fallthru
          _
        // Predicated region
        $region17: #{conv_tanh.1} parent=11 // pred_check
          %p134 = pneg %p82
        $region18: #{conv_tanh.1} parent=11 // pred_check_branch
          %136 = sbr.rel (%p134) target = $region20
        $region19: #{conv_tanh.1} parent=11 // pred_region
          _
        $region20: #{conv_tanh.1} parent=11 // pred_fallthru
          _
      $region12: #{conv_tanh.1} parent=5 // pred_fallthru
        _
      %p137 = scmp.lt.s32.totalorder %s14, 2
      // Predicated region
      $region21: #{conv_tanh.1} parent=5 // pred_check
        %p138 = pneg %p137
      $region22: #{conv_tanh.1} parent=5 // pred_check_branch
        %140 = sbr.rel (%p138) target = $region24
      $region23: #{conv_tanh.1} parent=5 // pred_region
        // Predicated region
        $region25: #{conv_tanh.1} parent=23 // pred_check
          %p141 = pneg %p34
        $region26: #{conv_tanh.1} parent=23 // pred_check_branch
          %143 = sbr.rel (%p141) target = $region28
        $region27: #{conv_tanh.1} parent=23 // pred_region
          %p144 = scmp.lt.s32.totalorder %s14, 1
          %s145 = scalar_select %p144, %s14, 1
          %s146 = smul.addr %s145, 294
          %s147 = smul.addr %s146, 8
          %s148 = scalar_lea.vmem %s0, %s147
        $region28: #{conv_tanh.1} parent=23 // pred_fallthru
          _
      $region24: #{conv_tanh.1} parent=5 // pred_fallthru
        _
      %p149 = scmp.le.s32.totalorder 1, %s14
      %p150 = scmp.lt.s32.totalorder %s14, 3
      %p151 = pnand %p149, %p150
      %p152 = pneg %p151
      // Predicated region
      $region29: #{conv_tanh.1} parent=5 // pred_check
        _
      $region30: #{conv_tanh.1} parent=5 // pred_check_branch
        %154 = sbr.rel (%p151) target = $region32
      $region31: #{conv_tanh.1} parent=5 // pred_region
        %s155 = ssub.s32 %s14, 1
        // Predicated region
        $region33: #{conv_tanh.1} parent=31 // pred_check
          %p156 = pneg %p61
        $region34: #{conv_tanh.1} parent=31 // pred_check_branch
          %158 = sbr.rel (%p156) target = $region36
        $region35: #{conv_tanh.1} parent=31 // pred_region
          %159 = dma.done [#allocation5], 48
        $region36: #{conv_tanh.1} parent=31 // pred_fallthru
          _
        %160 = sfence
        %p161 = scmp.lt.s32.totalorder %s19, 1
        %s162 = scalar_select %p161, %s19, 1
        %s163 = smul.addr %s162, 294
        %s164 = smul.addr %s163, 8
        %s165 = scalar_lea.vmem %s0, %s164
        %p166 = pneg %p40
        %p167 = pneg %p37
        %p168 = pneg %p61
        %p169 = pneg %p58
        %p170 = pneg %p82
        %p171 = pneg %p79
        %p172 = pneg %p108
        %p173 = pneg %p105
        %s174 = sand.u32 %s95, 1
        %s175 = scalar_lea.sflag [#allocation4], %s174
        %s176 = sand.u32 %s95, 1
        %s177 = smul.addr %s176, 8
        %s178 = scalar_lea.vmem [#allocation6], %s177
        %p179 = scmp.lt.s32.totalorder %s19, 1
        %s180 = scalar_select %p179, %s19, 1
        %s181 = smul.addr %s180, 294
        %s182 = smul.addr %s181, 8
        %s183 = scalar_lea.vmem %s0, %s182
        %v184 = vld [vmem:[%s183] sm:$0xff]
        %s185 = sld [smem:[#allocation3]]
        %v186 = vstv %s185
        %v187 = vmul.f32 %v186, %v184
        %v188 = vadd.f32 %v187, 0.0
        %s189 = scalar_lea.vmem %s183, 32
        %v190 = vld [vmem:[%s189] sm:$0xff]
        %s191 = sld [smem:[#allocation3 + $0x1]]
        %v192 = vstv %s191
        %v193 = vmul.f32 %v192, %v190
        %v194 = vadd.f32 %v188, %v193
        %s195 = scalar_lea.vmem %s183, 64
        %v196 = vld [vmem:[%s195] sm:$0xff]
        %s197 = sld [smem:[#allocation3 + $0x2]]
        %v198 = vstv %s197
        %v199 = vmul.f32 %v198, %v196
        %v200 = vadd.f32 %v194, %v199
        %s201 = scalar_lea.vmem %s183, 96
        %v202 = vld [vmem:[%s201] sm:$0xff]
        %s203 = sld [smem:[#allocation3 + $0x3]]
        %v204 = vstv %s203
        %v205 = vmul.f32 %v204, %v202
        %v206 = vadd.f32 %v200, %v205
        %s207 = scalar_lea.vmem %s183, 16
        %v208 = vld [vmem:[%s207] sm:$0xff]
        %s209 = sld [smem:[#allocation3 + $0x4]]
        %v210 = vstv %s209
        %v211 = vmul.f32 %v210, %v208
        %213 = vrot.lane.b32.xlu0 %v211, 127
        %v214 = vpop.permute.xlu0 %213
        %v216 = vadd.f32 %v206, %v214
        %s217 = scalar_lea.vmem %s183, 48
        %v218 = vld [vmem:[%s217] sm:$0xff]
        %s219 = sld [smem:[#allocation3 + $0x5]]
        %v220 = vstv %s219
        %v221 = vmul.f32 %v220, %v218
        %223 = vrot.lane.b32.xlu0 %v221, 127
        %v224 = vpop.permute.xlu0 %223
        %v226 = vadd.f32 %v216, %v224
        %s227 = scalar_lea.vmem %s183, 80
        %v228 = vld [vmem:[%s227] sm:$0xff]
        %s229 = sld [smem:[#allocation3 + $0x6]]
        %v230 = vstv %s229
        %v231 = vmul.f32 %v230, %v228
        %233 = vrot.lane.b32.xlu0 %v231, 127
        %v234 = vpop.permute.xlu0 %233
        %v236 = vadd.f32 %v226, %v234
        %s237 = sld [smem:[#allocation3 + $0x7]]
        %v238 = vstv %s237
        %v239 = vmul.f32 %v238, %v184
        %241 = vrot.lane.b32.xlu0 %v239, 126
        %v242 = vpop.permute.xlu0 %241
        %v244 = vadd.f32 %v236, %v242
        %s245 = sld [smem:[#allocation3 + $0x8]]
        %v246 = vstv %s245
        %v247 = vmul.f32 %v246, %v190
        %249 = vrot.lane.b32.xlu0 %v247, 126
        %v250 = vpop.permute.xlu0 %249
        %v252 = vadd.f32 %v244, %v250
        %s253 = sld [smem:[#allocation3 + $0x9]]
        %v254 = vstv %s253
        %v255 = vmul.f32 %v254, %v196
        %257 = vrot.lane.b32.xlu0 %v255, 126
        %v258 = vpop.permute.xlu0 %257
        %v260 = vadd.f32 %v252, %v258
        %s261 = sld [smem:[#allocation3 + $0xa]]
        %v262 = vstv %s261
        %v263 = vmul.f32 %v262, %v202
        %265 = vrot.lane.b32.xlu0 %v263, 126
        %v266 = vpop.permute.xlu0 %265
        %v268 = vadd.f32 %v260, %v266
        %s269 = scalar_lea.vmem %s183, 224
        %v270 = vld [vmem:[%s269] sm:$0xff]
        %s271 = sld [smem:[#allocation3 + $0xb]]
        %v272 = vstv %s271
        %v273 = vmul.f32 %v272, %v270
        %v274 = vadd.f32 %v268, %v273
        %s275 = scalar_lea.vmem %s183, 256
        %v276 = vld [vmem:[%s275] sm:$0xff]
        %s277 = sld [smem:[#allocation3 + $0xc]]
        %v278 = vstv %s277
        %v279 = vmul.f32 %v278, %v276
        %v280 = vadd.f32 %v274, %v279
        %s281 = scalar_lea.vmem %s183, 288
        %v282 = vld [vmem:[%s281] sm:$0xff]
        %s283 = sld [smem:[#allocation3 + $0xd]]
        %v284 = vstv %s283
        %v285 = vmul.f32 %v284, %v282
        %v286 = vadd.f32 %v280, %v285
        %s287 = scalar_lea.vmem %s183, 320
        %v288 = vld [vmem:[%s287] sm:$0xff]
        %s289 = sld [smem:[#allocation3 + $0xe]]
        %v290 = vstv %s289
        %v291 = vmul.f32 %v290, %v288
        %v292 = vadd.f32 %v286, %v291
        %s293 = scalar_lea.vmem %s183, 240
        %v294 = vld [vmem:[%s293] sm:$0xff]
        %s295 = sld [smem:[#allocation3 + $0xf]]
        %v296 = vstv %s295
        %v297 = vmul.f32 %v296, %v294
        %299 = vrot.lane.b32.xlu0 %v297, 127
        %v300 = vpop.permute.xlu0 %299
        %v302 = vadd.f32 %v292, %v300
        %s303 = scalar_lea.vmem %s183, 272
        %v304 = vld [vmem:[%s303] sm:$0xff]
        %s305 = sld [smem:[#allocation3 + $0x10]]
        %v306 = vstv %s305
        %v307 = vmul.f32 %v306, %v304
        %309 = vrot.lane.b32.xlu0 %v307, 127
        %v310 = vpop.permute.xlu0 %309
        %v312 = vadd.f32 %v302, %v310
        %s313 = scalar_lea.vmem %s183, 304
        %v314 = vld [vmem:[%s313] sm:$0xff]
        %s315 = sld [smem:[#allocation3 + $0x11]]
        %v316 = vstv %s315
        %v317 = vmul.f32 %v316, %v314
        %319 = vrot.lane.b32.xlu0 %v317, 127
        %v320 = vpop.permute.xlu0 %319
        %v322 = vadd.f32 %v312, %v320
        %s323 = sld [smem:[#allocation3 + $0x12]]
        %v324 = vstv %s323
        %v325 = vmul.f32 %v324, %v270
        %327 = vrot.lane.b32.xlu0 %v325, 126
        %v328 = vpop.permute.xlu0 %327
        %v330 = vadd.f32 %v322, %v328
        %s331 = sld [smem:[#allocation3 + $0x13]]
        %v332 = vstv %s331
        %v333 = vmul.f32 %v332, %v276
        %335 = vrot.lane.b32.xlu0 %v333, 126
        %v336 = vpop.permute.xlu0 %335
        %v338 = vadd.f32 %v330, %v336
        %s339 = sld [smem:[#allocation3 + $0x14]]
        %v340 = vstv %s339
        %v341 = vmul.f32 %v340, %v282
        %343 = vrot.lane.b32.xlu0 %v341, 126
        %v344 = vpop.permute.xlu0 %343
        %v346 = vadd.f32 %v338, %v344
        %s347 = sld [smem:[#allocation3 + $0x15]]
        %v348 = vstv %s347
        %v349 = vmul.f32 %v348, %v288
        %351 = vrot.lane.b32.xlu0 %v349, 126
        %v352 = vpop.permute.xlu0 %351
        %v354 = vadd.f32 %v346, %v352
        %s355 = scalar_lea.vmem %s183, 448
        %v356 = vld [vmem:[%s355] sm:$0xff]
        %s357 = sld [smem:[#allocation3 + $0x16]]
        %v358 = vstv %s357
        %v359 = vmul.f32 %v358, %v356
        %v360 = vadd.f32 %v354, %v359
        %s361 = scalar_lea.vmem %s183, 480
        %v362 = vld [vmem:[%s361] sm:$0xff]
        %s363 = sld [smem:[#allocation3 + $0x17]]
        %v364 = vstv %s363
        %v365 = vmul.f32 %v364, %v362
        %v366 = vadd.f32 %v360, %v365
        %s367 = scalar_lea.vmem %s183, 512
        %v368 = vld [vmem:[%s367] sm:$0xff]
        %s369 = sld [smem:[#allocation3 + $0x18]]
        %v370 = vstv %s369
        %v371 = vmul.f32 %v370, %v368
        %v372 = vadd.f32 %v366, %v371
        %s373 = scalar_lea.vmem %s183, 544
        %v374 = vld [vmem:[%s373] sm:$0xff]
        %s375 = sld [smem:[#allocation3 + $0x19]]
        %v376 = vstv %s375
        %v377 = vmul.f32 %v376, %v374
        %v378 = vadd.f32 %v372, %v377
        %s379 = scalar_lea.vmem %s183, 464
        %v380 = vld [vmem:[%s379] sm:$0xff]
        %s381 = sld [smem:[#allocation3 + $0x1a]]
        %v382 = vstv %s381
        %v383 = vmul.f32 %v382, %v380
        %385 = vrot.lane.b32.xlu0 %v383, 127
        %v386 = vpop.permute.xlu0 %385
        %v388 = vadd.f32 %v378, %v386
        %s389 = scalar_lea.vmem %s183, 496
        %v390 = vld [vmem:[%s389] sm:$0xff]
        %s391 = sld [smem:[#allocation3 + $0x1b]]
        %v392 = vstv %s391
        %v393 = vmul.f32 %v392, %v390
        %395 = vrot.lane.b32.xlu0 %v393, 127
        %v396 = vpop.permute.xlu0 %395
        %v398 = vadd.f32 %v388, %v396
        %s399 = scalar_lea.vmem %s183, 528
        %v400 = vld [vmem:[%s399] sm:$0xff]
        %s401 = sld [smem:[#allocation3 + $0x1c]]
        %v402 = vstv %s401
        %v403 = vmul.f32 %v402, %v400
        %405 = vrot.lane.b32.xlu0 %v403, 127
        %v406 = vpop.permute.xlu0 %405
        %v408 = vadd.f32 %v398, %v406
        %s409 = sld [smem:[#allocation3 + $0x1d]]
        %v410 = vstv %s409
        %v411 = vmul.f32 %v410, %v356
        %413 = vrot.lane.b32.xlu0 %v411, 126
        %v414 = vpop.permute.xlu0 %413
        %v416 = vadd.f32 %v408, %v414
        %s417 = sld [smem:[#allocation3 + $0x1e]]
        %v418 = vstv %s417
        %v419 = vmul.f32 %v418, %v362
        %421 = vrot.lane.b32.xlu0 %v419, 126
        %v422 = vpop.permute.xlu0 %421
        %v424 = vadd.f32 %v416, %v422
        %s425 = sld [smem:[#allocation3 + $0x1f]]
        %v426 = vstv %s425
        %v427 = vmul.f32 %v426, %v368
        %429 = vrot.lane.b32.xlu0 %v427, 126
        %v430 = vpop.permute.xlu0 %429
        %v432 = vadd.f32 %v424, %v430
        %s433 = sld [smem:[#allocation3 + $0x20]]
        %v434 = vstv %s433
        %v435 = vmul.f32 %v434, %v374
        %437 = vrot.lane.b32.xlu0 %v435, 126
        %v438 = vpop.permute.xlu0 %437
        %v440 = vadd.f32 %v432, %v438
        %s441 = scalar_lea.vmem %s183, 672
        %v442 = vld [vmem:[%s441] sm:$0xff]
        %s443 = sld [smem:[#allocation3 + $0x21]]
        %v444 = vstv %s443
        %v445 = vmul.f32 %v444, %v442
        %v446 = vadd.f32 %v440, %v445
        %s447 = scalar_lea.vmem %s183, 704
        %v448 = vld [vmem:[%s447] sm:$0xff]
        %s449 = sld [smem:[#allocation3 + $0x22]]
        %v450 = vstv %s449
        %v451 = vmul.f32 %v450, %v448
        %v452 = vadd.f32 %v446, %v451
        %s453 = scalar_lea.vmem %s183, 736
        %v454 = vld [vmem:[%s453] sm:$0xff]
        %s455 = sld [smem:[#allocation3 + $0x23]]
        %v456 = vstv %s455
        %v457 = vmul.f32 %v456, %v454
        %v458 = vadd.f32 %v452, %v457
        %s459 = scalar_lea.vmem %s183, 768
        %v460 = vld [vmem:[%s459] sm:$0xff]
        %s461 = sld [smem:[#allocation3 + $0x24]]
        %v462 = vstv %s461
        %v463 = vmul.f32 %v462, %v460
        %v464 = vadd.f32 %v458, %v463
        %s465 = scalar_lea.vmem %s183, 688
        %v466 = vld [vmem:[%s465] sm:$0xff]
        %s467 = sld [smem:[#allocation3 + $0x25]]
        %v468 = vstv %s467
        %v469 = vmul.f32 %v468, %v466
        %471 = vrot.lane.b32.xlu0 %v469, 127
        %v472 = vpop.permute.xlu0 %471
        %v474 = vadd.f32 %v464, %v472
        %s475 = scalar_lea.vmem %s183, 720
        %v476 = vld [vmem:[%s475] sm:$0xff]
        %s477 = sld [smem:[#allocation3 + $0x26]]
        %v478 = vstv %s477
        %v479 = vmul.f32 %v478, %v476
        %481 = vrot.lane.b32.xlu0 %v479, 127
        %v482 = vpop.permute.xlu0 %481
        %v484 = vadd.f32 %v474, %v482
        %s485 = scalar_lea.vmem %s183, 752
        %v486 = vld [vmem:[%s485] sm:$0xff]
        %s487 = sld [smem:[#allocation3 + $0x27]]
        %v488 = vstv %s487
        %v489 = vmul.f32 %v488, %v486
        %491 = vrot.lane.b32.xlu0 %v489, 127
        %v492 = vpop.permute.xlu0 %491
        %v494 = vadd.f32 %v484, %v492
        %s495 = sld [smem:[#allocation3 + $0x28]]
        %v496 = vstv %s495
        %v497 = vmul.f32 %v496, %v442
        %499 = vrot.lane.b32.xlu0 %v497, 126
        %v500 = vpop.permute.xlu0 %499
        %v502 = vadd.f32 %v494, %v500
        %s503 = sld [smem:[#allocation3 + $0x29]]
        %v504 = vstv %s503
        %v505 = vmul.f32 %v504, %v448
        %507 = vrot.lane.b32.xlu0 %v505, 126
        %v508 = vpop.permute.xlu0 %507
        %v510 = vadd.f32 %v502, %v508
        %s511 = sld [smem:[#allocation3 + $0x2a]]
        %v512 = vstv %s511
        %v513 = vmul.f32 %v512, %v454
        %515 = vrot.lane.b32.xlu0 %v513, 126
        %v516 = vpop.permute.xlu0 %515
        %v518 = vadd.f32 %v510, %v516
        %s519 = sld [smem:[#allocation3 + $0x2b]]
        %v520 = vstv %s519
        %v521 = vmul.f32 %v520, %v460
        %523 = vrot.lane.b32.xlu0 %v521, 126
        %v524 = vpop.permute.xlu0 %523
        %v526 = vadd.f32 %v518, %v524
        %s527 = scalar_lea.vmem %s183, 112
        %v528 = vld [vmem:[%s527 + $0x1] sm:$0xff]
        %s529 = sld [smem:[#allocation3 + $0x2c]]
        %v530 = vstv %s529
        %v531 = vmul.f32 %v530, %v528
        %v532 = vadd.f32 %v526, %v531
        %s533 = scalar_lea.vmem %s183, 144
        %v534 = vld [vmem:[%s533 + $0x1] sm:$0xff]
        %s535 = sld [smem:[#allocation3 + $0x2d]]
        %v536 = vstv %s535
        %v537 = vmul.f32 %v536, %v534
        %v538 = vadd.f32 %v532, %v537
        %s539 = scalar_lea.vmem %s183, 176
        %v540 = vld [vmem:[%s539 + $0x1] sm:$0xff]
        %s541 = sld [smem:[#allocation3 + $0x2e]]
        %v542 = vstv %s541
        %v543 = vmul.f32 %v542, %v540
        %v544 = vadd.f32 %v538, %v543
        %s545 = scalar_lea.vmem %s183, 208
        %v546 = vld [vmem:[%s545 + $0x1] sm:$0xff]
        %s547 = sld [smem:[#allocation3 + $0x2f]]
        %v548 = vstv %s547
        %v549 = vmul.f32 %v548, %v546
        %v550 = vadd.f32 %v544, %v549
        %s551 = scalar_lea.vmem %s183, 128
        %v552 = vld [vmem:[%s551 + $0x1] sm:$0xff]
        %s553 = sld [smem:[#allocation3 + $0x30]]
        %v554 = vstv %s553
        %v555 = vmul.f32 %v554, %v552
        %557 = vrot.lane.b32.xlu0 %v555, 127
        %v558 = vpop.permute.xlu0 %557
        %v560 = vadd.f32 %v550, %v558
        %s561 = scalar_lea.vmem %s183, 160
        %v562 = vld [vmem:[%s561 + $0x1] sm:$0xff]
        %s563 = sld [smem:[#allocation3 + $0x31]]
        %v564 = vstv %s563
        %v565 = vmul.f32 %v564, %v562
        %567 = vrot.lane.b32.xlu0 %v565, 127
        %v568 = vpop.permute.xlu0 %567
        %v570 = vadd.f32 %v560, %v568
        %s571 = scalar_lea.vmem %s183, 192
        %v572 = vld [vmem:[%s571 + $0x1] sm:$0xff]
        %s573 = sld [smem:[#allocation3 + $0x32]]
        %v574 = vstv %s573
        %v575 = vmul.f32 %v574, %v572
        %577 = vrot.lane.b32.xlu0 %v575, 127
        %v578 = vpop.permute.xlu0 %577
        %v580 = vadd.f32 %v570, %v578
        %s581 = sld [smem:[#allocation3 + $0x33]]
        %v582 = vstv %s581
        %v583 = vmul.f32 %v582, %v528
        %585 = vrot.lane.b32.xlu0 %v583, 126
        %v586 = vpop.permute.xlu0 %585
        %v588 = vadd.f32 %v580, %v586
        %s589 = sld [smem:[#allocation3 + $0x34]]
        %v590 = vstv %s589
        %v591 = vmul.f32 %v590, %v534
        %593 = vrot.lane.b32.xlu0 %v591, 126
        %v594 = vpop.permute.xlu0 %593
        %v596 = vadd.f32 %v588, %v594
        %s597 = sld [smem:[#allocation3 + $0x35]]
        %v598 = vstv %s597
        %v599 = vmul.f32 %v598, %v540
        %601 = vrot.lane.b32.xlu0 %v599, 126
        %v602 = vpop.permute.xlu0 %601
        %v604 = vadd.f32 %v596, %v602
        %s605 = sld [smem:[#allocation3 + $0x36]]
        %v606 = vstv %s605
        %v607 = vmul.f32 %v606, %v546
        %609 = vrot.lane.b32.xlu0 %v607, 126
        %v610 = vpop.permute.xlu0 %609
        %v612 = vadd.f32 %v604, %v610
        %s613 = scalar_lea.vmem %s183, 336
        %v614 = vld [vmem:[%s613 + $0x1] sm:$0xff]
        %s615 = sld [smem:[#allocation3 + $0x37]]
        %v616 = vstv %s615
        %v617 = vmul.f32 %v616, %v614
        %v618 = vadd.f32 %v612, %v617
        %s619 = scalar_lea.vmem %s183, 368
        %v620 = vld [vmem:[%s619 + $0x1] sm:$0xff]
        %s621 = sld [smem:[#allocation3 + $0x38]]
        %v622 = vstv %s621
        %v623 = vmul.f32 %v622, %v620
        %v624 = vadd.f32 %v618, %v623
        %s625 = scalar_lea.vmem %s183, 400
        %v626 = vld [vmem:[%s625 + $0x1] sm:$0xff]
        %s627 = sld [smem:[#allocation3 + $0x39]]
        %v628 = vstv %s627
        %v629 = vmul.f32 %v628, %v626
        %v630 = vadd.f32 %v624, %v629
        %s631 = scalar_lea.vmem %s183, 432
        %v632 = vld [vmem:[%s631 + $0x1] sm:$0xff]
        %s633 = sld [smem:[#allocation3 + $0x3a]]
        %v634 = vstv %s633
        %v635 = vmul.f32 %v634, %v632
        %v636 = vadd.f32 %v630, %v635
        %s637 = scalar_lea.vmem %s183, 352
        %v638 = vld [vmem:[%s637 + $0x1] sm:$0xff]
        %s639 = sld [smem:[#allocation3 + $0x3b]]
        %v640 = vstv %s639
        %v641 = vmul.f32 %v640, %v638
        %643 = vrot.lane.b32.xlu0 %v641, 127
        %v644 = vpop.permute.xlu0 %643
        %v646 = vadd.f32 %v636, %v644
        %s647 = scalar_lea.vmem %s183, 384
        %v648 = vld [vmem:[%s647 + $0x1] sm:$0xff]
        %s649 = sld [smem:[#allocation3 + $0x3c]]
        %v650 = vstv %s649
        %v651 = vmul.f32 %v650, %v648
        %653 = vrot.lane.b32.xlu0 %v651, 127
        %v654 = vpop.permute.xlu0 %653
        %v656 = vadd.f32 %v646, %v654
        %s657 = scalar_lea.vmem %s183, 416
        %v658 = vld [vmem:[%s657 + $0x1] sm:$0xff]
        %s659 = sld [smem:[#allocation3 + $0x3d]]
        %v660 = vstv %s659
        %v661 = vmul.f32 %v660, %v658
        %663 = vrot.lane.b32.xlu0 %v661, 127
        %v664 = vpop.permute.xlu0 %663
        %v666 = vadd.f32 %v656, %v664
        %s667 = sld [smem:[#allocation3 + $0x3e]]
        %v668 = vstv %s667
        %v669 = vmul.f32 %v668, %v614
        %671 = vrot.lane.b32.xlu0 %v669, 126
        %v672 = vpop.permute.xlu0 %671
        %v674 = vadd.f32 %v666, %v672
        %s675 = sld [smem:[#allocation3 + $0x3f]]
        %v676 = vstv %s675
        %v677 = vmul.f32 %v676, %v620
        %679 = vrot.lane.b32.xlu0 %v677, 126
        %v680 = vpop.permute.xlu0 %679
        %v682 = vadd.f32 %v674, %v680
        %s683 = sld [smem:[#allocation3 + $0x40]]
        %v684 = vstv %s683
        %v685 = vmul.f32 %v684, %v626
        %687 = vrot.lane.b32.xlu0 %v685, 126
        %v688 = vpop.permute.xlu0 %687
        %v690 = vadd.f32 %v682, %v688
        %s691 = sld [smem:[#allocation3 + $0x41]]
        %v692 = vstv %s691
        %v693 = vmul.f32 %v692, %v632
        %695 = vrot.lane.b32.xlu0 %v693, 126
        %v696 = vpop.permute.xlu0 %695
        %v698 = vadd.f32 %v690, %v696
        %s699 = scalar_lea.vmem %s183, 560
        %v700 = vld [vmem:[%s699 + $0x1] sm:$0xff]
        %s701 = sld [smem:[#allocation3 + $0x42]]
        %v702 = vstv %s701
        %v703 = vmul.f32 %v702, %v700
        %v704 = vadd.f32 %v698, %v703
        %s705 = scalar_lea.vmem %s183, 592
        %v706 = vld [vmem:[%s705 + $0x1] sm:$0xff]
        %s707 = sld [smem:[#allocation3 + $0x43]]
        %v708 = vstv %s707
        %v709 = vmul.f32 %v708, %v706
        %v710 = vadd.f32 %v704, %v709
        %s711 = scalar_lea.vmem %s183, 624
        %v712 = vld [vmem:[%s711 + $0x1] sm:$0xff]
        %s713 = sld [smem:[#allocation3 + $0x44]]
        %v714 = vstv %s713
        %v715 = vmul.f32 %v714, %v712
        %v716 = vadd.f32 %v710, %v715
        %s717 = scalar_lea.vmem %s183, 656
        %v718 = vld [vmem:[%s717 + $0x1] sm:$0xff]
        %s719 = sld [smem:[#allocation3 + $0x45]]
        %v720 = vstv %s719
        %v721 = vmul.f32 %v720, %v718
        %v722 = vadd.f32 %v716, %v721
        %s723 = scalar_lea.vmem %s183, 576
        %v724 = vld [vmem:[%s723 + $0x1] sm:$0xff]
        %s725 = sld [smem:[#allocation3 + $0x46]]
        %v726 = vstv %s725
        %v727 = vmul.f32 %v726, %v724
        %729 = vrot.lane.b32.xlu0 %v727, 127
        %v730 = vpop.permute.xlu0 %729
        %v732 = vadd.f32 %v722, %v730
        %s733 = scalar_lea.vmem %s183, 608
        %v734 = vld [vmem:[%s733 + $0x1] sm:$0xff]
        %s735 = sld [smem:[#allocation3 + $0x47]]
        %v736 = vstv %s735
        %v737 = vmul.f32 %v736, %v734
        %739 = vrot.lane.b32.xlu0 %v737, 127
        %v740 = vpop.permute.xlu0 %739
        %v742 = vadd.f32 %v732, %v740
        %s743 = scalar_lea.vmem %s183, 640
        %v744 = vld [vmem:[%s743 + $0x1] sm:$0xff]
        %s745 = sld [smem:[#allocation3 + $0x48]]
        %v746 = vstv %s745
        %v747 = vmul.f32 %v746, %v744
        %749 = vrot.lane.b32.xlu0 %v747, 127
        %v750 = vpop.permute.xlu0 %749
        %v752 = vadd.f32 %v742, %v750
        %s753 = sld [smem:[#allocation3 + $0x49]]
        %v754 = vstv %s753
        %v755 = vmul.f32 %v754, %v700
        %757 = vrot.lane.b32.xlu0 %v755, 126
        %v758 = vpop.permute.xlu0 %757
        %v760 = vadd.f32 %v752, %v758
        %s761 = sld [smem:[#allocation3 + $0x4a]]
        %v762 = vstv %s761
        %v763 = vmul.f32 %v762, %v706
        %765 = vrot.lane.b32.xlu0 %v763, 126
        %v766 = vpop.permute.xlu0 %765
        %v768 = vadd.f32 %v760, %v766
        %s769 = sld [smem:[#allocation3 + $0x4b]]
        %v770 = vstv %s769
        %v771 = vmul.f32 %v770, %v712
        %773 = vrot.lane.b32.xlu0 %v771, 126
        %v774 = vpop.permute.xlu0 %773
        %v776 = vadd.f32 %v768, %v774
        %s777 = sld [smem:[#allocation3 + $0x4c]]
        %v778 = vstv %s777
        %v779 = vmul.f32 %v778, %v718
        %781 = vrot.lane.b32.xlu0 %v779, 126
        %v782 = vpop.permute.xlu0 %781
        %v784 = vadd.f32 %v776, %v782
        %v785 = vld [vmem:[%s183 + $0x2] sm:$0xff]
        %s786 = sld [smem:[#allocation3 + $0x4d]]
        %v787 = vstv %s786
        %v788 = vmul.f32 %v787, %v785
        %v789 = vadd.f32 %v784, %v788
        %v790 = vld [vmem:[%s189 + $0x2] sm:$0xff]
        %s791 = sld [smem:[#allocation3 + $0x4e]]
        %v792 = vstv %s791
        %v793 = vmul.f32 %v792, %v790
        %v794 = vadd.f32 %v789, %v793
        %v795 = vld [vmem:[%s195 + $0x2] sm:$0xff]
        %s796 = sld [smem:[#allocation3 + $0x4f]]
        %v797 = vstv %s796
        %v798 = vmul.f32 %v797, %v795
        %v799 = vadd.f32 %v794, %v798
        %v800 = vld [vmem:[%s201 + $0x2] sm:$0xff]
        %s801 = sld [smem:[#allocation3 + $0x50]]
        %v802 = vstv %s801
        %v803 = vmul.f32 %v802, %v800
        %v804 = vadd.f32 %v799, %v803
        %v805 = vld [vmem:[%s207 + $0x2] sm:$0xff]
        %s806 = sld [smem:[#allocation3 + $0x51]]
        %v807 = vstv %s806
        %v808 = vmul.f32 %v807, %v805
        %810 = vrot.lane.b32.xlu0 %v808, 127
        %v811 = vpop.permute.xlu0 %810
        %v813 = vadd.f32 %v804, %v811
        %v814 = vld [vmem:[%s217 + $0x2] sm:$0xff]
        %s815 = sld [smem:[#allocation3 + $0x52]]
        %v816 = vstv %s815
        %v817 = vmul.f32 %v816, %v814
        %819 = vrot.lane.b32.xlu0 %v817, 127
        %v820 = vpop.permute.xlu0 %819
        %v822 = vadd.f32 %v813, %v820
        %v823 = vld [vmem:[%s227 + $0x2] sm:$0xff]
        %s824 = sld [smem:[#allocation3 + $0x53]]
        %v825 = vstv %s824
        %v826 = vmul.f32 %v825, %v823
        %828 = vrot.lane.b32.xlu0 %v826, 127
        %v829 = vpop.permute.xlu0 %828
        %v831 = vadd.f32 %v822, %v829
        %s832 = sld [smem:[#allocation3 + $0x54]]
        %v833 = vstv %s832
        %v834 = vmul.f32 %v833, %v785
        %836 = vrot.lane.b32.xlu0 %v834, 126
        %v837 = vpop.permute.xlu0 %836
        %v839 = vadd.f32 %v831, %v837
        %s840 = sld [smem:[#allocation3 + $0x55]]
        %v841 = vstv %s840
        %v842 = vmul.f32 %v841, %v790
        %844 = vrot.lane.b32.xlu0 %v842, 126
        %v845 = vpop.permute.xlu0 %844
        %v847 = vadd.f32 %v839, %v845
        %s848 = sld [smem:[#allocation3 + $0x56]]
        %v849 = vstv %s848
        %v850 = vmul.f32 %v849, %v795
        %852 = vrot.lane.b32.xlu0 %v850, 126
        %v853 = vpop.permute.xlu0 %852
        %v855 = vadd.f32 %v847, %v853
        %s856 = sld [smem:[#allocation3 + $0x57]]
        %v857 = vstv %s856
        %v858 = vmul.f32 %v857, %v800
        %860 = vrot.lane.b32.xlu0 %v858, 126
        %v861 = vpop.permute.xlu0 %860
        %v863 = vadd.f32 %v855, %v861
        %v864 = vld [vmem:[%s269 + $0x2] sm:$0xff]
        %s865 = sld [smem:[#allocation3 + $0x58]]
        %v866 = vstv %s865
        %v867 = vmul.f32 %v866, %v864
        %v868 = vadd.f32 %v863, %v867
        %v869 = vld [vmem:[%s275 + $0x2] sm:$0xff]
        %s870 = sld [smem:[#allocation3 + $0x59]]
        %v871 = vstv %s870
        %v872 = vmul.f32 %v871, %v869
        %v873 = vadd.f32 %v868, %v872
        %v874 = vld [vmem:[%s281 + $0x2] sm:$0xff]
        %s875 = sld [smem:[#allocation3 + $0x5a]]
        %v876 = vstv %s875
        %v877 = vmul.f32 %v876, %v874
        %v878 = vadd.f32 %v873, %v877
        %v879 = vld [vmem:[%s287 + $0x2] sm:$0xff]
        %s880 = sld [smem:[#allocation3 + $0x5b]]
        %v881 = vstv %s880
        %v882 = vmul.f32 %v881, %v879
        %v883 = vadd.f32 %v878, %v882
        %v884 = vld [vmem:[%s293 + $0x2] sm:$0xff]
        %s885 = sld [smem:[#allocation3 + $0x5c]]
        %v886 = vstv %s885
        %v887 = vmul.f32 %v886, %v884
        %889 = vrot.lane.b32.xlu0 %v887, 127
        %v890 = vpop.permute.xlu0 %889
        %v892 = vadd.f32 %v883, %v890
        %v893 = vld [vmem:[%s303 + $0x2] sm:$0xff]
        %s894 = sld [smem:[#allocation3 + $0x5d]]
        %v895 = vstv %s894
        %v896 = vmul.f32 %v895, %v893
        %898 = vrot.lane.b32.xlu0 %v896, 127
        %v899 = vpop.permute.xlu0 %898
        %v901 = vadd.f32 %v892, %v899
        %v902 = vld [vmem:[%s313 + $0x2] sm:$0xff]
        %s903 = sld [smem:[#allocation3 + $0x5e]]
        %v904 = vstv %s903
        %v905 = vmul.f32 %v904, %v902
        %907 = vrot.lane.b32.xlu0 %v905, 127
        %v908 = vpop.permute.xlu0 %907
        %v910 = vadd.f32 %v901, %v908
        %s911 = sld [smem:[#allocation3 + $0x5f]]
        %v912 = vstv %s911
        %v913 = vmul.f32 %v912, %v864
        %915 = vrot.lane.b32.xlu0 %v913, 126
        %v916 = vpop.permute.xlu0 %915
        %v918 = vadd.f32 %v910, %v916
        %s919 = sld [smem:[#allocation3 + $0x60]]
        %v920 = vstv %s919
        %v921 = vmul.f32 %v920, %v869
        %923 = vrot.lane.b32.xlu0 %v921, 126
        %v924 = vpop.permute.xlu0 %923
        %v926 = vadd.f32 %v918, %v924
        %s927 = sld [smem:[#allocation3 + $0x61]]
        %v928 = vstv %s927
        %v929 = vmul.f32 %v928, %v874
        %931 = vrot.lane.b32.xlu0 %v929, 126
        %v932 = vpop.permute.xlu0 %931
        %v934 = vadd.f32 %v926, %v932
        %s935 = sld [smem:[#allocation3 + $0x62]]
        %v936 = vstv %s935
        %v937 = vmul.f32 %v936, %v879
        %939 = vrot.lane.b32.xlu0 %v937, 126
        %v940 = vpop.permute.xlu0 %939
        %v942 = vadd.f32 %v934, %v940
        %v943 = vld [vmem:[%s355 + $0x2] sm:$0xff]
        %s944 = sld [smem:[#allocation3 + $0x63]]
        %v945 = vstv %s944
        %v946 = vmul.f32 %v945, %v943
        %v947 = vadd.f32 %v942, %v946
        %v948 = vld [vmem:[%s361 + $0x2] sm:$0xff]
        %s949 = sld [smem:[#allocation3 + $0x64]]
        %v950 = vstv %s949
        %v951 = vmul.f32 %v950, %v948
        %v952 = vadd.f32 %v947, %v951
        %v953 = vld [vmem:[%s367 + $0x2] sm:$0xff]
        %s954 = sld [smem:[#allocation3 + $0x65]]
        %v955 = vstv %s954
        %v956 = vmul.f32 %v955, %v953
        %v957 = vadd.f32 %v952, %v956
        %v958 = vld [vmem:[%s373 + $0x2] sm:$0xff]
        %s959 = sld [smem:[#allocation3 + $0x66]]
        %v960 = vstv %s959
        %v961 = vmul.f32 %v960, %v958
        %v962 = vadd.f32 %v957, %v961
        %v963 = vld [vmem:[%s379 + $0x2] sm:$0xff]
        %s964 = sld [smem:[#allocation3 + $0x67]]
        %v965 = vstv %s964
        %v966 = vmul.f32 %v965, %v963
        %968 = vrot.lane.b32.xlu0 %v966, 127
        %v969 = vpop.permute.xlu0 %968
        %v971 = vadd.f32 %v962, %v969
        %v972 = vld [vmem:[%s389 + $0x2] sm:$0xff]
        %s973 = sld [smem:[#allocation3 + $0x68]]
        %v974 = vstv %s973
        %v975 = vmul.f32 %v974, %v972
        %977 = vrot.lane.b32.xlu0 %v975, 127
        %v978 = vpop.permute.xlu0 %977
        %v980 = vadd.f32 %v971, %v978
        %v981 = vld [vmem:[%s399 + $0x2] sm:$0xff]
        %s982 = sld [smem:[#allocation3 + $0x69]]
        %v983 = vstv %s982
        %v984 = vmul.f32 %v983, %v981
        %986 = vrot.lane.b32.xlu0 %v984, 127
        %v987 = vpop.permute.xlu0 %986
        %v989 = vadd.f32 %v980, %v987
        %s990 = sld [smem:[#allocation3 + $0x6a]]
        %v991 = vstv %s990
        %v992 = vmul.f32 %v991, %v943
        %994 = vrot.lane.b32.xlu0 %v992, 126
        %v995 = vpop.permute.xlu0 %994
        %v997 = vadd.f32 %v989, %v995
        %s998 = sld [smem:[#allocation3 + $0x6b]]
        %v999 = vstv %s998
        %v1000 = vmul.f32 %v999, %v948
        %1002 = vrot.lane.b32.xlu0 %v1000, 126
        %v1003 = vpop.permute.xlu0 %1002
        %v1005 = vadd.f32 %v997, %v1003
        %s1006 = sld [smem:[#allocation3 + $0x6c]]
        %v1007 = vstv %s1006
        %v1008 = vmul.f32 %v1007, %v953
        %1010 = vrot.lane.b32.xlu0 %v1008, 126
        %v1011 = vpop.permute.xlu0 %1010
        %v1013 = vadd.f32 %v1005, %v1011
        %s1014 = sld [smem:[#allocation3 + $0x6d]]
        %v1015 = vstv %s1014
        %v1016 = vmul.f32 %v1015, %v958
        %1018 = vrot.lane.b32.xlu0 %v1016, 126
        %v1019 = vpop.permute.xlu0 %1018
        %v1021 = vadd.f32 %v1013, %v1019
        %v1022 = vld [vmem:[%s441 + $0x2] sm:$0xff]
        %s1023 = sld [smem:[#allocation3 + $0x6e]]
        %v1024 = vstv %s1023
        %v1025 = vmul.f32 %v1024, %v1022
        %v1026 = vadd.f32 %v1021, %v1025
        %v1027 = vld [vmem:[%s447 + $0x2] sm:$0xff]
        %s1028 = sld [smem:[#allocation3 + $0x6f]]
        %v1029 = vstv %s1028
        %v1030 = vmul.f32 %v1029, %v1027
        %v1031 = vadd.f32 %v1026, %v1030
        %v1032 = vld [vmem:[%s453 + $0x2] sm:$0xff]
        %s1033 = sld [smem:[#allocation3 + $0x70]]
        %v1034 = vstv %s1033
        %v1035 = vmul.f32 %v1034, %v1032
        %v1036 = vadd.f32 %v1031, %v1035
        %v1037 = vld [vmem:[%s459 + $0x2] sm:$0xff]
        %s1038 = sld [smem:[#allocation3 + $0x71]]
        %v1039 = vstv %s1038
        %v1040 = vmul.f32 %v1039, %v1037
        %v1041 = vadd.f32 %v1036, %v1040
        %v1042 = vld [vmem:[%s465 + $0x2] sm:$0xff]
        %s1043 = sld [smem:[#allocation3 + $0x72]]
        %v1044 = vstv %s1043
        %v1045 = vmul.f32 %v1044, %v1042
        %1047 = vrot.lane.b32.xlu0 %v1045, 127
        %v1048 = vpop.permute.xlu0 %1047
        %v1050 = vadd.f32 %v1041, %v1048
        %v1051 = vld [vmem:[%s475 + $0x2] sm:$0xff]
        %s1052 = sld [smem:[#allocation3 + $0x73]]
        %v1053 = vstv %s1052
        %v1054 = vmul.f32 %v1053, %v1051
        %1056 = vrot.lane.b32.xlu0 %v1054, 127
        %v1057 = vpop.permute.xlu0 %1056
        %v1059 = vadd.f32 %v1050, %v1057
        %v1060 = vld [vmem:[%s485 + $0x2] sm:$0xff]
        %s1061 = sld [smem:[#allocation3 + $0x74]]
        %v1062 = vstv %s1061
        %v1063 = vmul.f32 %v1062, %v1060
        %1065 = vrot.lane.b32.xlu0 %v1063, 127
        %v1066 = vpop.permute.xlu0 %1065
        %v1068 = vadd.f32 %v1059, %v1066
        %s1069 = sld [smem:[#allocation3 + $0x75]]
        %v1070 = vstv %s1069
        %v1071 = vmul.f32 %v1070, %v1022
        %1073 = vrot.lane.b32.xlu0 %v1071, 126
        %v1074 = vpop.permute.xlu0 %1073
        %v1076 = vadd.f32 %v1068, %v1074
        %s1077 = sld [smem:[#allocation3 + $0x76]]
        %v1078 = vstv %s1077
        %v1079 = vmul.f32 %v1078, %v1027
        %1081 = vrot.lane.b32.xlu0 %v1079, 126
        %v1082 = vpop.permute.xlu0 %1081
        %v1084 = vadd.f32 %v1076, %v1082
        %s1085 = sld [smem:[#allocation3 + $0x77]]
        %v1086 = vstv %s1085
        %v1087 = vmul.f32 %v1086, %v1032
        %1089 = vrot.lane.b32.xlu0 %v1087, 126
        %v1090 = vpop.permute.xlu0 %1089
        %v1092 = vadd.f32 %v1084, %v1090
        %s1093 = sld [smem:[#allocation3 + $0x78]]
        %v1094 = vstv %s1093
        %v1095 = vmul.f32 %v1094, %v1037
        %1097 = vrot.lane.b32.xlu0 %v1095, 126
        %v1098 = vpop.permute.xlu0 %1097
        %v1100 = vadd.f32 %v1092, %v1098
        %s1101 = scalar_lea.vmem %s183, 784
        %v1102 = vld [vmem:[%s1101] sm:$0xff]
        %s1103 = sld [smem:[#allocation3 + $0x79]]
        %v1104 = vstv %s1103
        %v1105 = vmul.f32 %v1104, %v1102
        %v1106 = vadd.f32 %v1100, %v1105
        %s1107 = scalar_lea.vmem %s183, 816
        %v1108 = vld [vmem:[%s1107] sm:$0xff]
        %s1109 = sld [smem:[#allocation3 + $0x7a]]
        %v1110 = vstv %s1109
        %v1111 = vmul.f32 %v1110, %v1108
        %v1112 = vadd.f32 %v1106, %v1111
        %s1113 = scalar_lea.vmem %s183, 848
        %v1114 = vld [vmem:[%s1113] sm:$0xff]
        %s1115 = sld [smem:[#allocation3 + $0x7b]]
        %v1116 = vstv %s1115
        %v1117 = vmul.f32 %v1116, %v1114
        %v1118 = vadd.f32 %v1112, %v1117
        %s1119 = scalar_lea.vmem %s183, 880
        %v1120 = vld [vmem:[%s1119] sm:$0xff]
        %s1121 = sld [smem:[#allocation3 + $0x7c]]
        %v1122 = vstv %s1121
        %v1123 = vmul.f32 %v1122, %v1120
        %v1124 = vadd.f32 %v1118, %v1123
        %s1125 = scalar_lea.vmem %s183, 800
        %v1126 = vld [vmem:[%s1125] sm:$0xff]
        %s1127 = sld [smem:[#allocation3 + $0x7d]]
        %v1128 = vstv %s1127
        %v1129 = vmul.f32 %v1128, %v1126
        %1131 = vrot.lane.b32.xlu0 %v1129, 127
        %v1132 = vpop.permute.xlu0 %1131
        %v1134 = vadd.f32 %v1124, %v1132
        %s1135 = scalar_lea.vmem %s183, 832
        %v1136 = vld [vmem:[%s1135] sm:$0xff]
        %s1137 = sld [smem:[#allocation3 + $0x7e]]
        %v1138 = vstv %s1137
        %v1139 = vmul.f32 %v1138, %v1136
        %1141 = vrot.lane.b32.xlu0 %v1139, 127
        %v1142 = vpop.permute.xlu0 %1141
        %v1144 = vadd.f32 %v1134, %v1142
        %s1145 = scalar_lea.vmem %s183, 864
        %v1146 = vld [vmem:[%s1145] sm:$0xff]
        %s1147 = sld [smem:[#allocation3 + $0x7f]]
        %v1148 = vstv %s1147
        %v1149 = vmul.f32 %v1148, %v1146
        %1151 = vrot.lane.b32.xlu0 %v1149, 127
        %v1152 = vpop.permute.xlu0 %1151
        %v1154 = vadd.f32 %v1144, %v1152
        %s1155 = sld [smem:[#allocation3 + $0x80]]
        %v1156 = vstv %s1155
        %v1157 = vmul.f32 %v1156, %v1102
        %1159 = vrot.lane.b32.xlu0 %v1157, 126
        %v1160 = vpop.permute.xlu0 %1159
        %v1162 = vadd.f32 %v1154, %v1160
        %s1163 = sld [smem:[#allocation3 + $0x81]]
        %v1164 = vstv %s1163
        %v1165 = vmul.f32 %v1164, %v1108
        %1167 = vrot.lane.b32.xlu0 %v1165, 126
        %v1168 = vpop.permute.xlu0 %1167
        %v1170 = vadd.f32 %v1162, %v1168
        %s1171 = sld [smem:[#allocation3 + $0x82]]
        %v1172 = vstv %s1171
        %v1173 = vmul.f32 %v1172, %v1114
        %1175 = vrot.lane.b32.xlu0 %v1173, 126
        %v1176 = vpop.permute.xlu0 %1175
        %v1178 = vadd.f32 %v1170, %v1176
        %s1179 = sld [smem:[#allocation3 + $0x83]]
        %v1180 = vstv %s1179
        %v1181 = vmul.f32 %v1180, %v1120
        %1183 = vrot.lane.b32.xlu0 %v1181, 126
        %v1184 = vpop.permute.xlu0 %1183
        %v1186 = vadd.f32 %v1178, %v1184
        %s1187 = scalar_lea.vmem %s183, 1008
        %v1188 = vld [vmem:[%s1187] sm:$0xff]
        %s1189 = sld [smem:[#allocation3 + $0x84]]
        %v1190 = vstv %s1189
        %v1191 = vmul.f32 %v1190, %v1188
        %v1192 = vadd.f32 %v1186, %v1191
        %s1193 = scalar_lea.vmem %s183, 1040
        %v1194 = vld [vmem:[%s1193] sm:$0xff]
        %s1195 = sld [smem:[#allocation3 + $0x85]]
        %v1196 = vstv %s1195
        %v1197 = vmul.f32 %v1196, %v1194
        %v1198 = vadd.f32 %v1192, %v1197
        %s1199 = scalar_lea.vmem %s183, 1072
        %v1200 = vld [vmem:[%s1199] sm:$0xff]
        %s1201 = sld [smem:[#allocation3 + $0x86]]
        %v1202 = vstv %s1201
        %v1203 = vmul.f32 %v1202, %v1200
        %v1204 = vadd.f32 %v1198, %v1203
        %s1205 = scalar_lea.vmem %s183, 1104
        %v1206 = vld [vmem:[%s1205] sm:$0xff]
        %s1207 = sld [smem:[#allocation3 + $0x87]]
        %v1208 = vstv %s1207
        %v1209 = vmul.f32 %v1208, %v1206
        %v1210 = vadd.f32 %v1204, %v1209
        %s1211 = scalar_lea.vmem %s183, 1024
        %v1212 = vld [vmem:[%s1211] sm:$0xff]
        %s1213 = sld [smem:[#allocation3 + $0x88]]
        %v1214 = vstv %s1213
        %v1215 = vmul.f32 %v1214, %v1212
        %1217 = vrot.lane.b32.xlu0 %v1215, 127
        %v1218 = vpop.permute.xlu0 %1217
        %v1220 = vadd.f32 %v1210, %v1218
        %s1221 = scalar_lea.vmem %s183, 1056
        %v1222 = vld [vmem:[%s1221] sm:$0xff]
        %s1223 = sld [smem:[#allocation3 + $0x89]]
        %v1224 = vstv %s1223
        %v1225 = vmul.f32 %v1224, %v1222
        %1227 = vrot.lane.b32.xlu0 %v1225, 127
        %v1228 = vpop.permute.xlu0 %1227
        %v1230 = vadd.f32 %v1220, %v1228
        %s1231 = scalar_lea.vmem %s183, 1088
        %v1232 = vld [vmem:[%s1231] sm:$0xff]
        %s1233 = sld [smem:[#allocation3 + $0x8a]]
        %v1234 = vstv %s1233
        %v1235 = vmul.f32 %v1234, %v1232
        %1237 = vrot.lane.b32.xlu0 %v1235, 127
        %v1238 = vpop.permute.xlu0 %1237
        %v1240 = vadd.f32 %v1230, %v1238
        %s1241 = sld [smem:[#allocation3 + $0x8b]]
        %v1242 = vstv %s1241
        %v1243 = vmul.f32 %v1242, %v1188
        %1245 = vrot.lane.b32.xlu0 %v1243, 126
        %v1246 = vpop.permute.xlu0 %1245
        %v1248 = vadd.f32 %v1240, %v1246
        %s1249 = sld [smem:[#allocation3 + $0x8c]]
        %v1250 = vstv %s1249
        %v1251 = vmul.f32 %v1250, %v1194
        %1253 = vrot.lane.b32.xlu0 %v1251, 126
        %v1254 = vpop.permute.xlu0 %1253
        %v1256 = vadd.f32 %v1248, %v1254
        %s1257 = sld [smem:[#allocation3 + $0x8d]]
        %v1258 = vstv %s1257
        %v1259 = vmul.f32 %v1258, %v1200
        %1261 = vrot.lane.b32.xlu0 %v1259, 126
        %v1262 = vpop.permute.xlu0 %1261
        %v1264 = vadd.f32 %v1256, %v1262
        %s1265 = sld [smem:[#allocation3 + $0x8e]]
        %v1266 = vstv %s1265
        %v1267 = vmul.f32 %v1266, %v1206
        %1269 = vrot.lane.b32.xlu0 %v1267, 126
        %v1270 = vpop.permute.xlu0 %1269
        %v1272 = vadd.f32 %v1264, %v1270
        %s1273 = scalar_lea.vmem %s183, 1232
        %v1274 = vld [vmem:[%s1273] sm:$0xff]
        %s1275 = sld [smem:[#allocation3 + $0x8f]]
        %v1276 = vstv %s1275
        %v1277 = vmul.f32 %v1276, %v1274
        %v1278 = vadd.f32 %v1272, %v1277
        %s1279 = scalar_lea.vmem %s183, 1264
        %v1280 = vld [vmem:[%s1279] sm:$0xff]
        %s1281 = sld [smem:[#allocation3 + $0x90]]
        %v1282 = vstv %s1281
        %v1283 = vmul.f32 %v1282, %v1280
        %v1284 = vadd.f32 %v1278, %v1283
        %s1285 = scalar_lea.vmem %s183, 1296
        %v1286 = vld [vmem:[%s1285] sm:$0xff]
        %s1287 = sld [smem:[#allocation3 + $0x91]]
        %v1288 = vstv %s1287
        %v1289 = vmul.f32 %v1288, %v1286
        %v1290 = vadd.f32 %v1284, %v1289
        %s1291 = scalar_lea.vmem %s183, 1328
        %v1292 = vld [vmem:[%s1291] sm:$0xff]
        %s1293 = sld [smem:[#allocation3 + $0x92]]
        %v1294 = vstv %s1293
        %v1295 = vmul.f32 %v1294, %v1292
        %v1296 = vadd.f32 %v1290, %v1295
        %s1297 = scalar_lea.vmem %s183, 1248
        %v1298 = vld [vmem:[%s1297] sm:$0xff]
        %s1299 = sld [smem:[#allocation3 + $0x93]]
        %v1300 = vstv %s1299
        %v1301 = vmul.f32 %v1300, %v1298
        %1303 = vrot.lane.b32.xlu0 %v1301, 127
        %v1304 = vpop.permute.xlu0 %1303
        %v1306 = vadd.f32 %v1296, %v1304
        %s1307 = scalar_lea.vmem %s183, 1280
        %v1308 = vld [vmem:[%s1307] sm:$0xff]
        %s1309 = sld [smem:[#allocation3 + $0x94]]
        %v1310 = vstv %s1309
        %v1311 = vmul.f32 %v1310, %v1308
        %1313 = vrot.lane.b32.xlu0 %v1311, 127
        %v1314 = vpop.permute.xlu0 %1313
        %v1316 = vadd.f32 %v1306, %v1314
        %s1317 = scalar_lea.vmem %s183, 1312
        %v1318 = vld [vmem:[%s1317] sm:$0xff]
        %s1319 = sld [smem:[#allocation3 + $0x95]]
        %v1320 = vstv %s1319
        %v1321 = vmul.f32 %v1320, %v1318
        %1323 = vrot.lane.b32.xlu0 %v1321, 127
        %v1324 = vpop.permute.xlu0 %1323
        %v1326 = vadd.f32 %v1316, %v1324
        %s1327 = sld [smem:[#allocation3 + $0x96]]
        %v1328 = vstv %s1327
        %v1329 = vmul.f32 %v1328, %v1274
        %1331 = vrot.lane.b32.xlu0 %v1329, 126
        %v1332 = vpop.permute.xlu0 %1331
        %v1334 = vadd.f32 %v1326, %v1332
        %s1335 = sld [smem:[#allocation3 + $0x97]]
        %v1336 = vstv %s1335
        %v1337 = vmul.f32 %v1336, %v1280
        %1339 = vrot.lane.b32.xlu0 %v1337, 126
        %v1340 = vpop.permute.xlu0 %1339
        %v1342 = vadd.f32 %v1334, %v1340
        %s1343 = sld [smem:[#allocation3 + $0x98]]
        %v1344 = vstv %s1343
        %v1345 = vmul.f32 %v1344, %v1286
        %1347 = vrot.lane.b32.xlu0 %v1345, 126
        %v1348 = vpop.permute.xlu0 %1347
        %v1350 = vadd.f32 %v1342, %v1348
        %s1351 = sld [smem:[#allocation3 + $0x99]]
        %v1352 = vstv %s1351
        %v1353 = vmul.f32 %v1352, %v1292
        %1355 = vrot.lane.b32.xlu0 %v1353, 126
        %v1356 = vpop.permute.xlu0 %1355
        %v1358 = vadd.f32 %v1350, %v1356
        %s1359 = scalar_lea.vmem %s183, 1456
        %v1360 = vld [vmem:[%s1359] sm:$0xff]
        %s1361 = sld [smem:[#allocation3 + $0x9a]]
        %v1362 = vstv %s1361
        %v1363 = vmul.f32 %v1362, %v1360
        %v1364 = vadd.f32 %v1358, %v1363
        %s1365 = scalar_lea.vmem %s183, 1488
        %v1366 = vld [vmem:[%s1365] sm:$0xff]
        %s1367 = sld [smem:[#allocation3 + $0x9b]]
        %v1368 = vstv %s1367
        %v1369 = vmul.f32 %v1368, %v1366
        %v1370 = vadd.f32 %v1364, %v1369
        %s1371 = scalar_lea.vmem %s183, 1520
        %v1372 = vld [vmem:[%s1371] sm:$0xff]
        %s1373 = sld [smem:[#allocation3 + $0x9c]]
        %v1374 = vstv %s1373
        %v1375 = vmul.f32 %v1374, %v1372
        %v1376 = vadd.f32 %v1370, %v1375
        %s1377 = scalar_lea.vmem %s183, 1552
        %v1378 = vld [vmem:[%s1377] sm:$0xff]
        %s1379 = sld [smem:[#allocation3 + $0x9d]]
        %v1380 = vstv %s1379
        %v1381 = vmul.f32 %v1380, %v1378
        %v1382 = vadd.f32 %v1376, %v1381
        %s1383 = scalar_lea.vmem %s183, 1472
        %v1384 = vld [vmem:[%s1383] sm:$0xff]
        %s1385 = sld [smem:[#allocation3 + $0x9e]]
        %v1386 = vstv %s1385
        %v1387 = vmul.f32 %v1386, %v1384
        %1389 = vrot.lane.b32.xlu0 %v1387, 127
        %v1390 = vpop.permute.xlu0 %1389
        %v1392 = vadd.f32 %v1382, %v1390
        %s1393 = scalar_lea.vmem %s183, 1504
        %v1394 = vld [vmem:[%s1393] sm:$0xff]
        %s1395 = sld [smem:[#allocation3 + $0x9f]]
        %v1396 = vstv %s1395
        %v1397 = vmul.f32 %v1396, %v1394
        %1399 = vrot.lane.b32.xlu0 %v1397, 127
        %v1400 = vpop.permute.xlu0 %1399
        %v1402 = vadd.f32 %v1392, %v1400
        %s1403 = scalar_lea.vmem %s183, 1536
        %v1404 = vld [vmem:[%s1403] sm:$0xff]
        %s1405 = sld [smem:[#allocation3 + $0xa0]]
        %v1406 = vstv %s1405
        %v1407 = vmul.f32 %v1406, %v1404
        %1409 = vrot.lane.b32.xlu0 %v1407, 127
        %v1410 = vpop.permute.xlu0 %1409
        %v1412 = vadd.f32 %v1402, %v1410
        %s1413 = sld [smem:[#allocation3 + $0xa1]]
        %v1414 = vstv %s1413
        %v1415 = vmul.f32 %v1414, %v1360
        %1417 = vrot.lane.b32.xlu0 %v1415, 126
        %v1418 = vpop.permute.xlu0 %1417
        %v1420 = vadd.f32 %v1412, %v1418
        %s1421 = sld [smem:[#allocation3 + $0xa2]]
        %v1422 = vstv %s1421
        %v1423 = vmul.f32 %v1422, %v1366
        %1425 = vrot.lane.b32.xlu0 %v1423, 126
        %v1426 = vpop.permute.xlu0 %1425
        %v1428 = vadd.f32 %v1420, %v1426
        %s1429 = sld [smem:[#allocation3 + $0xa3]]
        %v1430 = vstv %s1429
        %v1431 = vmul.f32 %v1430, %v1372
        %1433 = vrot.lane.b32.xlu0 %v1431, 126
        %v1434 = vpop.permute.xlu0 %1433
        %v1436 = vadd.f32 %v1428, %v1434
        %s1437 = sld [smem:[#allocation3 + $0xa4]]
        %v1438 = vstv %s1437
        %v1439 = vmul.f32 %v1438, %v1378
        %1441 = vrot.lane.b32.xlu0 %v1439, 126
        %v1442 = vpop.permute.xlu0 %1441
        %v1444 = vadd.f32 %v1436, %v1442
        %s1445 = scalar_lea.vmem %s183, 896
        %v1446 = vld [vmem:[%s1445 + $0x1] sm:$0xff]
        %s1447 = sld [smem:[#allocation3 + $0xa5]]
        %v1448 = vstv %s1447
        %v1449 = vmul.f32 %v1448, %v1446
        %v1450 = vadd.f32 %v1444, %v1449
        %s1451 = scalar_lea.vmem %s183, 928
        %v1452 = vld [vmem:[%s1451 + $0x1] sm:$0xff]
        %s1453 = sld [smem:[#allocation3 + $0xa6]]
        %v1454 = vstv %s1453
        %v1455 = vmul.f32 %v1454, %v1452
        %v1456 = vadd.f32 %v1450, %v1455
        %s1457 = scalar_lea.vmem %s183, 960
        %v1458 = vld [vmem:[%s1457 + $0x1] sm:$0xff]
        %s1459 = sld [smem:[#allocation3 + $0xa7]]
        %v1460 = vstv %s1459
        %v1461 = vmul.f32 %v1460, %v1458
        %v1462 = vadd.f32 %v1456, %v1461
        %s1463 = scalar_lea.vmem %s183, 992
        %v1464 = vld [vmem:[%s1463 + $0x1] sm:$0xff]
        %s1465 = sld [smem:[#allocation3 + $0xa8]]
        %v1466 = vstv %s1465
        %v1467 = vmul.f32 %v1466, %v1464
        %v1468 = vadd.f32 %v1462, %v1467
        %s1469 = scalar_lea.vmem %s183, 912
        %v1470 = vld [vmem:[%s1469 + $0x1] sm:$0xff]
        %s1471 = sld [smem:[#allocation3 + $0xa9]]
        %v1472 = vstv %s1471
        %v1473 = vmul.f32 %v1472, %v1470
        %1475 = vrot.lane.b32.xlu0 %v1473, 127
        %v1476 = vpop.permute.xlu0 %1475
        %v1478 = vadd.f32 %v1468, %v1476
        %s1479 = scalar_lea.vmem %s183, 944
        %v1480 = vld [vmem:[%s1479 + $0x1] sm:$0xff]
        %s1481 = sld [smem:[#allocation3 + $0xaa]]
        %v1482 = vstv %s1481
        %v1483 = vmul.f32 %v1482, %v1480
        %1485 = vrot.lane.b32.xlu0 %v1483, 127
        %v1486 = vpop.permute.xlu0 %1485
        %v1488 = vadd.f32 %v1478, %v1486
        %s1489 = scalar_lea.vmem %s183, 976
        %v1490 = vld [vmem:[%s1489 + $0x1] sm:$0xff]
        %s1491 = sld [smem:[#allocation3 + $0xab]]
        %v1492 = vstv %s1491
        %v1493 = vmul.f32 %v1492, %v1490
        %1495 = vrot.lane.b32.xlu0 %v1493, 127
        %v1496 = vpop.permute.xlu0 %1495
        %v1498 = vadd.f32 %v1488, %v1496
        %s1499 = sld [smem:[#allocation3 + $0xac]]
        %v1500 = vstv %s1499
        %v1501 = vmul.f32 %v1500, %v1446
        %1503 = vrot.lane.b32.xlu0 %v1501, 126
        %v1504 = vpop.permute.xlu0 %1503
        %v1506 = vadd.f32 %v1498, %v1504
        %s1507 = sld [smem:[#allocation3 + $0xad]]
        %v1508 = vstv %s1507
        %v1509 = vmul.f32 %v1508, %v1452
        %1511 = vrot.lane.b32.xlu0 %v1509, 126
        %v1512 = vpop.permute.xlu0 %1511
        %v1514 = vadd.f32 %v1506, %v1512
        %s1515 = sld [smem:[#allocation3 + $0xae]]
        %v1516 = vstv %s1515
        %v1517 = vmul.f32 %v1516, %v1458
        %1519 = vrot.lane.b32.xlu0 %v1517, 126
        %v1520 = vpop.permute.xlu0 %1519
        %v1522 = vadd.f32 %v1514, %v1520
        %s1523 = sld [smem:[#allocation3 + $0xaf]]
        %v1524 = vstv %s1523
        %v1525 = vmul.f32 %v1524, %v1464
        %1527 = vrot.lane.b32.xlu0 %v1525, 126
        %v1528 = vpop.permute.xlu0 %1527
        %v1530 = vadd.f32 %v1522, %v1528
        %s1531 = scalar_lea.vmem %s183, 1120
        %v1532 = vld [vmem:[%s1531 + $0x1] sm:$0xff]
        %s1533 = sld [smem:[#allocation3 + $0xb0]]
        %v1534 = vstv %s1533
        %v1535 = vmul.f32 %v1534, %v1532
        %v1536 = vadd.f32 %v1530, %v1535
        %s1537 = scalar_lea.vmem %s183, 1152
        %v1538 = vld [vmem:[%s1537 + $0x1] sm:$0xff]
        %s1539 = sld [smem:[#allocation3 + $0xb1]]
        %v1540 = vstv %s1539
        %v1541 = vmul.f32 %v1540, %v1538
        %v1542 = vadd.f32 %v1536, %v1541
        %s1543 = scalar_lea.vmem %s183, 1184
        %v1544 = vld [vmem:[%s1543 + $0x1] sm:$0xff]
        %s1545 = sld [smem:[#allocation3 + $0xb2]]
        %v1546 = vstv %s1545
        %v1547 = vmul.f32 %v1546, %v1544
        %v1548 = vadd.f32 %v1542, %v1547
        %s1549 = scalar_lea.vmem %s183, 1216
        %v1550 = vld [vmem:[%s1549 + $0x1] sm:$0xff]
        %s1551 = sld [smem:[#allocation3 + $0xb3]]
        %v1552 = vstv %s1551
        %v1553 = vmul.f32 %v1552, %v1550
        %v1554 = vadd.f32 %v1548, %v1553
        %s1555 = scalar_lea.vmem %s183, 1136
        %v1556 = vld [vmem:[%s1555 + $0x1] sm:$0xff]
        %s1557 = sld [smem:[#allocation3 + $0xb4]]
        %v1558 = vstv %s1557
        %v1559 = vmul.f32 %v1558, %v1556
        %1561 = vrot.lane.b32.xlu0 %v1559, 127
        %v1562 = vpop.permute.xlu0 %1561
        %v1564 = vadd.f32 %v1554, %v1562
        %s1565 = scalar_lea.vmem %s183, 1168
        %v1566 = vld [vmem:[%s1565 + $0x1] sm:$0xff]
        %s1567 = sld [smem:[#allocation3 + $0xb5]]
        %v1568 = vstv %s1567
        %v1569 = vmul.f32 %v1568, %v1566
        %1571 = vrot.lane.b32.xlu0 %v1569, 127
        %v1572 = vpop.permute.xlu0 %1571
        %v1574 = vadd.f32 %v1564, %v1572
        %s1575 = scalar_lea.vmem %s183, 1200
        %v1576 = vld [vmem:[%s1575 + $0x1] sm:$0xff]
        %s1577 = sld [smem:[#allocation3 + $0xb6]]
        %v1578 = vstv %s1577
        %v1579 = vmul.f32 %v1578, %v1576
        %1581 = vrot.lane.b32.xlu0 %v1579, 127
        %v1582 = vpop.permute.xlu0 %1581
        %v1584 = vadd.f32 %v1574, %v1582
        %s1585 = sld [smem:[#allocation3 + $0xb7]]
        %v1586 = vstv %s1585
        %v1587 = vmul.f32 %v1586, %v1532
        %1589 = vrot.lane.b32.xlu0 %v1587, 126
        %v1590 = vpop.permute.xlu0 %1589
        %v1592 = vadd.f32 %v1584, %v1590
        %s1593 = sld [smem:[#allocation3 + $0xb8]]
        %v1594 = vstv %s1593
        %v1595 = vmul.f32 %v1594, %v1538
        %1597 = vrot.lane.b32.xlu0 %v1595, 126
        %v1598 = vpop.permute.xlu0 %1597
        %v1600 = vadd.f32 %v1592, %v1598
        %s1601 = sld [smem:[#allocation3 + $0xb9]]
        %v1602 = vstv %s1601
        %v1603 = vmul.f32 %v1602, %v1544
        %1605 = vrot.lane.b32.xlu0 %v1603, 126
        %v1606 = vpop.permute.xlu0 %1605
        %v1608 = vadd.f32 %v1600, %v1606
        %s1609 = sld [smem:[#allocation3 + $0xba]]
        %v1610 = vstv %s1609
        %v1611 = vmul.f32 %v1610, %v1550
        %1613 = vrot.lane.b32.xlu0 %v1611, 126
        %v1614 = vpop.permute.xlu0 %1613
        %v1616 = vadd.f32 %v1608, %v1614
        %s1617 = scalar_lea.vmem %s183, 1344
        %v1618 = vld [vmem:[%s1617 + $0x1] sm:$0xff]
        %s1619 = sld [smem:[#allocation3 + $0xbb]]
        %v1620 = vstv %s1619
        %v1621 = vmul.f32 %v1620, %v1618
        %v1622 = vadd.f32 %v1616, %v1621
        %s1623 = scalar_lea.vmem %s183, 1376
        %v1624 = vld [vmem:[%s1623 + $0x1] sm:$0xff]
        %s1625 = sld [smem:[#allocation3 + $0xbc]]
        %v1626 = vstv %s1625
        %v1627 = vmul.f32 %v1626, %v1624
        %v1628 = vadd.f32 %v1622, %v1627
        %s1629 = scalar_lea.vmem %s183, 1408
        %v1630 = vld [vmem:[%s1629 + $0x1] sm:$0xff]
        %s1631 = sld [smem:[#allocation3 + $0xbd]]
        %v1632 = vstv %s1631
        %v1633 = vmul.f32 %v1632, %v1630
        %v1634 = vadd.f32 %v1628, %v1633
        %s1635 = scalar_lea.vmem %s183, 1440
        %v1636 = vld [vmem:[%s1635 + $0x1] sm:$0xff]
        %s1637 = sld [smem:[#allocation3 + $0xbe]]
        %v1638 = vstv %s1637
        %v1639 = vmul.f32 %v1638, %v1636
        %v1640 = vadd.f32 %v1634, %v1639
        %s1641 = scalar_lea.vmem %s183, 1360
        %v1642 = vld [vmem:[%s1641 + $0x1] sm:$0xff]
        %s1643 = sld [smem:[#allocation3 + $0xbf]]
        %v1644 = vstv %s1643
        %v1645 = vmul.f32 %v1644, %v1642
        %1647 = vrot.lane.b32.xlu0 %v1645, 127
        %v1648 = vpop.permute.xlu0 %1647
        %v1650 = vadd.f32 %v1640, %v1648
        %s1651 = scalar_lea.vmem %s183, 1392
        %v1652 = vld [vmem:[%s1651 + $0x1] sm:$0xff]
        %s1653 = sld [smem:[#allocation3 + $0xc0]]
        %v1654 = vstv %s1653
        %v1655 = vmul.f32 %v1654, %v1652
        %1657 = vrot.lane.b32.xlu0 %v1655, 127
        %v1658 = vpop.permute.xlu0 %1657
        %v1660 = vadd.f32 %v1650, %v1658
        %s1661 = scalar_lea.vmem %s183, 1424
        %v1662 = vld [vmem:[%s1661 + $0x1] sm:$0xff]
        %s1663 = sld [smem:[#allocation3 + $0xc1]]
        %v1664 = vstv %s1663
        %v1665 = vmul.f32 %v1664, %v1662
        %1667 = vrot.lane.b32.xlu0 %v1665, 127
        %v1668 = vpop.permute.xlu0 %1667
        %v1670 = vadd.f32 %v1660, %v1668
        %s1671 = sld [smem:[#allocation3 + $0xc2]]
        %v1672 = vstv %s1671
        %v1673 = vmul.f32 %v1672, %v1618
        %1675 = vrot.lane.b32.xlu0 %v1673, 126
        %v1676 = vpop.permute.xlu0 %1675
        %v1678 = vadd.f32 %v1670, %v1676
        %s1679 = sld [smem:[#allocation3 + $0xc3]]
        %v1680 = vstv %s1679
        %v1681 = vmul.f32 %v1680, %v1624
        %1683 = vrot.lane.b32.xlu0 %v1681, 126
        %v1684 = vpop.permute.xlu0 %1683
        %v1686 = vadd.f32 %v1678, %v1684
        %s1687 = sld [smem:[#allocation3 + $0xc4]]
        %v1688 = vstv %s1687
        %v1689 = vmul.f32 %v1688, %v1630
        %1691 = vrot.lane.b32.xlu0 %v1689, 126
        %v1692 = vpop.permute.xlu0 %1691
        %v1694 = vadd.f32 %v1686, %v1692
        %s1695 = sld [smem:[#allocation3 + $0xc5]]
        %v1696 = vstv %s1695
        %v1697 = vmul.f32 %v1696, %v1636
        %1699 = vrot.lane.b32.xlu0 %v1697, 126
        %v1700 = vpop.permute.xlu0 %1699
        %v1702 = vadd.f32 %v1694, %v1700
        %v1703 = vld [vmem:[%s1101 + $0x2] sm:$0xff]
        %s1704 = sld [smem:[#allocation3 + $0xc6]]
        %v1705 = vstv %s1704
        %v1706 = vmul.f32 %v1705, %v1703
        %v1707 = vadd.f32 %v1702, %v1706
        %v1708 = vld [vmem:[%s1107 + $0x2] sm:$0xff]
        %s1709 = sld [smem:[#allocation3 + $0xc7]]
        %v1710 = vstv %s1709
        %v1711 = vmul.f32 %v1710, %v1708
        %v1712 = vadd.f32 %v1707, %v1711
        %v1713 = vld [vmem:[%s1113 + $0x2] sm:$0xff]
        %s1714 = sld [smem:[#allocation3 + $0xc8]]
        %v1715 = vstv %s1714
        %v1716 = vmul.f32 %v1715, %v1713
        %v1717 = vadd.f32 %v1712, %v1716
        %v1718 = vld [vmem:[%s1119 + $0x2] sm:$0xff]
        %s1719 = sld [smem:[#allocation3 + $0xc9]]
        %v1720 = vstv %s1719
        %v1721 = vmul.f32 %v1720, %v1718
        %v1722 = vadd.f32 %v1717, %v1721
        %v1723 = vld [vmem:[%s1125 + $0x2] sm:$0xff]
        %s1724 = sld [smem:[#allocation3 + $0xca]]
        %v1725 = vstv %s1724
        %v1726 = vmul.f32 %v1725, %v1723
        %1728 = vrot.lane.b32.xlu0 %v1726, 127
        %v1729 = vpop.permute.xlu0 %1728
        %v1731 = vadd.f32 %v1722, %v1729
        %v1732 = vld [vmem:[%s1135 + $0x2] sm:$0xff]
        %s1733 = sld [smem:[#allocation3 + $0xcb]]
        %v1734 = vstv %s1733
        %v1735 = vmul.f32 %v1734, %v1732
        %1737 = vrot.lane.b32.xlu0 %v1735, 127
        %v1738 = vpop.permute.xlu0 %1737
        %v1740 = vadd.f32 %v1731, %v1738
        %v1741 = vld [vmem:[%s1145 + $0x2] sm:$0xff]
        %s1742 = sld [smem:[#allocation3 + $0xcc]]
        %v1743 = vstv %s1742
        %v1744 = vmul.f32 %v1743, %v1741
        %1746 = vrot.lane.b32.xlu0 %v1744, 127
        %v1747 = vpop.permute.xlu0 %1746
        %v1749 = vadd.f32 %v1740, %v1747
        %s1750 = sld [smem:[#allocation3 + $0xcd]]
        %v1751 = vstv %s1750
        %v1752 = vmul.f32 %v1751, %v1703
        %1754 = vrot.lane.b32.xlu0 %v1752, 126
        %v1755 = vpop.permute.xlu0 %1754
        %v1757 = vadd.f32 %v1749, %v1755
        %s1758 = sld [smem:[#allocation3 + $0xce]]
        %v1759 = vstv %s1758
        %v1760 = vmul.f32 %v1759, %v1708
        %1762 = vrot.lane.b32.xlu0 %v1760, 126
        %v1763 = vpop.permute.xlu0 %1762
        %v1765 = vadd.f32 %v1757, %v1763
        %s1766 = sld [smem:[#allocation3 + $0xcf]]
        %v1767 = vstv %s1766
        %v1768 = vmul.f32 %v1767, %v1713
        %1770 = vrot.lane.b32.xlu0 %v1768, 126
        %v1771 = vpop.permute.xlu0 %1770
        %v1773 = vadd.f32 %v1765, %v1771
        %s1774 = sld [smem:[#allocation3 + $0xd0]]
        %v1775 = vstv %s1774
        %v1776 = vmul.f32 %v1775, %v1718
        %1778 = vrot.lane.b32.xlu0 %v1776, 126
        %v1779 = vpop.permute.xlu0 %1778
        %v1781 = vadd.f32 %v1773, %v1779
        %v1782 = vld [vmem:[%s1187 + $0x2] sm:$0xff]
        %s1783 = sld [smem:[#allocation3 + $0xd1]]
        %v1784 = vstv %s1783
        %v1785 = vmul.f32 %v1784, %v1782
        %v1786 = vadd.f32 %v1781, %v1785
        %v1787 = vld [vmem:[%s1193 + $0x2] sm:$0xff]
        %s1788 = sld [smem:[#allocation3 + $0xd2]]
        %v1789 = vstv %s1788
        %v1790 = vmul.f32 %v1789, %v1787
        %v1791 = vadd.f32 %v1786, %v1790
        %v1792 = vld [vmem:[%s1199 + $0x2] sm:$0xff]
        %s1793 = sld [smem:[#allocation3 + $0xd3]]
        %v1794 = vstv %s1793
        %v1795 = vmul.f32 %v1794, %v1792
        %v1796 = vadd.f32 %v1791, %v1795
        %v1797 = vld [vmem:[%s1205 + $0x2] sm:$0xff]
        %s1798 = sld [smem:[#allocation3 + $0xd4]]
        %v1799 = vstv %s1798
        %v1800 = vmul.f32 %v1799, %v1797
        %v1801 = vadd.f32 %v1796, %v1800
        %v1802 = vld [vmem:[%s1211 + $0x2] sm:$0xff]
        %s1803 = sld [smem:[#allocation3 + $0xd5]]
        %v1804 = vstv %s1803
        %v1805 = vmul.f32 %v1804, %v1802
        %1807 = vrot.lane.b32.xlu0 %v1805, 127
        %v1808 = vpop.permute.xlu0 %1807
        %v1810 = vadd.f32 %v1801, %v1808
        %v1811 = vld [vmem:[%s1221 + $0x2] sm:$0xff]
        %s1812 = sld [smem:[#allocation3 + $0xd6]]
        %v1813 = vstv %s1812
        %v1814 = vmul.f32 %v1813, %v1811
        %1816 = vrot.lane.b32.xlu0 %v1814, 127
        %v1817 = vpop.permute.xlu0 %1816
        %v1819 = vadd.f32 %v1810, %v1817
        %v1820 = vld [vmem:[%s1231 + $0x2] sm:$0xff]
        %s1821 = sld [smem:[#allocation3 + $0xd7]]
        %v1822 = vstv %s1821
        %v1823 = vmul.f32 %v1822, %v1820
        %1825 = vrot.lane.b32.xlu0 %v1823, 127
        %v1826 = vpop.permute.xlu0 %1825
        %v1828 = vadd.f32 %v1819, %v1826
        %s1829 = sld [smem:[#allocation3 + $0xd8]]
        %v1830 = vstv %s1829
        %v1831 = vmul.f32 %v1830, %v1782
        %1833 = vrot.lane.b32.xlu0 %v1831, 126
        %v1834 = vpop.permute.xlu0 %1833
        %v1836 = vadd.f32 %v1828, %v1834
        %s1837 = sld [smem:[#allocation3 + $0xd9]]
        %v1838 = vstv %s1837
        %v1839 = vmul.f32 %v1838, %v1787
        %1841 = vrot.lane.b32.xlu0 %v1839, 126
        %v1842 = vpop.permute.xlu0 %1841
        %v1844 = vadd.f32 %v1836, %v1842
        %s1845 = sld [smem:[#allocation3 + $0xda]]
        %v1846 = vstv %s1845
        %v1847 = vmul.f32 %v1846, %v1792
        %1849 = vrot.lane.b32.xlu0 %v1847, 126
        %v1850 = vpop.permute.xlu0 %1849
        %v1852 = vadd.f32 %v1844, %v1850
        %s1853 = sld [smem:[#allocation3 + $0xdb]]
        %v1854 = vstv %s1853
        %v1855 = vmul.f32 %v1854, %v1797
        %1857 = vrot.lane.b32.xlu0 %v1855, 126
        %v1858 = vpop.permute.xlu0 %1857
        %v1860 = vadd.f32 %v1852, %v1858
        %v1861 = vld [vmem:[%s1273 + $0x2] sm:$0xff]
        %s1862 = sld [smem:[#allocation3 + $0xdc]]
        %v1863 = vstv %s1862
        %v1864 = vmul.f32 %v1863, %v1861
        %v1865 = vadd.f32 %v1860, %v1864
        %v1866 = vld [vmem:[%s1279 + $0x2] sm:$0xff]
        %s1867 = sld [smem:[#allocation3 + $0xdd]]
        %v1868 = vstv %s1867
        %v1869 = vmul.f32 %v1868, %v1866
        %v1870 = vadd.f32 %v1865, %v1869
        %v1871 = vld [vmem:[%s1285 + $0x2] sm:$0xff]
        %s1872 = sld [smem:[#allocation3 + $0xde]]
        %v1873 = vstv %s1872
        %v1874 = vmul.f32 %v1873, %v1871
        %v1875 = vadd.f32 %v1870, %v1874
        %v1876 = vld [vmem:[%s1291 + $0x2] sm:$0xff]
        %s1877 = sld [smem:[#allocation3 + $0xdf]]
        %v1878 = vstv %s1877
        %v1879 = vmul.f32 %v1878, %v1876
        %v1880 = vadd.f32 %v1875, %v1879
        %v1881 = vld [vmem:[%s1297 + $0x2] sm:$0xff]
        %s1882 = sld [smem:[#allocation3 + $0xe0]]
        %v1883 = vstv %s1882
        %v1884 = vmul.f32 %v1883, %v1881
        %1886 = vrot.lane.b32.xlu0 %v1884, 127
        %v1887 = vpop.permute.xlu0 %1886
        %v1889 = vadd.f32 %v1880, %v1887
        %v1890 = vld [vmem:[%s1307 + $0x2] sm:$0xff]
        %s1891 = sld [smem:[#allocation3 + $0xe1]]
        %v1892 = vstv %s1891
        %v1893 = vmul.f32 %v1892, %v1890
        %1895 = vrot.lane.b32.xlu0 %v1893, 127
        %v1896 = vpop.permute.xlu0 %1895
        %v1898 = vadd.f32 %v1889, %v1896
        %v1899 = vld [vmem:[%s1317 + $0x2] sm:$0xff]
        %s1900 = sld [smem:[#allocation3 + $0xe2]]
        %v1901 = vstv %s1900
        %v1902 = vmul.f32 %v1901, %v1899
        %1904 = vrot.lane.b32.xlu0 %v1902, 127
        %v1905 = vpop.permute.xlu0 %1904
        %v1907 = vadd.f32 %v1898, %v1905
        %s1908 = sld [smem:[#allocation3 + $0xe3]]
        %v1909 = vstv %s1908
        %v1910 = vmul.f32 %v1909, %v1861
        %1912 = vrot.lane.b32.xlu0 %v1910, 126
        %v1913 = vpop.permute.xlu0 %1912
        %v1915 = vadd.f32 %v1907, %v1913
        %s1916 = sld [smem:[#allocation3 + $0xe4]]
        %v1917 = vstv %s1916
        %v1918 = vmul.f32 %v1917, %v1866
        %1920 = vrot.lane.b32.xlu0 %v1918, 126
        %v1921 = vpop.permute.xlu0 %1920
        %v1923 = vadd.f32 %v1915, %v1921
        %s1924 = sld [smem:[#allocation3 + $0xe5]]
        %v1925 = vstv %s1924
        %v1926 = vmul.f32 %v1925, %v1871
        %1928 = vrot.lane.b32.xlu0 %v1926, 126
        %v1929 = vpop.permute.xlu0 %1928
        %v1931 = vadd.f32 %v1923, %v1929
        %s1932 = sld [smem:[#allocation3 + $0xe6]]
        %v1933 = vstv %s1932
        %v1934 = vmul.f32 %v1933, %v1876
        %1936 = vrot.lane.b32.xlu0 %v1934, 126
        %v1937 = vpop.permute.xlu0 %1936
        %v1939 = vadd.f32 %v1931, %v1937
        %v1940 = vld [vmem:[%s1359 + $0x2] sm:$0xff]
        %s1941 = sld [smem:[#allocation3 + $0xe7]]
        %v1942 = vstv %s1941
        %v1943 = vmul.f32 %v1942, %v1940
        %v1944 = vadd.f32 %v1939, %v1943
        %v1945 = vld [vmem:[%s1365 + $0x2] sm:$0xff]
        %s1946 = sld [smem:[#allocation3 + $0xe8]]
        %v1947 = vstv %s1946
        %v1948 = vmul.f32 %v1947, %v1945
        %v1949 = vadd.f32 %v1944, %v1948
        %v1950 = vld [vmem:[%s1371 + $0x2] sm:$0xff]
        %s1951 = sld [smem:[#allocation3 + $0xe9]]
        %v1952 = vstv %s1951
        %v1953 = vmul.f32 %v1952, %v1950
        %v1954 = vadd.f32 %v1949, %v1953
        %v1955 = vld [vmem:[%s1377 + $0x2] sm:$0xff]
        %s1956 = sld [smem:[#allocation3 + $0xea]]
        %v1957 = vstv %s1956
        %v1958 = vmul.f32 %v1957, %v1955
        %v1959 = vadd.f32 %v1954, %v1958
        %v1960 = vld [vmem:[%s1383 + $0x2] sm:$0xff]
        %s1961 = sld [smem:[#allocation3 + $0xeb]]
        %v1962 = vstv %s1961
        %v1963 = vmul.f32 %v1962, %v1960
        %1965 = vrot.lane.b32.xlu0 %v1963, 127
        %v1966 = vpop.permute.xlu0 %1965
        %v1968 = vadd.f32 %v1959, %v1966
        %v1969 = vld [vmem:[%s1393 + $0x2] sm:$0xff]
        %s1970 = sld [smem:[#allocation3 + $0xec]]
        %v1971 = vstv %s1970
        %v1972 = vmul.f32 %v1971, %v1969
        %1974 = vrot.lane.b32.xlu0 %v1972, 127
        %v1975 = vpop.permute.xlu0 %1974
        %v1977 = vadd.f32 %v1968, %v1975
        %v1978 = vld [vmem:[%s1403 + $0x2] sm:$0xff]
        %s1979 = sld [smem:[#allocation3 + $0xed]]
        %v1980 = vstv %s1979
        %v1981 = vmul.f32 %v1980, %v1978
        %1983 = vrot.lane.b32.xlu0 %v1981, 127
        %v1984 = vpop.permute.xlu0 %1983
        %v1986 = vadd.f32 %v1977, %v1984
        %s1987 = sld [smem:[#allocation3 + $0xee]]
        %v1988 = vstv %s1987
        %v1989 = vmul.f32 %v1988, %v1940
        %1991 = vrot.lane.b32.xlu0 %v1989, 126
        %v1992 = vpop.permute.xlu0 %1991
        %v1994 = vadd.f32 %v1986, %v1992
        %s1995 = sld [smem:[#allocation3 + $0xef]]
        %v1996 = vstv %s1995
        %v1997 = vmul.f32 %v1996, %v1945
        %1999 = vrot.lane.b32.xlu0 %v1997, 126
        %v2000 = vpop.permute.xlu0 %1999
        %v2002 = vadd.f32 %v1994, %v2000
        %s2003 = sld [smem:[#allocation3 + $0xf0]]
        %v2004 = vstv %s2003
        %v2005 = vmul.f32 %v2004, %v1950
        %2007 = vrot.lane.b32.xlu0 %v2005, 126
        %v2008 = vpop.permute.xlu0 %2007
        %v2010 = vadd.f32 %v2002, %v2008
        %s2011 = sld [smem:[#allocation3 + $0xf1]]
        %v2012 = vstv %s2011
        %v2013 = vmul.f32 %v2012, %v1955
        %2015 = vrot.lane.b32.xlu0 %v2013, 126
        %v2016 = vpop.permute.xlu0 %2015
        %v2018 = vadd.f32 %v2010, %v2016
        %s2019 = scalar_lea.vmem %s183, 1568
        %v2020 = vld [vmem:[%s2019] sm:$0xff]
        %s2021 = sld [smem:[#allocation3 + $0xf2]]
        %v2022 = vstv %s2021
        %v2023 = vmul.f32 %v2022, %v2020
        %v2024 = vadd.f32 %v2018, %v2023
        %s2025 = scalar_lea.vmem %s183, 1600
        %v2026 = vld [vmem:[%s2025] sm:$0xff]
        %s2027 = sld [smem:[#allocation3 + $0xf3]]
        %v2028 = vstv %s2027
        %v2029 = vmul.f32 %v2028, %v2026
        %v2030 = vadd.f32 %v2024, %v2029
        %s2031 = scalar_lea.vmem %s183, 1632
        %v2032 = vld [vmem:[%s2031] sm:$0xff]
        %s2033 = sld [smem:[#allocation3 + $0xf4]]
        %v2034 = vstv %s2033
        %v2035 = vmul.f32 %v2034, %v2032
        %v2036 = vadd.f32 %v2030, %v2035
        %s2037 = scalar_lea.vmem %s183, 1664
        %v2038 = vld [vmem:[%s2037] sm:$0xff]
        %s2039 = sld [smem:[#allocation3 + $0xf5]]
        %v2040 = vstv %s2039
        %v2041 = vmul.f32 %v2040, %v2038
        %v2042 = vadd.f32 %v2036, %v2041
        %s2043 = scalar_lea.vmem %s183, 1584
        %v2044 = vld [vmem:[%s2043] sm:$0xff]
        %s2045 = sld [smem:[#allocation3 + $0xf6]]
        %v2046 = vstv %s2045
        %v2047 = vmul.f32 %v2046, %v2044
        %2049 = vrot.lane.b32.xlu0 %v2047, 127
        %v2050 = vpop.permute.xlu0 %2049
        %v2052 = vadd.f32 %v2042, %v2050
        %s2053 = scalar_lea.vmem %s183, 1616
        %v2054 = vld [vmem:[%s2053] sm:$0xff]
        %s2055 = sld [smem:[#allocation3 + $0xf7]]
        %v2056 = vstv %s2055
        %v2057 = vmul.f32 %v2056, %v2054
        %2059 = vrot.lane.b32.xlu0 %v2057, 127
        %v2060 = vpop.permute.xlu0 %2059
        %v2062 = vadd.f32 %v2052, %v2060
        %s2063 = scalar_lea.vmem %s183, 1648
        %v2064 = vld [vmem:[%s2063] sm:$0xff]
        %s2065 = sld [smem:[#allocation3 + $0xf8]]
        %v2066 = vstv %s2065
        %v2067 = vmul.f32 %v2066, %v2064
        %2069 = vrot.lane.b32.xlu0 %v2067, 127
        %v2070 = vpop.permute.xlu0 %2069
        %v2072 = vadd.f32 %v2062, %v2070
        %s2073 = sld [smem:[#allocation3 + $0xf9]]
        %v2074 = vstv %s2073
        %v2075 = vmul.f32 %v2074, %v2020
        %2077 = vrot.lane.b32.xlu0 %v2075, 126
        %v2078 = vpop.permute.xlu0 %2077
        %v2080 = vadd.f32 %v2072, %v2078
        %s2081 = sld [smem:[#allocation3 + $0xfa]]
        %v2082 = vstv %s2081
        %v2083 = vmul.f32 %v2082, %v2026
        %2085 = vrot.lane.b32.xlu0 %v2083, 126
        %v2086 = vpop.permute.xlu0 %2085
        %v2088 = vadd.f32 %v2080, %v2086
        %s2089 = sld [smem:[#allocation3 + $0xfb]]
        %v2090 = vstv %s2089
        %v2091 = vmul.f32 %v2090, %v2032
        %2093 = vrot.lane.b32.xlu0 %v2091, 126
        %v2094 = vpop.permute.xlu0 %2093
        %v2096 = vadd.f32 %v2088, %v2094
        %s2097 = sld [smem:[#allocation3 + $0xfc]]
        %v2098 = vstv %s2097
        %v2099 = vmul.f32 %v2098, %v2038
        %2101 = vrot.lane.b32.xlu0 %v2099, 126
        %v2102 = vpop.permute.xlu0 %2101
        %v2104 = vadd.f32 %v2096, %v2102
        %s2105 = scalar_lea.vmem %s183, 1792
        %v2106 = vld [vmem:[%s2105] sm:$0xff]
        %s2107 = sld [smem:[#allocation3 + $0xfd]]
        %v2108 = vstv %s2107
        %v2109 = vmul.f32 %v2108, %v2106
        %v2110 = vadd.f32 %v2104, %v2109
        %s2111 = scalar_lea.vmem %s183, 1824
        %v2112 = vld [vmem:[%s2111] sm:$0xff]
        %s2113 = sld [smem:[#allocation3 + $0xfe]]
        %v2114 = vstv %s2113
        %v2115 = vmul.f32 %v2114, %v2112
        %v2116 = vadd.f32 %v2110, %v2115
        %s2117 = scalar_lea.vmem %s183, 1856
        %v2118 = vld [vmem:[%s2117] sm:$0xff]
        %s2119 = sld [smem:[#allocation3 + $0xff]]
        %v2120 = vstv %s2119
        %v2121 = vmul.f32 %v2120, %v2118
        %v2122 = vadd.f32 %v2116, %v2121
        %s2123 = scalar_lea.vmem %s183, 1888
        %v2124 = vld [vmem:[%s2123] sm:$0xff]
        %s2125 = sld [smem:[#allocation3 + $0x100]]
        %v2126 = vstv %s2125
        %v2127 = vmul.f32 %v2126, %v2124
        %v2128 = vadd.f32 %v2122, %v2127
        %s2129 = scalar_lea.vmem %s183, 1808
        %v2130 = vld [vmem:[%s2129] sm:$0xff]
        %s2131 = sld [smem:[#allocation3 + $0x101]]
        %v2132 = vstv %s2131
        %v2133 = vmul.f32 %v2132, %v2130
        %2135 = vrot.lane.b32.xlu0 %v2133, 127
        %v2136 = vpop.permute.xlu0 %2135
        %v2138 = vadd.f32 %v2128, %v2136
        %s2139 = scalar_lea.vmem %s183, 1840
        %v2140 = vld [vmem:[%s2139] sm:$0xff]
        %s2141 = sld [smem:[#allocation3 + $0x102]]
        %v2142 = vstv %s2141
        %v2143 = vmul.f32 %v2142, %v2140
        %2145 = vrot.lane.b32.xlu0 %v2143, 127
        %v2146 = vpop.permute.xlu0 %2145
        %v2148 = vadd.f32 %v2138, %v2146
        %s2149 = scalar_lea.vmem %s183, 1872
        %v2150 = vld [vmem:[%s2149] sm:$0xff]
        %s2151 = sld [smem:[#allocation3 + $0x103]]
        %v2152 = vstv %s2151
        %v2153 = vmul.f32 %v2152, %v2150
        %2155 = vrot.lane.b32.xlu0 %v2153, 127
        %v2156 = vpop.permute.xlu0 %2155
        %v2158 = vadd.f32 %v2148, %v2156
        %s2159 = sld [smem:[#allocation3 + $0x104]]
        %v2160 = vstv %s2159
        %v2161 = vmul.f32 %v2160, %v2106
        %2163 = vrot.lane.b32.xlu0 %v2161, 126
        %v2164 = vpop.permute.xlu0 %2163
        %v2166 = vadd.f32 %v2158, %v2164
        %s2167 = sld [smem:[#allocation3 + $0x105]]
        %v2168 = vstv %s2167
        %v2169 = vmul.f32 %v2168, %v2112
        %2171 = vrot.lane.b32.xlu0 %v2169, 126
        %v2172 = vpop.permute.xlu0 %2171
        %v2174 = vadd.f32 %v2166, %v2172
        %s2175 = sld [smem:[#allocation3 + $0x106]]
        %v2176 = vstv %s2175
        %v2177 = vmul.f32 %v2176, %v2118
        %2179 = vrot.lane.b32.xlu0 %v2177, 126
        %v2180 = vpop.permute.xlu0 %2179
        %v2182 = vadd.f32 %v2174, %v2180
        %s2183 = sld [smem:[#allocation3 + $0x107]]
        %v2184 = vstv %s2183
        %v2185 = vmul.f32 %v2184, %v2124
        %2187 = vrot.lane.b32.xlu0 %v2185, 126
        %v2188 = vpop.permute.xlu0 %2187
        %v2190 = vadd.f32 %v2182, %v2188
        %s2191 = scalar_lea.vmem %s183, 2016
        %v2192 = vld [vmem:[%s2191] sm:$0xff]
        %s2193 = sld [smem:[#allocation3 + $0x108]]
        %v2194 = vstv %s2193
        %v2195 = vmul.f32 %v2194, %v2192
        %v2196 = vadd.f32 %v2190, %v2195
        %s2197 = scalar_lea.vmem %s183, 2048
        %v2198 = vld [vmem:[%s2197] sm:$0xff]
        %s2199 = sld [smem:[#allocation3 + $0x109]]
        %v2200 = vstv %s2199
        %v2201 = vmul.f32 %v2200, %v2198
        %v2202 = vadd.f32 %v2196, %v2201
        %s2203 = scalar_lea.vmem %s183, 2080
        %v2204 = vld [vmem:[%s2203] sm:$0xff]
        %s2205 = sld [smem:[#allocation3 + $0x10a]]
        %v2206 = vstv %s2205
        %v2207 = vmul.f32 %v2206, %v2204
        %v2208 = vadd.f32 %v2202, %v2207
        %s2209 = scalar_lea.vmem %s183, 2112
        %v2210 = vld [vmem:[%s2209] sm:$0xff]
        %s2211 = sld [smem:[#allocation3 + $0x10b]]
        %v2212 = vstv %s2211
        %v2213 = vmul.f32 %v2212, %v2210
        %v2214 = vadd.f32 %v2208, %v2213
        %s2215 = scalar_lea.vmem %s183, 2032
        %v2216 = vld [vmem:[%s2215] sm:$0xff]
        %s2217 = sld [smem:[#allocation3 + $0x10c]]
        %v2218 = vstv %s2217
        %v2219 = vmul.f32 %v2218, %v2216
        %2221 = vrot.lane.b32.xlu0 %v2219, 127
        %v2222 = vpop.permute.xlu0 %2221
        %v2224 = vadd.f32 %v2214, %v2222
        %s2225 = scalar_lea.vmem %s183, 2064
        %v2226 = vld [vmem:[%s2225] sm:$0xff]
        %s2227 = sld [smem:[#allocation3 + $0x10d]]
        %v2228 = vstv %s2227
        %v2229 = vmul.f32 %v2228, %v2226
        %2231 = vrot.lane.b32.xlu0 %v2229, 127
        %v2232 = vpop.permute.xlu0 %2231
        %v2234 = vadd.f32 %v2224, %v2232
        %s2235 = scalar_lea.vmem %s183, 2096
        %v2236 = vld [vmem:[%s2235] sm:$0xff]
        %s2237 = sld [smem:[#allocation3 + $0x10e]]
        %v2238 = vstv %s2237
        %v2239 = vmul.f32 %v2238, %v2236
        %2241 = vrot.lane.b32.xlu0 %v2239, 127
        %v2242 = vpop.permute.xlu0 %2241
        %v2244 = vadd.f32 %v2234, %v2242
        %s2245 = sld [smem:[#allocation3 + $0x10f]]
        %v2246 = vstv %s2245
        %v2247 = vmul.f32 %v2246, %v2192
        %2249 = vrot.lane.b32.xlu0 %v2247, 126
        %v2250 = vpop.permute.xlu0 %2249
        %v2252 = vadd.f32 %v2244, %v2250
        %s2253 = sld [smem:[#allocation3 + $0x110]]
        %v2254 = vstv %s2253
        %v2255 = vmul.f32 %v2254, %v2198
        %2257 = vrot.lane.b32.xlu0 %v2255, 126
        %v2258 = vpop.permute.xlu0 %2257
        %v2260 = vadd.f32 %v2252, %v2258
        %s2261 = sld [smem:[#allocation3 + $0x111]]
        %v2262 = vstv %s2261
        %v2263 = vmul.f32 %v2262, %v2204
        %2265 = vrot.lane.b32.xlu0 %v2263, 126
        %v2266 = vpop.permute.xlu0 %2265
        %v2268 = vadd.f32 %v2260, %v2266
        %s2269 = sld [smem:[#allocation3 + $0x112]]
        %v2270 = vstv %s2269
        %v2271 = vmul.f32 %v2270, %v2210
        %2273 = vrot.lane.b32.xlu0 %v2271, 126
        %v2274 = vpop.permute.xlu0 %2273
        %v2276 = vadd.f32 %v2268, %v2274
        %s2277 = scalar_lea.vmem %s183, 2240
        %v2278 = vld [vmem:[%s2277] sm:$0xff]
        %s2279 = sld [smem:[#allocation3 + $0x113]]
        %v2280 = vstv %s2279
        %v2281 = vmul.f32 %v2280, %v2278
        %v2282 = vadd.f32 %v2276, %v2281
        %s2283 = scalar_lea.vmem %s183, 2272
        %v2284 = vld [vmem:[%s2283] sm:$0xff]
        %s2285 = sld [smem:[#allocation3 + $0x114]]
        %v2286 = vstv %s2285
        %v2287 = vmul.f32 %v2286, %v2284
        %v2288 = vadd.f32 %v2282, %v2287
        %s2289 = scalar_lea.vmem %s183, 2304
        %v2290 = vld [vmem:[%s2289] sm:$0xff]
        %s2291 = sld [smem:[#allocation3 + $0x115]]
        %v2292 = vstv %s2291
        %v2293 = vmul.f32 %v2292, %v2290
        %v2294 = vadd.f32 %v2288, %v2293
        %s2295 = scalar_lea.vmem %s183, 2336
        %v2296 = vld [vmem:[%s2295] sm:$0xff]
        %s2297 = sld [smem:[#allocation3 + $0x116]]
        %v2298 = vstv %s2297
        %v2299 = vmul.f32 %v2298, %v2296
        %v2300 = vadd.f32 %v2294, %v2299
        %s2301 = scalar_lea.vmem %s183, 2256
        %v2302 = vld [vmem:[%s2301] sm:$0xff]
        %s2303 = sld [smem:[#allocation3 + $0x117]]
        %v2304 = vstv %s2303
        %v2305 = vmul.f32 %v2304, %v2302
        %2307 = vrot.lane.b32.xlu0 %v2305, 127
        %v2308 = vpop.permute.xlu0 %2307
        %v2310 = vadd.f32 %v2300, %v2308
        %s2311 = scalar_lea.vmem %s183, 2288
        %v2312 = vld [vmem:[%s2311] sm:$0xff]
        %s2313 = sld [smem:[#allocation3 + $0x118]]
        %v2314 = vstv %s2313
        %v2315 = vmul.f32 %v2314, %v2312
        %2317 = vrot.lane.b32.xlu0 %v2315, 127
        %v2318 = vpop.permute.xlu0 %2317
        %v2320 = vadd.f32 %v2310, %v2318
        %s2321 = scalar_lea.vmem %s183, 2320
        %v2322 = vld [vmem:[%s2321] sm:$0xff]
        %s2323 = sld [smem:[#allocation3 + $0x119]]
        %v2324 = vstv %s2323
        %v2325 = vmul.f32 %v2324, %v2322
        %2327 = vrot.lane.b32.xlu0 %v2325, 127
        %v2328 = vpop.permute.xlu0 %2327
        %v2330 = vadd.f32 %v2320, %v2328
        %s2331 = sld [smem:[#allocation3 + $0x11a]]
        %v2332 = vstv %s2331
        %v2333 = vmul.f32 %v2332, %v2278
        %2335 = vrot.lane.b32.xlu0 %v2333, 126
        %v2336 = vpop.permute.xlu0 %2335
        %v2338 = vadd.f32 %v2330, %v2336
        %s2339 = sld [smem:[#allocation3 + $0x11b]]
        %v2340 = vstv %s2339
        %v2341 = vmul.f32 %v2340, %v2284
        %2343 = vrot.lane.b32.xlu0 %v2341, 126
        %v2344 = vpop.permute.xlu0 %2343
        %v2346 = vadd.f32 %v2338, %v2344
        %s2347 = sld [smem:[#allocation3 + $0x11c]]
        %v2348 = vstv %s2347
        %v2349 = vmul.f32 %v2348, %v2290
        %2351 = vrot.lane.b32.xlu0 %v2349, 126
        %v2352 = vpop.permute.xlu0 %2351
        %v2354 = vadd.f32 %v2346, %v2352
        %s2355 = sld [smem:[#allocation3 + $0x11d]]
        %v2356 = vstv %s2355
        %v2357 = vmul.f32 %v2356, %v2296
        %2359 = vrot.lane.b32.xlu0 %v2357, 126
        %v2360 = vpop.permute.xlu0 %2359
        %v2362 = vadd.f32 %v2354, %v2360
        %s2363 = scalar_lea.vmem %s183, 1680
        %v2364 = vld [vmem:[%s2363 + $0x1] sm:$0xff]
        %s2365 = sld [smem:[#allocation3 + $0x11e]]
        %v2366 = vstv %s2365
        %v2367 = vmul.f32 %v2366, %v2364
        %v2368 = vadd.f32 %v2362, %v2367
        %s2369 = scalar_lea.vmem %s183, 1712
        %v2370 = vld [vmem:[%s2369 + $0x1] sm:$0xff]
        %s2371 = sld [smem:[#allocation3 + $0x11f]]
        %v2372 = vstv %s2371
        %v2373 = vmul.f32 %v2372, %v2370
        %v2374 = vadd.f32 %v2368, %v2373
        %s2375 = scalar_lea.vmem %s183, 1744
        %v2376 = vld [vmem:[%s2375 + $0x1] sm:$0xff]
        %s2377 = sld [smem:[#allocation3 + $0x120]]
        %v2378 = vstv %s2377
        %v2379 = vmul.f32 %v2378, %v2376
        %v2380 = vadd.f32 %v2374, %v2379
        %s2381 = scalar_lea.vmem %s183, 1776
        %v2382 = vld [vmem:[%s2381 + $0x1] sm:$0xff]
        %s2383 = sld [smem:[#allocation3 + $0x121]]
        %v2384 = vstv %s2383
        %v2385 = vmul.f32 %v2384, %v2382
        %v2386 = vadd.f32 %v2380, %v2385
        %s2387 = scalar_lea.vmem %s183, 1696
        %v2388 = vld [vmem:[%s2387 + $0x1] sm:$0xff]
        %s2389 = sld [smem:[#allocation3 + $0x122]]
        %v2390 = vstv %s2389
        %v2391 = vmul.f32 %v2390, %v2388
        %2393 = vrot.lane.b32.xlu0 %v2391, 127
        %v2394 = vpop.permute.xlu0 %2393
        %v2396 = vadd.f32 %v2386, %v2394
        %s2397 = scalar_lea.vmem %s183, 1728
        %v2398 = vld [vmem:[%s2397 + $0x1] sm:$0xff]
        %s2399 = sld [smem:[#allocation3 + $0x123]]
        %v2400 = vstv %s2399
        %v2401 = vmul.f32 %v2400, %v2398
        %2403 = vrot.lane.b32.xlu0 %v2401, 127
        %v2404 = vpop.permute.xlu0 %2403
        %v2406 = vadd.f32 %v2396, %v2404
        %s2407 = scalar_lea.vmem %s183, 1760
        %v2408 = vld [vmem:[%s2407 + $0x1] sm:$0xff]
        %s2409 = sld [smem:[#allocation3 + $0x124]]
        %v2410 = vstv %s2409
        %v2411 = vmul.f32 %v2410, %v2408
        %2413 = vrot.lane.b32.xlu0 %v2411, 127
        %v2414 = vpop.permute.xlu0 %2413
        %v2416 = vadd.f32 %v2406, %v2414
        %s2417 = sld [smem:[#allocation3 + $0x125]]
        %v2418 = vstv %s2417
        %v2419 = vmul.f32 %v2418, %v2364
        %2421 = vrot.lane.b32.xlu0 %v2419, 126
        %v2422 = vpop.permute.xlu0 %2421
        %v2424 = vadd.f32 %v2416, %v2422
        %s2425 = sld [smem:[#allocation3 + $0x126]]
        %v2426 = vstv %s2425
        %v2427 = vmul.f32 %v2426, %v2370
        %2429 = vrot.lane.b32.xlu0 %v2427, 126
        %v2430 = vpop.permute.xlu0 %2429
        %v2432 = vadd.f32 %v2424, %v2430
        %s2433 = sld [smem:[#allocation3 + $0x127]]
        %v2434 = vstv %s2433
        %v2435 = vmul.f32 %v2434, %v2376
        %2437 = vrot.lane.b32.xlu0 %v2435, 126
        %v2438 = vpop.permute.xlu0 %2437
        %v2440 = vadd.f32 %v2432, %v2438
        %s2441 = sld [smem:[#allocation3 + $0x128]]
        %v2442 = vstv %s2441
        %v2443 = vmul.f32 %v2442, %v2382
        %2445 = vrot.lane.b32.xlu0 %v2443, 126
        %v2446 = vpop.permute.xlu0 %2445
        %v2448 = vadd.f32 %v2440, %v2446
        %s2449 = scalar_lea.vmem %s183, 1904
        %v2450 = vld [vmem:[%s2449 + $0x1] sm:$0xff]
        %s2451 = sld [smem:[#allocation3 + $0x129]]
        %v2452 = vstv %s2451
        %v2453 = vmul.f32 %v2452, %v2450
        %v2454 = vadd.f32 %v2448, %v2453
        %s2455 = scalar_lea.vmem %s183, 1936
        %v2456 = vld [vmem:[%s2455 + $0x1] sm:$0xff]
        %s2457 = sld [smem:[#allocation3 + $0x12a]]
        %v2458 = vstv %s2457
        %v2459 = vmul.f32 %v2458, %v2456
        %v2460 = vadd.f32 %v2454, %v2459
        %s2461 = scalar_lea.vmem %s183, 1968
        %v2462 = vld [vmem:[%s2461 + $0x1] sm:$0xff]
        %s2463 = sld [smem:[#allocation3 + $0x12b]]
        %v2464 = vstv %s2463
        %v2465 = vmul.f32 %v2464, %v2462
        %v2466 = vadd.f32 %v2460, %v2465
        %s2467 = scalar_lea.vmem %s183, 2000
        %v2468 = vld [vmem:[%s2467 + $0x1] sm:$0xff]
        %s2469 = sld [smem:[#allocation3 + $0x12c]]
        %v2470 = vstv %s2469
        %v2471 = vmul.f32 %v2470, %v2468
        %v2472 = vadd.f32 %v2466, %v2471
        %s2473 = scalar_lea.vmem %s183, 1920
        %v2474 = vld [vmem:[%s2473 + $0x1] sm:$0xff]
        %s2475 = sld [smem:[#allocation3 + $0x12d]]
        %v2476 = vstv %s2475
        %v2477 = vmul.f32 %v2476, %v2474
        %2479 = vrot.lane.b32.xlu0 %v2477, 127
        %v2480 = vpop.permute.xlu0 %2479
        %v2482 = vadd.f32 %v2472, %v2480
        %s2483 = scalar_lea.vmem %s183, 1952
        %v2484 = vld [vmem:[%s2483 + $0x1] sm:$0xff]
        %s2485 = sld [smem:[#allocation3 + $0x12e]]
        %v2486 = vstv %s2485
        %v2487 = vmul.f32 %v2486, %v2484
        %2489 = vrot.lane.b32.xlu0 %v2487, 127
        %v2490 = vpop.permute.xlu0 %2489
        %v2492 = vadd.f32 %v2482, %v2490
        %s2493 = scalar_lea.vmem %s183, 1984
        %v2494 = vld [vmem:[%s2493 + $0x1] sm:$0xff]
        %s2495 = sld [smem:[#allocation3 + $0x12f]]
        %v2496 = vstv %s2495
        %v2497 = vmul.f32 %v2496, %v2494
        %2499 = vrot.lane.b32.xlu0 %v2497, 127
        %v2500 = vpop.permute.xlu0 %2499
        %v2502 = vadd.f32 %v2492, %v2500
        %s2503 = sld [smem:[#allocation3 + $0x130]]
        %v2504 = vstv %s2503
        %v2505 = vmul.f32 %v2504, %v2450
        %2507 = vrot.lane.b32.xlu0 %v2505, 126
        %v2508 = vpop.permute.xlu0 %2507
        %v2510 = vadd.f32 %v2502, %v2508
        %s2511 = sld [smem:[#allocation3 + $0x131]]
        %v2512 = vstv %s2511
        %v2513 = vmul.f32 %v2512, %v2456
        %2515 = vrot.lane.b32.xlu0 %v2513, 126
        %v2516 = vpop.permute.xlu0 %2515
        %v2518 = vadd.f32 %v2510, %v2516
        %s2519 = sld [smem:[#allocation3 + $0x132]]
        %v2520 = vstv %s2519
        %v2521 = vmul.f32 %v2520, %v2462
        %2523 = vrot.lane.b32.xlu0 %v2521, 126
        %v2524 = vpop.permute.xlu0 %2523
        %v2526 = vadd.f32 %v2518, %v2524
        %s2527 = sld [smem:[#allocation3 + $0x133]]
        %v2528 = vstv %s2527
        %v2529 = vmul.f32 %v2528, %v2468
        %2531 = vrot.lane.b32.xlu0 %v2529, 126
        %v2532 = vpop.permute.xlu0 %2531
        %v2534 = vadd.f32 %v2526, %v2532
        %s2535 = scalar_lea.vmem %s183, 2128
        %v2536 = vld [vmem:[%s2535 + $0x1] sm:$0xff]
        %s2537 = sld [smem:[#allocation3 + $0x134]]
        %v2538 = vstv %s2537
        %v2539 = vmul.f32 %v2538, %v2536
        %v2540 = vadd.f32 %v2534, %v2539
        %s2541 = scalar_lea.vmem %s183, 2160
        %v2542 = vld [vmem:[%s2541 + $0x1] sm:$0xff]
        %s2543 = sld [smem:[#allocation3 + $0x135]]
        %v2544 = vstv %s2543
        %v2545 = vmul.f32 %v2544, %v2542
        %v2546 = vadd.f32 %v2540, %v2545
        %s2547 = scalar_lea.vmem %s183, 2192
        %v2548 = vld [vmem:[%s2547 + $0x1] sm:$0xff]
        %s2549 = sld [smem:[#allocation3 + $0x136]]
        %v2550 = vstv %s2549
        %v2551 = vmul.f32 %v2550, %v2548
        %v2552 = vadd.f32 %v2546, %v2551
        %s2553 = scalar_lea.vmem %s183, 2224
        %v2554 = vld [vmem:[%s2553 + $0x1] sm:$0xff]
        %s2555 = sld [smem:[#allocation3 + $0x137]]
        %v2556 = vstv %s2555
        %v2557 = vmul.f32 %v2556, %v2554
        %v2558 = vadd.f32 %v2552, %v2557
        %s2559 = scalar_lea.vmem %s183, 2144
        %v2560 = vld [vmem:[%s2559 + $0x1] sm:$0xff]
        %s2561 = sld [smem:[#allocation3 + $0x138]]
        %v2562 = vstv %s2561
        %v2563 = vmul.f32 %v2562, %v2560
        %2565 = vrot.lane.b32.xlu0 %v2563, 127
        %v2566 = vpop.permute.xlu0 %2565
        %v2568 = vadd.f32 %v2558, %v2566
        %s2569 = scalar_lea.vmem %s183, 2176
        %v2570 = vld [vmem:[%s2569 + $0x1] sm:$0xff]
        %s2571 = sld [smem:[#allocation3 + $0x139]]
        %v2572 = vstv %s2571
        %v2573 = vmul.f32 %v2572, %v2570
        %2575 = vrot.lane.b32.xlu0 %v2573, 127
        %v2576 = vpop.permute.xlu0 %2575
        %v2578 = vadd.f32 %v2568, %v2576
        %s2579 = scalar_lea.vmem %s183, 2208
        %v2580 = vld [vmem:[%s2579 + $0x1] sm:$0xff]
        %s2581 = sld [smem:[#allocation3 + $0x13a]]
        %v2582 = vstv %s2581
        %v2583 = vmul.f32 %v2582, %v2580
        %2585 = vrot.lane.b32.xlu0 %v2583, 127
        %v2586 = vpop.permute.xlu0 %2585
        %v2588 = vadd.f32 %v2578, %v2586
        %s2589 = sld [smem:[#allocation3 + $0x13b]]
        %v2590 = vstv %s2589
        %v2591 = vmul.f32 %v2590, %v2536
        %2593 = vrot.lane.b32.xlu0 %v2591, 126
        %v2594 = vpop.permute.xlu0 %2593
        %v2596 = vadd.f32 %v2588, %v2594
        %s2597 = sld [smem:[#allocation3 + $0x13c]]
        %v2598 = vstv %s2597
        %v2599 = vmul.f32 %v2598, %v2542
        %2601 = vrot.lane.b32.xlu0 %v2599, 126
        %v2602 = vpop.permute.xlu0 %2601
        %v2604 = vadd.f32 %v2596, %v2602
        %s2605 = sld [smem:[#allocation3 + $0x13d]]
        %v2606 = vstv %s2605
        %v2607 = vmul.f32 %v2606, %v2548
        %2609 = vrot.lane.b32.xlu0 %v2607, 126
        %v2610 = vpop.permute.xlu0 %2609
        %v2612 = vadd.f32 %v2604, %v2610
        %s2613 = sld [smem:[#allocation3 + $0x13e]]
        %v2614 = vstv %s2613
        %v2615 = vmul.f32 %v2614, %v2554
        %2617 = vrot.lane.b32.xlu0 %v2615, 126
        %v2618 = vpop.permute.xlu0 %2617
        %v2620 = vadd.f32 %v2612, %v2618
        %v2621 = vld [vmem:[%s2019 + $0x2] sm:$0xff]
        %s2622 = sld [smem:[#allocation3 + $0x13f]]
        %v2623 = vstv %s2622
        %v2624 = vmul.f32 %v2623, %v2621
        %v2625 = vadd.f32 %v2620, %v2624
        %v2626 = vld [vmem:[%s2025 + $0x2] sm:$0xff]
        %s2627 = sld [smem:[#allocation3 + $0x140]]
        %v2628 = vstv %s2627
        %v2629 = vmul.f32 %v2628, %v2626
        %v2630 = vadd.f32 %v2625, %v2629
        %v2631 = vld [vmem:[%s2031 + $0x2] sm:$0xff]
        %s2632 = sld [smem:[#allocation3 + $0x141]]
        %v2633 = vstv %s2632
        %v2634 = vmul.f32 %v2633, %v2631
        %v2635 = vadd.f32 %v2630, %v2634
        %v2636 = vld [vmem:[%s2037 + $0x2] sm:$0xff]
        %s2637 = sld [smem:[#allocation3 + $0x142]]
        %v2638 = vstv %s2637
        %v2639 = vmul.f32 %v2638, %v2636
        %v2640 = vadd.f32 %v2635, %v2639
        %v2641 = vld [vmem:[%s2043 + $0x2] sm:$0xff]
        %s2642 = sld [smem:[#allocation3 + $0x143]]
        %v2643 = vstv %s2642
        %v2644 = vmul.f32 %v2643, %v2641
        %2646 = vrot.lane.b32.xlu0 %v2644, 127
        %v2647 = vpop.permute.xlu0 %2646
        %v2649 = vadd.f32 %v2640, %v2647
        %v2650 = vld [vmem:[%s2053 + $0x2] sm:$0xff]
        %s2651 = sld [smem:[#allocation3 + $0x144]]
        %v2652 = vstv %s2651
        %v2653 = vmul.f32 %v2652, %v2650
        %2655 = vrot.lane.b32.xlu0 %v2653, 127
        %v2656 = vpop.permute.xlu0 %2655
        %v2658 = vadd.f32 %v2649, %v2656
        %v2659 = vld [vmem:[%s2063 + $0x2] sm:$0xff]
        %s2660 = sld [smem:[#allocation3 + $0x145]]
        %v2661 = vstv %s2660
        %v2662 = vmul.f32 %v2661, %v2659
        %2664 = vrot.lane.b32.xlu0 %v2662, 127
        %v2665 = vpop.permute.xlu0 %2664
        %v2667 = vadd.f32 %v2658, %v2665
        %s2668 = sld [smem:[#allocation3 + $0x146]]
        %v2669 = vstv %s2668
        %v2670 = vmul.f32 %v2669, %v2621
        %2672 = vrot.lane.b32.xlu0 %v2670, 126
        %v2673 = vpop.permute.xlu0 %2672
        %v2675 = vadd.f32 %v2667, %v2673
        %s2676 = sld [smem:[#allocation3 + $0x147]]
        %v2677 = vstv %s2676
        %v2678 = vmul.f32 %v2677, %v2626
        %2680 = vrot.lane.b32.xlu0 %v2678, 126
        %v2681 = vpop.permute.xlu0 %2680
        %v2683 = vadd.f32 %v2675, %v2681
        %s2684 = sld [smem:[#allocation3 + $0x148]]
        %v2685 = vstv %s2684
        %v2686 = vmul.f32 %v2685, %v2631
        %2688 = vrot.lane.b32.xlu0 %v2686, 126
        %v2689 = vpop.permute.xlu0 %2688
        %v2691 = vadd.f32 %v2683, %v2689
        %s2692 = sld [smem:[#allocation3 + $0x149]]
        %v2693 = vstv %s2692
        %v2694 = vmul.f32 %v2693, %v2636
        %2696 = vrot.lane.b32.xlu0 %v2694, 126
        %v2697 = vpop.permute.xlu0 %2696
        %v2699 = vadd.f32 %v2691, %v2697
        %v2700 = vld [vmem:[%s2105 + $0x2] sm:$0xff]
        %s2701 = sld [smem:[#allocation3 + $0x14a]]
        %v2702 = vstv %s2701
        %v2703 = vmul.f32 %v2702, %v2700
        %v2704 = vadd.f32 %v2699, %v2703
        %v2705 = vld [vmem:[%s2111 + $0x2] sm:$0xff]
        %s2706 = sld [smem:[#allocation3 + $0x14b]]
        %v2707 = vstv %s2706
        %v2708 = vmul.f32 %v2707, %v2705
        %v2709 = vadd.f32 %v2704, %v2708
        %v2710 = vld [vmem:[%s2117 + $0x2] sm:$0xff]
        %s2711 = sld [smem:[#allocation3 + $0x14c]]
        %v2712 = vstv %s2711
        %v2713 = vmul.f32 %v2712, %v2710
        %v2714 = vadd.f32 %v2709, %v2713
        %v2715 = vld [vmem:[%s2123 + $0x2] sm:$0xff]
        %s2716 = sld [smem:[#allocation3 + $0x14d]]
        %v2717 = vstv %s2716
        %v2718 = vmul.f32 %v2717, %v2715
        %v2719 = vadd.f32 %v2714, %v2718
        %v2720 = vld [vmem:[%s2129 + $0x2] sm:$0xff]
        %s2721 = sld [smem:[#allocation3 + $0x14e]]
        %v2722 = vstv %s2721
        %v2723 = vmul.f32 %v2722, %v2720
        %2725 = vrot.lane.b32.xlu0 %v2723, 127
        %v2726 = vpop.permute.xlu0 %2725
        %v2728 = vadd.f32 %v2719, %v2726
        %v2729 = vld [vmem:[%s2139 + $0x2] sm:$0xff]
        %s2730 = sld [smem:[#allocation3 + $0x14f]]
        %v2731 = vstv %s2730
        %v2732 = vmul.f32 %v2731, %v2729
        %2734 = vrot.lane.b32.xlu0 %v2732, 127
        %v2735 = vpop.permute.xlu0 %2734
        %v2737 = vadd.f32 %v2728, %v2735
        %v2738 = vld [vmem:[%s2149 + $0x2] sm:$0xff]
        %s2739 = sld [smem:[#allocation3 + $0x150]]
        %v2740 = vstv %s2739
        %v2741 = vmul.f32 %v2740, %v2738
        %2743 = vrot.lane.b32.xlu0 %v2741, 127
        %v2744 = vpop.permute.xlu0 %2743
        %v2746 = vadd.f32 %v2737, %v2744
        %s2747 = sld [smem:[#allocation3 + $0x151]]
        %v2748 = vstv %s2747
        %v2749 = vmul.f32 %v2748, %v2700
        %2751 = vrot.lane.b32.xlu0 %v2749, 126
        %v2752 = vpop.permute.xlu0 %2751
        %v2754 = vadd.f32 %v2746, %v2752
        %s2755 = sld [smem:[#allocation3 + $0x152]]
        %v2756 = vstv %s2755
        %v2757 = vmul.f32 %v2756, %v2705
        %2759 = vrot.lane.b32.xlu0 %v2757, 126
        %v2760 = vpop.permute.xlu0 %2759
        %v2762 = vadd.f32 %v2754, %v2760
        %s2763 = sld [smem:[#allocation3 + $0x153]]
        %v2764 = vstv %s2763
        %v2765 = vmul.f32 %v2764, %v2710
        %2767 = vrot.lane.b32.xlu0 %v2765, 126
        %v2768 = vpop.permute.xlu0 %2767
        %v2770 = vadd.f32 %v2762, %v2768
        %s2771 = sld [smem:[#allocation3 + $0x154]]
        %v2772 = vstv %s2771
        %v2773 = vmul.f32 %v2772, %v2715
        %2775 = vrot.lane.b32.xlu0 %v2773, 126
        %v2776 = vpop.permute.xlu0 %2775
        %v2778 = vadd.f32 %v2770, %v2776
        %v2779 = vld [vmem:[%s2191 + $0x2] sm:$0xff]
        %s2780 = sld [smem:[#allocation3 + $0x155]]
        %v2781 = vstv %s2780
        %v2782 = vmul.f32 %v2781, %v2779
        %v2783 = vadd.f32 %v2778, %v2782
        %v2784 = vld [vmem:[%s2197 + $0x2] sm:$0xff]
        %s2785 = sld [smem:[#allocation3 + $0x156]]
        %v2786 = vstv %s2785
        %v2787 = vmul.f32 %v2786, %v2784
        %v2788 = vadd.f32 %v2783, %v2787
        %v2789 = vld [vmem:[%s2203 + $0x2] sm:$0xff]
        %s2790 = sld [smem:[#allocation3 + $0x157]]
        %v2791 = vstv %s2790
        %v2792 = vmul.f32 %v2791, %v2789
        %v2793 = vadd.f32 %v2788, %v2792
        %v2794 = vld [vmem:[%s2209 + $0x2] sm:$0xff]
        %s2795 = sld [smem:[#allocation3 + $0x158]]
        %v2796 = vstv %s2795
        %v2797 = vmul.f32 %v2796, %v2794
        %v2798 = vadd.f32 %v2793, %v2797
        %v2799 = vld [vmem:[%s2215 + $0x2] sm:$0xff]
        %s2800 = sld [smem:[#allocation3 + $0x159]]
        %v2801 = vstv %s2800
        %v2802 = vmul.f32 %v2801, %v2799
        %2804 = vrot.lane.b32.xlu0 %v2802, 127
        %v2805 = vpop.permute.xlu0 %2804
        %v2807 = vadd.f32 %v2798, %v2805
        %v2808 = vld [vmem:[%s2225 + $0x2] sm:$0xff]
        %s2809 = sld [smem:[#allocation3 + $0x15a]]
        %v2810 = vstv %s2809
        %v2811 = vmul.f32 %v2810, %v2808
        %2813 = vrot.lane.b32.xlu0 %v2811, 127
        %v2814 = vpop.permute.xlu0 %2813
        %v2816 = vadd.f32 %v2807, %v2814
        %v2817 = vld [vmem:[%s2235 + $0x2] sm:$0xff]
        %s2818 = sld [smem:[#allocation3 + $0x15b]]
        %v2819 = vstv %s2818
        %v2820 = vmul.f32 %v2819, %v2817
        %2822 = vrot.lane.b32.xlu0 %v2820, 127
        %v2823 = vpop.permute.xlu0 %2822
        %v2825 = vadd.f32 %v2816, %v2823
        %s2826 = sld [smem:[#allocation3 + $0x15c]]
        %v2827 = vstv %s2826
        %v2828 = vmul.f32 %v2827, %v2779
        %2830 = vrot.lane.b32.xlu0 %v2828, 126
        %v2831 = vpop.permute.xlu0 %2830
        %v2833 = vadd.f32 %v2825, %v2831
        %s2834 = sld [smem:[#allocation3 + $0x15d]]
        %v2835 = vstv %s2834
        %v2836 = vmul.f32 %v2835, %v2784
        %2838 = vrot.lane.b32.xlu0 %v2836, 126
        %v2839 = vpop.permute.xlu0 %2838
        %v2841 = vadd.f32 %v2833, %v2839
        %s2842 = sld [smem:[#allocation3 + $0x15e]]
        %v2843 = vstv %s2842
        %v2844 = vmul.f32 %v2843, %v2789
        %2846 = vrot.lane.b32.xlu0 %v2844, 126
        %v2847 = vpop.permute.xlu0 %2846
        %v2849 = vadd.f32 %v2841, %v2847
        %s2850 = sld [smem:[#allocation3 + $0x15f]]
        %v2851 = vstv %s2850
        %v2852 = vmul.f32 %v2851, %v2794
        %2854 = vrot.lane.b32.xlu0 %v2852, 126
        %v2855 = vpop.permute.xlu0 %2854
        %v2857 = vadd.f32 %v2849, %v2855
        %v2858 = vld [vmem:[%s2277 + $0x2] sm:$0xff]
        %s2859 = sld [smem:[#allocation3 + $0x160]]
        %v2860 = vstv %s2859
        %v2861 = vmul.f32 %v2860, %v2858
        %v2862 = vadd.f32 %v2857, %v2861
        %v2863 = vld [vmem:[%s2283 + $0x2] sm:$0xff]
        %s2864 = sld [smem:[#allocation3 + $0x161]]
        %v2865 = vstv %s2864
        %v2866 = vmul.f32 %v2865, %v2863
        %v2867 = vadd.f32 %v2862, %v2866
        %v2868 = vld [vmem:[%s2289 + $0x2] sm:$0xff]
        %s2869 = sld [smem:[#allocation3 + $0x162]]
        %v2870 = vstv %s2869
        %v2871 = vmul.f32 %v2870, %v2868
        %v2872 = vadd.f32 %v2867, %v2871
        %v2873 = vld [vmem:[%s2295 + $0x2] sm:$0xff]
        %s2874 = sld [smem:[#allocation3 + $0x163]]
        %v2875 = vstv %s2874
        %v2876 = vmul.f32 %v2875, %v2873
        %v2877 = vadd.f32 %v2872, %v2876
        %v2878 = vld [vmem:[%s2301 + $0x2] sm:$0xff]
        %s2879 = sld [smem:[#allocation3 + $0x164]]
        %v2880 = vstv %s2879
        %v2881 = vmul.f32 %v2880, %v2878
        %2883 = vrot.lane.b32.xlu0 %v2881, 127
        %v2884 = vpop.permute.xlu0 %2883
        %v2886 = vadd.f32 %v2877, %v2884
        %v2887 = vld [vmem:[%s2311 + $0x2] sm:$0xff]
        %s2888 = sld [smem:[#allocation3 + $0x165]]
        %v2889 = vstv %s2888
        %v2890 = vmul.f32 %v2889, %v2887
        %2892 = vrot.lane.b32.xlu0 %v2890, 127
        %v2893 = vpop.permute.xlu0 %2892
        %v2895 = vadd.f32 %v2886, %v2893
        %v2896 = vld [vmem:[%s2321 + $0x2] sm:$0xff]
        %s2897 = sld [smem:[#allocation3 + $0x166]]
        %v2898 = vstv %s2897
        %v2899 = vmul.f32 %v2898, %v2896
        %2901 = vrot.lane.b32.xlu0 %v2899, 127
        %v2902 = vpop.permute.xlu0 %2901
        %v2904 = vadd.f32 %v2895, %v2902
        %s2905 = sld [smem:[#allocation3 + $0x167]]
        %v2906 = vstv %s2905
        %v2907 = vmul.f32 %v2906, %v2858
        %2909 = vrot.lane.b32.xlu0 %v2907, 126
        %v2910 = vpop.permute.xlu0 %2909
        %v2912 = vadd.f32 %v2904, %v2910
        %s2913 = sld [smem:[#allocation3 + $0x168]]
        %v2914 = vstv %s2913
        %v2915 = vmul.f32 %v2914, %v2863
        %2917 = vrot.lane.b32.xlu0 %v2915, 126
        %v2918 = vpop.permute.xlu0 %2917
        %v2920 = vadd.f32 %v2912, %v2918
        %s2921 = sld [smem:[#allocation3 + $0x169]]
        %v2922 = vstv %s2921
        %v2923 = vmul.f32 %v2922, %v2868
        %2925 = vrot.lane.b32.xlu0 %v2923, 126
        %v2926 = vpop.permute.xlu0 %2925
        %v2928 = vadd.f32 %v2920, %v2926
        %s2929 = sld [smem:[#allocation3 + $0x16a]]
        %v2930 = vstv %s2929
        %v2931 = vmul.f32 %v2930, %v2873
        %2933 = vrot.lane.b32.xlu0 %v2931, 126
        %v2934 = vpop.permute.xlu0 %2933
        %v2936 = vadd.f32 %v2928, %v2934
        %s2937 = sld [smem:[#allocation2]]
        %v2938 = vstv %s2937
        %v2939 = vadd.f32 %v2936, %v2938
        %v2940 = vtanh.pop %v2939
        %vm2941 = vcmask 64512
        %2942 = vst.msk [vmem:[%s178] sm:$0xff] %vm2941, %v2940
        %s2943 = sand.u32 %s95, 1
        %s2944 = scalar_lea.sflag [#allocation4], %s2943
        %s2945 = sand.u32 %s95, 1
        %s2946 = smul.addr %s2945, 8
        %s2947 = scalar_lea.vmem [#allocation6], %s2946
        // Predicated region
        $region37: #{conv_tanh.1} parent=31 // pred_check
          %p2948 = pneg %p105
        $region38: #{conv_tanh.1} parent=31 // pred_check_branch
          %2950 = sbr.rel (%p2948) target = $region40
        $region39: #{conv_tanh.1} parent=31 // pred_region
          %s2952 = ssub.s32 128, 128
          %2953 = vsyncadd %s2944, %s2952
          %s2954 = smul.addr %s19, 128
          %s2955 = scalar_lea.hbm %s3, %s2954
          %s2957 = sshll.u32 %s2947, 4
          %s2958 = int_to_ptr.vmem [resolvable:$true] %s2957
          %2960 = dma.vmem_to_hbm [thread:$0]  %s2958, 128, %s2955, %s2944
        $region40: #{conv_tanh.1} parent=31 // pred_fallthru
          _
      $region32: #{conv_tanh.1} parent=5 // pred_fallthru
        _
      %p2961 = scmp.le.s32.totalorder 2, %s14
      // Predicated region
      $region41: #{conv_tanh.1} parent=5 // pred_check
        %p2962 = pneg %p2961
      $region42: #{conv_tanh.1} parent=5 // pred_check_branch
        %2964 = sbr.rel (%p2962) target = $region44
      $region43: #{conv_tanh.1} parent=5 // pred_region
        %s2965 = ssub.s32 %s14, 2
        // Predicated region
        $region45: #{conv_tanh.1} parent=43 // pred_check
          %p2966 = pneg %p111
        $region46: #{conv_tanh.1} parent=43 // pred_check_branch
          %2968 = sbr.rel (%p2966) target = $region48
        $region47: #{conv_tanh.1} parent=43 // pred_region
          %s2969 = sand.u32 %s96, 1
          %s2970 = scalar_lea.sflag [#allocation4], %s2969
          %s2971 = sand.u32 %s96, 1
          %s2972 = smul.addr %s2971, 8
          %s2973 = scalar_lea.vmem [#allocation6], %s2972
          %2974 = dma.done %s2970, 128
        $region48: #{conv_tanh.1} parent=43 // pred_fallthru
          _
      $region44: #{conv_tanh.1} parent=5 // pred_fallthru
        _
    $region6: #{conv_tanh.1} parent=1 // loop_footer
      %s18 = sadd.s32 1, %s14
    $region7: #{conv_tanh.1} parent=1 // loop_footer_branch
      %13 = sbr.rel target = $region3
    $region8: #{conv_tanh.1} parent=1 // loop_exit
      _
    %2975 = vsyncpa [#allocation4], 1
    %s2976 = scalar_lea.sflag [#allocation4], 1
    %2977 = vsyncpa %s2976, 1
    %2978 = vsyncpa [#allocation5], 1
    %s2979 = scalar_lea.sflag [#allocation5], 1
    %2980 = vsyncpa %s2979, 1

</llo_original>
